<compile_context>
chip_gen: v7x
topology: tpu7x:2x2x1
jax: 0.10.0
libtpu: 0.0.40
codegen_flags: <defaults>
</compile_context>

<pallas_src>
import jax
import jax.numpy as jnp
from jax.experimental import pallas as pl
from jax.experimental.pallas import tpu as pltpu

CIN = 1024   # fixed by the module: Conv2d(1024, 256, 1x1, bias=False)
COUT = 256


def _add_relu_conv1x1_kernel(a_ref, b_ref, w_ref, o_ref):
    # a_ref, b_ref: (CIN, tn) f32 tiles of the two NCHW inputs (channels-major)
    # w_ref:        (COUT, CIN) bf16 weight, resident across all grid steps
    # o_ref:        (COUT, tn) f32 output tile (lane-dense along spatial)
    x = jnp.maximum(a_ref[...] + b_ref[...], 0.0)            # fused add + ReLU (VPU, f32)
    o_ref[...] = jnp.dot(
        w_ref[...], x.astype(jnp.bfloat16),                   # bf16 operands -> MXU-native
        preferred_element_type=jnp.float32,                    # f32 accumulation
    ).astype(o_ref.dtype)


def add_relu_conv1x1(x130, x122, weight, *, tn=256):
    """x130, x122: (N, Cin, H, W) float32. weight: (Cout, Cin, 1, 1) float32.

    Returns (N, Cout, H, W) ~= Conv2d(1024, 256, 1x1, bias=False)(relu(x130 + x122)).
    Matmul uses bf16 operands with f32 accumulation (MXU-native).
    """
    n, c, h, w = x130.shape
    assert c == CIN and x122.shape == x130.shape
    assert weight.shape == (COUT, CIN, 1, 1)
    hw = h * w

    # Free (no-copy) reshapes: NCHW -> (N, Cin, H*W); (Cout, Cin, 1, 1) -> (Cout, Cin).
    a3 = x130.reshape(n, CIN, hw)
    b3 = x122.reshape(n, CIN, hw)
    # Resident weight, cast to bf16 once (halves its HBM traffic, no per-step cast).
    w2d = weight.reshape(COUT, CIN).astype(jnp.bfloat16)

    if hw <= tn:
        # Tiny feature maps: one full-extent spatial block (legal for any hw).
        tn_eff = hw
        grid_s = 1
    else:
        # tn is a multiple of 128. Pallas masks the (independent) tail columns
        # of the last block on the output store, so no explicit padding copy
        # (which would itself cost an extra HBM round-trip) is needed.
        tn_eff = tn
        grid_s = pl.cdiv(hw, tn)

    flops = 2 * n * COUT * CIN * hw
    bytes_accessed = (a3.size + b3.size) * 4 + w2d.size * 2 + n * COUT * hw * 4

    out3 = pl.pallas_call(
        _add_relu_conv1x1_kernel,
        out_shape=jax.ShapeDtypeStruct((n, COUT, hw), x130.dtype),
        grid_spec=pltpu.PrefetchScalarGridSpec(
            num_scalar_prefetch=0,
            grid=(n, grid_s),
            in_specs=[
                pl.BlockSpec((None, CIN, tn_eff), lambda b, s: (b, 0, s)),
                pl.BlockSpec((None, CIN, tn_eff), lambda b, s: (b, 0, s)),
                pl.BlockSpec((COUT, CIN), lambda b, s: (0, 0)),   # resident weight
            ],
            out_specs=pl.BlockSpec((None, COUT, tn_eff), lambda b, s: (b, 0, s)),
        ),
        compiler_params=pltpu.CompilerParams(
            # Both axes are independent -> megacore can shard spatial steps
            # across v7x's two TensorCores.
            dimension_semantics=("parallel", "parallel"),
        ),
        cost_estimate=pl.CostEstimate(
            flops=flops, transcendentals=0, bytes_accessed=bytes_accessed),
    )(a3, b3, w2d)

    # Free reshape back to NCHW.
    return out3.reshape(n, COUT, h, w)


if __name__ == "__main__":
    key = jax.random.PRNGKey(0)
    k1, k2, k3 = jax.random.split(key, 3)

    # Shapes from the module spec: (1, 1024, 28, 28) inputs, Conv2d(1024 -> 256, 1x1).
    # H*W = 784 -> 4 spatial grid steps of tn=256 (last one masked).
    N, H, W = 1, 28, 28
    x130 = jax.random.normal(k1, (N, CIN, H, W), dtype=jnp.float32)
    x122 = jax.random.normal(k2, (N, CIN, H, W), dtype=jnp.float32)
    # Deterministic conv weight (kaiming-ish scale), torch layout (Cout, Cin, 1, 1).
    weight = jax.random.normal(k3, (COUT, CIN, 1, 1), dtype=jnp.float32) * (1.0 / (CIN ** 0.5))

    out = add_relu_conv1x1(x130, x122, weight)
    out = jax.block_until_ready(out)

    # Pure-JAX exact-f32 reference. The kernel runs the matmul with bf16 operands
    # + f32 accumulation (per perf review), so allow bf16-level tolerance.
    ref_x = jnp.maximum(x130 + x122, 0.0)
    ref = jnp.einsum(
        "nchw,oc->nohw", ref_x, weight.reshape(COUT, CIN),
        precision=jax.lax.Precision.HIGHEST,
        preferred_element_type=jnp.float32,
    )
    assert out.shape == (N, COUT, H, W), out.shape
    max_err = float(jnp.max(jnp.abs(out - ref)))
    assert jnp.allclose(out, ref, atol=3e-2, rtol=3e-2), max_err

    print("KERNEL_OK")
</pallas_src>

<mosaic_0001>
module attributes {stable_mosaic.version = 11 : i64} {
  func.func @_add_relu_conv1x1_kernel(%arg0: i32, %arg1: i32, %arg2: memref<1x1024x256xf32, #tpu.memory_space<vmem>>, %arg3: memref<1x1024x256xf32, #tpu.memory_space<vmem>>, %arg4: memref<256x1024xbf16, #tpu.memory_space<vmem>>, %arg5: memref<1x256x256xf32, #tpu.memory_space<vmem>>) attributes {dimension_semantics = [#tpu.dimension_semantics<parallel>, #tpu.dimension_semantics<parallel>], iteration_bounds = array<i64: 1, 4>, scalar_prefetch = 0 : i64, scratch_operands = 0 : i64, tpu.core_type = #tpu.core_type<tc>, window_params = [{transform_indices = @transform_0, window_bounds = array<i64: 1, 1024, 256>}, {transform_indices = @transform_1, window_bounds = array<i64: 1, 1024, 256>}, {pipeline_mode = #tpu.pipeline_mode<synchronous>, transform_indices = @transform_2, window_bounds = array<i64: 256, 1024>}, {transform_indices = @transform_3, window_bounds = array<i64: 1, 256, 256>}]} {
    %c0 = arith.constant 0 : index
    %c0_0 = arith.constant 0 : index
    %c0_1 = arith.constant 0 : index
    %0 = vector.load %arg2[%c0, %c0_0, %c0_1] : memref<1x1024x256xf32, #tpu.memory_space<vmem>>, vector<1x1024x256xf32>
    %1 = vector.shape_cast %0 : vector<1x1024x256xf32> to vector<1024x256xf32>
    %c0_2 = arith.constant 0 : index
    %c0_3 = arith.constant 0 : index
    %c0_4 = arith.constant 0 : index
    %2 = vector.load %arg3[%c0_2, %c0_3, %c0_4] : memref<1x1024x256xf32, #tpu.memory_space<vmem>>, vector<1x1024x256xf32>
    %3 = vector.shape_cast %2 : vector<1x1024x256xf32> to vector<1024x256xf32>
    %4 = arith.addf %1, %3 : vector<1024x256xf32>
    %cst = arith.constant 0.000000e+00 : f32
    %5 = vector.broadcast %cst : f32 to vector<1024x256xf32>
    %6 = arith.maximumf %4, %5 : vector<1024x256xf32>
    %c0_5 = arith.constant 0 : index
    %c0_6 = arith.constant 0 : index
    %7 = vector.load %arg4[%c0_5, %c0_6] : memref<256x1024xbf16, #tpu.memory_space<vmem>>, vector<256x1024xbf16>
    %8 = arith.truncf %6 : vector<1024x256xf32> to vector<1024x256xbf16>
    %cst_7 = arith.constant dense<0.000000e+00> : vector<256x256xf32>
    %9 = tpu.matmul %7, %8, %cst_7 {dimension_numbers = #tpu.dot_dimension_numbers<[1], [0], [0], [1], [0, 0, 1, 1], [], []>} : vector<256x1024xbf16>, vector<1024x256xbf16>, vector<256x256xf32> -> vector<256x256xf32>
    %c0_8 = arith.constant 0 : index
    %c0_9 = arith.constant 0 : index
    %c0_10 = arith.constant 0 : index
    %10 = vector.load %arg5[%c0_8, %c0_9, %c0_10] : memref<1x256x256xf32, #tpu.memory_space<vmem>>, vector<1x256x256xf32>
    %11 = vector.shape_cast %10 : vector<1x256x256xf32> to vector<256x256xf32>
    %12 = vector.shape_cast %9 : vector<256x256xf32> to vector<1x256x256xf32>
    tpu.vector_store %arg5[%c0_8, %c0_9, %c0_10], %12 {strides = array<i32>} : memref<1x256x256xf32, #tpu.memory_space<vmem>>, vector<1x256x256xf32>,
    return
  }
  func.func @transform_0(%arg0: i32, %arg1: i32) -> (i32, i32, i32) {
    %c0_i32 = arith.constant 0 : i32
    %c0_i32_0 = arith.constant 0 : i32
    return %arg0, %c0_i32, %arg1 : i32, i32, i32
  }
  func.func @transform_1(%arg0: i32, %arg1: i32) -> (i32, i32, i32) {
    %c0_i32 = arith.constant 0 : i32
    %c0_i32_0 = arith.constant 0 : i32
    return %arg0, %c0_i32, %arg1 : i32, i32, i32
  }
  func.func @transform_2(%arg0: i32, %arg1: i32) -> (i32, i32) {
    %c0_i32 = arith.constant 0 : i32
    %c0_i32_0 = arith.constant 0 : i32
    %c0_i32_1 = arith.constant 0 : i32
    return %c0_i32, %c0_i32_0 : i32, i32
  }
  func.func @transform_3(%arg0: i32, %arg1: i32) -> (i32, i32, i32) {
    %c0_i32 = arith.constant 0 : i32
    %c0_i32_0 = arith.constant 0 : i32
    return %arg0, %c0_i32, %arg1 : i32, i32, i32
  }
}

</mosaic_0001>

<llo_original>
// kernel: tpu_custom_call.1
$region0: #{tpu_custom_call.1}
  #allocation0 [shape = 'u32[]', space=smem, size = 0x4, offset = 0x4, fixed_abs, tag = 'smem constant byte address 0x4 - core index']
  #allocation1 [shape = 'u32[144,128]{1,0:T(1,128)}', space=vmem, size = 0x12000, scoped, tag = 'internal scratch']
  %s0 = inlined_call_operand.vmem [shape: f32[1,1024,784], index: 0, kind: input, shape index: {}]
  %s1 = inlined_call_operand.vmem [shape: f32[1,1024,784], index: 1, kind: input, shape index: {}]
  %s2 = inlined_call_operand.vmem [shape: bf16[256,1024], index: 2, kind: input, shape index: {}]
  %s3 = inlined_call_operand.vmem [shape: f32[1,256,784], index: 3, kind: output, shape index: {}]
  %s4 = sld [smem:[#allocation0]]
  $region211: #{tpu_custom_call.1} parent=0
    _
  %s6 = ssub.s32 1, %s4
  %s7 = scalar_select 0, %s6, %s4
  $region1: #{tpu_custom_call.1} parent=0
    #allocation2 [shape = 'u8[2097152]{0}', space=vmem, size = 0x200000, scoped, tag = 'input window, operand 0']
    #allocation3 [shape = 'u8[2097152]{0}', space=vmem, size = 0x200000, scoped, tag = 'input window, operand 1']
    #allocation4 [shape = 'u8[524288]{0}', space=vmem, size = 0x80000, scoped, tag = 'output window, operand 0']
    loop: start=0, step=1, limit=6
    $region2: #{tpu_custom_call.1} parent=1 // loop_pre_header
      _
    $region3: #{tpu_custom_call.1} parent=1 // loop_header
      %s9 = sphi 0, %s13
      %p10 = scmp.ge.s32.totalorder %s9, 6
      %s16 = sphi 0, %s28
      %s17 = sphi 0, %s24
      %s18 = sphi 0, %s16
      %s19 = sphi 0, %s17
      %s20 = sphi 0, %s18
      %s21 = sphi 0, %s19
      %s33 = sphi 0, %s35
      %s36 = sphi 0, %s33
      %s37 = sphi 0, %s36
      %s53 = sphi 0, %s37
      %s61 = sphi 0, %s63
      %s64 = sphi 0, %s61
      %s65 = sphi 0, %s64
      %s81 = sphi 0, %s65
      %s85 = sphi 0, %s85
      %s87 = sphi 0, %s85
      %s88 = sphi 0, %s87
      %s102 = sphi 0, %s88
      %s110 = sphi 0, %s112
      %s113 = sphi 0, %s110
      %s114 = sphi 0, %s113
      %s130 = sphi 0, %s114
    $region4: #{tpu_custom_call.1} parent=1 // loop_header_branch
      %12 = sbr.rel (%p10) target = $region8
    $region5: #{tpu_custom_call.1} parent=1 // loop_body
      %s14 = ssub.s32 %s9, 1
      %s15 = ssub.s32 %s9, 2
      %s22 = sadd.s32 1, %s17
      %p23 = scmp.ge.s32.totalorder %s22, 4
      %s24 = scalar_select %p23, 0, %s22
      %s25 = sadd.s32 1, %s16
      %s26 = scalar_select %p23, %s25, %s16
      %p27 = scmp.ge.s32.totalorder %s26, 1
      %s28 = scalar_select %p27, 0, %s26
      %s29 = ssub.s32 %s16, %s28
      %s30 = ssub.s32 %s17, %s24
      %s31 = sor.u32 %s29, %s30
      %p32 = scmp.eq.s32.totalorder %s31, 0
      %s34 = sadd.s32 %s33, 1
      %s35 = scalar_select %p32, %s33, %s34
      %p38 = pneg %p32
      %p39 = scmp.eq.s32.totalorder %s9, 3
      %p40 = por %p38, %p39
      %p41 = scmp.ne.s32.totalorder %s33, %s36
      %p42 = scmp.eq.s32.totalorder %s9, 0
      %p43 = por %p41, %p42
      %p44 = scmp.ne.s32.totalorder %s33, %s36
      %p45 = scmp.eq.s32.totalorder %s14, 3
      %p46 = por %p44, %p45
      %p47 = scmp.ne.s32.totalorder %s36, %s37
      %p48 = scmp.eq.s32.totalorder %s14, 0
      %p49 = por %p47, %p48
      %p50 = scmp.ne.s32.totalorder %s36, %s37
      %p51 = scmp.eq.s32.totalorder %s15, 3
      %p52 = por %p50, %p51
      %p54 = scmp.ne.s32.totalorder %s37, %s53
      %p55 = scmp.eq.s32.totalorder %s15, 0
      %p56 = por %p54, %p55
      %s57 = ssub.s32 %s16, %s28
      %s58 = ssub.s32 %s17, %s24
      %s59 = sor.u32 %s57, %s58
      %p60 = scmp.eq.s32.totalorder %s59, 0
      %s62 = sadd.s32 %s61, 1
      %s63 = scalar_select %p60, %s61, %s62
      %p66 = pneg %p60
      %p67 = scmp.eq.s32.totalorder %s9, 3
      %p68 = por %p66, %p67
      %p69 = scmp.ne.s32.totalorder %s61, %s64
      %p70 = scmp.eq.s32.totalorder %s9, 0
      %p71 = por %p69, %p70
      %p72 = scmp.ne.s32.totalorder %s61, %s64
      %p73 = scmp.eq.s32.totalorder %s14, 3
      %p74 = por %p72, %p73
      %p75 = scmp.ne.s32.totalorder %s64, %s65
      %p76 = scmp.eq.s32.totalorder %s14, 0
      %p77 = por %p75, %p76
      %p78 = scmp.ne.s32.totalorder %s64, %s65
      %p79 = scmp.eq.s32.totalorder %s15, 3
      %p80 = por %p78, %p79
      %p82 = scmp.ne.s32.totalorder %s65, %s81
      %p83 = scmp.eq.s32.totalorder %s15, 0
      %p84 = por %p82, %p83
      %s86 = sadd.s32 %s85, 1
      %p89 = scmp.eq.s32.totalorder %s9, 3
      %p90 = scmp.ne.s32.totalorder %s85, %s87
      %p91 = scmp.eq.s32.totalorder %s9, 0
      %p92 = por %p90, %p91
      %p93 = scmp.ne.s32.totalorder %s85, %s87
      %p94 = scmp.eq.s32.totalorder %s14, 3
      %p95 = por %p93, %p94
      %p96 = scmp.ne.s32.totalorder %s87, %s88
      %p97 = scmp.eq.s32.totalorder %s14, 0
      %p98 = por %p96, %p97
      %p99 = scmp.ne.s32.totalorder %s87, %s88
      %p100 = scmp.eq.s32.totalorder %s15, 3
      %p101 = por %p99, %p100
      %p103 = scmp.ne.s32.totalorder %s88, %s102
      %p104 = scmp.eq.s32.totalorder %s15, 0
      %p105 = por %p103, %p104
      %s106 = ssub.s32 %s16, %s28
      %s107 = ssub.s32 %s17, %s24
      %s108 = sor.u32 %s106, %s107
      %p109 = scmp.eq.s32.totalorder %s108, 0
      %s111 = sadd.s32 %s110, 1
      %s112 = scalar_select %p109, %s110, %s111
      %p115 = pneg %p109
      %p116 = scmp.eq.s32.totalorder %s9, 3
      %p117 = por %p115, %p116
      %p118 = scmp.ne.s32.totalorder %s110, %s113
      %p119 = scmp.eq.s32.totalorder %s9, 0
      %p120 = por %p118, %p119
      %p121 = scmp.ne.s32.totalorder %s110, %s113
      %p122 = scmp.eq.s32.totalorder %s14, 3
      %p123 = por %p121, %p122
      %p124 = scmp.ne.s32.totalorder %s113, %s114
      %p125 = scmp.eq.s32.totalorder %s14, 0
      %p126 = por %p124, %p125
      %p127 = scmp.ne.s32.totalorder %s113, %s114
      %p128 = scmp.eq.s32.totalorder %s15, 3
      %p129 = por %p127, %p128
      %p131 = scmp.ne.s32.totalorder %s114, %s130
      %p132 = scmp.eq.s32.totalorder %s15, 0
      %p133 = por %p131, %p132
      %p134 = scmp.le.s32.totalorder 1, %s9
      %p135 = scmp.lt.s32.totalorder %s9, 5
      %p136 = pnand %p134, %p135
      %p137 = pneg %p136
      // Predicated region
      $region9: #{tpu_custom_call.1} parent=5 // pred_check
        _
      $region10: #{tpu_custom_call.1} parent=5 // pred_check_branch
        %139 = sbr.rel (%p136) target = $region12
      $region11: #{tpu_custom_call.1} parent=5 // pred_region
        %s140 = ssub.s32 %s9, 1
        // Predicated region
        $region13: #{tpu_custom_call.1} parent=11 // pred_check
          %p141 = pneg %p98
        $region14: #{tpu_custom_call.1} parent=11 // pred_check_branch
          %143 = sbr.rel (%p141) target = $region16
        $region15: #{tpu_custom_call.1} parent=11 // pred_region
          _
        $region16: #{tpu_custom_call.1} parent=11 // pred_fallthru
          _
      $region12: #{tpu_custom_call.1} parent=5 // pred_fallthru
        _
      %p144 = scmp.lt.s32.totalorder %s9, 4
      // Predicated region
      $region17: #{tpu_custom_call.1} parent=5 // pred_check
        %p145 = pneg %p144
      $region18: #{tpu_custom_call.1} parent=5 // pred_check_branch
        %147 = sbr.rel (%p145) target = $region20
      $region19: #{tpu_custom_call.1} parent=5 // pred_region
        // Predicated region
        $region21: #{tpu_custom_call.1} parent=19 // pred_check
          %p148 = pneg %p43
        $region22: #{tpu_custom_call.1} parent=19 // pred_check_branch
          %150 = sbr.rel (%p148) target = $region24
        $region23: #{tpu_custom_call.1} parent=19 // pred_region
          %s151 = sand.u32 %s33, 1
          %s152 = sand.u32 %s33, 1
          %s153 = smul.addr %s152, 2048
          %s154 = scalar_lea.vmem [#allocation2], %s153
          %s155 = smul.u32 2, %s17
          %s156 = ssub.s32 7, %s155
          %p157 = scmp.lt.s32.totalorder %s156, 2
          %s158 = scalar_select %p157, %s156, 2
          %s159 = smul.u32 16384, %s158
          %p160 = scmp.ne.s32.totalorder 0, %s159
          %s161 = smul.addr %s16, 896
          %s162 = sadd.s32 %s155, %s161
          %s163 = smul.addr %s162, 8
          %s164 = scalar_lea.vmem %s0, %s163
          %s165 = smul.u32 %s158, 8
          // Predicated region
          $region25: #{tpu_custom_call.1} parent=23 // pred_check
            %p166 = pneg %p160
          $region26: #{tpu_custom_call.1} parent=23 // pred_check_branch
            %168 = sbr.rel (%p166) target = $region28
          $region27: #{tpu_custom_call.1} parent=23 // pred_region
            %p169 = scmp.lt.u32.totalorder %s165, 8
            %p170 = pneg %p169
            // Predicated region
            $region29: #{tpu_custom_call.1} parent=27 // pred_check
              _
            $region30: #{tpu_custom_call.1} parent=27 // pred_check_branch
              %172 = sbr.rel (%p169) target = $region32
            $region31: #{tpu_custom_call.1} parent=27 // pred_region
              %s441 = sand.u32 %s165, 7
              %p442 = scmp.eq.s32.totalorder %s441, 0
              // Predicated region
              $region44: #{tpu_custom_call.1} parent=31 // pred_check
                %p443 = pneg %p442
              $region45: #{tpu_custom_call.1} parent=31 // pred_check_branch
                %445 = sbr.rel (%p443) target = $region47
              $region46: #{tpu_custom_call.1} parent=31 // pred_region
                %s446 = sshrl.u32 %s165, 3
                // While loop
                $region48: #{tpu_custom_call.1} parent=46 // loop_pre_header
                  _
                $region49: #{tpu_custom_call.1} parent=46 // loop_header
                  %s450 = sphi 0, %s452
                  %p451 = scmp.ge.s32.totalorder %s450, %s446
                  %s455 = sphi 0, %s716
                  %s456 = sphi %s164, %s719
                  %s457 = sphi %s154, %s720
                $region50: #{tpu_custom_call.1} parent=46 // loop_header_branch
                  %454 = sbr.rel (%p451) target = $region54
                $region51: #{tpu_custom_call.1} parent=46 // loop_body
                  %v458 = vld [vmem:[%s456] sm:$0xff]
                  %459 = vst [vmem:[%s457] sm:$0xff] %v458
                  %v460 = vld [vmem:[%s456 + $0x38] sm:$0xff]
                  %461 = vst [vmem:[%s457 + $0x10] sm:$0xff] %v460
                  %v462 = vld [vmem:[%s456 + $0x70] sm:$0xff]
                  %463 = vst [vmem:[%s457 + $0x20] sm:$0xff] %v462
                  %v464 = vld [vmem:[%s456 + $0xa8] sm:$0xff]
                  %465 = vst [vmem:[%s457 + $0x30] sm:$0xff] %v464
                  %v466 = vld [vmem:[%s456 + $0xe0] sm:$0xff]
                  %467 = vst [vmem:[%s457 + $0x40] sm:$0xff] %v466
                  %v468 = vld [vmem:[%s456 + $0x118] sm:$0xff]
                  %469 = vst [vmem:[%s457 + $0x50] sm:$0xff] %v468
                  %v470 = vld [vmem:[%s456 + $0x150] sm:$0xff]
                  %471 = vst [vmem:[%s457 + $0x60] sm:$0xff] %v470
                  %v472 = vld [vmem:[%s456 + $0x188] sm:$0xff]
                  %473 = vst [vmem:[%s457 + $0x70] sm:$0xff] %v472
                  %v474 = vld [vmem:[%s456 + $0x1c0] sm:$0xff]
                  %475 = vst [vmem:[%s457 + $0x80] sm:$0xff] %v474
                  %v476 = vld [vmem:[%s456 + $0x1f8] sm:$0xff]
                  %477 = vst [vmem:[%s457 + $0x90] sm:$0xff] %v476
                  %v478 = vld [vmem:[%s456 + $0x230] sm:$0xff]
                  %479 = vst [vmem:[%s457 + $0xa0] sm:$0xff] %v478
                  %v480 = vld [vmem:[%s456 + $0x268] sm:$0xff]
                  %481 = vst [vmem:[%s457 + $0xb0] sm:$0xff] %v480
                  %v482 = vld [vmem:[%s456 + $0x2a0] sm:$0xff]
                  %483 = vst [vmem:[%s457 + $0xc0] sm:$0xff] %v482
                  %v484 = vld [vmem:[%s456 + $0x2d8] sm:$0xff]
                  %485 = vst [vmem:[%s457 + $0xd0] sm:$0xff] %v484
                  %v486 = vld [vmem:[%s456 + $0x310] sm:$0xff]
                  %487 = vst [vmem:[%s457 + $0xe0] sm:$0xff] %v486
                  %v488 = vld [vmem:[%s456 + $0x348] sm:$0xff]
                  %489 = vst [vmem:[%s457 + $0xf0] sm:$0xff] %v488
                  %v490 = vld [vmem:[%s456 + $0x380] sm:$0xff]
                  %491 = vst [vmem:[%s457 + $0x100] sm:$0xff] %v490
                  %v492 = vld [vmem:[%s456 + $0x3b8] sm:$0xff]
                  %493 = vst [vmem:[%s457 + $0x110] sm:$0xff] %v492
                  %v494 = vld [vmem:[%s456 + $0x3f0] sm:$0xff]
                  %495 = vst [vmem:[%s457 + $0x120] sm:$0xff] %v494
                  %v496 = vld [vmem:[%s456 + $0x428] sm:$0xff]
                  %497 = vst [vmem:[%s457 + $0x130] sm:$0xff] %v496
                  %v498 = vld [vmem:[%s456 + $0x460] sm:$0xff]
                  %499 = vst [vmem:[%s457 + $0x140] sm:$0xff] %v498
                  %v500 = vld [vmem:[%s456 + $0x498] sm:$0xff]
                  %501 = vst [vmem:[%s457 + $0x150] sm:$0xff] %v500
                  %v502 = vld [vmem:[%s456 + $0x4d0] sm:$0xff]
                  %503 = vst [vmem:[%s457 + $0x160] sm:$0xff] %v502
                  %v504 = vld [vmem:[%s456 + $0x508] sm:$0xff]
                  %505 = vst [vmem:[%s457 + $0x170] sm:$0xff] %v504
                  %v506 = vld [vmem:[%s456 + $0x540] sm:$0xff]
                  %507 = vst [vmem:[%s457 + $0x180] sm:$0xff] %v506
                  %v508 = vld [vmem:[%s456 + $0x578] sm:$0xff]
                  %509 = vst [vmem:[%s457 + $0x190] sm:$0xff] %v508
                  %v510 = vld [vmem:[%s456 + $0x5b0] sm:$0xff]
                  %511 = vst [vmem:[%s457 + $0x1a0] sm:$0xff] %v510
                  %v512 = vld [vmem:[%s456 + $0x5e8] sm:$0xff]
                  %513 = vst [vmem:[%s457 + $0x1b0] sm:$0xff] %v512
                  %v514 = vld [vmem:[%s456 + $0x620] sm:$0xff]
                  %515 = vst [vmem:[%s457 + $0x1c0] sm:$0xff] %v514
                  %v516 = vld [vmem:[%s456 + $0x658] sm:$0xff]
                  %517 = vst [vmem:[%s457 + $0x1d0] sm:$0xff] %v516
                  %v518 = vld [vmem:[%s456 + $0x690] sm:$0xff]
                  %519 = vst [vmem:[%s457 + $0x1e0] sm:$0xff] %v518
                  %v520 = vld [vmem:[%s456 + $0x6c8] sm:$0xff]
                  %521 = vst [vmem:[%s457 + $0x1f0] sm:$0xff] %v520
                  %v522 = vld [vmem:[%s456 + $0x700] sm:$0xff]
                  %523 = vst [vmem:[%s457 + $0x200] sm:$0xff] %v522
                  %v524 = vld [vmem:[%s456 + $0x738] sm:$0xff]
                  %525 = vst [vmem:[%s457 + $0x210] sm:$0xff] %v524
                  %v526 = vld [vmem:[%s456 + $0x770] sm:$0xff]
                  %527 = vst [vmem:[%s457 + $0x220] sm:$0xff] %v526
                  %v528 = vld [vmem:[%s456 + $0x7a8] sm:$0xff]
                  %529 = vst [vmem:[%s457 + $0x230] sm:$0xff] %v528
                  %v530 = vld [vmem:[%s456 + $0x7e0] sm:$0xff]
                  %531 = vst [vmem:[%s457 + $0x240] sm:$0xff] %v530
                  %v532 = vld [vmem:[%s456 + $0x818] sm:$0xff]
                  %533 = vst [vmem:[%s457 + $0x250] sm:$0xff] %v532
                  %v534 = vld [vmem:[%s456 + $0x850] sm:$0xff]
                  %535 = vst [vmem:[%s457 + $0x260] sm:$0xff] %v534
                  %v536 = vld [vmem:[%s456 + $0x888] sm:$0xff]
                  %537 = vst [vmem:[%s457 + $0x270] sm:$0xff] %v536
                  %v538 = vld [vmem:[%s456 + $0x8c0] sm:$0xff]
                  %539 = vst [vmem:[%s457 + $0x280] sm:$0xff] %v538
                  %v540 = vld [vmem:[%s456 + $0x8f8] sm:$0xff]
                  %541 = vst [vmem:[%s457 + $0x290] sm:$0xff] %v540
                  %v542 = vld [vmem:[%s456 + $0x930] sm:$0xff]
                  %543 = vst [vmem:[%s457 + $0x2a0] sm:$0xff] %v542
                  %v544 = vld [vmem:[%s456 + $0x968] sm:$0xff]
                  %545 = vst [vmem:[%s457 + $0x2b0] sm:$0xff] %v544
                  %v546 = vld [vmem:[%s456 + $0x9a0] sm:$0xff]
                  %547 = vst [vmem:[%s457 + $0x2c0] sm:$0xff] %v546
                  %v548 = vld [vmem:[%s456 + $0x9d8] sm:$0xff]
                  %549 = vst [vmem:[%s457 + $0x2d0] sm:$0xff] %v548
                  %v550 = vld [vmem:[%s456 + $0xa10] sm:$0xff]
                  %551 = vst [vmem:[%s457 + $0x2e0] sm:$0xff] %v550
                  %v552 = vld [vmem:[%s456 + $0xa48] sm:$0xff]
                  %553 = vst [vmem:[%s457 + $0x2f0] sm:$0xff] %v552
                  %v554 = vld [vmem:[%s456 + $0xa80] sm:$0xff]
                  %555 = vst [vmem:[%s457 + $0x300] sm:$0xff] %v554
                  %v556 = vld [vmem:[%s456 + $0xab8] sm:$0xff]
                  %557 = vst [vmem:[%s457 + $0x310] sm:$0xff] %v556
                  %v558 = vld [vmem:[%s456 + $0xaf0] sm:$0xff]
                  %559 = vst [vmem:[%s457 + $0x320] sm:$0xff] %v558
                  %v560 = vld [vmem:[%s456 + $0xb28] sm:$0xff]
                  %561 = vst [vmem:[%s457 + $0x330] sm:$0xff] %v560
                  %v562 = vld [vmem:[%s456 + $0xb60] sm:$0xff]
                  %563 = vst [vmem:[%s457 + $0x340] sm:$0xff] %v562
                  %v564 = vld [vmem:[%s456 + $0xb98] sm:$0xff]
                  %565 = vst [vmem:[%s457 + $0x350] sm:$0xff] %v564
                  %v566 = vld [vmem:[%s456 + $0xbd0] sm:$0xff]
                  %567 = vst [vmem:[%s457 + $0x360] sm:$0xff] %v566
                  %v568 = vld [vmem:[%s456 + $0xc08] sm:$0xff]
                  %569 = vst [vmem:[%s457 + $0x370] sm:$0xff] %v568
                  %v570 = vld [vmem:[%s456 + $0xc40] sm:$0xff]
                  %571 = vst [vmem:[%s457 + $0x380] sm:$0xff] %v570
                  %v572 = vld [vmem:[%s456 + $0xc78] sm:$0xff]
                  %573 = vst [vmem:[%s457 + $0x390] sm:$0xff] %v572
                  %v574 = vld [vmem:[%s456 + $0xcb0] sm:$0xff]
                  %575 = vst [vmem:[%s457 + $0x3a0] sm:$0xff] %v574
                  %v576 = vld [vmem:[%s456 + $0xce8] sm:$0xff]
                  %577 = vst [vmem:[%s457 + $0x3b0] sm:$0xff] %v576
                  %v578 = vld [vmem:[%s456 + $0xd20] sm:$0xff]
                  %579 = vst [vmem:[%s457 + $0x3c0] sm:$0xff] %v578
                  %v580 = vld [vmem:[%s456 + $0xd58] sm:$0xff]
                  %581 = vst [vmem:[%s457 + $0x3d0] sm:$0xff] %v580
                  %v582 = vld [vmem:[%s456 + $0xd90] sm:$0xff]
                  %583 = vst [vmem:[%s457 + $0x3e0] sm:$0xff] %v582
                  %v584 = vld [vmem:[%s456 + $0xdc8] sm:$0xff]
                  %585 = vst [vmem:[%s457 + $0x3f0] sm:$0xff] %v584
                  %v586 = vld [vmem:[%s456 + $0xe00] sm:$0xff]
                  %587 = vst [vmem:[%s457 + $0x400] sm:$0xff] %v586
                  %v588 = vld [vmem:[%s456 + $0xe38] sm:$0xff]
                  %589 = vst [vmem:[%s457 + $0x410] sm:$0xff] %v588
                  %v590 = vld [vmem:[%s456 + $0xe70] sm:$0xff]
                  %591 = vst [vmem:[%s457 + $0x420] sm:$0xff] %v590
                  %v592 = vld [vmem:[%s456 + $0xea8] sm:$0xff]
                  %593 = vst [vmem:[%s457 + $0x430] sm:$0xff] %v592
                  %v594 = vld [vmem:[%s456 + $0xee0] sm:$0xff]
                  %595 = vst [vmem:[%s457 + $0x440] sm:$0xff] %v594
                  %v596 = vld [vmem:[%s456 + $0xf18] sm:$0xff]
                  %597 = vst [vmem:[%s457 + $0x450] sm:$0xff] %v596
                  %v598 = vld [vmem:[%s456 + $0xf50] sm:$0xff]
                  %599 = vst [vmem:[%s457 + $0x460] sm:$0xff] %v598
                  %v600 = vld [vmem:[%s456 + $0xf88] sm:$0xff]
                  %601 = vst [vmem:[%s457 + $0x470] sm:$0xff] %v600
                  %v602 = vld [vmem:[%s456 + $0xfc0] sm:$0xff]
                  %603 = vst [vmem:[%s457 + $0x480] sm:$0xff] %v602
                  %v604 = vld [vmem:[%s456 + $0xff8] sm:$0xff]
                  %605 = vst [vmem:[%s457 + $0x490] sm:$0xff] %v604
                  %v606 = vld [vmem:[%s456 + $0x1030] sm:$0xff]
                  %607 = vst [vmem:[%s457 + $0x4a0] sm:$0xff] %v606
                  %v608 = vld [vmem:[%s456 + $0x1068] sm:$0xff]
                  %609 = vst [vmem:[%s457 + $0x4b0] sm:$0xff] %v608
                  %v610 = vld [vmem:[%s456 + $0x10a0] sm:$0xff]
                  %611 = vst [vmem:[%s457 + $0x4c0] sm:$0xff] %v610
                  %v612 = vld [vmem:[%s456 + $0x10d8] sm:$0xff]
                  %613 = vst [vmem:[%s457 + $0x4d0] sm:$0xff] %v612
                  %v614 = vld [vmem:[%s456 + $0x1110] sm:$0xff]
                  %615 = vst [vmem:[%s457 + $0x4e0] sm:$0xff] %v614
                  %v616 = vld [vmem:[%s456 + $0x1148] sm:$0xff]
                  %617 = vst [vmem:[%s457 + $0x4f0] sm:$0xff] %v616
                  %v618 = vld [vmem:[%s456 + $0x1180] sm:$0xff]
                  %619 = vst [vmem:[%s457 + $0x500] sm:$0xff] %v618
                  %v620 = vld [vmem:[%s456 + $0x11b8] sm:$0xff]
                  %621 = vst [vmem:[%s457 + $0x510] sm:$0xff] %v620
                  %v622 = vld [vmem:[%s456 + $0x11f0] sm:$0xff]
                  %623 = vst [vmem:[%s457 + $0x520] sm:$0xff] %v622
                  %v624 = vld [vmem:[%s456 + $0x1228] sm:$0xff]
                  %625 = vst [vmem:[%s457 + $0x530] sm:$0xff] %v624
                  %v626 = vld [vmem:[%s456 + $0x1260] sm:$0xff]
                  %627 = vst [vmem:[%s457 + $0x540] sm:$0xff] %v626
                  %v628 = vld [vmem:[%s456 + $0x1298] sm:$0xff]
                  %629 = vst [vmem:[%s457 + $0x550] sm:$0xff] %v628
                  %v630 = vld [vmem:[%s456 + $0x12d0] sm:$0xff]
                  %631 = vst [vmem:[%s457 + $0x560] sm:$0xff] %v630
                  %v632 = vld [vmem:[%s456 + $0x1308] sm:$0xff]
                  %633 = vst [vmem:[%s457 + $0x570] sm:$0xff] %v632
                  %v634 = vld [vmem:[%s456 + $0x1340] sm:$0xff]
                  %635 = vst [vmem:[%s457 + $0x580] sm:$0xff] %v634
                  %v636 = vld [vmem:[%s456 + $0x1378] sm:$0xff]
                  %637 = vst [vmem:[%s457 + $0x590] sm:$0xff] %v636
                  %v638 = vld [vmem:[%s456 + $0x13b0] sm:$0xff]
                  %639 = vst [vmem:[%s457 + $0x5a0] sm:$0xff] %v638
                  %v640 = vld [vmem:[%s456 + $0x13e8] sm:$0xff]
                  %641 = vst [vmem:[%s457 + $0x5b0] sm:$0xff] %v640
                  %v642 = vld [vmem:[%s456 + $0x1420] sm:$0xff]
                  %643 = vst [vmem:[%s457 + $0x5c0] sm:$0xff] %v642
                  %v644 = vld [vmem:[%s456 + $0x1458] sm:$0xff]
                  %645 = vst [vmem:[%s457 + $0x5d0] sm:$0xff] %v644
                  %v646 = vld [vmem:[%s456 + $0x1490] sm:$0xff]
                  %647 = vst [vmem:[%s457 + $0x5e0] sm:$0xff] %v646
                  %v648 = vld [vmem:[%s456 + $0x14c8] sm:$0xff]
                  %649 = vst [vmem:[%s457 + $0x5f0] sm:$0xff] %v648
                  %v650 = vld [vmem:[%s456 + $0x1500] sm:$0xff]
                  %651 = vst [vmem:[%s457 + $0x600] sm:$0xff] %v650
                  %v652 = vld [vmem:[%s456 + $0x1538] sm:$0xff]
                  %653 = vst [vmem:[%s457 + $0x610] sm:$0xff] %v652
                  %v654 = vld [vmem:[%s456 + $0x1570] sm:$0xff]
                  %655 = vst [vmem:[%s457 + $0x620] sm:$0xff] %v654
                  %v656 = vld [vmem:[%s456 + $0x15a8] sm:$0xff]
                  %657 = vst [vmem:[%s457 + $0x630] sm:$0xff] %v656
                  %v658 = vld [vmem:[%s456 + $0x15e0] sm:$0xff]
                  %659 = vst [vmem:[%s457 + $0x640] sm:$0xff] %v658
                  %v660 = vld [vmem:[%s456 + $0x1618] sm:$0xff]
                  %661 = vst [vmem:[%s457 + $0x650] sm:$0xff] %v660
                  %v662 = vld [vmem:[%s456 + $0x1650] sm:$0xff]
                  %663 = vst [vmem:[%s457 + $0x660] sm:$0xff] %v662
                  %v664 = vld [vmem:[%s456 + $0x1688] sm:$0xff]
                  %665 = vst [vmem:[%s457 + $0x670] sm:$0xff] %v664
                  %v666 = vld [vmem:[%s456 + $0x16c0] sm:$0xff]
                  %667 = vst [vmem:[%s457 + $0x680] sm:$0xff] %v666
                  %v668 = vld [vmem:[%s456 + $0x16f8] sm:$0xff]
                  %669 = vst [vmem:[%s457 + $0x690] sm:$0xff] %v668
                  %v670 = vld [vmem:[%s456 + $0x1730] sm:$0xff]
                  %671 = vst [vmem:[%s457 + $0x6a0] sm:$0xff] %v670
                  %v672 = vld [vmem:[%s456 + $0x1768] sm:$0xff]
                  %673 = vst [vmem:[%s457 + $0x6b0] sm:$0xff] %v672
                  %v674 = vld [vmem:[%s456 + $0x17a0] sm:$0xff]
                  %675 = vst [vmem:[%s457 + $0x6c0] sm:$0xff] %v674
                  %v676 = vld [vmem:[%s456 + $0x17d8] sm:$0xff]
                  %677 = vst [vmem:[%s457 + $0x6d0] sm:$0xff] %v676
                  %v678 = vld [vmem:[%s456 + $0x1810] sm:$0xff]
                  %679 = vst [vmem:[%s457 + $0x6e0] sm:$0xff] %v678
                  %v680 = vld [vmem:[%s456 + $0x1848] sm:$0xff]
                  %681 = vst [vmem:[%s457 + $0x6f0] sm:$0xff] %v680
                  %v682 = vld [vmem:[%s456 + $0x1880] sm:$0xff]
                  %683 = vst [vmem:[%s457 + $0x700] sm:$0xff] %v682
                  %v684 = vld [vmem:[%s456 + $0x18b8] sm:$0xff]
                  %685 = vst [vmem:[%s457 + $0x710] sm:$0xff] %v684
                  %v686 = vld [vmem:[%s456 + $0x18f0] sm:$0xff]
                  %687 = vst [vmem:[%s457 + $0x720] sm:$0xff] %v686
                  %v688 = vld [vmem:[%s456 + $0x1928] sm:$0xff]
                  %689 = vst [vmem:[%s457 + $0x730] sm:$0xff] %v688
                  %v690 = vld [vmem:[%s456 + $0x1960] sm:$0xff]
                  %691 = vst [vmem:[%s457 + $0x740] sm:$0xff] %v690
                  %v692 = vld [vmem:[%s456 + $0x1998] sm:$0xff]
                  %693 = vst [vmem:[%s457 + $0x750] sm:$0xff] %v692
                  %v694 = vld [vmem:[%s456 + $0x19d0] sm:$0xff]
                  %695 = vst [vmem:[%s457 + $0x760] sm:$0xff] %v694
                  %v696 = vld [vmem:[%s456 + $0x1a08] sm:$0xff]
                  %697 = vst [vmem:[%s457 + $0x770] sm:$0xff] %v696
                  %v698 = vld [vmem:[%s456 + $0x1a40] sm:$0xff]
                  %699 = vst [vmem:[%s457 + $0x780] sm:$0xff] %v698
                  %v700 = vld [vmem:[%s456 + $0x1a78] sm:$0xff]
                  %701 = vst [vmem:[%s457 + $0x790] sm:$0xff] %v700
                  %v702 = vld [vmem:[%s456 + $0x1ab0] sm:$0xff]
                  %703 = vst [vmem:[%s457 + $0x7a0] sm:$0xff] %v702
                  %v704 = vld [vmem:[%s456 + $0x1ae8] sm:$0xff]
                  %705 = vst [vmem:[%s457 + $0x7b0] sm:$0xff] %v704
                  %v706 = vld [vmem:[%s456 + $0x1b20] sm:$0xff]
                  %707 = vst [vmem:[%s457 + $0x7c0] sm:$0xff] %v706
                  %v708 = vld [vmem:[%s456 + $0x1b58] sm:$0xff]
                  %709 = vst [vmem:[%s457 + $0x7d0] sm:$0xff] %v708
                  %v710 = vld [vmem:[%s456 + $0x1b90] sm:$0xff]
                  %711 = vst [vmem:[%s457 + $0x7e0] sm:$0xff] %v710
                  %v712 = vld [vmem:[%s456 + $0x1bc8] sm:$0xff]
                  %713 = vst [vmem:[%s457 + $0x7f0] sm:$0xff] %v712
                  %s714 = sadd.s32 1, %s455
                  %p715 = scmp.ge.s32.totalorder %s714, %s446
                  %s716 = scalar_select %p715, 0, %s714
                  %s717 = smul.u32 %s716, 8
                  %s718 = smul.u32 %s716, 8
                  %s719 = scalar_lea.vmem %s164, %s717
                  %s720 = scalar_lea.vmem %s154, %s718 [#allocation2]
                $region52: #{tpu_custom_call.1} parent=46 // loop_footer
                  %s452 = sadd.s32 %s450, 1
                $region53: #{tpu_custom_call.1} parent=46 // loop_footer_branch
                  %449 = sbr.rel target = $region49
                $region54: #{tpu_custom_call.1} parent=46 // loop_exit
                  _
              $region47: #{tpu_custom_call.1} parent=31 // pred_fallthru
                _
              %p721 = pneg %p442
              // Predicated region
              $region55: #{tpu_custom_call.1} parent=31 // pred_check
                _
              $region56: #{tpu_custom_call.1} parent=31 // pred_check_branch
                %723 = sbr.rel (%p442) target = $region58
              $region57: #{tpu_custom_call.1} parent=31 // pred_region
                %s724 = sand.u32 %s165, 7
                %s725 = ssub.s32 %s165, %s724
                %s726 = scalar_lea.vmem %s164, %s725
                %s727 = ssub.s32 %s165, %s724
                %s728 = scalar_lea.vmem %s154, %s727 [#allocation2]
                %s729 = sshrl.u32 %s165, 3
                // While loop
                $region59: #{tpu_custom_call.1} parent=57 // loop_pre_header
                  _
                $region60: #{tpu_custom_call.1} parent=57 // loop_header
                  %s733 = sphi 0, %s735
                  %p734 = scmp.ge.s32.totalorder %s733, %s729
                  %s738 = sphi 0, %s999
                  %s739 = sphi %s164, %s1002
                  %s740 = sphi %s154, %s1003
                $region61: #{tpu_custom_call.1} parent=57 // loop_header_branch
                  %737 = sbr.rel (%p734) target = $region65
                $region62: #{tpu_custom_call.1} parent=57 // loop_body
                  %v741 = vld [vmem:[%s739] sm:$0xff]
                  %742 = vst [vmem:[%s740] sm:$0xff] %v741
                  %v743 = vld [vmem:[%s739 + $0x38] sm:$0xff]
                  %744 = vst [vmem:[%s740 + $0x10] sm:$0xff] %v743
                  %v745 = vld [vmem:[%s739 + $0x70] sm:$0xff]
                  %746 = vst [vmem:[%s740 + $0x20] sm:$0xff] %v745
                  %v747 = vld [vmem:[%s739 + $0xa8] sm:$0xff]
                  %748 = vst [vmem:[%s740 + $0x30] sm:$0xff] %v747
                  %v749 = vld [vmem:[%s739 + $0xe0] sm:$0xff]
                  %750 = vst [vmem:[%s740 + $0x40] sm:$0xff] %v749
                  %v751 = vld [vmem:[%s739 + $0x118] sm:$0xff]
                  %752 = vst [vmem:[%s740 + $0x50] sm:$0xff] %v751
                  %v753 = vld [vmem:[%s739 + $0x150] sm:$0xff]
                  %754 = vst [vmem:[%s740 + $0x60] sm:$0xff] %v753
                  %v755 = vld [vmem:[%s739 + $0x188] sm:$0xff]
                  %756 = vst [vmem:[%s740 + $0x70] sm:$0xff] %v755
                  %v757 = vld [vmem:[%s739 + $0x1c0] sm:$0xff]
                  %758 = vst [vmem:[%s740 + $0x80] sm:$0xff] %v757
                  %v759 = vld [vmem:[%s739 + $0x1f8] sm:$0xff]
                  %760 = vst [vmem:[%s740 + $0x90] sm:$0xff] %v759
                  %v761 = vld [vmem:[%s739 + $0x230] sm:$0xff]
                  %762 = vst [vmem:[%s740 + $0xa0] sm:$0xff] %v761
                  %v763 = vld [vmem:[%s739 + $0x268] sm:$0xff]
                  %764 = vst [vmem:[%s740 + $0xb0] sm:$0xff] %v763
                  %v765 = vld [vmem:[%s739 + $0x2a0] sm:$0xff]
                  %766 = vst [vmem:[%s740 + $0xc0] sm:$0xff] %v765
                  %v767 = vld [vmem:[%s739 + $0x2d8] sm:$0xff]
                  %768 = vst [vmem:[%s740 + $0xd0] sm:$0xff] %v767
                  %v769 = vld [vmem:[%s739 + $0x310] sm:$0xff]
                  %770 = vst [vmem:[%s740 + $0xe0] sm:$0xff] %v769
                  %v771 = vld [vmem:[%s739 + $0x348] sm:$0xff]
                  %772 = vst [vmem:[%s740 + $0xf0] sm:$0xff] %v771
                  %v773 = vld [vmem:[%s739 + $0x380] sm:$0xff]
                  %774 = vst [vmem:[%s740 + $0x100] sm:$0xff] %v773
                  %v775 = vld [vmem:[%s739 + $0x3b8] sm:$0xff]
                  %776 = vst [vmem:[%s740 + $0x110] sm:$0xff] %v775
                  %v777 = vld [vmem:[%s739 + $0x3f0] sm:$0xff]
                  %778 = vst [vmem:[%s740 + $0x120] sm:$0xff] %v777
                  %v779 = vld [vmem:[%s739 + $0x428] sm:$0xff]
                  %780 = vst [vmem:[%s740 + $0x130] sm:$0xff] %v779
                  %v781 = vld [vmem:[%s739 + $0x460] sm:$0xff]
                  %782 = vst [vmem:[%s740 + $0x140] sm:$0xff] %v781
                  %v783 = vld [vmem:[%s739 + $0x498] sm:$0xff]
                  %784 = vst [vmem:[%s740 + $0x150] sm:$0xff] %v783
                  %v785 = vld [vmem:[%s739 + $0x4d0] sm:$0xff]
                  %786 = vst [vmem:[%s740 + $0x160] sm:$0xff] %v785
                  %v787 = vld [vmem:[%s739 + $0x508] sm:$0xff]
                  %788 = vst [vmem:[%s740 + $0x170] sm:$0xff] %v787
                  %v789 = vld [vmem:[%s739 + $0x540] sm:$0xff]
                  %790 = vst [vmem:[%s740 + $0x180] sm:$0xff] %v789
                  %v791 = vld [vmem:[%s739 + $0x578] sm:$0xff]
                  %792 = vst [vmem:[%s740 + $0x190] sm:$0xff] %v791
                  %v793 = vld [vmem:[%s739 + $0x5b0] sm:$0xff]
                  %794 = vst [vmem:[%s740 + $0x1a0] sm:$0xff] %v793
                  %v795 = vld [vmem:[%s739 + $0x5e8] sm:$0xff]
                  %796 = vst [vmem:[%s740 + $0x1b0] sm:$0xff] %v795
                  %v797 = vld [vmem:[%s739 + $0x620] sm:$0xff]
                  %798 = vst [vmem:[%s740 + $0x1c0] sm:$0xff] %v797
                  %v799 = vld [vmem:[%s739 + $0x658] sm:$0xff]
                  %800 = vst [vmem:[%s740 + $0x1d0] sm:$0xff] %v799
                  %v801 = vld [vmem:[%s739 + $0x690] sm:$0xff]
                  %802 = vst [vmem:[%s740 + $0x1e0] sm:$0xff] %v801
                  %v803 = vld [vmem:[%s739 + $0x6c8] sm:$0xff]
                  %804 = vst [vmem:[%s740 + $0x1f0] sm:$0xff] %v803
                  %v805 = vld [vmem:[%s739 + $0x700] sm:$0xff]
                  %806 = vst [vmem:[%s740 + $0x200] sm:$0xff] %v805
                  %v807 = vld [vmem:[%s739 + $0x738] sm:$0xff]
                  %808 = vst [vmem:[%s740 + $0x210] sm:$0xff] %v807
                  %v809 = vld [vmem:[%s739 + $0x770] sm:$0xff]
                  %810 = vst [vmem:[%s740 + $0x220] sm:$0xff] %v809
                  %v811 = vld [vmem:[%s739 + $0x7a8] sm:$0xff]
                  %812 = vst [vmem:[%s740 + $0x230] sm:$0xff] %v811
                  %v813 = vld [vmem:[%s739 + $0x7e0] sm:$0xff]
                  %814 = vst [vmem:[%s740 + $0x240] sm:$0xff] %v813
                  %v815 = vld [vmem:[%s739 + $0x818] sm:$0xff]
                  %816 = vst [vmem:[%s740 + $0x250] sm:$0xff] %v815
                  %v817 = vld [vmem:[%s739 + $0x850] sm:$0xff]
                  %818 = vst [vmem:[%s740 + $0x260] sm:$0xff] %v817
                  %v819 = vld [vmem:[%s739 + $0x888] sm:$0xff]
                  %820 = vst [vmem:[%s740 + $0x270] sm:$0xff] %v819
                  %v821 = vld [vmem:[%s739 + $0x8c0] sm:$0xff]
                  %822 = vst [vmem:[%s740 + $0x280] sm:$0xff] %v821
                  %v823 = vld [vmem:[%s739 + $0x8f8] sm:$0xff]
                  %824 = vst [vmem:[%s740 + $0x290] sm:$0xff] %v823
                  %v825 = vld [vmem:[%s739 + $0x930] sm:$0xff]
                  %826 = vst [vmem:[%s740 + $0x2a0] sm:$0xff] %v825
                  %v827 = vld [vmem:[%s739 + $0x968] sm:$0xff]
                  %828 = vst [vmem:[%s740 + $0x2b0] sm:$0xff] %v827
                  %v829 = vld [vmem:[%s739 + $0x9a0] sm:$0xff]
                  %830 = vst [vmem:[%s740 + $0x2c0] sm:$0xff] %v829
                  %v831 = vld [vmem:[%s739 + $0x9d8] sm:$0xff]
                  %832 = vst [vmem:[%s740 + $0x2d0] sm:$0xff] %v831
                  %v833 = vld [vmem:[%s739 + $0xa10] sm:$0xff]
                  %834 = vst [vmem:[%s740 + $0x2e0] sm:$0xff] %v833
                  %v835 = vld [vmem:[%s739 + $0xa48] sm:$0xff]
                  %836 = vst [vmem:[%s740 + $0x2f0] sm:$0xff] %v835
                  %v837 = vld [vmem:[%s739 + $0xa80] sm:$0xff]
                  %838 = vst [vmem:[%s740 + $0x300] sm:$0xff] %v837
                  %v839 = vld [vmem:[%s739 + $0xab8] sm:$0xff]
                  %840 = vst [vmem:[%s740 + $0x310] sm:$0xff] %v839
                  %v841 = vld [vmem:[%s739 + $0xaf0] sm:$0xff]
                  %842 = vst [vmem:[%s740 + $0x320] sm:$0xff] %v841
                  %v843 = vld [vmem:[%s739 + $0xb28] sm:$0xff]
                  %844 = vst [vmem:[%s740 + $0x330] sm:$0xff] %v843
                  %v845 = vld [vmem:[%s739 + $0xb60] sm:$0xff]
                  %846 = vst [vmem:[%s740 + $0x340] sm:$0xff] %v845
                  %v847 = vld [vmem:[%s739 + $0xb98] sm:$0xff]
                  %848 = vst [vmem:[%s740 + $0x350] sm:$0xff] %v847
                  %v849 = vld [vmem:[%s739 + $0xbd0] sm:$0xff]
                  %850 = vst [vmem:[%s740 + $0x360] sm:$0xff] %v849
                  %v851 = vld [vmem:[%s739 + $0xc08] sm:$0xff]
                  %852 = vst [vmem:[%s740 + $0x370] sm:$0xff] %v851
                  %v853 = vld [vmem:[%s739 + $0xc40] sm:$0xff]
                  %854 = vst [vmem:[%s740 + $0x380] sm:$0xff] %v853
                  %v855 = vld [vmem:[%s739 + $0xc78] sm:$0xff]
                  %856 = vst [vmem:[%s740 + $0x390] sm:$0xff] %v855
                  %v857 = vld [vmem:[%s739 + $0xcb0] sm:$0xff]
                  %858 = vst [vmem:[%s740 + $0x3a0] sm:$0xff] %v857
                  %v859 = vld [vmem:[%s739 + $0xce8] sm:$0xff]
                  %860 = vst [vmem:[%s740 + $0x3b0] sm:$0xff] %v859
                  %v861 = vld [vmem:[%s739 + $0xd20] sm:$0xff]
                  %862 = vst [vmem:[%s740 + $0x3c0] sm:$0xff] %v861
                  %v863 = vld [vmem:[%s739 + $0xd58] sm:$0xff]
                  %864 = vst [vmem:[%s740 + $0x3d0] sm:$0xff] %v863
                  %v865 = vld [vmem:[%s739 + $0xd90] sm:$0xff]
                  %866 = vst [vmem:[%s740 + $0x3e0] sm:$0xff] %v865
                  %v867 = vld [vmem:[%s739 + $0xdc8] sm:$0xff]
                  %868 = vst [vmem:[%s740 + $0x3f0] sm:$0xff] %v867
                  %v869 = vld [vmem:[%s739 + $0xe00] sm:$0xff]
                  %870 = vst [vmem:[%s740 + $0x400] sm:$0xff] %v869
                  %v871 = vld [vmem:[%s739 + $0xe38] sm:$0xff]
                  %872 = vst [vmem:[%s740 + $0x410] sm:$0xff] %v871
                  %v873 = vld [vmem:[%s739 + $0xe70] sm:$0xff]
                  %874 = vst [vmem:[%s740 + $0x420] sm:$0xff] %v873
                  %v875 = vld [vmem:[%s739 + $0xea8] sm:$0xff]
                  %876 = vst [vmem:[%s740 + $0x430] sm:$0xff] %v875
                  %v877 = vld [vmem:[%s739 + $0xee0] sm:$0xff]
                  %878 = vst [vmem:[%s740 + $0x440] sm:$0xff] %v877
                  %v879 = vld [vmem:[%s739 + $0xf18] sm:$0xff]
                  %880 = vst [vmem:[%s740 + $0x450] sm:$0xff] %v879
                  %v881 = vld [vmem:[%s739 + $0xf50] sm:$0xff]
                  %882 = vst [vmem:[%s740 + $0x460] sm:$0xff] %v881
                  %v883 = vld [vmem:[%s739 + $0xf88] sm:$0xff]
                  %884 = vst [vmem:[%s740 + $0x470] sm:$0xff] %v883
                  %v885 = vld [vmem:[%s739 + $0xfc0] sm:$0xff]
                  %886 = vst [vmem:[%s740 + $0x480] sm:$0xff] %v885
                  %v887 = vld [vmem:[%s739 + $0xff8] sm:$0xff]
                  %888 = vst [vmem:[%s740 + $0x490] sm:$0xff] %v887
                  %v889 = vld [vmem:[%s739 + $0x1030] sm:$0xff]
                  %890 = vst [vmem:[%s740 + $0x4a0] sm:$0xff] %v889
                  %v891 = vld [vmem:[%s739 + $0x1068] sm:$0xff]
                  %892 = vst [vmem:[%s740 + $0x4b0] sm:$0xff] %v891
                  %v893 = vld [vmem:[%s739 + $0x10a0] sm:$0xff]
                  %894 = vst [vmem:[%s740 + $0x4c0] sm:$0xff] %v893
                  %v895 = vld [vmem:[%s739 + $0x10d8] sm:$0xff]
                  %896 = vst [vmem:[%s740 + $0x4d0] sm:$0xff] %v895
                  %v897 = vld [vmem:[%s739 + $0x1110] sm:$0xff]
                  %898 = vst [vmem:[%s740 + $0x4e0] sm:$0xff] %v897
                  %v899 = vld [vmem:[%s739 + $0x1148] sm:$0xff]
                  %900 = vst [vmem:[%s740 + $0x4f0] sm:$0xff] %v899
                  %v901 = vld [vmem:[%s739 + $0x1180] sm:$0xff]
                  %902 = vst [vmem:[%s740 + $0x500] sm:$0xff] %v901
                  %v903 = vld [vmem:[%s739 + $0x11b8] sm:$0xff]
                  %904 = vst [vmem:[%s740 + $0x510] sm:$0xff] %v903
                  %v905 = vld [vmem:[%s739 + $0x11f0] sm:$0xff]
                  %906 = vst [vmem:[%s740 + $0x520] sm:$0xff] %v905
                  %v907 = vld [vmem:[%s739 + $0x1228] sm:$0xff]
                  %908 = vst [vmem:[%s740 + $0x530] sm:$0xff] %v907
                  %v909 = vld [vmem:[%s739 + $0x1260] sm:$0xff]
                  %910 = vst [vmem:[%s740 + $0x540] sm:$0xff] %v909
                  %v911 = vld [vmem:[%s739 + $0x1298] sm:$0xff]
                  %912 = vst [vmem:[%s740 + $0x550] sm:$0xff] %v911
                  %v913 = vld [vmem:[%s739 + $0x12d0] sm:$0xff]
                  %914 = vst [vmem:[%s740 + $0x560] sm:$0xff] %v913
                  %v915 = vld [vmem:[%s739 + $0x1308] sm:$0xff]
                  %916 = vst [vmem:[%s740 + $0x570] sm:$0xff] %v915
                  %v917 = vld [vmem:[%s739 + $0x1340] sm:$0xff]
                  %918 = vst [vmem:[%s740 + $0x580] sm:$0xff] %v917
                  %v919 = vld [vmem:[%s739 + $0x1378] sm:$0xff]
                  %920 = vst [vmem:[%s740 + $0x590] sm:$0xff] %v919
                  %v921 = vld [vmem:[%s739 + $0x13b0] sm:$0xff]
                  %922 = vst [vmem:[%s740 + $0x5a0] sm:$0xff] %v921
                  %v923 = vld [vmem:[%s739 + $0x13e8] sm:$0xff]
                  %924 = vst [vmem:[%s740 + $0x5b0] sm:$0xff] %v923
                  %v925 = vld [vmem:[%s739 + $0x1420] sm:$0xff]
                  %926 = vst [vmem:[%s740 + $0x5c0] sm:$0xff] %v925
                  %v927 = vld [vmem:[%s739 + $0x1458] sm:$0xff]
                  %928 = vst [vmem:[%s740 + $0x5d0] sm:$0xff] %v927
                  %v929 = vld [vmem:[%s739 + $0x1490] sm:$0xff]
                  %930 = vst [vmem:[%s740 + $0x5e0] sm:$0xff] %v929
                  %v931 = vld [vmem:[%s739 + $0x14c8] sm:$0xff]
                  %932 = vst [vmem:[%s740 + $0x5f0] sm:$0xff] %v931
                  %v933 = vld [vmem:[%s739 + $0x1500] sm:$0xff]
                  %934 = vst [vmem:[%s740 + $0x600] sm:$0xff] %v933
                  %v935 = vld [vmem:[%s739 + $0x1538] sm:$0xff]
                  %936 = vst [vmem:[%s740 + $0x610] sm:$0xff] %v935
                  %v937 = vld [vmem:[%s739 + $0x1570] sm:$0xff]
                  %938 = vst [vmem:[%s740 + $0x620] sm:$0xff] %v937
                  %v939 = vld [vmem:[%s739 + $0x15a8] sm:$0xff]
                  %940 = vst [vmem:[%s740 + $0x630] sm:$0xff] %v939
                  %v941 = vld [vmem:[%s739 + $0x15e0] sm:$0xff]
                  %942 = vst [vmem:[%s740 + $0x640] sm:$0xff] %v941
                  %v943 = vld [vmem:[%s739 + $0x1618] sm:$0xff]
                  %944 = vst [vmem:[%s740 + $0x650] sm:$0xff] %v943
                  %v945 = vld [vmem:[%s739 + $0x1650] sm:$0xff]
                  %946 = vst [vmem:[%s740 + $0x660] sm:$0xff] %v945
                  %v947 = vld [vmem:[%s739 + $0x1688] sm:$0xff]
                  %948 = vst [vmem:[%s740 + $0x670] sm:$0xff] %v947
                  %v949 = vld [vmem:[%s739 + $0x16c0] sm:$0xff]
                  %950 = vst [vmem:[%s740 + $0x680] sm:$0xff] %v949
                  %v951 = vld [vmem:[%s739 + $0x16f8] sm:$0xff]
                  %952 = vst [vmem:[%s740 + $0x690] sm:$0xff] %v951
                  %v953 = vld [vmem:[%s739 + $0x1730] sm:$0xff]
                  %954 = vst [vmem:[%s740 + $0x6a0] sm:$0xff] %v953
                  %v955 = vld [vmem:[%s739 + $0x1768] sm:$0xff]
                  %956 = vst [vmem:[%s740 + $0x6b0] sm:$0xff] %v955
                  %v957 = vld [vmem:[%s739 + $0x17a0] sm:$0xff]
                  %958 = vst [vmem:[%s740 + $0x6c0] sm:$0xff] %v957
                  %v959 = vld [vmem:[%s739 + $0x17d8] sm:$0xff]
                  %960 = vst [vmem:[%s740 + $0x6d0] sm:$0xff] %v959
                  %v961 = vld [vmem:[%s739 + $0x1810] sm:$0xff]
                  %962 = vst [vmem:[%s740 + $0x6e0] sm:$0xff] %v961
                  %v963 = vld [vmem:[%s739 + $0x1848] sm:$0xff]
                  %964 = vst [vmem:[%s740 + $0x6f0] sm:$0xff] %v963
                  %v965 = vld [vmem:[%s739 + $0x1880] sm:$0xff]
                  %966 = vst [vmem:[%s740 + $0x700] sm:$0xff] %v965
                  %v967 = vld [vmem:[%s739 + $0x18b8] sm:$0xff]
                  %968 = vst [vmem:[%s740 + $0x710] sm:$0xff] %v967
                  %v969 = vld [vmem:[%s739 + $0x18f0] sm:$0xff]
                  %970 = vst [vmem:[%s740 + $0x720] sm:$0xff] %v969
                  %v971 = vld [vmem:[%s739 + $0x1928] sm:$0xff]
                  %972 = vst [vmem:[%s740 + $0x730] sm:$0xff] %v971
                  %v973 = vld [vmem:[%s739 + $0x1960] sm:$0xff]
                  %974 = vst [vmem:[%s740 + $0x740] sm:$0xff] %v973
                  %v975 = vld [vmem:[%s739 + $0x1998] sm:$0xff]
                  %976 = vst [vmem:[%s740 + $0x750] sm:$0xff] %v975
                  %v977 = vld [vmem:[%s739 + $0x19d0] sm:$0xff]
                  %978 = vst [vmem:[%s740 + $0x760] sm:$0xff] %v977
                  %v979 = vld [vmem:[%s739 + $0x1a08] sm:$0xff]
                  %980 = vst [vmem:[%s740 + $0x770] sm:$0xff] %v979
                  %v981 = vld [vmem:[%s739 + $0x1a40] sm:$0xff]
                  %982 = vst [vmem:[%s740 + $0x780] sm:$0xff] %v981
                  %v983 = vld [vmem:[%s739 + $0x1a78] sm:$0xff]
                  %984 = vst [vmem:[%s740 + $0x790] sm:$0xff] %v983
                  %v985 = vld [vmem:[%s739 + $0x1ab0] sm:$0xff]
                  %986 = vst [vmem:[%s740 + $0x7a0] sm:$0xff] %v985
                  %v987 = vld [vmem:[%s739 + $0x1ae8] sm:$0xff]
                  %988 = vst [vmem:[%s740 + $0x7b0] sm:$0xff] %v987
                  %v989 = vld [vmem:[%s739 + $0x1b20] sm:$0xff]
                  %990 = vst [vmem:[%s740 + $0x7c0] sm:$0xff] %v989
                  %v991 = vld [vmem:[%s739 + $0x1b58] sm:$0xff]
                  %992 = vst [vmem:[%s740 + $0x7d0] sm:$0xff] %v991
                  %v993 = vld [vmem:[%s739 + $0x1b90] sm:$0xff]
                  %994 = vst [vmem:[%s740 + $0x7e0] sm:$0xff] %v993
                  %v995 = vld [vmem:[%s739 + $0x1bc8] sm:$0xff]
                  %996 = vst [vmem:[%s740 + $0x7f0] sm:$0xff] %v995
                  %s997 = sadd.s32 1, %s738
                  %p998 = scmp.ge.s32.totalorder %s997, %s729
                  %s999 = scalar_select %p998, 0, %s997
                  %s1000 = smul.u32 %s999, 8
                  %s1001 = smul.u32 %s999, 8
                  %s1002 = scalar_lea.vmem %s164, %s1000
                  %s1003 = scalar_lea.vmem %s154, %s1001 [#allocation2]
                $region63: #{tpu_custom_call.1} parent=57 // loop_footer
                  %s735 = sadd.s32 %s733, 1
                $region64: #{tpu_custom_call.1} parent=57 // loop_footer_branch
                  %732 = sbr.rel target = $region60
                $region65: #{tpu_custom_call.1} parent=57 // loop_exit
                  _
                %s1004 = sshllo.u32 0, %s724
                loop: start=0, step=1, limit=1
                $region66: #{tpu_custom_call.1} parent=57 // loop_pre_header
                  _
                $region67: #{tpu_custom_call.1} parent=57 // loop_header
                  %s1006 = sphi 0, %s1010
                  %p1007 = scmp.ge.s32.totalorder %s1006, 1
                  %s1011 = sphi %s726, %s726
                  %s1012 = sphi %s728, %s728
                $region68: #{tpu_custom_call.1} parent=57 // loop_header_branch
                  %1009 = sbr.rel (%p1007) target = $region72
                $region69: #{tpu_custom_call.1} parent=57 // loop_body
                  %v1013 = vld [vmem:[%s1011] sm:%s1004]
                  %1014 = vst [vmem:[%s1012] sm:%s1004] %v1013
                  %v1015 = vld [vmem:[%s1011 + $0x38] sm:%s1004]
                  %1016 = vst [vmem:[%s1012 + $0x10] sm:%s1004] %v1015
                  %v1017 = vld [vmem:[%s1011 + $0x70] sm:%s1004]
                  %1018 = vst [vmem:[%s1012 + $0x20] sm:%s1004] %v1017
                  %v1019 = vld [vmem:[%s1011 + $0xa8] sm:%s1004]
                  %1020 = vst [vmem:[%s1012 + $0x30] sm:%s1004] %v1019
                  %v1021 = vld [vmem:[%s1011 + $0xe0] sm:%s1004]
                  %1022 = vst [vmem:[%s1012 + $0x40] sm:%s1004] %v1021
                  %v1023 = vld [vmem:[%s1011 + $0x118] sm:%s1004]
                  %1024 = vst [vmem:[%s1012 + $0x50] sm:%s1004] %v1023
                  %v1025 = vld [vmem:[%s1011 + $0x150] sm:%s1004]
                  %1026 = vst [vmem:[%s1012 + $0x60] sm:%s1004] %v1025
                  %v1027 = vld [vmem:[%s1011 + $0x188] sm:%s1004]
                  %1028 = vst [vmem:[%s1012 + $0x70] sm:%s1004] %v1027
                  %v1029 = vld [vmem:[%s1011 + $0x1c0] sm:%s1004]
                  %1030 = vst [vmem:[%s1012 + $0x80] sm:%s1004] %v1029
                  %v1031 = vld [vmem:[%s1011 + $0x1f8] sm:%s1004]
                  %1032 = vst [vmem:[%s1012 + $0x90] sm:%s1004] %v1031
                  %v1033 = vld [vmem:[%s1011 + $0x230] sm:%s1004]
                  %1034 = vst [vmem:[%s1012 + $0xa0] sm:%s1004] %v1033
                  %v1035 = vld [vmem:[%s1011 + $0x268] sm:%s1004]
                  %1036 = vst [vmem:[%s1012 + $0xb0] sm:%s1004] %v1035
                  %v1037 = vld [vmem:[%s1011 + $0x2a0] sm:%s1004]
                  %1038 = vst [vmem:[%s1012 + $0xc0] sm:%s1004] %v1037
                  %v1039 = vld [vmem:[%s1011 + $0x2d8] sm:%s1004]
                  %1040 = vst [vmem:[%s1012 + $0xd0] sm:%s1004] %v1039
                  %v1041 = vld [vmem:[%s1011 + $0x310] sm:%s1004]
                  %1042 = vst [vmem:[%s1012 + $0xe0] sm:%s1004] %v1041
                  %v1043 = vld [vmem:[%s1011 + $0x348] sm:%s1004]
                  %1044 = vst [vmem:[%s1012 + $0xf0] sm:%s1004] %v1043
                  %v1045 = vld [vmem:[%s1011 + $0x380] sm:%s1004]
                  %1046 = vst [vmem:[%s1012 + $0x100] sm:%s1004] %v1045
                  %v1047 = vld [vmem:[%s1011 + $0x3b8] sm:%s1004]
                  %1048 = vst [vmem:[%s1012 + $0x110] sm:%s1004] %v1047
                  %v1049 = vld [vmem:[%s1011 + $0x3f0] sm:%s1004]
                  %1050 = vst [vmem:[%s1012 + $0x120] sm:%s1004] %v1049
                  %v1051 = vld [vmem:[%s1011 + $0x428] sm:%s1004]
                  %1052 = vst [vmem:[%s1012 + $0x130] sm:%s1004] %v1051
                  %v1053 = vld [vmem:[%s1011 + $0x460] sm:%s1004]
                  %1054 = vst [vmem:[%s1012 + $0x140] sm:%s1004] %v1053
                  %v1055 = vld [vmem:[%s1011 + $0x498] sm:%s1004]
                  %1056 = vst [vmem:[%s1012 + $0x150] sm:%s1004] %v1055
                  %v1057 = vld [vmem:[%s1011 + $0x4d0] sm:%s1004]
                  %1058 = vst [vmem:[%s1012 + $0x160] sm:%s1004] %v1057
                  %v1059 = vld [vmem:[%s1011 + $0x508] sm:%s1004]
                  %1060 = vst [vmem:[%s1012 + $0x170] sm:%s1004] %v1059
                  %v1061 = vld [vmem:[%s1011 + $0x540] sm:%s1004]
                  %1062 = vst [vmem:[%s1012 + $0x180] sm:%s1004] %v1061
                  %v1063 = vld [vmem:[%s1011 + $0x578] sm:%s1004]
                  %1064 = vst [vmem:[%s1012 + $0x190] sm:%s1004] %v1063
                  %v1065 = vld [vmem:[%s1011 + $0x5b0] sm:%s1004]
                  %1066 = vst [vmem:[%s1012 + $0x1a0] sm:%s1004] %v1065
                  %v1067 = vld [vmem:[%s1011 + $0x5e8] sm:%s1004]
                  %1068 = vst [vmem:[%s1012 + $0x1b0] sm:%s1004] %v1067
                  %v1069 = vld [vmem:[%s1011 + $0x620] sm:%s1004]
                  %1070 = vst [vmem:[%s1012 + $0x1c0] sm:%s1004] %v1069
                  %v1071 = vld [vmem:[%s1011 + $0x658] sm:%s1004]
                  %1072 = vst [vmem:[%s1012 + $0x1d0] sm:%s1004] %v1071
                  %v1073 = vld [vmem:[%s1011 + $0x690] sm:%s1004]
                  %1074 = vst [vmem:[%s1012 + $0x1e0] sm:%s1004] %v1073
                  %v1075 = vld [vmem:[%s1011 + $0x6c8] sm:%s1004]
                  %1076 = vst [vmem:[%s1012 + $0x1f0] sm:%s1004] %v1075
                  %v1077 = vld [vmem:[%s1011 + $0x700] sm:%s1004]
                  %1078 = vst [vmem:[%s1012 + $0x200] sm:%s1004] %v1077
                  %v1079 = vld [vmem:[%s1011 + $0x738] sm:%s1004]
                  %1080 = vst [vmem:[%s1012 + $0x210] sm:%s1004] %v1079
                  %v1081 = vld [vmem:[%s1011 + $0x770] sm:%s1004]
                  %1082 = vst [vmem:[%s1012 + $0x220] sm:%s1004] %v1081
                  %v1083 = vld [vmem:[%s1011 + $0x7a8] sm:%s1004]
                  %1084 = vst [vmem:[%s1012 + $0x230] sm:%s1004] %v1083
                  %v1085 = vld [vmem:[%s1011 + $0x7e0] sm:%s1004]
                  %1086 = vst [vmem:[%s1012 + $0x240] sm:%s1004] %v1085
                  %v1087 = vld [vmem:[%s1011 + $0x818] sm:%s1004]
                  %1088 = vst [vmem:[%s1012 + $0x250] sm:%s1004] %v1087
                  %v1089 = vld [vmem:[%s1011 + $0x850] sm:%s1004]
                  %1090 = vst [vmem:[%s1012 + $0x260] sm:%s1004] %v1089
                  %v1091 = vld [vmem:[%s1011 + $0x888] sm:%s1004]
                  %1092 = vst [vmem:[%s1012 + $0x270] sm:%s1004] %v1091
                  %v1093 = vld [vmem:[%s1011 + $0x8c0] sm:%s1004]
                  %1094 = vst [vmem:[%s1012 + $0x280] sm:%s1004] %v1093
                  %v1095 = vld [vmem:[%s1011 + $0x8f8] sm:%s1004]
                  %1096 = vst [vmem:[%s1012 + $0x290] sm:%s1004] %v1095
                  %v1097 = vld [vmem:[%s1011 + $0x930] sm:%s1004]
                  %1098 = vst [vmem:[%s1012 + $0x2a0] sm:%s1004] %v1097
                  %v1099 = vld [vmem:[%s1011 + $0x968] sm:%s1004]
                  %1100 = vst [vmem:[%s1012 + $0x2b0] sm:%s1004] %v1099
                  %v1101 = vld [vmem:[%s1011 + $0x9a0] sm:%s1004]
                  %1102 = vst [vmem:[%s1012 + $0x2c0] sm:%s1004] %v1101
                  %v1103 = vld [vmem:[%s1011 + $0x9d8] sm:%s1004]
                  %1104 = vst [vmem:[%s1012 + $0x2d0] sm:%s1004] %v1103
                  %v1105 = vld [vmem:[%s1011 + $0xa10] sm:%s1004]
                  %1106 = vst [vmem:[%s1012 + $0x2e0] sm:%s1004] %v1105
                  %v1107 = vld [vmem:[%s1011 + $0xa48] sm:%s1004]
                  %1108 = vst [vmem:[%s1012 + $0x2f0] sm:%s1004] %v1107
                  %v1109 = vld [vmem:[%s1011 + $0xa80] sm:%s1004]
                  %1110 = vst [vmem:[%s1012 + $0x300] sm:%s1004] %v1109
                  %v1111 = vld [vmem:[%s1011 + $0xab8] sm:%s1004]
                  %1112 = vst [vmem:[%s1012 + $0x310] sm:%s1004] %v1111
                  %v1113 = vld [vmem:[%s1011 + $0xaf0] sm:%s1004]
                  %1114 = vst [vmem:[%s1012 + $0x320] sm:%s1004] %v1113
                  %v1115 = vld [vmem:[%s1011 + $0xb28] sm:%s1004]
                  %1116 = vst [vmem:[%s1012 + $0x330] sm:%s1004] %v1115
                  %v1117 = vld [vmem:[%s1011 + $0xb60] sm:%s1004]
                  %1118 = vst [vmem:[%s1012 + $0x340] sm:%s1004] %v1117
                  %v1119 = vld [vmem:[%s1011 + $0xb98] sm:%s1004]
                  %1120 = vst [vmem:[%s1012 + $0x350] sm:%s1004] %v1119
                  %v1121 = vld [vmem:[%s1011 + $0xbd0] sm:%s1004]
                  %1122 = vst [vmem:[%s1012 + $0x360] sm:%s1004] %v1121
                  %v1123 = vld [vmem:[%s1011 + $0xc08] sm:%s1004]
                  %1124 = vst [vmem:[%s1012 + $0x370] sm:%s1004] %v1123
                  %v1125 = vld [vmem:[%s1011 + $0xc40] sm:%s1004]
                  %1126 = vst [vmem:[%s1012 + $0x380] sm:%s1004] %v1125
                  %v1127 = vld [vmem:[%s1011 + $0xc78] sm:%s1004]
                  %1128 = vst [vmem:[%s1012 + $0x390] sm:%s1004] %v1127
                  %v1129 = vld [vmem:[%s1011 + $0xcb0] sm:%s1004]
                  %1130 = vst [vmem:[%s1012 + $0x3a0] sm:%s1004] %v1129
                  %v1131 = vld [vmem:[%s1011 + $0xce8] sm:%s1004]
                  %1132 = vst [vmem:[%s1012 + $0x3b0] sm:%s1004] %v1131
                  %v1133 = vld [vmem:[%s1011 + $0xd20] sm:%s1004]
                  %1134 = vst [vmem:[%s1012 + $0x3c0] sm:%s1004] %v1133
                  %v1135 = vld [vmem:[%s1011 + $0xd58] sm:%s1004]
                  %1136 = vst [vmem:[%s1012 + $0x3d0] sm:%s1004] %v1135
                  %v1137 = vld [vmem:[%s1011 + $0xd90] sm:%s1004]
                  %1138 = vst [vmem:[%s1012 + $0x3e0] sm:%s1004] %v1137
                  %v1139 = vld [vmem:[%s1011 + $0xdc8] sm:%s1004]
                  %1140 = vst [vmem:[%s1012 + $0x3f0] sm:%s1004] %v1139
                  %v1141 = vld [vmem:[%s1011 + $0xe00] sm:%s1004]
                  %1142 = vst [vmem:[%s1012 + $0x400] sm:%s1004] %v1141
                  %v1143 = vld [vmem:[%s1011 + $0xe38] sm:%s1004]
                  %1144 = vst [vmem:[%s1012 + $0x410] sm:%s1004] %v1143
                  %v1145 = vld [vmem:[%s1011 + $0xe70] sm:%s1004]
                  %1146 = vst [vmem:[%s1012 + $0x420] sm:%s1004] %v1145
                  %v1147 = vld [vmem:[%s1011 + $0xea8] sm:%s1004]
                  %1148 = vst [vmem:[%s1012 + $0x430] sm:%s1004] %v1147
                  %v1149 = vld [vmem:[%s1011 + $0xee0] sm:%s1004]
                  %1150 = vst [vmem:[%s1012 + $0x440] sm:%s1004] %v1149
                  %v1151 = vld [vmem:[%s1011 + $0xf18] sm:%s1004]
                  %1152 = vst [vmem:[%s1012 + $0x450] sm:%s1004] %v1151
                  %v1153 = vld [vmem:[%s1011 + $0xf50] sm:%s1004]
                  %1154 = vst [vmem:[%s1012 + $0x460] sm:%s1004] %v1153
                  %v1155 = vld [vmem:[%s1011 + $0xf88] sm:%s1004]
                  %1156 = vst [vmem:[%s1012 + $0x470] sm:%s1004] %v1155
                  %v1157 = vld [vmem:[%s1011 + $0xfc0] sm:%s1004]
                  %1158 = vst [vmem:[%s1012 + $0x480] sm:%s1004] %v1157
                  %v1159 = vld [vmem:[%s1011 + $0xff8] sm:%s1004]
                  %1160 = vst [vmem:[%s1012 + $0x490] sm:%s1004] %v1159
                  %v1161 = vld [vmem:[%s1011 + $0x1030] sm:%s1004]
                  %1162 = vst [vmem:[%s1012 + $0x4a0] sm:%s1004] %v1161
                  %v1163 = vld [vmem:[%s1011 + $0x1068] sm:%s1004]
                  %1164 = vst [vmem:[%s1012 + $0x4b0] sm:%s1004] %v1163
                  %v1165 = vld [vmem:[%s1011 + $0x10a0] sm:%s1004]
                  %1166 = vst [vmem:[%s1012 + $0x4c0] sm:%s1004] %v1165
                  %v1167 = vld [vmem:[%s1011 + $0x10d8] sm:%s1004]
                  %1168 = vst [vmem:[%s1012 + $0x4d0] sm:%s1004] %v1167
                  %v1169 = vld [vmem:[%s1011 + $0x1110] sm:%s1004]
                  %1170 = vst [vmem:[%s1012 + $0x4e0] sm:%s1004] %v1169
                  %v1171 = vld [vmem:[%s1011 + $0x1148] sm:%s1004]
                  %1172 = vst [vmem:[%s1012 + $0x4f0] sm:%s1004] %v1171
                  %v1173 = vld [vmem:[%s1011 + $0x1180] sm:%s1004]
                  %1174 = vst [vmem:[%s1012 + $0x500] sm:%s1004] %v1173
                  %v1175 = vld [vmem:[%s1011 + $0x11b8] sm:%s1004]
                  %1176 = vst [vmem:[%s1012 + $0x510] sm:%s1004] %v1175
                  %v1177 = vld [vmem:[%s1011 + $0x11f0] sm:%s1004]
                  %1178 = vst [vmem:[%s1012 + $0x520] sm:%s1004] %v1177
                  %v1179 = vld [vmem:[%s1011 + $0x1228] sm:%s1004]
                  %1180 = vst [vmem:[%s1012 + $0x530] sm:%s1004] %v1179
                  %v1181 = vld [vmem:[%s1011 + $0x1260] sm:%s1004]
                  %1182 = vst [vmem:[%s1012 + $0x540] sm:%s1004] %v1181
                  %v1183 = vld [vmem:[%s1011 + $0x1298] sm:%s1004]
                  %1184 = vst [vmem:[%s1012 + $0x550] sm:%s1004] %v1183
                  %v1185 = vld [vmem:[%s1011 + $0x12d0] sm:%s1004]
                  %1186 = vst [vmem:[%s1012 + $0x560] sm:%s1004] %v1185
                  %v1187 = vld [vmem:[%s1011 + $0x1308] sm:%s1004]
                  %1188 = vst [vmem:[%s1012 + $0x570] sm:%s1004] %v1187
                  %v1189 = vld [vmem:[%s1011 + $0x1340] sm:%s1004]
                  %1190 = vst [vmem:[%s1012 + $0x580] sm:%s1004] %v1189
                  %v1191 = vld [vmem:[%s1011 + $0x1378] sm:%s1004]
                  %1192 = vst [vmem:[%s1012 + $0x590] sm:%s1004] %v1191
                  %v1193 = vld [vmem:[%s1011 + $0x13b0] sm:%s1004]
                  %1194 = vst [vmem:[%s1012 + $0x5a0] sm:%s1004] %v1193
                  %v1195 = vld [vmem:[%s1011 + $0x13e8] sm:%s1004]
                  %1196 = vst [vmem:[%s1012 + $0x5b0] sm:%s1004] %v1195
                  %v1197 = vld [vmem:[%s1011 + $0x1420] sm:%s1004]
                  %1198 = vst [vmem:[%s1012 + $0x5c0] sm:%s1004] %v1197
                  %v1199 = vld [vmem:[%s1011 + $0x1458] sm:%s1004]
                  %1200 = vst [vmem:[%s1012 + $0x5d0] sm:%s1004] %v1199
                  %v1201 = vld [vmem:[%s1011 + $0x1490] sm:%s1004]
                  %1202 = vst [vmem:[%s1012 + $0x5e0] sm:%s1004] %v1201
                  %v1203 = vld [vmem:[%s1011 + $0x14c8] sm:%s1004]
                  %1204 = vst [vmem:[%s1012 + $0x5f0] sm:%s1004] %v1203
                  %v1205 = vld [vmem:[%s1011 + $0x1500] sm:%s1004]
                  %1206 = vst [vmem:[%s1012 + $0x600] sm:%s1004] %v1205
                  %v1207 = vld [vmem:[%s1011 + $0x1538] sm:%s1004]
                  %1208 = vst [vmem:[%s1012 + $0x610] sm:%s1004] %v1207
                  %v1209 = vld [vmem:[%s1011 + $0x1570] sm:%s1004]
                  %1210 = vst [vmem:[%s1012 + $0x620] sm:%s1004] %v1209
                  %v1211 = vld [vmem:[%s1011 + $0x15a8] sm:%s1004]
                  %1212 = vst [vmem:[%s1012 + $0x630] sm:%s1004] %v1211
                  %v1213 = vld [vmem:[%s1011 + $0x15e0] sm:%s1004]
                  %1214 = vst [vmem:[%s1012 + $0x640] sm:%s1004] %v1213
                  %v1215 = vld [vmem:[%s1011 + $0x1618] sm:%s1004]
                  %1216 = vst [vmem:[%s1012 + $0x650] sm:%s1004] %v1215
                  %v1217 = vld [vmem:[%s1011 + $0x1650] sm:%s1004]
                  %1218 = vst [vmem:[%s1012 + $0x660] sm:%s1004] %v1217
                  %v1219 = vld [vmem:[%s1011 + $0x1688] sm:%s1004]
                  %1220 = vst [vmem:[%s1012 + $0x670] sm:%s1004] %v1219
                  %v1221 = vld [vmem:[%s1011 + $0x16c0] sm:%s1004]
                  %1222 = vst [vmem:[%s1012 + $0x680] sm:%s1004] %v1221
                  %v1223 = vld [vmem:[%s1011 + $0x16f8] sm:%s1004]
                  %1224 = vst [vmem:[%s1012 + $0x690] sm:%s1004] %v1223
                  %v1225 = vld [vmem:[%s1011 + $0x1730] sm:%s1004]
                  %1226 = vst [vmem:[%s1012 + $0x6a0] sm:%s1004] %v1225
                  %v1227 = vld [vmem:[%s1011 + $0x1768] sm:%s1004]
                  %1228 = vst [vmem:[%s1012 + $0x6b0] sm:%s1004] %v1227
                  %v1229 = vld [vmem:[%s1011 + $0x17a0] sm:%s1004]
                  %1230 = vst [vmem:[%s1012 + $0x6c0] sm:%s1004] %v1229
                  %v1231 = vld [vmem:[%s1011 + $0x17d8] sm:%s1004]
                  %1232 = vst [vmem:[%s1012 + $0x6d0] sm:%s1004] %v1231
                  %v1233 = vld [vmem:[%s1011 + $0x1810] sm:%s1004]
                  %1234 = vst [vmem:[%s1012 + $0x6e0] sm:%s1004] %v1233
                  %v1235 = vld [vmem:[%s1011 + $0x1848] sm:%s1004]
                  %1236 = vst [vmem:[%s1012 + $0x6f0] sm:%s1004] %v1235
                  %v1237 = vld [vmem:[%s1011 + $0x1880] sm:%s1004]
                  %1238 = vst [vmem:[%s1012 + $0x700] sm:%s1004] %v1237
                  %v1239 = vld [vmem:[%s1011 + $0x18b8] sm:%s1004]
                  %1240 = vst [vmem:[%s1012 + $0x710] sm:%s1004] %v1239
                  %v1241 = vld [vmem:[%s1011 + $0x18f0] sm:%s1004]
                  %1242 = vst [vmem:[%s1012 + $0x720] sm:%s1004] %v1241
                  %v1243 = vld [vmem:[%s1011 + $0x1928] sm:%s1004]
                  %1244 = vst [vmem:[%s1012 + $0x730] sm:%s1004] %v1243
                  %v1245 = vld [vmem:[%s1011 + $0x1960] sm:%s1004]
                  %1246 = vst [vmem:[%s1012 + $0x740] sm:%s1004] %v1245
                  %v1247 = vld [vmem:[%s1011 + $0x1998] sm:%s1004]
                  %1248 = vst [vmem:[%s1012 + $0x750] sm:%s1004] %v1247
                  %v1249 = vld [vmem:[%s1011 + $0x19d0] sm:%s1004]
                  %1250 = vst [vmem:[%s1012 + $0x760] sm:%s1004] %v1249
                  %v1251 = vld [vmem:[%s1011 + $0x1a08] sm:%s1004]
                  %1252 = vst [vmem:[%s1012 + $0x770] sm:%s1004] %v1251
                  %v1253 = vld [vmem:[%s1011 + $0x1a40] sm:%s1004]
                  %1254 = vst [vmem:[%s1012 + $0x780] sm:%s1004] %v1253
                  %v1255 = vld [vmem:[%s1011 + $0x1a78] sm:%s1004]
                  %1256 = vst [vmem:[%s1012 + $0x790] sm:%s1004] %v1255
                  %v1257 = vld [vmem:[%s1011 + $0x1ab0] sm:%s1004]
                  %1258 = vst [vmem:[%s1012 + $0x7a0] sm:%s1004] %v1257
                  %v1259 = vld [vmem:[%s1011 + $0x1ae8] sm:%s1004]
                  %1260 = vst [vmem:[%s1012 + $0x7b0] sm:%s1004] %v1259
                  %v1261 = vld [vmem:[%s1011 + $0x1b20] sm:%s1004]
                  %1262 = vst [vmem:[%s1012 + $0x7c0] sm:%s1004] %v1261
                  %v1263 = vld [vmem:[%s1011 + $0x1b58] sm:%s1004]
                  %1264 = vst [vmem:[%s1012 + $0x7d0] sm:%s1004] %v1263
                  %v1265 = vld [vmem:[%s1011 + $0x1b90] sm:%s1004]
                  %1266 = vst [vmem:[%s1012 + $0x7e0] sm:%s1004] %v1265
                  %v1267 = vld [vmem:[%s1011 + $0x1bc8] sm:%s1004]
                  %1268 = vst [vmem:[%s1012 + $0x7f0] sm:%s1004] %v1267
                $region70: #{tpu_custom_call.1} parent=57 // loop_footer
                  %s1010 = sadd.s32 1, %s1006
                $region71: #{tpu_custom_call.1} parent=57 // loop_footer_branch
                  %1005 = sbr.rel target = $region67
                $region72: #{tpu_custom_call.1} parent=57 // loop_exit
                  _
              $region58: #{tpu_custom_call.1} parent=31 // pred_fallthru
                _
            $region32: #{tpu_custom_call.1} parent=27 // pred_fallthru
              _
            // Predicated region
            $region33: #{tpu_custom_call.1} parent=27 // pred_check
              %p173 = pneg %p169
            $region34: #{tpu_custom_call.1} parent=27 // pred_check_branch
              %175 = sbr.rel (%p173) target = $region36
            $region35: #{tpu_custom_call.1} parent=27 // pred_region
              %s176 = sshllo.u32 0, %s165
              loop: start=0, step=1, limit=1
              $region37: #{tpu_custom_call.1} parent=35 // loop_pre_header
                _
              $region38: #{tpu_custom_call.1} parent=35 // loop_header
                %s178 = sphi 0, %s182
                %p179 = scmp.ge.s32.totalorder %s178, 1
                %s183 = sphi %s164, %s164
                %s184 = sphi %s154, %s154
              $region39: #{tpu_custom_call.1} parent=35 // loop_header_branch
                %181 = sbr.rel (%p179) target = $region43
              $region40: #{tpu_custom_call.1} parent=35 // loop_body
                %v185 = vld [vmem:[%s183] sm:%s176]
                %186 = vst [vmem:[%s184] sm:%s176] %v185
                %v187 = vld [vmem:[%s183 + $0x38] sm:%s176]
                %188 = vst [vmem:[%s184 + $0x10] sm:%s176] %v187
                %v189 = vld [vmem:[%s183 + $0x70] sm:%s176]
                %190 = vst [vmem:[%s184 + $0x20] sm:%s176] %v189
                %v191 = vld [vmem:[%s183 + $0xa8] sm:%s176]
                %192 = vst [vmem:[%s184 + $0x30] sm:%s176] %v191
                %v193 = vld [vmem:[%s183 + $0xe0] sm:%s176]
                %194 = vst [vmem:[%s184 + $0x40] sm:%s176] %v193
                %v195 = vld [vmem:[%s183 + $0x118] sm:%s176]
                %196 = vst [vmem:[%s184 + $0x50] sm:%s176] %v195
                %v197 = vld [vmem:[%s183 + $0x150] sm:%s176]
                %198 = vst [vmem:[%s184 + $0x60] sm:%s176] %v197
                %v199 = vld [vmem:[%s183 + $0x188] sm:%s176]
                %200 = vst [vmem:[%s184 + $0x70] sm:%s176] %v199
                %v201 = vld [vmem:[%s183 + $0x1c0] sm:%s176]
                %202 = vst [vmem:[%s184 + $0x80] sm:%s176] %v201
                %v203 = vld [vmem:[%s183 + $0x1f8] sm:%s176]
                %204 = vst [vmem:[%s184 + $0x90] sm:%s176] %v203
                %v205 = vld [vmem:[%s183 + $0x230] sm:%s176]
                %206 = vst [vmem:[%s184 + $0xa0] sm:%s176] %v205
                %v207 = vld [vmem:[%s183 + $0x268] sm:%s176]
                %208 = vst [vmem:[%s184 + $0xb0] sm:%s176] %v207
                %v209 = vld [vmem:[%s183 + $0x2a0] sm:%s176]
                %210 = vst [vmem:[%s184 + $0xc0] sm:%s176] %v209
                %v211 = vld [vmem:[%s183 + $0x2d8] sm:%s176]
                %212 = vst [vmem:[%s184 + $0xd0] sm:%s176] %v211
                %v213 = vld [vmem:[%s183 + $0x310] sm:%s176]
                %214 = vst [vmem:[%s184 + $0xe0] sm:%s176] %v213
                %v215 = vld [vmem:[%s183 + $0x348] sm:%s176]
                %216 = vst [vmem:[%s184 + $0xf0] sm:%s176] %v215
                %v217 = vld [vmem:[%s183 + $0x380] sm:%s176]
                %218 = vst [vmem:[%s184 + $0x100] sm:%s176] %v217
                %v219 = vld [vmem:[%s183 + $0x3b8] sm:%s176]
                %220 = vst [vmem:[%s184 + $0x110] sm:%s176] %v219
                %v221 = vld [vmem:[%s183 + $0x3f0] sm:%s176]
                %222 = vst [vmem:[%s184 + $0x120] sm:%s176] %v221
                %v223 = vld [vmem:[%s183 + $0x428] sm:%s176]
                %224 = vst [vmem:[%s184 + $0x130] sm:%s176] %v223
                %v225 = vld [vmem:[%s183 + $0x460] sm:%s176]
                %226 = vst [vmem:[%s184 + $0x140] sm:%s176] %v225
                %v227 = vld [vmem:[%s183 + $0x498] sm:%s176]
                %228 = vst [vmem:[%s184 + $0x150] sm:%s176] %v227
                %v229 = vld [vmem:[%s183 + $0x4d0] sm:%s176]
                %230 = vst [vmem:[%s184 + $0x160] sm:%s176] %v229
                %v231 = vld [vmem:[%s183 + $0x508] sm:%s176]
                %232 = vst [vmem:[%s184 + $0x170] sm:%s176] %v231
                %v233 = vld [vmem:[%s183 + $0x540] sm:%s176]
                %234 = vst [vmem:[%s184 + $0x180] sm:%s176] %v233
                %v235 = vld [vmem:[%s183 + $0x578] sm:%s176]
                %236 = vst [vmem:[%s184 + $0x190] sm:%s176] %v235
                %v237 = vld [vmem:[%s183 + $0x5b0] sm:%s176]
                %238 = vst [vmem:[%s184 + $0x1a0] sm:%s176] %v237
                %v239 = vld [vmem:[%s183 + $0x5e8] sm:%s176]
                %240 = vst [vmem:[%s184 + $0x1b0] sm:%s176] %v239
                %v241 = vld [vmem:[%s183 + $0x620] sm:%s176]
                %242 = vst [vmem:[%s184 + $0x1c0] sm:%s176] %v241
                %v243 = vld [vmem:[%s183 + $0x658] sm:%s176]
                %244 = vst [vmem:[%s184 + $0x1d0] sm:%s176] %v243
                %v245 = vld [vmem:[%s183 + $0x690] sm:%s176]
                %246 = vst [vmem:[%s184 + $0x1e0] sm:%s176] %v245
                %v247 = vld [vmem:[%s183 + $0x6c8] sm:%s176]
                %248 = vst [vmem:[%s184 + $0x1f0] sm:%s176] %v247
                %v249 = vld [vmem:[%s183 + $0x700] sm:%s176]
                %250 = vst [vmem:[%s184 + $0x200] sm:%s176] %v249
                %v251 = vld [vmem:[%s183 + $0x738] sm:%s176]
                %252 = vst [vmem:[%s184 + $0x210] sm:%s176] %v251
                %v253 = vld [vmem:[%s183 + $0x770] sm:%s176]
                %254 = vst [vmem:[%s184 + $0x220] sm:%s176] %v253
                %v255 = vld [vmem:[%s183 + $0x7a8] sm:%s176]
                %256 = vst [vmem:[%s184 + $0x230] sm:%s176] %v255
                %v257 = vld [vmem:[%s183 + $0x7e0] sm:%s176]
                %258 = vst [vmem:[%s184 + $0x240] sm:%s176] %v257
                %v259 = vld [vmem:[%s183 + $0x818] sm:%s176]
                %260 = vst [vmem:[%s184 + $0x250] sm:%s176] %v259
                %v261 = vld [vmem:[%s183 + $0x850] sm:%s176]
                %262 = vst [vmem:[%s184 + $0x260] sm:%s176] %v261
                %v263 = vld [vmem:[%s183 + $0x888] sm:%s176]
                %264 = vst [vmem:[%s184 + $0x270] sm:%s176] %v263
                %v265 = vld [vmem:[%s183 + $0x8c0] sm:%s176]
                %266 = vst [vmem:[%s184 + $0x280] sm:%s176] %v265
                %v267 = vld [vmem:[%s183 + $0x8f8] sm:%s176]
                %268 = vst [vmem:[%s184 + $0x290] sm:%s176] %v267
                %v269 = vld [vmem:[%s183 + $0x930] sm:%s176]
                %270 = vst [vmem:[%s184 + $0x2a0] sm:%s176] %v269
                %v271 = vld [vmem:[%s183 + $0x968] sm:%s176]
                %272 = vst [vmem:[%s184 + $0x2b0] sm:%s176] %v271
                %v273 = vld [vmem:[%s183 + $0x9a0] sm:%s176]
                %274 = vst [vmem:[%s184 + $0x2c0] sm:%s176] %v273
                %v275 = vld [vmem:[%s183 + $0x9d8] sm:%s176]
                %276 = vst [vmem:[%s184 + $0x2d0] sm:%s176] %v275
                %v277 = vld [vmem:[%s183 + $0xa10] sm:%s176]
                %278 = vst [vmem:[%s184 + $0x2e0] sm:%s176] %v277
                %v279 = vld [vmem:[%s183 + $0xa48] sm:%s176]
                %280 = vst [vmem:[%s184 + $0x2f0] sm:%s176] %v279
                %v281 = vld [vmem:[%s183 + $0xa80] sm:%s176]
                %282 = vst [vmem:[%s184 + $0x300] sm:%s176] %v281
                %v283 = vld [vmem:[%s183 + $0xab8] sm:%s176]
                %284 = vst [vmem:[%s184 + $0x310] sm:%s176] %v283
                %v285 = vld [vmem:[%s183 + $0xaf0] sm:%s176]
                %286 = vst [vmem:[%s184 + $0x320] sm:%s176] %v285
                %v287 = vld [vmem:[%s183 + $0xb28] sm:%s176]
                %288 = vst [vmem:[%s184 + $0x330] sm:%s176] %v287
                %v289 = vld [vmem:[%s183 + $0xb60] sm:%s176]
                %290 = vst [vmem:[%s184 + $0x340] sm:%s176] %v289
                %v291 = vld [vmem:[%s183 + $0xb98] sm:%s176]
                %292 = vst [vmem:[%s184 + $0x350] sm:%s176] %v291
                %v293 = vld [vmem:[%s183 + $0xbd0] sm:%s176]
                %294 = vst [vmem:[%s184 + $0x360] sm:%s176] %v293
                %v295 = vld [vmem:[%s183 + $0xc08] sm:%s176]
                %296 = vst [vmem:[%s184 + $0x370] sm:%s176] %v295
                %v297 = vld [vmem:[%s183 + $0xc40] sm:%s176]
                %298 = vst [vmem:[%s184 + $0x380] sm:%s176] %v297
                %v299 = vld [vmem:[%s183 + $0xc78] sm:%s176]
                %300 = vst [vmem:[%s184 + $0x390] sm:%s176] %v299
                %v301 = vld [vmem:[%s183 + $0xcb0] sm:%s176]
                %302 = vst [vmem:[%s184 + $0x3a0] sm:%s176] %v301
                %v303 = vld [vmem:[%s183 + $0xce8] sm:%s176]
                %304 = vst [vmem:[%s184 + $0x3b0] sm:%s176] %v303
                %v305 = vld [vmem:[%s183 + $0xd20] sm:%s176]
                %306 = vst [vmem:[%s184 + $0x3c0] sm:%s176] %v305
                %v307 = vld [vmem:[%s183 + $0xd58] sm:%s176]
                %308 = vst [vmem:[%s184 + $0x3d0] sm:%s176] %v307
                %v309 = vld [vmem:[%s183 + $0xd90] sm:%s176]
                %310 = vst [vmem:[%s184 + $0x3e0] sm:%s176] %v309
                %v311 = vld [vmem:[%s183 + $0xdc8] sm:%s176]
                %312 = vst [vmem:[%s184 + $0x3f0] sm:%s176] %v311
                %v313 = vld [vmem:[%s183 + $0xe00] sm:%s176]
                %314 = vst [vmem:[%s184 + $0x400] sm:%s176] %v313
                %v315 = vld [vmem:[%s183 + $0xe38] sm:%s176]
                %316 = vst [vmem:[%s184 + $0x410] sm:%s176] %v315
                %v317 = vld [vmem:[%s183 + $0xe70] sm:%s176]
                %318 = vst [vmem:[%s184 + $0x420] sm:%s176] %v317
                %v319 = vld [vmem:[%s183 + $0xea8] sm:%s176]
                %320 = vst [vmem:[%s184 + $0x430] sm:%s176] %v319
                %v321 = vld [vmem:[%s183 + $0xee0] sm:%s176]
                %322 = vst [vmem:[%s184 + $0x440] sm:%s176] %v321
                %v323 = vld [vmem:[%s183 + $0xf18] sm:%s176]
                %324 = vst [vmem:[%s184 + $0x450] sm:%s176] %v323
                %v325 = vld [vmem:[%s183 + $0xf50] sm:%s176]
                %326 = vst [vmem:[%s184 + $0x460] sm:%s176] %v325
                %v327 = vld [vmem:[%s183 + $0xf88] sm:%s176]
                %328 = vst [vmem:[%s184 + $0x470] sm:%s176] %v327
                %v329 = vld [vmem:[%s183 + $0xfc0] sm:%s176]
                %330 = vst [vmem:[%s184 + $0x480] sm:%s176] %v329
                %v331 = vld [vmem:[%s183 + $0xff8] sm:%s176]
                %332 = vst [vmem:[%s184 + $0x490] sm:%s176] %v331
                %v333 = vld [vmem:[%s183 + $0x1030] sm:%s176]
                %334 = vst [vmem:[%s184 + $0x4a0] sm:%s176] %v333
                %v335 = vld [vmem:[%s183 + $0x1068] sm:%s176]
                %336 = vst [vmem:[%s184 + $0x4b0] sm:%s176] %v335
                %v337 = vld [vmem:[%s183 + $0x10a0] sm:%s176]
                %338 = vst [vmem:[%s184 + $0x4c0] sm:%s176] %v337
                %v339 = vld [vmem:[%s183 + $0x10d8] sm:%s176]
                %340 = vst [vmem:[%s184 + $0x4d0] sm:%s176] %v339
                %v341 = vld [vmem:[%s183 + $0x1110] sm:%s176]
                %342 = vst [vmem:[%s184 + $0x4e0] sm:%s176] %v341
                %v343 = vld [vmem:[%s183 + $0x1148] sm:%s176]
                %344 = vst [vmem:[%s184 + $0x4f0] sm:%s176] %v343
                %v345 = vld [vmem:[%s183 + $0x1180] sm:%s176]
                %346 = vst [vmem:[%s184 + $0x500] sm:%s176] %v345
                %v347 = vld [vmem:[%s183 + $0x11b8] sm:%s176]
                %348 = vst [vmem:[%s184 + $0x510] sm:%s176] %v347
                %v349 = vld [vmem:[%s183 + $0x11f0] sm:%s176]
                %350 = vst [vmem:[%s184 + $0x520] sm:%s176] %v349
                %v351 = vld [vmem:[%s183 + $0x1228] sm:%s176]
                %352 = vst [vmem:[%s184 + $0x530] sm:%s176] %v351
                %v353 = vld [vmem:[%s183 + $0x1260] sm:%s176]
                %354 = vst [vmem:[%s184 + $0x540] sm:%s176] %v353
                %v355 = vld [vmem:[%s183 + $0x1298] sm:%s176]
                %356 = vst [vmem:[%s184 + $0x550] sm:%s176] %v355
                %v357 = vld [vmem:[%s183 + $0x12d0] sm:%s176]
                %358 = vst [vmem:[%s184 + $0x560] sm:%s176] %v357
                %v359 = vld [vmem:[%s183 + $0x1308] sm:%s176]
                %360 = vst [vmem:[%s184 + $0x570] sm:%s176] %v359
                %v361 = vld [vmem:[%s183 + $0x1340] sm:%s176]
                %362 = vst [vmem:[%s184 + $0x580] sm:%s176] %v361
                %v363 = vld [vmem:[%s183 + $0x1378] sm:%s176]
                %364 = vst [vmem:[%s184 + $0x590] sm:%s176] %v363
                %v365 = vld [vmem:[%s183 + $0x13b0] sm:%s176]
                %366 = vst [vmem:[%s184 + $0x5a0] sm:%s176] %v365
                %v367 = vld [vmem:[%s183 + $0x13e8] sm:%s176]
                %368 = vst [vmem:[%s184 + $0x5b0] sm:%s176] %v367
                %v369 = vld [vmem:[%s183 + $0x1420] sm:%s176]
                %370 = vst [vmem:[%s184 + $0x5c0] sm:%s176] %v369
                %v371 = vld [vmem:[%s183 + $0x1458] sm:%s176]
                %372 = vst [vmem:[%s184 + $0x5d0] sm:%s176] %v371
                %v373 = vld [vmem:[%s183 + $0x1490] sm:%s176]
                %374 = vst [vmem:[%s184 + $0x5e0] sm:%s176] %v373
                %v375 = vld [vmem:[%s183 + $0x14c8] sm:%s176]
                %376 = vst [vmem:[%s184 + $0x5f0] sm:%s176] %v375
                %v377 = vld [vmem:[%s183 + $0x1500] sm:%s176]
                %378 = vst [vmem:[%s184 + $0x600] sm:%s176] %v377
                %v379 = vld [vmem:[%s183 + $0x1538] sm:%s176]
                %380 = vst [vmem:[%s184 + $0x610] sm:%s176] %v379
                %v381 = vld [vmem:[%s183 + $0x1570] sm:%s176]
                %382 = vst [vmem:[%s184 + $0x620] sm:%s176] %v381
                %v383 = vld [vmem:[%s183 + $0x15a8] sm:%s176]
                %384 = vst [vmem:[%s184 + $0x630] sm:%s176] %v383
                %v385 = vld [vmem:[%s183 + $0x15e0] sm:%s176]
                %386 = vst [vmem:[%s184 + $0x640] sm:%s176] %v385
                %v387 = vld [vmem:[%s183 + $0x1618] sm:%s176]
                %388 = vst [vmem:[%s184 + $0x650] sm:%s176] %v387
                %v389 = vld [vmem:[%s183 + $0x1650] sm:%s176]
                %390 = vst [vmem:[%s184 + $0x660] sm:%s176] %v389
                %v391 = vld [vmem:[%s183 + $0x1688] sm:%s176]
                %392 = vst [vmem:[%s184 + $0x670] sm:%s176] %v391
                %v393 = vld [vmem:[%s183 + $0x16c0] sm:%s176]
                %394 = vst [vmem:[%s184 + $0x680] sm:%s176] %v393
                %v395 = vld [vmem:[%s183 + $0x16f8] sm:%s176]
                %396 = vst [vmem:[%s184 + $0x690] sm:%s176] %v395
                %v397 = vld [vmem:[%s183 + $0x1730] sm:%s176]
                %398 = vst [vmem:[%s184 + $0x6a0] sm:%s176] %v397
                %v399 = vld [vmem:[%s183 + $0x1768] sm:%s176]
                %400 = vst [vmem:[%s184 + $0x6b0] sm:%s176] %v399
                %v401 = vld [vmem:[%s183 + $0x17a0] sm:%s176]
                %402 = vst [vmem:[%s184 + $0x6c0] sm:%s176] %v401
                %v403 = vld [vmem:[%s183 + $0x17d8] sm:%s176]
                %404 = vst [vmem:[%s184 + $0x6d0] sm:%s176] %v403
                %v405 = vld [vmem:[%s183 + $0x1810] sm:%s176]
                %406 = vst [vmem:[%s184 + $0x6e0] sm:%s176] %v405
                %v407 = vld [vmem:[%s183 + $0x1848] sm:%s176]
                %408 = vst [vmem:[%s184 + $0x6f0] sm:%s176] %v407
                %v409 = vld [vmem:[%s183 + $0x1880] sm:%s176]
                %410 = vst [vmem:[%s184 + $0x700] sm:%s176] %v409
                %v411 = vld [vmem:[%s183 + $0x18b8] sm:%s176]
                %412 = vst [vmem:[%s184 + $0x710] sm:%s176] %v411
                %v413 = vld [vmem:[%s183 + $0x18f0] sm:%s176]
                %414 = vst [vmem:[%s184 + $0x720] sm:%s176] %v413
                %v415 = vld [vmem:[%s183 + $0x1928] sm:%s176]
                %416 = vst [vmem:[%s184 + $0x730] sm:%s176] %v415
                %v417 = vld [vmem:[%s183 + $0x1960] sm:%s176]
                %418 = vst [vmem:[%s184 + $0x740] sm:%s176] %v417
                %v419 = vld [vmem:[%s183 + $0x1998] sm:%s176]
                %420 = vst [vmem:[%s184 + $0x750] sm:%s176] %v419
                %v421 = vld [vmem:[%s183 + $0x19d0] sm:%s176]
                %422 = vst [vmem:[%s184 + $0x760] sm:%s176] %v421
                %v423 = vld [vmem:[%s183 + $0x1a08] sm:%s176]
                %424 = vst [vmem:[%s184 + $0x770] sm:%s176] %v423
                %v425 = vld [vmem:[%s183 + $0x1a40] sm:%s176]
                %426 = vst [vmem:[%s184 + $0x780] sm:%s176] %v425
                %v427 = vld [vmem:[%s183 + $0x1a78] sm:%s176]
                %428 = vst [vmem:[%s184 + $0x790] sm:%s176] %v427
                %v429 = vld [vmem:[%s183 + $0x1ab0] sm:%s176]
                %430 = vst [vmem:[%s184 + $0x7a0] sm:%s176] %v429
                %v431 = vld [vmem:[%s183 + $0x1ae8] sm:%s176]
                %432 = vst [vmem:[%s184 + $0x7b0] sm:%s176] %v431
                %v433 = vld [vmem:[%s183 + $0x1b20] sm:%s176]
                %434 = vst [vmem:[%s184 + $0x7c0] sm:%s176] %v433
                %v435 = vld [vmem:[%s183 + $0x1b58] sm:%s176]
                %436 = vst [vmem:[%s184 + $0x7d0] sm:%s176] %v435
                %v437 = vld [vmem:[%s183 + $0x1b90] sm:%s176]
                %438 = vst [vmem:[%s184 + $0x7e0] sm:%s176] %v437
                %v439 = vld [vmem:[%s183 + $0x1bc8] sm:%s176]
                %440 = vst [vmem:[%s184 + $0x7f0] sm:%s176] %v439
              $region41: #{tpu_custom_call.1} parent=35 // loop_footer
                %s182 = sadd.s32 1, %s178
              $region42: #{tpu_custom_call.1} parent=35 // loop_footer_branch
                %177 = sbr.rel target = $region38
              $region43: #{tpu_custom_call.1} parent=35 // loop_exit
                _
            $region36: #{tpu_custom_call.1} parent=27 // pred_fallthru
              _
          $region28: #{tpu_custom_call.1} parent=23 // pred_fallthru
            _
          %1269 = vnop
        $region24: #{tpu_custom_call.1} parent=19 // pred_fallthru
          _
        // Predicated region
        $region73: #{tpu_custom_call.1} parent=19 // pred_check
          %p1270 = pneg %p71
        $region74: #{tpu_custom_call.1} parent=19 // pred_check_branch
          %1272 = sbr.rel (%p1270) target = $region76
        $region75: #{tpu_custom_call.1} parent=19 // pred_region
          %s1273 = sand.u32 %s61, 1
          %s1274 = sand.u32 %s61, 1
          %s1275 = smul.addr %s1274, 2048
          %s1276 = scalar_lea.vmem [#allocation3], %s1275
          %s1277 = smul.u32 2, %s17
          %s1278 = ssub.s32 7, %s1277
          %p1279 = scmp.lt.s32.totalorder %s1278, 2
          %s1280 = scalar_select %p1279, %s1278, 2
          %s1281 = smul.u32 16384, %s1280
          %p1282 = scmp.ne.s32.totalorder 0, %s1281
          %s1283 = smul.addr %s16, 896
          %s1284 = sadd.s32 %s1277, %s1283
          %s1285 = smul.addr %s1284, 8
          %s1286 = scalar_lea.vmem %s1, %s1285
          %s1287 = smul.u32 %s1280, 8
          // Predicated region
          $region77: #{tpu_custom_call.1} parent=75 // pred_check
            %p1288 = pneg %p1282
          $region78: #{tpu_custom_call.1} parent=75 // pred_check_branch
            %1290 = sbr.rel (%p1288) target = $region80
          $region79: #{tpu_custom_call.1} parent=75 // pred_region
            %p1291 = scmp.lt.u32.totalorder %s1287, 8
            %p1292 = pneg %p1291
            // Predicated region
            $region81: #{tpu_custom_call.1} parent=79 // pred_check
              _
            $region82: #{tpu_custom_call.1} parent=79 // pred_check_branch
              %1294 = sbr.rel (%p1291) target = $region84
            $region83: #{tpu_custom_call.1} parent=79 // pred_region
              %s1563 = sand.u32 %s1287, 7
              %p1564 = scmp.eq.s32.totalorder %s1563, 0
              // Predicated region
              $region96: #{tpu_custom_call.1} parent=83 // pred_check
                %p1565 = pneg %p1564
              $region97: #{tpu_custom_call.1} parent=83 // pred_check_branch
                %1567 = sbr.rel (%p1565) target = $region99
              $region98: #{tpu_custom_call.1} parent=83 // pred_region
                %s1568 = sshrl.u32 %s1287, 3
                // While loop
                $region100: #{tpu_custom_call.1} parent=98 // loop_pre_header
                  _
                $region101: #{tpu_custom_call.1} parent=98 // loop_header
                  %s1572 = sphi 0, %s1574
                  %p1573 = scmp.ge.s32.totalorder %s1572, %s1568
                  %s1577 = sphi 0, %s1838
                  %s1578 = sphi %s1286, %s1841
                  %s1579 = sphi %s1276, %s1842
                $region102: #{tpu_custom_call.1} parent=98 // loop_header_branch
                  %1576 = sbr.rel (%p1573) target = $region106
                $region103: #{tpu_custom_call.1} parent=98 // loop_body
                  %v1580 = vld [vmem:[%s1578] sm:$0xff]
                  %1581 = vst [vmem:[%s1579] sm:$0xff] %v1580
                  %v1582 = vld [vmem:[%s1578 + $0x38] sm:$0xff]
                  %1583 = vst [vmem:[%s1579 + $0x10] sm:$0xff] %v1582
                  %v1584 = vld [vmem:[%s1578 + $0x70] sm:$0xff]
                  %1585 = vst [vmem:[%s1579 + $0x20] sm:$0xff] %v1584
                  %v1586 = vld [vmem:[%s1578 + $0xa8] sm:$0xff]
                  %1587 = vst [vmem:[%s1579 + $0x30] sm:$0xff] %v1586
                  %v1588 = vld [vmem:[%s1578 + $0xe0] sm:$0xff]
                  %1589 = vst [vmem:[%s1579 + $0x40] sm:$0xff] %v1588
                  %v1590 = vld [vmem:[%s1578 + $0x118] sm:$0xff]
                  %1591 = vst [vmem:[%s1579 + $0x50] sm:$0xff] %v1590
                  %v1592 = vld [vmem:[%s1578 + $0x150] sm:$0xff]
                  %1593 = vst [vmem:[%s1579 + $0x60] sm:$0xff] %v1592
                  %v1594 = vld [vmem:[%s1578 + $0x188] sm:$0xff]
                  %1595 = vst [vmem:[%s1579 + $0x70] sm:$0xff] %v1594
                  %v1596 = vld [vmem:[%s1578 + $0x1c0] sm:$0xff]
                  %1597 = vst [vmem:[%s1579 + $0x80] sm:$0xff] %v1596
                  %v1598 = vld [vmem:[%s1578 + $0x1f8] sm:$0xff]
                  %1599 = vst [vmem:[%s1579 + $0x90] sm:$0xff] %v1598
                  %v1600 = vld [vmem:[%s1578 + $0x230] sm:$0xff]
                  %1601 = vst [vmem:[%s1579 + $0xa0] sm:$0xff] %v1600
                  %v1602 = vld [vmem:[%s1578 + $0x268] sm:$0xff]
                  %1603 = vst [vmem:[%s1579 + $0xb0] sm:$0xff] %v1602
                  %v1604 = vld [vmem:[%s1578 + $0x2a0] sm:$0xff]
                  %1605 = vst [vmem:[%s1579 + $0xc0] sm:$0xff] %v1604
                  %v1606 = vld [vmem:[%s1578 + $0x2d8] sm:$0xff]
                  %1607 = vst [vmem:[%s1579 + $0xd0] sm:$0xff] %v1606
                  %v1608 = vld [vmem:[%s1578 + $0x310] sm:$0xff]
                  %1609 = vst [vmem:[%s1579 + $0xe0] sm:$0xff] %v1608
                  %v1610 = vld [vmem:[%s1578 + $0x348] sm:$0xff]
                  %1611 = vst [vmem:[%s1579 + $0xf0] sm:$0xff] %v1610
                  %v1612 = vld [vmem:[%s1578 + $0x380] sm:$0xff]
                  %1613 = vst [vmem:[%s1579 + $0x100] sm:$0xff] %v1612
                  %v1614 = vld [vmem:[%s1578 + $0x3b8] sm:$0xff]
                  %1615 = vst [vmem:[%s1579 + $0x110] sm:$0xff] %v1614
                  %v1616 = vld [vmem:[%s1578 + $0x3f0] sm:$0xff]
                  %1617 = vst [vmem:[%s1579 + $0x120] sm:$0xff] %v1616
                  %v1618 = vld [vmem:[%s1578 + $0x428] sm:$0xff]
                  %1619 = vst [vmem:[%s1579 + $0x130] sm:$0xff] %v1618
                  %v1620 = vld [vmem:[%s1578 + $0x460] sm:$0xff]
                  %1621 = vst [vmem:[%s1579 + $0x140] sm:$0xff] %v1620
                  %v1622 = vld [vmem:[%s1578 + $0x498] sm:$0xff]
                  %1623 = vst [vmem:[%s1579 + $0x150] sm:$0xff] %v1622
                  %v1624 = vld [vmem:[%s1578 + $0x4d0] sm:$0xff]
                  %1625 = vst [vmem:[%s1579 + $0x160] sm:$0xff] %v1624
                  %v1626 = vld [vmem:[%s1578 + $0x508] sm:$0xff]
                  %1627 = vst [vmem:[%s1579 + $0x170] sm:$0xff] %v1626
                  %v1628 = vld [vmem:[%s1578 + $0x540] sm:$0xff]
                  %1629 = vst [vmem:[%s1579 + $0x180] sm:$0xff] %v1628
                  %v1630 = vld [vmem:[%s1578 + $0x578] sm:$0xff]
                  %1631 = vst [vmem:[%s1579 + $0x190] sm:$0xff] %v1630
                  %v1632 = vld [vmem:[%s1578 + $0x5b0] sm:$0xff]
                  %1633 = vst [vmem:[%s1579 + $0x1a0] sm:$0xff] %v1632
                  %v1634 = vld [vmem:[%s1578 + $0x5e8] sm:$0xff]
                  %1635 = vst [vmem:[%s1579 + $0x1b0] sm:$0xff] %v1634
                  %v1636 = vld [vmem:[%s1578 + $0x620] sm:$0xff]
                  %1637 = vst [vmem:[%s1579 + $0x1c0] sm:$0xff] %v1636
                  %v1638 = vld [vmem:[%s1578 + $0x658] sm:$0xff]
                  %1639 = vst [vmem:[%s1579 + $0x1d0] sm:$0xff] %v1638
                  %v1640 = vld [vmem:[%s1578 + $0x690] sm:$0xff]
                  %1641 = vst [vmem:[%s1579 + $0x1e0] sm:$0xff] %v1640
                  %v1642 = vld [vmem:[%s1578 + $0x6c8] sm:$0xff]
                  %1643 = vst [vmem:[%s1579 + $0x1f0] sm:$0xff] %v1642
                  %v1644 = vld [vmem:[%s1578 + $0x700] sm:$0xff]
                  %1645 = vst [vmem:[%s1579 + $0x200] sm:$0xff] %v1644
                  %v1646 = vld [vmem:[%s1578 + $0x738] sm:$0xff]
                  %1647 = vst [vmem:[%s1579 + $0x210] sm:$0xff] %v1646
                  %v1648 = vld [vmem:[%s1578 + $0x770] sm:$0xff]
                  %1649 = vst [vmem:[%s1579 + $0x220] sm:$0xff] %v1648
                  %v1650 = vld [vmem:[%s1578 + $0x7a8] sm:$0xff]
                  %1651 = vst [vmem:[%s1579 + $0x230] sm:$0xff] %v1650
                  %v1652 = vld [vmem:[%s1578 + $0x7e0] sm:$0xff]
                  %1653 = vst [vmem:[%s1579 + $0x240] sm:$0xff] %v1652
                  %v1654 = vld [vmem:[%s1578 + $0x818] sm:$0xff]
                  %1655 = vst [vmem:[%s1579 + $0x250] sm:$0xff] %v1654
                  %v1656 = vld [vmem:[%s1578 + $0x850] sm:$0xff]
                  %1657 = vst [vmem:[%s1579 + $0x260] sm:$0xff] %v1656
                  %v1658 = vld [vmem:[%s1578 + $0x888] sm:$0xff]
                  %1659 = vst [vmem:[%s1579 + $0x270] sm:$0xff] %v1658
                  %v1660 = vld [vmem:[%s1578 + $0x8c0] sm:$0xff]
                  %1661 = vst [vmem:[%s1579 + $0x280] sm:$0xff] %v1660
                  %v1662 = vld [vmem:[%s1578 + $0x8f8] sm:$0xff]
                  %1663 = vst [vmem:[%s1579 + $0x290] sm:$0xff] %v1662
                  %v1664 = vld [vmem:[%s1578 + $0x930] sm:$0xff]
                  %1665 = vst [vmem:[%s1579 + $0x2a0] sm:$0xff] %v1664
                  %v1666 = vld [vmem:[%s1578 + $0x968] sm:$0xff]
                  %1667 = vst [vmem:[%s1579 + $0x2b0] sm:$0xff] %v1666
                  %v1668 = vld [vmem:[%s1578 + $0x9a0] sm:$0xff]
                  %1669 = vst [vmem:[%s1579 + $0x2c0] sm:$0xff] %v1668
                  %v1670 = vld [vmem:[%s1578 + $0x9d8] sm:$0xff]
                  %1671 = vst [vmem:[%s1579 + $0x2d0] sm:$0xff] %v1670
                  %v1672 = vld [vmem:[%s1578 + $0xa10] sm:$0xff]
                  %1673 = vst [vmem:[%s1579 + $0x2e0] sm:$0xff] %v1672
                  %v1674 = vld [vmem:[%s1578 + $0xa48] sm:$0xff]
                  %1675 = vst [vmem:[%s1579 + $0x2f0] sm:$0xff] %v1674
                  %v1676 = vld [vmem:[%s1578 + $0xa80] sm:$0xff]
                  %1677 = vst [vmem:[%s1579 + $0x300] sm:$0xff] %v1676
                  %v1678 = vld [vmem:[%s1578 + $0xab8] sm:$0xff]
                  %1679 = vst [vmem:[%s1579 + $0x310] sm:$0xff] %v1678
                  %v1680 = vld [vmem:[%s1578 + $0xaf0] sm:$0xff]
                  %1681 = vst [vmem:[%s1579 + $0x320] sm:$0xff] %v1680
                  %v1682 = vld [vmem:[%s1578 + $0xb28] sm:$0xff]
                  %1683 = vst [vmem:[%s1579 + $0x330] sm:$0xff] %v1682
                  %v1684 = vld [vmem:[%s1578 + $0xb60] sm:$0xff]
                  %1685 = vst [vmem:[%s1579 + $0x340] sm:$0xff] %v1684
                  %v1686 = vld [vmem:[%s1578 + $0xb98] sm:$0xff]
                  %1687 = vst [vmem:[%s1579 + $0x350] sm:$0xff] %v1686
                  %v1688 = vld [vmem:[%s1578 + $0xbd0] sm:$0xff]
                  %1689 = vst [vmem:[%s1579 + $0x360] sm:$0xff] %v1688
                  %v1690 = vld [vmem:[%s1578 + $0xc08] sm:$0xff]
                  %1691 = vst [vmem:[%s1579 + $0x370] sm:$0xff] %v1690
                  %v1692 = vld [vmem:[%s1578 + $0xc40] sm:$0xff]
                  %1693 = vst [vmem:[%s1579 + $0x380] sm:$0xff] %v1692
                  %v1694 = vld [vmem:[%s1578 + $0xc78] sm:$0xff]
                  %1695 = vst [vmem:[%s1579 + $0x390] sm:$0xff] %v1694
                  %v1696 = vld [vmem:[%s1578 + $0xcb0] sm:$0xff]
                  %1697 = vst [vmem:[%s1579 + $0x3a0] sm:$0xff] %v1696
                  %v1698 = vld [vmem:[%s1578 + $0xce8] sm:$0xff]
                  %1699 = vst [vmem:[%s1579 + $0x3b0] sm:$0xff] %v1698
                  %v1700 = vld [vmem:[%s1578 + $0xd20] sm:$0xff]
                  %1701 = vst [vmem:[%s1579 + $0x3c0] sm:$0xff] %v1700
                  %v1702 = vld [vmem:[%s1578 + $0xd58] sm:$0xff]
                  %1703 = vst [vmem:[%s1579 + $0x3d0] sm:$0xff] %v1702
                  %v1704 = vld [vmem:[%s1578 + $0xd90] sm:$0xff]
                  %1705 = vst [vmem:[%s1579 + $0x3e0] sm:$0xff] %v1704
                  %v1706 = vld [vmem:[%s1578 + $0xdc8] sm:$0xff]
                  %1707 = vst [vmem:[%s1579 + $0x3f0] sm:$0xff] %v1706
                  %v1708 = vld [vmem:[%s1578 + $0xe00] sm:$0xff]
                  %1709 = vst [vmem:[%s1579 + $0x400] sm:$0xff] %v1708
                  %v1710 = vld [vmem:[%s1578 + $0xe38] sm:$0xff]
                  %1711 = vst [vmem:[%s1579 + $0x410] sm:$0xff] %v1710
                  %v1712 = vld [vmem:[%s1578 + $0xe70] sm:$0xff]
                  %1713 = vst [vmem:[%s1579 + $0x420] sm:$0xff] %v1712
                  %v1714 = vld [vmem:[%s1578 + $0xea8] sm:$0xff]
                  %1715 = vst [vmem:[%s1579 + $0x430] sm:$0xff] %v1714
                  %v1716 = vld [vmem:[%s1578 + $0xee0] sm:$0xff]
                  %1717 = vst [vmem:[%s1579 + $0x440] sm:$0xff] %v1716
                  %v1718 = vld [vmem:[%s1578 + $0xf18] sm:$0xff]
                  %1719 = vst [vmem:[%s1579 + $0x450] sm:$0xff] %v1718
                  %v1720 = vld [vmem:[%s1578 + $0xf50] sm:$0xff]
                  %1721 = vst [vmem:[%s1579 + $0x460] sm:$0xff] %v1720
                  %v1722 = vld [vmem:[%s1578 + $0xf88] sm:$0xff]
                  %1723 = vst [vmem:[%s1579 + $0x470] sm:$0xff] %v1722
                  %v1724 = vld [vmem:[%s1578 + $0xfc0] sm:$0xff]
                  %1725 = vst [vmem:[%s1579 + $0x480] sm:$0xff] %v1724
                  %v1726 = vld [vmem:[%s1578 + $0xff8] sm:$0xff]
                  %1727 = vst [vmem:[%s1579 + $0x490] sm:$0xff] %v1726
                  %v1728 = vld [vmem:[%s1578 + $0x1030] sm:$0xff]
                  %1729 = vst [vmem:[%s1579 + $0x4a0] sm:$0xff] %v1728
                  %v1730 = vld [vmem:[%s1578 + $0x1068] sm:$0xff]
                  %1731 = vst [vmem:[%s1579 + $0x4b0] sm:$0xff] %v1730
                  %v1732 = vld [vmem:[%s1578 + $0x10a0] sm:$0xff]
                  %1733 = vst [vmem:[%s1579 + $0x4c0] sm:$0xff] %v1732
                  %v1734 = vld [vmem:[%s1578 + $0x10d8] sm:$0xff]
                  %1735 = vst [vmem:[%s1579 + $0x4d0] sm:$0xff] %v1734
                  %v1736 = vld [vmem:[%s1578 + $0x1110] sm:$0xff]
                  %1737 = vst [vmem:[%s1579 + $0x4e0] sm:$0xff] %v1736
                  %v1738 = vld [vmem:[%s1578 + $0x1148] sm:$0xff]
                  %1739 = vst [vmem:[%s1579 + $0x4f0] sm:$0xff] %v1738
                  %v1740 = vld [vmem:[%s1578 + $0x1180] sm:$0xff]
                  %1741 = vst [vmem:[%s1579 + $0x500] sm:$0xff] %v1740
                  %v1742 = vld [vmem:[%s1578 + $0x11b8] sm:$0xff]
                  %1743 = vst [vmem:[%s1579 + $0x510] sm:$0xff] %v1742
                  %v1744 = vld [vmem:[%s1578 + $0x11f0] sm:$0xff]
                  %1745 = vst [vmem:[%s1579 + $0x520] sm:$0xff] %v1744
                  %v1746 = vld [vmem:[%s1578 + $0x1228] sm:$0xff]
                  %1747 = vst [vmem:[%s1579 + $0x530] sm:$0xff] %v1746
                  %v1748 = vld [vmem:[%s1578 + $0x1260] sm:$0xff]
                  %1749 = vst [vmem:[%s1579 + $0x540] sm:$0xff] %v1748
                  %v1750 = vld [vmem:[%s1578 + $0x1298] sm:$0xff]
                  %1751 = vst [vmem:[%s1579 + $0x550] sm:$0xff] %v1750
                  %v1752 = vld [vmem:[%s1578 + $0x12d0] sm:$0xff]
                  %1753 = vst [vmem:[%s1579 + $0x560] sm:$0xff] %v1752
                  %v1754 = vld [vmem:[%s1578 + $0x1308] sm:$0xff]
                  %1755 = vst [vmem:[%s1579 + $0x570] sm:$0xff] %v1754
                  %v1756 = vld [vmem:[%s1578 + $0x1340] sm:$0xff]
                  %1757 = vst [vmem:[%s1579 + $0x580] sm:$0xff] %v1756
                  %v1758 = vld [vmem:[%s1578 + $0x1378] sm:$0xff]
                  %1759 = vst [vmem:[%s1579 + $0x590] sm:$0xff] %v1758
                  %v1760 = vld [vmem:[%s1578 + $0x13b0] sm:$0xff]
                  %1761 = vst [vmem:[%s1579 + $0x5a0] sm:$0xff] %v1760
                  %v1762 = vld [vmem:[%s1578 + $0x13e8] sm:$0xff]
                  %1763 = vst [vmem:[%s1579 + $0x5b0] sm:$0xff] %v1762
                  %v1764 = vld [vmem:[%s1578 + $0x1420] sm:$0xff]
                  %1765 = vst [vmem:[%s1579 + $0x5c0] sm:$0xff] %v1764
                  %v1766 = vld [vmem:[%s1578 + $0x1458] sm:$0xff]
                  %1767 = vst [vmem:[%s1579 + $0x5d0] sm:$0xff] %v1766
                  %v1768 = vld [vmem:[%s1578 + $0x1490] sm:$0xff]
                  %1769 = vst [vmem:[%s1579 + $0x5e0] sm:$0xff] %v1768
                  %v1770 = vld [vmem:[%s1578 + $0x14c8] sm:$0xff]
                  %1771 = vst [vmem:[%s1579 + $0x5f0] sm:$0xff] %v1770
                  %v1772 = vld [vmem:[%s1578 + $0x1500] sm:$0xff]
                  %1773 = vst [vmem:[%s1579 + $0x600] sm:$0xff] %v1772
                  %v1774 = vld [vmem:[%s1578 + $0x1538] sm:$0xff]
                  %1775 = vst [vmem:[%s1579 + $0x610] sm:$0xff] %v1774
                  %v1776 = vld [vmem:[%s1578 + $0x1570] sm:$0xff]
                  %1777 = vst [vmem:[%s1579 + $0x620] sm:$0xff] %v1776
                  %v1778 = vld [vmem:[%s1578 + $0x15a8] sm:$0xff]
                  %1779 = vst [vmem:[%s1579 + $0x630] sm:$0xff] %v1778
                  %v1780 = vld [vmem:[%s1578 + $0x15e0] sm:$0xff]
                  %1781 = vst [vmem:[%s1579 + $0x640] sm:$0xff] %v1780
                  %v1782 = vld [vmem:[%s1578 + $0x1618] sm:$0xff]
                  %1783 = vst [vmem:[%s1579 + $0x650] sm:$0xff] %v1782
                  %v1784 = vld [vmem:[%s1578 + $0x1650] sm:$0xff]
                  %1785 = vst [vmem:[%s1579 + $0x660] sm:$0xff] %v1784
                  %v1786 = vld [vmem:[%s1578 + $0x1688] sm:$0xff]
                  %1787 = vst [vmem:[%s1579 + $0x670] sm:$0xff] %v1786
                  %v1788 = vld [vmem:[%s1578 + $0x16c0] sm:$0xff]
                  %1789 = vst [vmem:[%s1579 + $0x680] sm:$0xff] %v1788
                  %v1790 = vld [vmem:[%s1578 + $0x16f8] sm:$0xff]
                  %1791 = vst [vmem:[%s1579 + $0x690] sm:$0xff] %v1790
                  %v1792 = vld [vmem:[%s1578 + $0x1730] sm:$0xff]
                  %1793 = vst [vmem:[%s1579 + $0x6a0] sm:$0xff] %v1792
                  %v1794 = vld [vmem:[%s1578 + $0x1768] sm:$0xff]
                  %1795 = vst [vmem:[%s1579 + $0x6b0] sm:$0xff] %v1794
                  %v1796 = vld [vmem:[%s1578 + $0x17a0] sm:$0xff]
                  %1797 = vst [vmem:[%s1579 + $0x6c0] sm:$0xff] %v1796
                  %v1798 = vld [vmem:[%s1578 + $0x17d8] sm:$0xff]
                  %1799 = vst [vmem:[%s1579 + $0x6d0] sm:$0xff] %v1798
                  %v1800 = vld [vmem:[%s1578 + $0x1810] sm:$0xff]
                  %1801 = vst [vmem:[%s1579 + $0x6e0] sm:$0xff] %v1800
                  %v1802 = vld [vmem:[%s1578 + $0x1848] sm:$0xff]
                  %1803 = vst [vmem:[%s1579 + $0x6f0] sm:$0xff] %v1802
                  %v1804 = vld [vmem:[%s1578 + $0x1880] sm:$0xff]
                  %1805 = vst [vmem:[%s1579 + $0x700] sm:$0xff] %v1804
                  %v1806 = vld [vmem:[%s1578 + $0x18b8] sm:$0xff]
                  %1807 = vst [vmem:[%s1579 + $0x710] sm:$0xff] %v1806
                  %v1808 = vld [vmem:[%s1578 + $0x18f0] sm:$0xff]
                  %1809 = vst [vmem:[%s1579 + $0x720] sm:$0xff] %v1808
                  %v1810 = vld [vmem:[%s1578 + $0x1928] sm:$0xff]
                  %1811 = vst [vmem:[%s1579 + $0x730] sm:$0xff] %v1810
                  %v1812 = vld [vmem:[%s1578 + $0x1960] sm:$0xff]
                  %1813 = vst [vmem:[%s1579 + $0x740] sm:$0xff] %v1812
                  %v1814 = vld [vmem:[%s1578 + $0x1998] sm:$0xff]
                  %1815 = vst [vmem:[%s1579 + $0x750] sm:$0xff] %v1814
                  %v1816 = vld [vmem:[%s1578 + $0x19d0] sm:$0xff]
                  %1817 = vst [vmem:[%s1579 + $0x760] sm:$0xff] %v1816
                  %v1818 = vld [vmem:[%s1578 + $0x1a08] sm:$0xff]
                  %1819 = vst [vmem:[%s1579 + $0x770] sm:$0xff] %v1818
                  %v1820 = vld [vmem:[%s1578 + $0x1a40] sm:$0xff]
                  %1821 = vst [vmem:[%s1579 + $0x780] sm:$0xff] %v1820
                  %v1822 = vld [vmem:[%s1578 + $0x1a78] sm:$0xff]
                  %1823 = vst [vmem:[%s1579 + $0x790] sm:$0xff] %v1822
                  %v1824 = vld [vmem:[%s1578 + $0x1ab0] sm:$0xff]
                  %1825 = vst [vmem:[%s1579 + $0x7a0] sm:$0xff] %v1824
                  %v1826 = vld [vmem:[%s1578 + $0x1ae8] sm:$0xff]
                  %1827 = vst [vmem:[%s1579 + $0x7b0] sm:$0xff] %v1826
                  %v1828 = vld [vmem:[%s1578 + $0x1b20] sm:$0xff]
                  %1829 = vst [vmem:[%s1579 + $0x7c0] sm:$0xff] %v1828
                  %v1830 = vld [vmem:[%s1578 + $0x1b58] sm:$0xff]
                  %1831 = vst [vmem:[%s1579 + $0x7d0] sm:$0xff] %v1830
                  %v1832 = vld [vmem:[%s1578 + $0x1b90] sm:$0xff]
                  %1833 = vst [vmem:[%s1579 + $0x7e0] sm:$0xff] %v1832
                  %v1834 = vld [vmem:[%s1578 + $0x1bc8] sm:$0xff]
                  %1835 = vst [vmem:[%s1579 + $0x7f0] sm:$0xff] %v1834
                  %s1836 = sadd.s32 1, %s1577
                  %p1837 = scmp.ge.s32.totalorder %s1836, %s1568
                  %s1838 = scalar_select %p1837, 0, %s1836
                  %s1839 = smul.u32 %s1838, 8
                  %s1840 = smul.u32 %s1838, 8
                  %s1841 = scalar_lea.vmem %s1286, %s1839
                  %s1842 = scalar_lea.vmem %s1276, %s1840 [#allocation3]
                $region104: #{tpu_custom_call.1} parent=98 // loop_footer
                  %s1574 = sadd.s32 %s1572, 1
                $region105: #{tpu_custom_call.1} parent=98 // loop_footer_branch
                  %1571 = sbr.rel target = $region101
                $region106: #{tpu_custom_call.1} parent=98 // loop_exit
                  _
              $region99: #{tpu_custom_call.1} parent=83 // pred_fallthru
                _
              %p1843 = pneg %p1564
              // Predicated region
              $region107: #{tpu_custom_call.1} parent=83 // pred_check
                _
              $region108: #{tpu_custom_call.1} parent=83 // pred_check_branch
                %1845 = sbr.rel (%p1564) target = $region110
              $region109: #{tpu_custom_call.1} parent=83 // pred_region
                %s1846 = sand.u32 %s1287, 7
                %s1847 = ssub.s32 %s1287, %s1846
                %s1848 = scalar_lea.vmem %s1286, %s1847
                %s1849 = ssub.s32 %s1287, %s1846
                %s1850 = scalar_lea.vmem %s1276, %s1849 [#allocation3]
                %s1851 = sshrl.u32 %s1287, 3
                // While loop
                $region111: #{tpu_custom_call.1} parent=109 // loop_pre_header
                  _
                $region112: #{tpu_custom_call.1} parent=109 // loop_header
                  %s1855 = sphi 0, %s1857
                  %p1856 = scmp.ge.s32.totalorder %s1855, %s1851
                  %s1860 = sphi 0, %s2121
                  %s1861 = sphi %s1286, %s2124
                  %s1862 = sphi %s1276, %s2125
                $region113: #{tpu_custom_call.1} parent=109 // loop_header_branch
                  %1859 = sbr.rel (%p1856) target = $region117
                $region114: #{tpu_custom_call.1} parent=109 // loop_body
                  %v1863 = vld [vmem:[%s1861] sm:$0xff]
                  %1864 = vst [vmem:[%s1862] sm:$0xff] %v1863
                  %v1865 = vld [vmem:[%s1861 + $0x38] sm:$0xff]
                  %1866 = vst [vmem:[%s1862 + $0x10] sm:$0xff] %v1865
                  %v1867 = vld [vmem:[%s1861 + $0x70] sm:$0xff]
                  %1868 = vst [vmem:[%s1862 + $0x20] sm:$0xff] %v1867
                  %v1869 = vld [vmem:[%s1861 + $0xa8] sm:$0xff]
                  %1870 = vst [vmem:[%s1862 + $0x30] sm:$0xff] %v1869
                  %v1871 = vld [vmem:[%s1861 + $0xe0] sm:$0xff]
                  %1872 = vst [vmem:[%s1862 + $0x40] sm:$0xff] %v1871
                  %v1873 = vld [vmem:[%s1861 + $0x118] sm:$0xff]
                  %1874 = vst [vmem:[%s1862 + $0x50] sm:$0xff] %v1873
                  %v1875 = vld [vmem:[%s1861 + $0x150] sm:$0xff]
                  %1876 = vst [vmem:[%s1862 + $0x60] sm:$0xff] %v1875
                  %v1877 = vld [vmem:[%s1861 + $0x188] sm:$0xff]
                  %1878 = vst [vmem:[%s1862 + $0x70] sm:$0xff] %v1877
                  %v1879 = vld [vmem:[%s1861 + $0x1c0] sm:$0xff]
                  %1880 = vst [vmem:[%s1862 + $0x80] sm:$0xff] %v1879
                  %v1881 = vld [vmem:[%s1861 + $0x1f8] sm:$0xff]
                  %1882 = vst [vmem:[%s1862 + $0x90] sm:$0xff] %v1881
                  %v1883 = vld [vmem:[%s1861 + $0x230] sm:$0xff]
                  %1884 = vst [vmem:[%s1862 + $0xa0] sm:$0xff] %v1883
                  %v1885 = vld [vmem:[%s1861 + $0x268] sm:$0xff]
                  %1886 = vst [vmem:[%s1862 + $0xb0] sm:$0xff] %v1885
                  %v1887 = vld [vmem:[%s1861 + $0x2a0] sm:$0xff]
                  %1888 = vst [vmem:[%s1862 + $0xc0] sm:$0xff] %v1887
                  %v1889 = vld [vmem:[%s1861 + $0x2d8] sm:$0xff]
                  %1890 = vst [vmem:[%s1862 + $0xd0] sm:$0xff] %v1889
                  %v1891 = vld [vmem:[%s1861 + $0x310] sm:$0xff]
                  %1892 = vst [vmem:[%s1862 + $0xe0] sm:$0xff] %v1891
                  %v1893 = vld [vmem:[%s1861 + $0x348] sm:$0xff]
                  %1894 = vst [vmem:[%s1862 + $0xf0] sm:$0xff] %v1893
                  %v1895 = vld [vmem:[%s1861 + $0x380] sm:$0xff]
                  %1896 = vst [vmem:[%s1862 + $0x100] sm:$0xff] %v1895
                  %v1897 = vld [vmem:[%s1861 + $0x3b8] sm:$0xff]
                  %1898 = vst [vmem:[%s1862 + $0x110] sm:$0xff] %v1897
                  %v1899 = vld [vmem:[%s1861 + $0x3f0] sm:$0xff]
                  %1900 = vst [vmem:[%s1862 + $0x120] sm:$0xff] %v1899
                  %v1901 = vld [vmem:[%s1861 + $0x428] sm:$0xff]
                  %1902 = vst [vmem:[%s1862 + $0x130] sm:$0xff] %v1901
                  %v1903 = vld [vmem:[%s1861 + $0x460] sm:$0xff]
                  %1904 = vst [vmem:[%s1862 + $0x140] sm:$0xff] %v1903
                  %v1905 = vld [vmem:[%s1861 + $0x498] sm:$0xff]
                  %1906 = vst [vmem:[%s1862 + $0x150] sm:$0xff] %v1905
                  %v1907 = vld [vmem:[%s1861 + $0x4d0] sm:$0xff]
                  %1908 = vst [vmem:[%s1862 + $0x160] sm:$0xff] %v1907
                  %v1909 = vld [vmem:[%s1861 + $0x508] sm:$0xff]
                  %1910 = vst [vmem:[%s1862 + $0x170] sm:$0xff] %v1909
                  %v1911 = vld [vmem:[%s1861 + $0x540] sm:$0xff]
                  %1912 = vst [vmem:[%s1862 + $0x180] sm:$0xff] %v1911
                  %v1913 = vld [vmem:[%s1861 + $0x578] sm:$0xff]
                  %1914 = vst [vmem:[%s1862 + $0x190] sm:$0xff] %v1913
                  %v1915 = vld [vmem:[%s1861 + $0x5b0] sm:$0xff]
                  %1916 = vst [vmem:[%s1862 + $0x1a0] sm:$0xff] %v1915
                  %v1917 = vld [vmem:[%s1861 + $0x5e8] sm:$0xff]
                  %1918 = vst [vmem:[%s1862 + $0x1b0] sm:$0xff] %v1917
                  %v1919 = vld [vmem:[%s1861 + $0x620] sm:$0xff]
                  %1920 = vst [vmem:[%s1862 + $0x1c0] sm:$0xff] %v1919
                  %v1921 = vld [vmem:[%s1861 + $0x658] sm:$0xff]
                  %1922 = vst [vmem:[%s1862 + $0x1d0] sm:$0xff] %v1921
                  %v1923 = vld [vmem:[%s1861 + $0x690] sm:$0xff]
                  %1924 = vst [vmem:[%s1862 + $0x1e0] sm:$0xff] %v1923
                  %v1925 = vld [vmem:[%s1861 + $0x6c8] sm:$0xff]
                  %1926 = vst [vmem:[%s1862 + $0x1f0] sm:$0xff] %v1925
                  %v1927 = vld [vmem:[%s1861 + $0x700] sm:$0xff]
                  %1928 = vst [vmem:[%s1862 + $0x200] sm:$0xff] %v1927
                  %v1929 = vld [vmem:[%s1861 + $0x738] sm:$0xff]
                  %1930 = vst [vmem:[%s1862 + $0x210] sm:$0xff] %v1929
                  %v1931 = vld [vmem:[%s1861 + $0x770] sm:$0xff]
                  %1932 = vst [vmem:[%s1862 + $0x220] sm:$0xff] %v1931
                  %v1933 = vld [vmem:[%s1861 + $0x7a8] sm:$0xff]
                  %1934 = vst [vmem:[%s1862 + $0x230] sm:$0xff] %v1933
                  %v1935 = vld [vmem:[%s1861 + $0x7e0] sm:$0xff]
                  %1936 = vst [vmem:[%s1862 + $0x240] sm:$0xff] %v1935
                  %v1937 = vld [vmem:[%s1861 + $0x818] sm:$0xff]
                  %1938 = vst [vmem:[%s1862 + $0x250] sm:$0xff] %v1937
                  %v1939 = vld [vmem:[%s1861 + $0x850] sm:$0xff]
                  %1940 = vst [vmem:[%s1862 + $0x260] sm:$0xff] %v1939
                  %v1941 = vld [vmem:[%s1861 + $0x888] sm:$0xff]
                  %1942 = vst [vmem:[%s1862 + $0x270] sm:$0xff] %v1941
                  %v1943 = vld [vmem:[%s1861 + $0x8c0] sm:$0xff]
                  %1944 = vst [vmem:[%s1862 + $0x280] sm:$0xff] %v1943
                  %v1945 = vld [vmem:[%s1861 + $0x8f8] sm:$0xff]
                  %1946 = vst [vmem:[%s1862 + $0x290] sm:$0xff] %v1945
                  %v1947 = vld [vmem:[%s1861 + $0x930] sm:$0xff]
                  %1948 = vst [vmem:[%s1862 + $0x2a0] sm:$0xff] %v1947
                  %v1949 = vld [vmem:[%s1861 + $0x968] sm:$0xff]
                  %1950 = vst [vmem:[%s1862 + $0x2b0] sm:$0xff] %v1949
                  %v1951 = vld [vmem:[%s1861 + $0x9a0] sm:$0xff]
                  %1952 = vst [vmem:[%s1862 + $0x2c0] sm:$0xff] %v1951
                  %v1953 = vld [vmem:[%s1861 + $0x9d8] sm:$0xff]
                  %1954 = vst [vmem:[%s1862 + $0x2d0] sm:$0xff] %v1953
                  %v1955 = vld [vmem:[%s1861 + $0xa10] sm:$0xff]
                  %1956 = vst [vmem:[%s1862 + $0x2e0] sm:$0xff] %v1955
                  %v1957 = vld [vmem:[%s1861 + $0xa48] sm:$0xff]
                  %1958 = vst [vmem:[%s1862 + $0x2f0] sm:$0xff] %v1957
                  %v1959 = vld [vmem:[%s1861 + $0xa80] sm:$0xff]
                  %1960 = vst [vmem:[%s1862 + $0x300] sm:$0xff] %v1959
                  %v1961 = vld [vmem:[%s1861 + $0xab8] sm:$0xff]
                  %1962 = vst [vmem:[%s1862 + $0x310] sm:$0xff] %v1961
                  %v1963 = vld [vmem:[%s1861 + $0xaf0] sm:$0xff]
                  %1964 = vst [vmem:[%s1862 + $0x320] sm:$0xff] %v1963
                  %v1965 = vld [vmem:[%s1861 + $0xb28] sm:$0xff]
                  %1966 = vst [vmem:[%s1862 + $0x330] sm:$0xff] %v1965
                  %v1967 = vld [vmem:[%s1861 + $0xb60] sm:$0xff]
                  %1968 = vst [vmem:[%s1862 + $0x340] sm:$0xff] %v1967
                  %v1969 = vld [vmem:[%s1861 + $0xb98] sm:$0xff]
                  %1970 = vst [vmem:[%s1862 + $0x350] sm:$0xff] %v1969
                  %v1971 = vld [vmem:[%s1861 + $0xbd0] sm:$0xff]
                  %1972 = vst [vmem:[%s1862 + $0x360] sm:$0xff] %v1971
                  %v1973 = vld [vmem:[%s1861 + $0xc08] sm:$0xff]
                  %1974 = vst [vmem:[%s1862 + $0x370] sm:$0xff] %v1973
                  %v1975 = vld [vmem:[%s1861 + $0xc40] sm:$0xff]
                  %1976 = vst [vmem:[%s1862 + $0x380] sm:$0xff] %v1975
                  %v1977 = vld [vmem:[%s1861 + $0xc78] sm:$0xff]
                  %1978 = vst [vmem:[%s1862 + $0x390] sm:$0xff] %v1977
                  %v1979 = vld [vmem:[%s1861 + $0xcb0] sm:$0xff]
                  %1980 = vst [vmem:[%s1862 + $0x3a0] sm:$0xff] %v1979
                  %v1981 = vld [vmem:[%s1861 + $0xce8] sm:$0xff]
                  %1982 = vst [vmem:[%s1862 + $0x3b0] sm:$0xff] %v1981
                  %v1983 = vld [vmem:[%s1861 + $0xd20] sm:$0xff]
                  %1984 = vst [vmem:[%s1862 + $0x3c0] sm:$0xff] %v1983
                  %v1985 = vld [vmem:[%s1861 + $0xd58] sm:$0xff]
                  %1986 = vst [vmem:[%s1862 + $0x3d0] sm:$0xff] %v1985
                  %v1987 = vld [vmem:[%s1861 + $0xd90] sm:$0xff]
                  %1988 = vst [vmem:[%s1862 + $0x3e0] sm:$0xff] %v1987
                  %v1989 = vld [vmem:[%s1861 + $0xdc8] sm:$0xff]
                  %1990 = vst [vmem:[%s1862 + $0x3f0] sm:$0xff] %v1989
                  %v1991 = vld [vmem:[%s1861 + $0xe00] sm:$0xff]
                  %1992 = vst [vmem:[%s1862 + $0x400] sm:$0xff] %v1991
                  %v1993 = vld [vmem:[%s1861 + $0xe38] sm:$0xff]
                  %1994 = vst [vmem:[%s1862 + $0x410] sm:$0xff] %v1993
                  %v1995 = vld [vmem:[%s1861 + $0xe70] sm:$0xff]
                  %1996 = vst [vmem:[%s1862 + $0x420] sm:$0xff] %v1995
                  %v1997 = vld [vmem:[%s1861 + $0xea8] sm:$0xff]
                  %1998 = vst [vmem:[%s1862 + $0x430] sm:$0xff] %v1997
                  %v1999 = vld [vmem:[%s1861 + $0xee0] sm:$0xff]
                  %2000 = vst [vmem:[%s1862 + $0x440] sm:$0xff] %v1999
                  %v2001 = vld [vmem:[%s1861 + $0xf18] sm:$0xff]
                  %2002 = vst [vmem:[%s1862 + $0x450] sm:$0xff] %v2001
                  %v2003 = vld [vmem:[%s1861 + $0xf50] sm:$0xff]
                  %2004 = vst [vmem:[%s1862 + $0x460] sm:$0xff] %v2003
                  %v2005 = vld [vmem:[%s1861 + $0xf88] sm:$0xff]
                  %2006 = vst [vmem:[%s1862 + $0x470] sm:$0xff] %v2005
                  %v2007 = vld [vmem:[%s1861 + $0xfc0] sm:$0xff]
                  %2008 = vst [vmem:[%s1862 + $0x480] sm:$0xff] %v2007
                  %v2009 = vld [vmem:[%s1861 + $0xff8] sm:$0xff]
                  %2010 = vst [vmem:[%s1862 + $0x490] sm:$0xff] %v2009
                  %v2011 = vld [vmem:[%s1861 + $0x1030] sm:$0xff]
                  %2012 = vst [vmem:[%s1862 + $0x4a0] sm:$0xff] %v2011
                  %v2013 = vld [vmem:[%s1861 + $0x1068] sm:$0xff]
                  %2014 = vst [vmem:[%s1862 + $0x4b0] sm:$0xff] %v2013
                  %v2015 = vld [vmem:[%s1861 + $0x10a0] sm:$0xff]
                  %2016 = vst [vmem:[%s1862 + $0x4c0] sm:$0xff] %v2015
                  %v2017 = vld [vmem:[%s1861 + $0x10d8] sm:$0xff]
                  %2018 = vst [vmem:[%s1862 + $0x4d0] sm:$0xff] %v2017
                  %v2019 = vld [vmem:[%s1861 + $0x1110] sm:$0xff]
                  %2020 = vst [vmem:[%s1862 + $0x4e0] sm:$0xff] %v2019
                  %v2021 = vld [vmem:[%s1861 + $0x1148] sm:$0xff]
                  %2022 = vst [vmem:[%s1862 + $0x4f0] sm:$0xff] %v2021
                  %v2023 = vld [vmem:[%s1861 + $0x1180] sm:$0xff]
                  %2024 = vst [vmem:[%s1862 + $0x500] sm:$0xff] %v2023
                  %v2025 = vld [vmem:[%s1861 + $0x11b8] sm:$0xff]
                  %2026 = vst [vmem:[%s1862 + $0x510] sm:$0xff] %v2025
                  %v2027 = vld [vmem:[%s1861 + $0x11f0] sm:$0xff]
                  %2028 = vst [vmem:[%s1862 + $0x520] sm:$0xff] %v2027
                  %v2029 = vld [vmem:[%s1861 + $0x1228] sm:$0xff]
                  %2030 = vst [vmem:[%s1862 + $0x530] sm:$0xff] %v2029
                  %v2031 = vld [vmem:[%s1861 + $0x1260] sm:$0xff]
                  %2032 = vst [vmem:[%s1862 + $0x540] sm:$0xff] %v2031
                  %v2033 = vld [vmem:[%s1861 + $0x1298] sm:$0xff]
                  %2034 = vst [vmem:[%s1862 + $0x550] sm:$0xff] %v2033
                  %v2035 = vld [vmem:[%s1861 + $0x12d0] sm:$0xff]
                  %2036 = vst [vmem:[%s1862 + $0x560] sm:$0xff] %v2035
                  %v2037 = vld [vmem:[%s1861 + $0x1308] sm:$0xff]
                  %2038 = vst [vmem:[%s1862 + $0x570] sm:$0xff] %v2037
                  %v2039 = vld [vmem:[%s1861 + $0x1340] sm:$0xff]
                  %2040 = vst [vmem:[%s1862 + $0x580] sm:$0xff] %v2039
                  %v2041 = vld [vmem:[%s1861 + $0x1378] sm:$0xff]
                  %2042 = vst [vmem:[%s1862 + $0x590] sm:$0xff] %v2041
                  %v2043 = vld [vmem:[%s1861 + $0x13b0] sm:$0xff]
                  %2044 = vst [vmem:[%s1862 + $0x5a0] sm:$0xff] %v2043
                  %v2045 = vld [vmem:[%s1861 + $0x13e8] sm:$0xff]
                  %2046 = vst [vmem:[%s1862 + $0x5b0] sm:$0xff] %v2045
                  %v2047 = vld [vmem:[%s1861 + $0x1420] sm:$0xff]
                  %2048 = vst [vmem:[%s1862 + $0x5c0] sm:$0xff] %v2047
                  %v2049 = vld [vmem:[%s1861 + $0x1458] sm:$0xff]
                  %2050 = vst [vmem:[%s1862 + $0x5d0] sm:$0xff] %v2049
                  %v2051 = vld [vmem:[%s1861 + $0x1490] sm:$0xff]
                  %2052 = vst [vmem:[%s1862 + $0x5e0] sm:$0xff] %v2051
                  %v2053 = vld [vmem:[%s1861 + $0x14c8] sm:$0xff]
                  %2054 = vst [vmem:[%s1862 + $0x5f0] sm:$0xff] %v2053
                  %v2055 = vld [vmem:[%s1861 + $0x1500] sm:$0xff]
                  %2056 = vst [vmem:[%s1862 + $0x600] sm:$0xff] %v2055
                  %v2057 = vld [vmem:[%s1861 + $0x1538] sm:$0xff]
                  %2058 = vst [vmem:[%s1862 + $0x610] sm:$0xff] %v2057
                  %v2059 = vld [vmem:[%s1861 + $0x1570] sm:$0xff]
                  %2060 = vst [vmem:[%s1862 + $0x620] sm:$0xff] %v2059
                  %v2061 = vld [vmem:[%s1861 + $0x15a8] sm:$0xff]
                  %2062 = vst [vmem:[%s1862 + $0x630] sm:$0xff] %v2061
                  %v2063 = vld [vmem:[%s1861 + $0x15e0] sm:$0xff]
                  %2064 = vst [vmem:[%s1862 + $0x640] sm:$0xff] %v2063
                  %v2065 = vld [vmem:[%s1861 + $0x1618] sm:$0xff]
                  %2066 = vst [vmem:[%s1862 + $0x650] sm:$0xff] %v2065
                  %v2067 = vld [vmem:[%s1861 + $0x1650] sm:$0xff]
                  %2068 = vst [vmem:[%s1862 + $0x660] sm:$0xff] %v2067
                  %v2069 = vld [vmem:[%s1861 + $0x1688] sm:$0xff]
                  %2070 = vst [vmem:[%s1862 + $0x670] sm:$0xff] %v2069
                  %v2071 = vld [vmem:[%s1861 + $0x16c0] sm:$0xff]
                  %2072 = vst [vmem:[%s1862 + $0x680] sm:$0xff] %v2071
                  %v2073 = vld [vmem:[%s1861 + $0x16f8] sm:$0xff]
                  %2074 = vst [vmem:[%s1862 + $0x690] sm:$0xff] %v2073
                  %v2075 = vld [vmem:[%s1861 + $0x1730] sm:$0xff]
                  %2076 = vst [vmem:[%s1862 + $0x6a0] sm:$0xff] %v2075
                  %v2077 = vld [vmem:[%s1861 + $0x1768] sm:$0xff]
                  %2078 = vst [vmem:[%s1862 + $0x6b0] sm:$0xff] %v2077
                  %v2079 = vld [vmem:[%s1861 + $0x17a0] sm:$0xff]
                  %2080 = vst [vmem:[%s1862 + $0x6c0] sm:$0xff] %v2079
                  %v2081 = vld [vmem:[%s1861 + $0x17d8] sm:$0xff]
                  %2082 = vst [vmem:[%s1862 + $0x6d0] sm:$0xff] %v2081
                  %v2083 = vld [vmem:[%s1861 + $0x1810] sm:$0xff]
                  %2084 = vst [vmem:[%s1862 + $0x6e0] sm:$0xff] %v2083
                  %v2085 = vld [vmem:[%s1861 + $0x1848] sm:$0xff]
                  %2086 = vst [vmem:[%s1862 + $0x6f0] sm:$0xff] %v2085
                  %v2087 = vld [vmem:[%s1861 + $0x1880] sm:$0xff]
                  %2088 = vst [vmem:[%s1862 + $0x700] sm:$0xff] %v2087
                  %v2089 = vld [vmem:[%s1861 + $0x18b8] sm:$0xff]
                  %2090 = vst [vmem:[%s1862 + $0x710] sm:$0xff] %v2089
                  %v2091 = vld [vmem:[%s1861 + $0x18f0] sm:$0xff]
                  %2092 = vst [vmem:[%s1862 + $0x720] sm:$0xff] %v2091
                  %v2093 = vld [vmem:[%s1861 + $0x1928] sm:$0xff]
                  %2094 = vst [vmem:[%s1862 + $0x730] sm:$0xff] %v2093
                  %v2095 = vld [vmem:[%s1861 + $0x1960] sm:$0xff]
                  %2096 = vst [vmem:[%s1862 + $0x740] sm:$0xff] %v2095
                  %v2097 = vld [vmem:[%s1861 + $0x1998] sm:$0xff]
                  %2098 = vst [vmem:[%s1862 + $0x750] sm:$0xff] %v2097
                  %v2099 = vld [vmem:[%s1861 + $0x19d0] sm:$0xff]
                  %2100 = vst [vmem:[%s1862 + $0x760] sm:$0xff] %v2099
                  %v2101 = vld [vmem:[%s1861 + $0x1a08] sm:$0xff]
                  %2102 = vst [vmem:[%s1862 + $0x770] sm:$0xff] %v2101
                  %v2103 = vld [vmem:[%s1861 + $0x1a40] sm:$0xff]
                  %2104 = vst [vmem:[%s1862 + $0x780] sm:$0xff] %v2103
                  %v2105 = vld [vmem:[%s1861 + $0x1a78] sm:$0xff]
                  %2106 = vst [vmem:[%s1862 + $0x790] sm:$0xff] %v2105
                  %v2107 = vld [vmem:[%s1861 + $0x1ab0] sm:$0xff]
                  %2108 = vst [vmem:[%s1862 + $0x7a0] sm:$0xff] %v2107
                  %v2109 = vld [vmem:[%s1861 + $0x1ae8] sm:$0xff]
                  %2110 = vst [vmem:[%s1862 + $0x7b0] sm:$0xff] %v2109
                  %v2111 = vld [vmem:[%s1861 + $0x1b20] sm:$0xff]
                  %2112 = vst [vmem:[%s1862 + $0x7c0] sm:$0xff] %v2111
                  %v2113 = vld [vmem:[%s1861 + $0x1b58] sm:$0xff]
                  %2114 = vst [vmem:[%s1862 + $0x7d0] sm:$0xff] %v2113
                  %v2115 = vld [vmem:[%s1861 + $0x1b90] sm:$0xff]
                  %2116 = vst [vmem:[%s1862 + $0x7e0] sm:$0xff] %v2115
                  %v2117 = vld [vmem:[%s1861 + $0x1bc8] sm:$0xff]
                  %2118 = vst [vmem:[%s1862 + $0x7f0] sm:$0xff] %v2117
                  %s2119 = sadd.s32 1, %s1860
                  %p2120 = scmp.ge.s32.totalorder %s2119, %s1851
                  %s2121 = scalar_select %p2120, 0, %s2119
                  %s2122 = smul.u32 %s2121, 8
                  %s2123 = smul.u32 %s2121, 8
                  %s2124 = scalar_lea.vmem %s1286, %s2122
                  %s2125 = scalar_lea.vmem %s1276, %s2123 [#allocation3]
                $region115: #{tpu_custom_call.1} parent=109 // loop_footer
                  %s1857 = sadd.s32 %s1855, 1
                $region116: #{tpu_custom_call.1} parent=109 // loop_footer_branch
                  %1854 = sbr.rel target = $region112
                $region117: #{tpu_custom_call.1} parent=109 // loop_exit
                  _
                %s2126 = sshllo.u32 0, %s1846
                loop: start=0, step=1, limit=1
                $region118: #{tpu_custom_call.1} parent=109 // loop_pre_header
                  _
                $region119: #{tpu_custom_call.1} parent=109 // loop_header
                  %s2128 = sphi 0, %s2132
                  %p2129 = scmp.ge.s32.totalorder %s2128, 1
                  %s2133 = sphi %s1848, %s1848
                  %s2134 = sphi %s1850, %s1850
                $region120: #{tpu_custom_call.1} parent=109 // loop_header_branch
                  %2131 = sbr.rel (%p2129) target = $region124
                $region121: #{tpu_custom_call.1} parent=109 // loop_body
                  %v2135 = vld [vmem:[%s2133] sm:%s2126]
                  %2136 = vst [vmem:[%s2134] sm:%s2126] %v2135
                  %v2137 = vld [vmem:[%s2133 + $0x38] sm:%s2126]
                  %2138 = vst [vmem:[%s2134 + $0x10] sm:%s2126] %v2137
                  %v2139 = vld [vmem:[%s2133 + $0x70] sm:%s2126]
                  %2140 = vst [vmem:[%s2134 + $0x20] sm:%s2126] %v2139
                  %v2141 = vld [vmem:[%s2133 + $0xa8] sm:%s2126]
                  %2142 = vst [vmem:[%s2134 + $0x30] sm:%s2126] %v2141
                  %v2143 = vld [vmem:[%s2133 + $0xe0] sm:%s2126]
                  %2144 = vst [vmem:[%s2134 + $0x40] sm:%s2126] %v2143
                  %v2145 = vld [vmem:[%s2133 + $0x118] sm:%s2126]
                  %2146 = vst [vmem:[%s2134 + $0x50] sm:%s2126] %v2145
                  %v2147 = vld [vmem:[%s2133 + $0x150] sm:%s2126]
                  %2148 = vst [vmem:[%s2134 + $0x60] sm:%s2126] %v2147
                  %v2149 = vld [vmem:[%s2133 + $0x188] sm:%s2126]
                  %2150 = vst [vmem:[%s2134 + $0x70] sm:%s2126] %v2149
                  %v2151 = vld [vmem:[%s2133 + $0x1c0] sm:%s2126]
                  %2152 = vst [vmem:[%s2134 + $0x80] sm:%s2126] %v2151
                  %v2153 = vld [vmem:[%s2133 + $0x1f8] sm:%s2126]
                  %2154 = vst [vmem:[%s2134 + $0x90] sm:%s2126] %v2153
                  %v2155 = vld [vmem:[%s2133 + $0x230] sm:%s2126]
                  %2156 = vst [vmem:[%s2134 + $0xa0] sm:%s2126] %v2155
                  %v2157 = vld [vmem:[%s2133 + $0x268] sm:%s2126]
                  %2158 = vst [vmem:[%s2134 + $0xb0] sm:%s2126] %v2157
                  %v2159 = vld [vmem:[%s2133 + $0x2a0] sm:%s2126]
                  %2160 = vst [vmem:[%s2134 + $0xc0] sm:%s2126] %v2159
                  %v2161 = vld [vmem:[%s2133 + $0x2d8] sm:%s2126]
                  %2162 = vst [vmem:[%s2134 + $0xd0] sm:%s2126] %v2161
                  %v2163 = vld [vmem:[%s2133 + $0x310] sm:%s2126]
                  %2164 = vst [vmem:[%s2134 + $0xe0] sm:%s2126] %v2163
                  %v2165 = vld [vmem:[%s2133 + $0x348] sm:%s2126]
                  %2166 = vst [vmem:[%s2134 + $0xf0] sm:%s2126] %v2165
                  %v2167 = vld [vmem:[%s2133 + $0x380] sm:%s2126]
                  %2168 = vst [vmem:[%s2134 + $0x100] sm:%s2126] %v2167
                  %v2169 = vld [vmem:[%s2133 + $0x3b8] sm:%s2126]
                  %2170 = vst [vmem:[%s2134 + $0x110] sm:%s2126] %v2169
                  %v2171 = vld [vmem:[%s2133 + $0x3f0] sm:%s2126]
                  %2172 = vst [vmem:[%s2134 + $0x120] sm:%s2126] %v2171
                  %v2173 = vld [vmem:[%s2133 + $0x428] sm:%s2126]
                  %2174 = vst [vmem:[%s2134 + $0x130] sm:%s2126] %v2173
                  %v2175 = vld [vmem:[%s2133 + $0x460] sm:%s2126]
                  %2176 = vst [vmem:[%s2134 + $0x140] sm:%s2126] %v2175
                  %v2177 = vld [vmem:[%s2133 + $0x498] sm:%s2126]
                  %2178 = vst [vmem:[%s2134 + $0x150] sm:%s2126] %v2177
                  %v2179 = vld [vmem:[%s2133 + $0x4d0] sm:%s2126]
                  %2180 = vst [vmem:[%s2134 + $0x160] sm:%s2126] %v2179
                  %v2181 = vld [vmem:[%s2133 + $0x508] sm:%s2126]
                  %2182 = vst [vmem:[%s2134 + $0x170] sm:%s2126] %v2181
                  %v2183 = vld [vmem:[%s2133 + $0x540] sm:%s2126]
                  %2184 = vst [vmem:[%s2134 + $0x180] sm:%s2126] %v2183
                  %v2185 = vld [vmem:[%s2133 + $0x578] sm:%s2126]
                  %2186 = vst [vmem:[%s2134 + $0x190] sm:%s2126] %v2185
                  %v2187 = vld [vmem:[%s2133 + $0x5b0] sm:%s2126]
                  %2188 = vst [vmem:[%s2134 + $0x1a0] sm:%s2126] %v2187
                  %v2189 = vld [vmem:[%s2133 + $0x5e8] sm:%s2126]
                  %2190 = vst [vmem:[%s2134 + $0x1b0] sm:%s2126] %v2189
                  %v2191 = vld [vmem:[%s2133 + $0x620] sm:%s2126]
                  %2192 = vst [vmem:[%s2134 + $0x1c0] sm:%s2126] %v2191
                  %v2193 = vld [vmem:[%s2133 + $0x658] sm:%s2126]
                  %2194 = vst [vmem:[%s2134 + $0x1d0] sm:%s2126] %v2193
                  %v2195 = vld [vmem:[%s2133 + $0x690] sm:%s2126]
                  %2196 = vst [vmem:[%s2134 + $0x1e0] sm:%s2126] %v2195
                  %v2197 = vld [vmem:[%s2133 + $0x6c8] sm:%s2126]
                  %2198 = vst [vmem:[%s2134 + $0x1f0] sm:%s2126] %v2197
                  %v2199 = vld [vmem:[%s2133 + $0x700] sm:%s2126]
                  %2200 = vst [vmem:[%s2134 + $0x200] sm:%s2126] %v2199
                  %v2201 = vld [vmem:[%s2133 + $0x738] sm:%s2126]
                  %2202 = vst [vmem:[%s2134 + $0x210] sm:%s2126] %v2201
                  %v2203 = vld [vmem:[%s2133 + $0x770] sm:%s2126]
                  %2204 = vst [vmem:[%s2134 + $0x220] sm:%s2126] %v2203
                  %v2205 = vld [vmem:[%s2133 + $0x7a8] sm:%s2126]
                  %2206 = vst [vmem:[%s2134 + $0x230] sm:%s2126] %v2205
                  %v2207 = vld [vmem:[%s2133 + $0x7e0] sm:%s2126]
                  %2208 = vst [vmem:[%s2134 + $0x240] sm:%s2126] %v2207
                  %v2209 = vld [vmem:[%s2133 + $0x818] sm:%s2126]
                  %2210 = vst [vmem:[%s2134 + $0x250] sm:%s2126] %v2209
                  %v2211 = vld [vmem:[%s2133 + $0x850] sm:%s2126]
                  %2212 = vst [vmem:[%s2134 + $0x260] sm:%s2126] %v2211
                  %v2213 = vld [vmem:[%s2133 + $0x888] sm:%s2126]
                  %2214 = vst [vmem:[%s2134 + $0x270] sm:%s2126] %v2213
                  %v2215 = vld [vmem:[%s2133 + $0x8c0] sm:%s2126]
                  %2216 = vst [vmem:[%s2134 + $0x280] sm:%s2126] %v2215
                  %v2217 = vld [vmem:[%s2133 + $0x8f8] sm:%s2126]
                  %2218 = vst [vmem:[%s2134 + $0x290] sm:%s2126] %v2217
                  %v2219 = vld [vmem:[%s2133 + $0x930] sm:%s2126]
                  %2220 = vst [vmem:[%s2134 + $0x2a0] sm:%s2126] %v2219
                  %v2221 = vld [vmem:[%s2133 + $0x968] sm:%s2126]
                  %2222 = vst [vmem:[%s2134 + $0x2b0] sm:%s2126] %v2221
                  %v2223 = vld [vmem:[%s2133 + $0x9a0] sm:%s2126]
                  %2224 = vst [vmem:[%s2134 + $0x2c0] sm:%s2126] %v2223
                  %v2225 = vld [vmem:[%s2133 + $0x9d8] sm:%s2126]
                  %2226 = vst [vmem:[%s2134 + $0x2d0] sm:%s2126] %v2225
                  %v2227 = vld [vmem:[%s2133 + $0xa10] sm:%s2126]
                  %2228 = vst [vmem:[%s2134 + $0x2e0] sm:%s2126] %v2227
                  %v2229 = vld [vmem:[%s2133 + $0xa48] sm:%s2126]
                  %2230 = vst [vmem:[%s2134 + $0x2f0] sm:%s2126] %v2229
                  %v2231 = vld [vmem:[%s2133 + $0xa80] sm:%s2126]
                  %2232 = vst [vmem:[%s2134 + $0x300] sm:%s2126] %v2231
                  %v2233 = vld [vmem:[%s2133 + $0xab8] sm:%s2126]
                  %2234 = vst [vmem:[%s2134 + $0x310] sm:%s2126] %v2233
                  %v2235 = vld [vmem:[%s2133 + $0xaf0] sm:%s2126]
                  %2236 = vst [vmem:[%s2134 + $0x320] sm:%s2126] %v2235
                  %v2237 = vld [vmem:[%s2133 + $0xb28] sm:%s2126]
                  %2238 = vst [vmem:[%s2134 + $0x330] sm:%s2126] %v2237
                  %v2239 = vld [vmem:[%s2133 + $0xb60] sm:%s2126]
                  %2240 = vst [vmem:[%s2134 + $0x340] sm:%s2126] %v2239
                  %v2241 = vld [vmem:[%s2133 + $0xb98] sm:%s2126]
                  %2242 = vst [vmem:[%s2134 + $0x350] sm:%s2126] %v2241
                  %v2243 = vld [vmem:[%s2133 + $0xbd0] sm:%s2126]
                  %2244 = vst [vmem:[%s2134 + $0x360] sm:%s2126] %v2243
                  %v2245 = vld [vmem:[%s2133 + $0xc08] sm:%s2126]
                  %2246 = vst [vmem:[%s2134 + $0x370] sm:%s2126] %v2245
                  %v2247 = vld [vmem:[%s2133 + $0xc40] sm:%s2126]
                  %2248 = vst [vmem:[%s2134 + $0x380] sm:%s2126] %v2247
                  %v2249 = vld [vmem:[%s2133 + $0xc78] sm:%s2126]
                  %2250 = vst [vmem:[%s2134 + $0x390] sm:%s2126] %v2249
                  %v2251 = vld [vmem:[%s2133 + $0xcb0] sm:%s2126]
                  %2252 = vst [vmem:[%s2134 + $0x3a0] sm:%s2126] %v2251
                  %v2253 = vld [vmem:[%s2133 + $0xce8] sm:%s2126]
                  %2254 = vst [vmem:[%s2134 + $0x3b0] sm:%s2126] %v2253
                  %v2255 = vld [vmem:[%s2133 + $0xd20] sm:%s2126]
                  %2256 = vst [vmem:[%s2134 + $0x3c0] sm:%s2126] %v2255
                  %v2257 = vld [vmem:[%s2133 + $0xd58] sm:%s2126]
                  %2258 = vst [vmem:[%s2134 + $0x3d0] sm:%s2126] %v2257
                  %v2259 = vld [vmem:[%s2133 + $0xd90] sm:%s2126]
                  %2260 = vst [vmem:[%s2134 + $0x3e0] sm:%s2126] %v2259
                  %v2261 = vld [vmem:[%s2133 + $0xdc8] sm:%s2126]
                  %2262 = vst [vmem:[%s2134 + $0x3f0] sm:%s2126] %v2261
                  %v2263 = vld [vmem:[%s2133 + $0xe00] sm:%s2126]
                  %2264 = vst [vmem:[%s2134 + $0x400] sm:%s2126] %v2263
                  %v2265 = vld [vmem:[%s2133 + $0xe38] sm:%s2126]
                  %2266 = vst [vmem:[%s2134 + $0x410] sm:%s2126] %v2265
                  %v2267 = vld [vmem:[%s2133 + $0xe70] sm:%s2126]
                  %2268 = vst [vmem:[%s2134 + $0x420] sm:%s2126] %v2267
                  %v2269 = vld [vmem:[%s2133 + $0xea8] sm:%s2126]
                  %2270 = vst [vmem:[%s2134 + $0x430] sm:%s2126] %v2269
                  %v2271 = vld [vmem:[%s2133 + $0xee0] sm:%s2126]
                  %2272 = vst [vmem:[%s2134 + $0x440] sm:%s2126] %v2271
                  %v2273 = vld [vmem:[%s2133 + $0xf18] sm:%s2126]
                  %2274 = vst [vmem:[%s2134 + $0x450] sm:%s2126] %v2273
                  %v2275 = vld [vmem:[%s2133 + $0xf50] sm:%s2126]
                  %2276 = vst [vmem:[%s2134 + $0x460] sm:%s2126] %v2275
                  %v2277 = vld [vmem:[%s2133 + $0xf88] sm:%s2126]
                  %2278 = vst [vmem:[%s2134 + $0x470] sm:%s2126] %v2277
                  %v2279 = vld [vmem:[%s2133 + $0xfc0] sm:%s2126]
                  %2280 = vst [vmem:[%s2134 + $0x480] sm:%s2126] %v2279
                  %v2281 = vld [vmem:[%s2133 + $0xff8] sm:%s2126]
                  %2282 = vst [vmem:[%s2134 + $0x490] sm:%s2126] %v2281
                  %v2283 = vld [vmem:[%s2133 + $0x1030] sm:%s2126]
                  %2284 = vst [vmem:[%s2134 + $0x4a0] sm:%s2126] %v2283
                  %v2285 = vld [vmem:[%s2133 + $0x1068] sm:%s2126]
                  %2286 = vst [vmem:[%s2134 + $0x4b0] sm:%s2126] %v2285
                  %v2287 = vld [vmem:[%s2133 + $0x10a0] sm:%s2126]
                  %2288 = vst [vmem:[%s2134 + $0x4c0] sm:%s2126] %v2287
                  %v2289 = vld [vmem:[%s2133 + $0x10d8] sm:%s2126]
                  %2290 = vst [vmem:[%s2134 + $0x4d0] sm:%s2126] %v2289
                  %v2291 = vld [vmem:[%s2133 + $0x1110] sm:%s2126]
                  %2292 = vst [vmem:[%s2134 + $0x4e0] sm:%s2126] %v2291
                  %v2293 = vld [vmem:[%s2133 + $0x1148] sm:%s2126]
                  %2294 = vst [vmem:[%s2134 + $0x4f0] sm:%s2126] %v2293
                  %v2295 = vld [vmem:[%s2133 + $0x1180] sm:%s2126]
                  %2296 = vst [vmem:[%s2134 + $0x500] sm:%s2126] %v2295
                  %v2297 = vld [vmem:[%s2133 + $0x11b8] sm:%s2126]
                  %2298 = vst [vmem:[%s2134 + $0x510] sm:%s2126] %v2297
                  %v2299 = vld [vmem:[%s2133 + $0x11f0] sm:%s2126]
                  %2300 = vst [vmem:[%s2134 + $0x520] sm:%s2126] %v2299
                  %v2301 = vld [vmem:[%s2133 + $0x1228] sm:%s2126]
                  %2302 = vst [vmem:[%s2134 + $0x530] sm:%s2126] %v2301
                  %v2303 = vld [vmem:[%s2133 + $0x1260] sm:%s2126]
                  %2304 = vst [vmem:[%s2134 + $0x540] sm:%s2126] %v2303
                  %v2305 = vld [vmem:[%s2133 + $0x1298] sm:%s2126]
                  %2306 = vst [vmem:[%s2134 + $0x550] sm:%s2126] %v2305
                  %v2307 = vld [vmem:[%s2133 + $0x12d0] sm:%s2126]
                  %2308 = vst [vmem:[%s2134 + $0x560] sm:%s2126] %v2307
                  %v2309 = vld [vmem:[%s2133 + $0x1308] sm:%s2126]
                  %2310 = vst [vmem:[%s2134 + $0x570] sm:%s2126] %v2309
                  %v2311 = vld [vmem:[%s2133 + $0x1340] sm:%s2126]
                  %2312 = vst [vmem:[%s2134 + $0x580] sm:%s2126] %v2311
                  %v2313 = vld [vmem:[%s2133 + $0x1378] sm:%s2126]
                  %2314 = vst [vmem:[%s2134 + $0x590] sm:%s2126] %v2313
                  %v2315 = vld [vmem:[%s2133 + $0x13b0] sm:%s2126]
                  %2316 = vst [vmem:[%s2134 + $0x5a0] sm:%s2126] %v2315
                  %v2317 = vld [vmem:[%s2133 + $0x13e8] sm:%s2126]
                  %2318 = vst [vmem:[%s2134 + $0x5b0] sm:%s2126] %v2317
                  %v2319 = vld [vmem:[%s2133 + $0x1420] sm:%s2126]
                  %2320 = vst [vmem:[%s2134 + $0x5c0] sm:%s2126] %v2319
                  %v2321 = vld [vmem:[%s2133 + $0x1458] sm:%s2126]
                  %2322 = vst [vmem:[%s2134 + $0x5d0] sm:%s2126] %v2321
                  %v2323 = vld [vmem:[%s2133 + $0x1490] sm:%s2126]
                  %2324 = vst [vmem:[%s2134 + $0x5e0] sm:%s2126] %v2323
                  %v2325 = vld [vmem:[%s2133 + $0x14c8] sm:%s2126]
                  %2326 = vst [vmem:[%s2134 + $0x5f0] sm:%s2126] %v2325
                  %v2327 = vld [vmem:[%s2133 + $0x1500] sm:%s2126]
                  %2328 = vst [vmem:[%s2134 + $0x600] sm:%s2126] %v2327
                  %v2329 = vld [vmem:[%s2133 + $0x1538] sm:%s2126]
                  %2330 = vst [vmem:[%s2134 + $0x610] sm:%s2126] %v2329
                  %v2331 = vld [vmem:[%s2133 + $0x1570] sm:%s2126]
                  %2332 = vst [vmem:[%s2134 + $0x620] sm:%s2126] %v2331
                  %v2333 = vld [vmem:[%s2133 + $0x15a8] sm:%s2126]
                  %2334 = vst [vmem:[%s2134 + $0x630] sm:%s2126] %v2333
                  %v2335 = vld [vmem:[%s2133 + $0x15e0] sm:%s2126]
                  %2336 = vst [vmem:[%s2134 + $0x640] sm:%s2126] %v2335
                  %v2337 = vld [vmem:[%s2133 + $0x1618] sm:%s2126]
                  %2338 = vst [vmem:[%s2134 + $0x650] sm:%s2126] %v2337
                  %v2339 = vld [vmem:[%s2133 + $0x1650] sm:%s2126]
                  %2340 = vst [vmem:[%s2134 + $0x660] sm:%s2126] %v2339
                  %v2341 = vld [vmem:[%s2133 + $0x1688] sm:%s2126]
                  %2342 = vst [vmem:[%s2134 + $0x670] sm:%s2126] %v2341
                  %v2343 = vld [vmem:[%s2133 + $0x16c0] sm:%s2126]
                  %2344 = vst [vmem:[%s2134 + $0x680] sm:%s2126] %v2343
                  %v2345 = vld [vmem:[%s2133 + $0x16f8] sm:%s2126]
                  %2346 = vst [vmem:[%s2134 + $0x690] sm:%s2126] %v2345
                  %v2347 = vld [vmem:[%s2133 + $0x1730] sm:%s2126]
                  %2348 = vst [vmem:[%s2134 + $0x6a0] sm:%s2126] %v2347
                  %v2349 = vld [vmem:[%s2133 + $0x1768] sm:%s2126]
                  %2350 = vst [vmem:[%s2134 + $0x6b0] sm:%s2126] %v2349
                  %v2351 = vld [vmem:[%s2133 + $0x17a0] sm:%s2126]
                  %2352 = vst [vmem:[%s2134 + $0x6c0] sm:%s2126] %v2351
                  %v2353 = vld [vmem:[%s2133 + $0x17d8] sm:%s2126]
                  %2354 = vst [vmem:[%s2134 + $0x6d0] sm:%s2126] %v2353
                  %v2355 = vld [vmem:[%s2133 + $0x1810] sm:%s2126]
                  %2356 = vst [vmem:[%s2134 + $0x6e0] sm:%s2126] %v2355
                  %v2357 = vld [vmem:[%s2133 + $0x1848] sm:%s2126]
                  %2358 = vst [vmem:[%s2134 + $0x6f0] sm:%s2126] %v2357
                  %v2359 = vld [vmem:[%s2133 + $0x1880] sm:%s2126]
                  %2360 = vst [vmem:[%s2134 + $0x700] sm:%s2126] %v2359
                  %v2361 = vld [vmem:[%s2133 + $0x18b8] sm:%s2126]
                  %2362 = vst [vmem:[%s2134 + $0x710] sm:%s2126] %v2361
                  %v2363 = vld [vmem:[%s2133 + $0x18f0] sm:%s2126]
                  %2364 = vst [vmem:[%s2134 + $0x720] sm:%s2126] %v2363
                  %v2365 = vld [vmem:[%s2133 + $0x1928] sm:%s2126]
                  %2366 = vst [vmem:[%s2134 + $0x730] sm:%s2126] %v2365
                  %v2367 = vld [vmem:[%s2133 + $0x1960] sm:%s2126]
                  %2368 = vst [vmem:[%s2134 + $0x740] sm:%s2126] %v2367
                  %v2369 = vld [vmem:[%s2133 + $0x1998] sm:%s2126]
                  %2370 = vst [vmem:[%s2134 + $0x750] sm:%s2126] %v2369
                  %v2371 = vld [vmem:[%s2133 + $0x19d0] sm:%s2126]
                  %2372 = vst [vmem:[%s2134 + $0x760] sm:%s2126] %v2371
                  %v2373 = vld [vmem:[%s2133 + $0x1a08] sm:%s2126]
                  %2374 = vst [vmem:[%s2134 + $0x770] sm:%s2126] %v2373
                  %v2375 = vld [vmem:[%s2133 + $0x1a40] sm:%s2126]
                  %2376 = vst [vmem:[%s2134 + $0x780] sm:%s2126] %v2375
                  %v2377 = vld [vmem:[%s2133 + $0x1a78] sm:%s2126]
                  %2378 = vst [vmem:[%s2134 + $0x790] sm:%s2126] %v2377
                  %v2379 = vld [vmem:[%s2133 + $0x1ab0] sm:%s2126]
                  %2380 = vst [vmem:[%s2134 + $0x7a0] sm:%s2126] %v2379
                  %v2381 = vld [vmem:[%s2133 + $0x1ae8] sm:%s2126]
                  %2382 = vst [vmem:[%s2134 + $0x7b0] sm:%s2126] %v2381
                  %v2383 = vld [vmem:[%s2133 + $0x1b20] sm:%s2126]
                  %2384 = vst [vmem:[%s2134 + $0x7c0] sm:%s2126] %v2383
                  %v2385 = vld [vmem:[%s2133 + $0x1b58] sm:%s2126]
                  %2386 = vst [vmem:[%s2134 + $0x7d0] sm:%s2126] %v2385
                  %v2387 = vld [vmem:[%s2133 + $0x1b90] sm:%s2126]
                  %2388 = vst [vmem:[%s2134 + $0x7e0] sm:%s2126] %v2387
                  %v2389 = vld [vmem:[%s2133 + $0x1bc8] sm:%s2126]
                  %2390 = vst [vmem:[%s2134 + $0x7f0] sm:%s2126] %v2389
                $region122: #{tpu_custom_call.1} parent=109 // loop_footer
                  %s2132 = sadd.s32 1, %s2128
                $region123: #{tpu_custom_call.1} parent=109 // loop_footer_branch
                  %2127 = sbr.rel target = $region119
                $region124: #{tpu_custom_call.1} parent=109 // loop_exit
                  _
              $region110: #{tpu_custom_call.1} parent=83 // pred_fallthru
                _
            $region84: #{tpu_custom_call.1} parent=79 // pred_fallthru
              _
            // Predicated region
            $region85: #{tpu_custom_call.1} parent=79 // pred_check
              %p1295 = pneg %p1291
            $region86: #{tpu_custom_call.1} parent=79 // pred_check_branch
              %1297 = sbr.rel (%p1295) target = $region88
            $region87: #{tpu_custom_call.1} parent=79 // pred_region
              %s1298 = sshllo.u32 0, %s1287
              loop: start=0, step=1, limit=1
              $region89: #{tpu_custom_call.1} parent=87 // loop_pre_header
                _
              $region90: #{tpu_custom_call.1} parent=87 // loop_header
                %s1300 = sphi 0, %s1304
                %p1301 = scmp.ge.s32.totalorder %s1300, 1
                %s1305 = sphi %s1286, %s1286
                %s1306 = sphi %s1276, %s1276
              $region91: #{tpu_custom_call.1} parent=87 // loop_header_branch
                %1303 = sbr.rel (%p1301) target = $region95
              $region92: #{tpu_custom_call.1} parent=87 // loop_body
                %v1307 = vld [vmem:[%s1305] sm:%s1298]
                %1308 = vst [vmem:[%s1306] sm:%s1298] %v1307
                %v1309 = vld [vmem:[%s1305 + $0x38] sm:%s1298]
                %1310 = vst [vmem:[%s1306 + $0x10] sm:%s1298] %v1309
                %v1311 = vld [vmem:[%s1305 + $0x70] sm:%s1298]
                %1312 = vst [vmem:[%s1306 + $0x20] sm:%s1298] %v1311
                %v1313 = vld [vmem:[%s1305 + $0xa8] sm:%s1298]
                %1314 = vst [vmem:[%s1306 + $0x30] sm:%s1298] %v1313
                %v1315 = vld [vmem:[%s1305 + $0xe0] sm:%s1298]
                %1316 = vst [vmem:[%s1306 + $0x40] sm:%s1298] %v1315
                %v1317 = vld [vmem:[%s1305 + $0x118] sm:%s1298]
                %1318 = vst [vmem:[%s1306 + $0x50] sm:%s1298] %v1317
                %v1319 = vld [vmem:[%s1305 + $0x150] sm:%s1298]
                %1320 = vst [vmem:[%s1306 + $0x60] sm:%s1298] %v1319
                %v1321 = vld [vmem:[%s1305 + $0x188] sm:%s1298]
                %1322 = vst [vmem:[%s1306 + $0x70] sm:%s1298] %v1321
                %v1323 = vld [vmem:[%s1305 + $0x1c0] sm:%s1298]
                %1324 = vst [vmem:[%s1306 + $0x80] sm:%s1298] %v1323
                %v1325 = vld [vmem:[%s1305 + $0x1f8] sm:%s1298]
                %1326 = vst [vmem:[%s1306 + $0x90] sm:%s1298] %v1325
                %v1327 = vld [vmem:[%s1305 + $0x230] sm:%s1298]
                %1328 = vst [vmem:[%s1306 + $0xa0] sm:%s1298] %v1327
                %v1329 = vld [vmem:[%s1305 + $0x268] sm:%s1298]
                %1330 = vst [vmem:[%s1306 + $0xb0] sm:%s1298] %v1329
                %v1331 = vld [vmem:[%s1305 + $0x2a0] sm:%s1298]
                %1332 = vst [vmem:[%s1306 + $0xc0] sm:%s1298] %v1331
                %v1333 = vld [vmem:[%s1305 + $0x2d8] sm:%s1298]
                %1334 = vst [vmem:[%s1306 + $0xd0] sm:%s1298] %v1333
                %v1335 = vld [vmem:[%s1305 + $0x310] sm:%s1298]
                %1336 = vst [vmem:[%s1306 + $0xe0] sm:%s1298] %v1335
                %v1337 = vld [vmem:[%s1305 + $0x348] sm:%s1298]
                %1338 = vst [vmem:[%s1306 + $0xf0] sm:%s1298] %v1337
                %v1339 = vld [vmem:[%s1305 + $0x380] sm:%s1298]
                %1340 = vst [vmem:[%s1306 + $0x100] sm:%s1298] %v1339
                %v1341 = vld [vmem:[%s1305 + $0x3b8] sm:%s1298]
                %1342 = vst [vmem:[%s1306 + $0x110] sm:%s1298] %v1341
                %v1343 = vld [vmem:[%s1305 + $0x3f0] sm:%s1298]
                %1344 = vst [vmem:[%s1306 + $0x120] sm:%s1298] %v1343
                %v1345 = vld [vmem:[%s1305 + $0x428] sm:%s1298]
                %1346 = vst [vmem:[%s1306 + $0x130] sm:%s1298] %v1345
                %v1347 = vld [vmem:[%s1305 + $0x460] sm:%s1298]
                %1348 = vst [vmem:[%s1306 + $0x140] sm:%s1298] %v1347
                %v1349 = vld [vmem:[%s1305 + $0x498] sm:%s1298]
                %1350 = vst [vmem:[%s1306 + $0x150] sm:%s1298] %v1349
                %v1351 = vld [vmem:[%s1305 + $0x4d0] sm:%s1298]
                %1352 = vst [vmem:[%s1306 + $0x160] sm:%s1298] %v1351
                %v1353 = vld [vmem:[%s1305 + $0x508] sm:%s1298]
                %1354 = vst [vmem:[%s1306 + $0x170] sm:%s1298] %v1353
                %v1355 = vld [vmem:[%s1305 + $0x540] sm:%s1298]
                %1356 = vst [vmem:[%s1306 + $0x180] sm:%s1298] %v1355
                %v1357 = vld [vmem:[%s1305 + $0x578] sm:%s1298]
                %1358 = vst [vmem:[%s1306 + $0x190] sm:%s1298] %v1357
                %v1359 = vld [vmem:[%s1305 + $0x5b0] sm:%s1298]
                %1360 = vst [vmem:[%s1306 + $0x1a0] sm:%s1298] %v1359
                %v1361 = vld [vmem:[%s1305 + $0x5e8] sm:%s1298]
                %1362 = vst [vmem:[%s1306 + $0x1b0] sm:%s1298] %v1361
                %v1363 = vld [vmem:[%s1305 + $0x620] sm:%s1298]
                %1364 = vst [vmem:[%s1306 + $0x1c0] sm:%s1298] %v1363
                %v1365 = vld [vmem:[%s1305 + $0x658] sm:%s1298]
                %1366 = vst [vmem:[%s1306 + $0x1d0] sm:%s1298] %v1365
                %v1367 = vld [vmem:[%s1305 + $0x690] sm:%s1298]
                %1368 = vst [vmem:[%s1306 + $0x1e0] sm:%s1298] %v1367
                %v1369 = vld [vmem:[%s1305 + $0x6c8] sm:%s1298]
                %1370 = vst [vmem:[%s1306 + $0x1f0] sm:%s1298] %v1369
                %v1371 = vld [vmem:[%s1305 + $0x700] sm:%s1298]
                %1372 = vst [vmem:[%s1306 + $0x200] sm:%s1298] %v1371
                %v1373 = vld [vmem:[%s1305 + $0x738] sm:%s1298]
                %1374 = vst [vmem:[%s1306 + $0x210] sm:%s1298] %v1373
                %v1375 = vld [vmem:[%s1305 + $0x770] sm:%s1298]
                %1376 = vst [vmem:[%s1306 + $0x220] sm:%s1298] %v1375
                %v1377 = vld [vmem:[%s1305 + $0x7a8] sm:%s1298]
                %1378 = vst [vmem:[%s1306 + $0x230] sm:%s1298] %v1377
                %v1379 = vld [vmem:[%s1305 + $0x7e0] sm:%s1298]
                %1380 = vst [vmem:[%s1306 + $0x240] sm:%s1298] %v1379
                %v1381 = vld [vmem:[%s1305 + $0x818] sm:%s1298]
                %1382 = vst [vmem:[%s1306 + $0x250] sm:%s1298] %v1381
                %v1383 = vld [vmem:[%s1305 + $0x850] sm:%s1298]
                %1384 = vst [vmem:[%s1306 + $0x260] sm:%s1298] %v1383
                %v1385 = vld [vmem:[%s1305 + $0x888] sm:%s1298]
                %1386 = vst [vmem:[%s1306 + $0x270] sm:%s1298] %v1385
                %v1387 = vld [vmem:[%s1305 + $0x8c0] sm:%s1298]
                %1388 = vst [vmem:[%s1306 + $0x280] sm:%s1298] %v1387
                %v1389 = vld [vmem:[%s1305 + $0x8f8] sm:%s1298]
                %1390 = vst [vmem:[%s1306 + $0x290] sm:%s1298] %v1389
                %v1391 = vld [vmem:[%s1305 + $0x930] sm:%s1298]
                %1392 = vst [vmem:[%s1306 + $0x2a0] sm:%s1298] %v1391
                %v1393 = vld [vmem:[%s1305 + $0x968] sm:%s1298]
                %1394 = vst [vmem:[%s1306 + $0x2b0] sm:%s1298] %v1393
                %v1395 = vld [vmem:[%s1305 + $0x9a0] sm:%s1298]
                %1396 = vst [vmem:[%s1306 + $0x2c0] sm:%s1298] %v1395
                %v1397 = vld [vmem:[%s1305 + $0x9d8] sm:%s1298]
                %1398 = vst [vmem:[%s1306 + $0x2d0] sm:%s1298] %v1397
                %v1399 = vld [vmem:[%s1305 + $0xa10] sm:%s1298]
                %1400 = vst [vmem:[%s1306 + $0x2e0] sm:%s1298] %v1399
                %v1401 = vld [vmem:[%s1305 + $0xa48] sm:%s1298]
                %1402 = vst [vmem:[%s1306 + $0x2f0] sm:%s1298] %v1401
                %v1403 = vld [vmem:[%s1305 + $0xa80] sm:%s1298]
                %1404 = vst [vmem:[%s1306 + $0x300] sm:%s1298] %v1403
                %v1405 = vld [vmem:[%s1305 + $0xab8] sm:%s1298]
                %1406 = vst [vmem:[%s1306 + $0x310] sm:%s1298] %v1405
                %v1407 = vld [vmem:[%s1305 + $0xaf0] sm:%s1298]
                %1408 = vst [vmem:[%s1306 + $0x320] sm:%s1298] %v1407
                %v1409 = vld [vmem:[%s1305 + $0xb28] sm:%s1298]
                %1410 = vst [vmem:[%s1306 + $0x330] sm:%s1298] %v1409
                %v1411 = vld [vmem:[%s1305 + $0xb60] sm:%s1298]
                %1412 = vst [vmem:[%s1306 + $0x340] sm:%s1298] %v1411
                %v1413 = vld [vmem:[%s1305 + $0xb98] sm:%s1298]
                %1414 = vst [vmem:[%s1306 + $0x350] sm:%s1298] %v1413
                %v1415 = vld [vmem:[%s1305 + $0xbd0] sm:%s1298]
                %1416 = vst [vmem:[%s1306 + $0x360] sm:%s1298] %v1415
                %v1417 = vld [vmem:[%s1305 + $0xc08] sm:%s1298]
                %1418 = vst [vmem:[%s1306 + $0x370] sm:%s1298] %v1417
                %v1419 = vld [vmem:[%s1305 + $0xc40] sm:%s1298]
                %1420 = vst [vmem:[%s1306 + $0x380] sm:%s1298] %v1419
                %v1421 = vld [vmem:[%s1305 + $0xc78] sm:%s1298]
                %1422 = vst [vmem:[%s1306 + $0x390] sm:%s1298] %v1421
                %v1423 = vld [vmem:[%s1305 + $0xcb0] sm:%s1298]
                %1424 = vst [vmem:[%s1306 + $0x3a0] sm:%s1298] %v1423
                %v1425 = vld [vmem:[%s1305 + $0xce8] sm:%s1298]
                %1426 = vst [vmem:[%s1306 + $0x3b0] sm:%s1298] %v1425
                %v1427 = vld [vmem:[%s1305 + $0xd20] sm:%s1298]
                %1428 = vst [vmem:[%s1306 + $0x3c0] sm:%s1298] %v1427
                %v1429 = vld [vmem:[%s1305 + $0xd58] sm:%s1298]
                %1430 = vst [vmem:[%s1306 + $0x3d0] sm:%s1298] %v1429
                %v1431 = vld [vmem:[%s1305 + $0xd90] sm:%s1298]
                %1432 = vst [vmem:[%s1306 + $0x3e0] sm:%s1298] %v1431
                %v1433 = vld [vmem:[%s1305 + $0xdc8] sm:%s1298]
                %1434 = vst [vmem:[%s1306 + $0x3f0] sm:%s1298] %v1433
                %v1435 = vld [vmem:[%s1305 + $0xe00] sm:%s1298]
                %1436 = vst [vmem:[%s1306 + $0x400] sm:%s1298] %v1435
                %v1437 = vld [vmem:[%s1305 + $0xe38] sm:%s1298]
                %1438 = vst [vmem:[%s1306 + $0x410] sm:%s1298] %v1437
                %v1439 = vld [vmem:[%s1305 + $0xe70] sm:%s1298]
                %1440 = vst [vmem:[%s1306 + $0x420] sm:%s1298] %v1439
                %v1441 = vld [vmem:[%s1305 + $0xea8] sm:%s1298]
                %1442 = vst [vmem:[%s1306 + $0x430] sm:%s1298] %v1441
                %v1443 = vld [vmem:[%s1305 + $0xee0] sm:%s1298]
                %1444 = vst [vmem:[%s1306 + $0x440] sm:%s1298] %v1443
                %v1445 = vld [vmem:[%s1305 + $0xf18] sm:%s1298]
                %1446 = vst [vmem:[%s1306 + $0x450] sm:%s1298] %v1445
                %v1447 = vld [vmem:[%s1305 + $0xf50] sm:%s1298]
                %1448 = vst [vmem:[%s1306 + $0x460] sm:%s1298] %v1447
                %v1449 = vld [vmem:[%s1305 + $0xf88] sm:%s1298]
                %1450 = vst [vmem:[%s1306 + $0x470] sm:%s1298] %v1449
                %v1451 = vld [vmem:[%s1305 + $0xfc0] sm:%s1298]
                %1452 = vst [vmem:[%s1306 + $0x480] sm:%s1298] %v1451
                %v1453 = vld [vmem:[%s1305 + $0xff8] sm:%s1298]
                %1454 = vst [vmem:[%s1306 + $0x490] sm:%s1298] %v1453
                %v1455 = vld [vmem:[%s1305 + $0x1030] sm:%s1298]
                %1456 = vst [vmem:[%s1306 + $0x4a0] sm:%s1298] %v1455
                %v1457 = vld [vmem:[%s1305 + $0x1068] sm:%s1298]
                %1458 = vst [vmem:[%s1306 + $0x4b0] sm:%s1298] %v1457
                %v1459 = vld [vmem:[%s1305 + $0x10a0] sm:%s1298]
                %1460 = vst [vmem:[%s1306 + $0x4c0] sm:%s1298] %v1459
                %v1461 = vld [vmem:[%s1305 + $0x10d8] sm:%s1298]
                %1462 = vst [vmem:[%s1306 + $0x4d0] sm:%s1298] %v1461
                %v1463 = vld [vmem:[%s1305 + $0x1110] sm:%s1298]
                %1464 = vst [vmem:[%s1306 + $0x4e0] sm:%s1298] %v1463
                %v1465 = vld [vmem:[%s1305 + $0x1148] sm:%s1298]
                %1466 = vst [vmem:[%s1306 + $0x4f0] sm:%s1298] %v1465
                %v1467 = vld [vmem:[%s1305 + $0x1180] sm:%s1298]
                %1468 = vst [vmem:[%s1306 + $0x500] sm:%s1298] %v1467
                %v1469 = vld [vmem:[%s1305 + $0x11b8] sm:%s1298]
                %1470 = vst [vmem:[%s1306 + $0x510] sm:%s1298] %v1469
                %v1471 = vld [vmem:[%s1305 + $0x11f0] sm:%s1298]
                %1472 = vst [vmem:[%s1306 + $0x520] sm:%s1298] %v1471
                %v1473 = vld [vmem:[%s1305 + $0x1228] sm:%s1298]
                %1474 = vst [vmem:[%s1306 + $0x530] sm:%s1298] %v1473
                %v1475 = vld [vmem:[%s1305 + $0x1260] sm:%s1298]
                %1476 = vst [vmem:[%s1306 + $0x540] sm:%s1298] %v1475
                %v1477 = vld [vmem:[%s1305 + $0x1298] sm:%s1298]
                %1478 = vst [vmem:[%s1306 + $0x550] sm:%s1298] %v1477
                %v1479 = vld [vmem:[%s1305 + $0x12d0] sm:%s1298]
                %1480 = vst [vmem:[%s1306 + $0x560] sm:%s1298] %v1479
                %v1481 = vld [vmem:[%s1305 + $0x1308] sm:%s1298]
                %1482 = vst [vmem:[%s1306 + $0x570] sm:%s1298] %v1481
                %v1483 = vld [vmem:[%s1305 + $0x1340] sm:%s1298]
                %1484 = vst [vmem:[%s1306 + $0x580] sm:%s1298] %v1483
                %v1485 = vld [vmem:[%s1305 + $0x1378] sm:%s1298]
                %1486 = vst [vmem:[%s1306 + $0x590] sm:%s1298] %v1485
                %v1487 = vld [vmem:[%s1305 + $0x13b0] sm:%s1298]
                %1488 = vst [vmem:[%s1306 + $0x5a0] sm:%s1298] %v1487
                %v1489 = vld [vmem:[%s1305 + $0x13e8] sm:%s1298]
                %1490 = vst [vmem:[%s1306 + $0x5b0] sm:%s1298] %v1489
                %v1491 = vld [vmem:[%s1305 + $0x1420] sm:%s1298]
                %1492 = vst [vmem:[%s1306 + $0x5c0] sm:%s1298] %v1491
                %v1493 = vld [vmem:[%s1305 + $0x1458] sm:%s1298]
                %1494 = vst [vmem:[%s1306 + $0x5d0] sm:%s1298] %v1493
                %v1495 = vld [vmem:[%s1305 + $0x1490] sm:%s1298]
                %1496 = vst [vmem:[%s1306 + $0x5e0] sm:%s1298] %v1495
                %v1497 = vld [vmem:[%s1305 + $0x14c8] sm:%s1298]
                %1498 = vst [vmem:[%s1306 + $0x5f0] sm:%s1298] %v1497
                %v1499 = vld [vmem:[%s1305 + $0x1500] sm:%s1298]
                %1500 = vst [vmem:[%s1306 + $0x600] sm:%s1298] %v1499
                %v1501 = vld [vmem:[%s1305 + $0x1538] sm:%s1298]
                %1502 = vst [vmem:[%s1306 + $0x610] sm:%s1298] %v1501
                %v1503 = vld [vmem:[%s1305 + $0x1570] sm:%s1298]
                %1504 = vst [vmem:[%s1306 + $0x620] sm:%s1298] %v1503
                %v1505 = vld [vmem:[%s1305 + $0x15a8] sm:%s1298]
                %1506 = vst [vmem:[%s1306 + $0x630] sm:%s1298] %v1505
                %v1507 = vld [vmem:[%s1305 + $0x15e0] sm:%s1298]
                %1508 = vst [vmem:[%s1306 + $0x640] sm:%s1298] %v1507
                %v1509 = vld [vmem:[%s1305 + $0x1618] sm:%s1298]
                %1510 = vst [vmem:[%s1306 + $0x650] sm:%s1298] %v1509
                %v1511 = vld [vmem:[%s1305 + $0x1650] sm:%s1298]
                %1512 = vst [vmem:[%s1306 + $0x660] sm:%s1298] %v1511
                %v1513 = vld [vmem:[%s1305 + $0x1688] sm:%s1298]
                %1514 = vst [vmem:[%s1306 + $0x670] sm:%s1298] %v1513
                %v1515 = vld [vmem:[%s1305 + $0x16c0] sm:%s1298]
                %1516 = vst [vmem:[%s1306 + $0x680] sm:%s1298] %v1515
                %v1517 = vld [vmem:[%s1305 + $0x16f8] sm:%s1298]
                %1518 = vst [vmem:[%s1306 + $0x690] sm:%s1298] %v1517
                %v1519 = vld [vmem:[%s1305 + $0x1730] sm:%s1298]
                %1520 = vst [vmem:[%s1306 + $0x6a0] sm:%s1298] %v1519
                %v1521 = vld [vmem:[%s1305 + $0x1768] sm:%s1298]
                %1522 = vst [vmem:[%s1306 + $0x6b0] sm:%s1298] %v1521
                %v1523 = vld [vmem:[%s1305 + $0x17a0] sm:%s1298]
                %1524 = vst [vmem:[%s1306 + $0x6c0] sm:%s1298] %v1523
                %v1525 = vld [vmem:[%s1305 + $0x17d8] sm:%s1298]
                %1526 = vst [vmem:[%s1306 + $0x6d0] sm:%s1298] %v1525
                %v1527 = vld [vmem:[%s1305 + $0x1810] sm:%s1298]
                %1528 = vst [vmem:[%s1306 + $0x6e0] sm:%s1298] %v1527
                %v1529 = vld [vmem:[%s1305 + $0x1848] sm:%s1298]
                %1530 = vst [vmem:[%s1306 + $0x6f0] sm:%s1298] %v1529
                %v1531 = vld [vmem:[%s1305 + $0x1880] sm:%s1298]
                %1532 = vst [vmem:[%s1306 + $0x700] sm:%s1298] %v1531
                %v1533 = vld [vmem:[%s1305 + $0x18b8] sm:%s1298]
                %1534 = vst [vmem:[%s1306 + $0x710] sm:%s1298] %v1533
                %v1535 = vld [vmem:[%s1305 + $0x18f0] sm:%s1298]
                %1536 = vst [vmem:[%s1306 + $0x720] sm:%s1298] %v1535
                %v1537 = vld [vmem:[%s1305 + $0x1928] sm:%s1298]
                %1538 = vst [vmem:[%s1306 + $0x730] sm:%s1298] %v1537
                %v1539 = vld [vmem:[%s1305 + $0x1960] sm:%s1298]
                %1540 = vst [vmem:[%s1306 + $0x740] sm:%s1298] %v1539
                %v1541 = vld [vmem:[%s1305 + $0x1998] sm:%s1298]
                %1542 = vst [vmem:[%s1306 + $0x750] sm:%s1298] %v1541
                %v1543 = vld [vmem:[%s1305 + $0x19d0] sm:%s1298]
                %1544 = vst [vmem:[%s1306 + $0x760] sm:%s1298] %v1543
                %v1545 = vld [vmem:[%s1305 + $0x1a08] sm:%s1298]
                %1546 = vst [vmem:[%s1306 + $0x770] sm:%s1298] %v1545
                %v1547 = vld [vmem:[%s1305 + $0x1a40] sm:%s1298]
                %1548 = vst [vmem:[%s1306 + $0x780] sm:%s1298] %v1547
                %v1549 = vld [vmem:[%s1305 + $0x1a78] sm:%s1298]
                %1550 = vst [vmem:[%s1306 + $0x790] sm:%s1298] %v1549
                %v1551 = vld [vmem:[%s1305 + $0x1ab0] sm:%s1298]
                %1552 = vst [vmem:[%s1306 + $0x7a0] sm:%s1298] %v1551
                %v1553 = vld [vmem:[%s1305 + $0x1ae8] sm:%s1298]
                %1554 = vst [vmem:[%s1306 + $0x7b0] sm:%s1298] %v1553
                %v1555 = vld [vmem:[%s1305 + $0x1b20] sm:%s1298]
                %1556 = vst [vmem:[%s1306 + $0x7c0] sm:%s1298] %v1555
                %v1557 = vld [vmem:[%s1305 + $0x1b58] sm:%s1298]
                %1558 = vst [vmem:[%s1306 + $0x7d0] sm:%s1298] %v1557
                %v1559 = vld [vmem:[%s1305 + $0x1b90] sm:%s1298]
                %1560 = vst [vmem:[%s1306 + $0x7e0] sm:%s1298] %v1559
                %v1561 = vld [vmem:[%s1305 + $0x1bc8] sm:%s1298]
                %1562 = vst [vmem:[%s1306 + $0x7f0] sm:%s1298] %v1561
              $region93: #{tpu_custom_call.1} parent=87 // loop_footer
                %s1304 = sadd.s32 1, %s1300
              $region94: #{tpu_custom_call.1} parent=87 // loop_footer_branch
                %1299 = sbr.rel target = $region90
              $region95: #{tpu_custom_call.1} parent=87 // loop_exit
                _
            $region88: #{tpu_custom_call.1} parent=79 // pred_fallthru
              _
          $region80: #{tpu_custom_call.1} parent=75 // pred_fallthru
            _
          %2391 = vnop
        $region76: #{tpu_custom_call.1} parent=19 // pred_fallthru
          _
      $region20: #{tpu_custom_call.1} parent=5 // pred_fallthru
        _
      %p2392 = scmp.le.s32.totalorder 1, %s9
      %p2393 = scmp.lt.s32.totalorder %s9, 5
      %p2394 = pnand %p2392, %p2393
      %p2395 = pneg %p2394
      // Predicated region
      $region125: #{tpu_custom_call.1} parent=5 // pred_check
        _
      $region126: #{tpu_custom_call.1} parent=5 // pred_check_branch
        %2397 = sbr.rel (%p2394) target = $region128
      $region127: #{tpu_custom_call.1} parent=5 // pred_region
        %s2398 = ssub.s32 %s9, 1
        %s2399 = sand.u32 %s36, 1
        %s2400 = sand.u32 %s36, 1
        %s2401 = smul.addr %s2400, 2048
        %s2402 = scalar_lea.vmem [#allocation2], %s2401
        // Predicated region
        $region129: #{tpu_custom_call.1} parent=127 // pred_check
          %p2403 = pneg %p49
        $region130: #{tpu_custom_call.1} parent=127 // pred_check_branch
          %2405 = sbr.rel (%p2403) target = $region132
        $region131: #{tpu_custom_call.1} parent=127 // pred_region
          _
        $region132: #{tpu_custom_call.1} parent=127 // pred_fallthru
          _
        %s2406 = sand.u32 %s64, 1
        %s2407 = sand.u32 %s64, 1
        %s2408 = smul.addr %s2407, 2048
        %s2409 = scalar_lea.vmem [#allocation3], %s2408
        // Predicated region
        $region133: #{tpu_custom_call.1} parent=127 // pred_check
          %p2410 = pneg %p77
        $region134: #{tpu_custom_call.1} parent=127 // pred_check_branch
          %2412 = sbr.rel (%p2410) target = $region136
        $region135: #{tpu_custom_call.1} parent=127 // pred_region
          _
        $region136: #{tpu_custom_call.1} parent=127 // pred_fallthru
          _
        %s2413 = sand.u32 %s36, 1
        %s2414 = sand.u32 %s36, 1
        %s2415 = smul.addr %s2414, 2048
        %s2416 = scalar_lea.vmem [#allocation2], %s2415
        %p2417 = pneg %p49
        %p2418 = pneg %p46
        %s2419 = sand.u32 %s64, 1
        %s2420 = sand.u32 %s64, 1
        %s2421 = smul.addr %s2420, 2048
        %s2422 = scalar_lea.vmem [#allocation3], %s2421
        %p2423 = pneg %p77
        %p2424 = pneg %p74
        %p2425 = pneg %p98
        %p2426 = pneg %p95
        %p2427 = pneg %p126
        %p2428 = pneg %p123
        %s2429 = sand.u32 %s113, 1
        %s2430 = sand.u32 %s113, 1
        %s2431 = smul.addr %s2430, 512
        %s2432 = scalar_lea.vmem [#allocation4], %s2431
        %s2433 = smul.u32 2, %s19
        %s2434 = ssub.s32 7, %s2433
        %p2435 = scmp.lt.s32.totalorder %s2434, 2
        %s2436 = scalar_select %p2435, %s2434, 2
        %s2437 = smul.u32 16384, %s2436
        %s2438 = smul.u32 2, %s19
        %s2439 = ssub.s32 7, %s2438
        %p2440 = scmp.lt.s32.totalorder %s2439, 2
        %s2441 = scalar_select %p2440, %s2439, 2
        %s2442 = smul.u32 16384, %s2441
        %s2443 = smul.u32 2, %s19
        %s2444 = ssub.s32 7, %s2443
        %p2445 = scmp.lt.s32.totalorder %s2444, 2
        %s2446 = scalar_select %p2445, %s2444, 2
        %s2447 = smul.u32 4096, %s2446
        %v2448 = vld [vmem:[%s2402] sm:$0xff]
        %v2449 = vld [vmem:[%s2402 + $0x8] sm:$0xff]
        %v2450 = vld [vmem:[%s2402 + $0x10] sm:$0xff]
        %v2451 = vld [vmem:[%s2402 + $0x18] sm:$0xff]
        %v2452 = vld [vmem:[%s2402 + $0x20] sm:$0xff]
        %v2453 = vld [vmem:[%s2402 + $0x28] sm:$0xff]
        %v2454 = vld [vmem:[%s2402 + $0x30] sm:$0xff]
        %v2455 = vld [vmem:[%s2402 + $0x38] sm:$0xff]
        %v2456 = vld [vmem:[%s2402 + $0x40] sm:$0xff]
        %v2457 = vld [vmem:[%s2402 + $0x48] sm:$0xff]
        %v2458 = vld [vmem:[%s2402 + $0x50] sm:$0xff]
        %v2459 = vld [vmem:[%s2402 + $0x58] sm:$0xff]
        %v2460 = vld [vmem:[%s2402 + $0x60] sm:$0xff]
        %v2461 = vld [vmem:[%s2402 + $0x68] sm:$0xff]
        %v2462 = vld [vmem:[%s2402 + $0x70] sm:$0xff]
        %v2463 = vld [vmem:[%s2402 + $0x78] sm:$0xff]
        %v2464 = vld [vmem:[%s2402 + $0x80] sm:$0xff]
        %v2465 = vld [vmem:[%s2402 + $0x88] sm:$0xff]
        %v2466 = vld [vmem:[%s2402 + $0x90] sm:$0xff]
        %v2467 = vld [vmem:[%s2402 + $0x98] sm:$0xff]
        %v2468 = vld [vmem:[%s2402 + $0xa0] sm:$0xff]
        %v2469 = vld [vmem:[%s2402 + $0xa8] sm:$0xff]
        %v2470 = vld [vmem:[%s2402 + $0xb0] sm:$0xff]
        %v2471 = vld [vmem:[%s2402 + $0xb8] sm:$0xff]
        %v2472 = vld [vmem:[%s2402 + $0xc0] sm:$0xff]
        %v2473 = vld [vmem:[%s2402 + $0xc8] sm:$0xff]
        %v2474 = vld [vmem:[%s2402 + $0xd0] sm:$0xff]
        %v2475 = vld [vmem:[%s2402 + $0xd8] sm:$0xff]
        %v2476 = vld [vmem:[%s2402 + $0xe0] sm:$0xff]
        %v2477 = vld [vmem:[%s2402 + $0xe8] sm:$0xff]
        %v2478 = vld [vmem:[%s2402 + $0xf0] sm:$0xff]
        %v2479 = vld [vmem:[%s2402 + $0xf8] sm:$0xff]
        %v2480 = vld [vmem:[%s2402 + $0x100] sm:$0xff]
        %v2481 = vld [vmem:[%s2402 + $0x108] sm:$0xff]
        %v2482 = vld [vmem:[%s2402 + $0x110] sm:$0xff]
        %v2483 = vld [vmem:[%s2402 + $0x118] sm:$0xff]
        %v2484 = vld [vmem:[%s2402 + $0x120] sm:$0xff]
        %v2485 = vld [vmem:[%s2402 + $0x128] sm:$0xff]
        %v2486 = vld [vmem:[%s2402 + $0x130] sm:$0xff]
        %v2487 = vld [vmem:[%s2402 + $0x138] sm:$0xff]
        %v2488 = vld [vmem:[%s2402 + $0x140] sm:$0xff]
        %v2489 = vld [vmem:[%s2402 + $0x148] sm:$0xff]
        %v2490 = vld [vmem:[%s2402 + $0x150] sm:$0xff]
        %v2491 = vld [vmem:[%s2402 + $0x158] sm:$0xff]
        %v2492 = vld [vmem:[%s2402 + $0x160] sm:$0xff]
        %v2493 = vld [vmem:[%s2402 + $0x168] sm:$0xff]
        %v2494 = vld [vmem:[%s2402 + $0x170] sm:$0xff]
        %v2495 = vld [vmem:[%s2402 + $0x178] sm:$0xff]
        %v2496 = vld [vmem:[%s2402 + $0x180] sm:$0xff]
        %v2497 = vld [vmem:[%s2402 + $0x188] sm:$0xff]
        %v2498 = vld [vmem:[%s2402 + $0x190] sm:$0xff]
        %v2499 = vld [vmem:[%s2402 + $0x198] sm:$0xff]
        %v2500 = vld [vmem:[%s2402 + $0x1a0] sm:$0xff]
        %v2501 = vld [vmem:[%s2402 + $0x1a8] sm:$0xff]
        %v2502 = vld [vmem:[%s2402 + $0x1b0] sm:$0xff]
        %v2503 = vld [vmem:[%s2402 + $0x1b8] sm:$0xff]
        %v2504 = vld [vmem:[%s2402 + $0x1c0] sm:$0xff]
        %v2505 = vld [vmem:[%s2402 + $0x1c8] sm:$0xff]
        %v2506 = vld [vmem:[%s2402 + $0x1d0] sm:$0xff]
        %v2507 = vld [vmem:[%s2402 + $0x1d8] sm:$0xff]
        %v2508 = vld [vmem:[%s2402 + $0x1e0] sm:$0xff]
        %v2509 = vld [vmem:[%s2402 + $0x1e8] sm:$0xff]
        %v2510 = vld [vmem:[%s2402 + $0x1f0] sm:$0xff]
        %v2511 = vld [vmem:[%s2402 + $0x1f8] sm:$0xff]
        %v2512 = vld [vmem:[%s2402 + $0x200] sm:$0xff]
        %v2513 = vld [vmem:[%s2402 + $0x208] sm:$0xff]
        %v2514 = vld [vmem:[%s2402 + $0x210] sm:$0xff]
        %v2515 = vld [vmem:[%s2402 + $0x218] sm:$0xff]
        %v2516 = vld [vmem:[%s2402 + $0x220] sm:$0xff]
        %v2517 = vld [vmem:[%s2402 + $0x228] sm:$0xff]
        %v2518 = vld [vmem:[%s2402 + $0x230] sm:$0xff]
        %v2519 = vld [vmem:[%s2402 + $0x238] sm:$0xff]
        %v2520 = vld [vmem:[%s2402 + $0x240] sm:$0xff]
        %v2521 = vld [vmem:[%s2402 + $0x248] sm:$0xff]
        %v2522 = vld [vmem:[%s2402 + $0x250] sm:$0xff]
        %v2523 = vld [vmem:[%s2402 + $0x258] sm:$0xff]
        %v2524 = vld [vmem:[%s2402 + $0x260] sm:$0xff]
        %v2525 = vld [vmem:[%s2402 + $0x268] sm:$0xff]
        %v2526 = vld [vmem:[%s2402 + $0x270] sm:$0xff]
        %v2527 = vld [vmem:[%s2402 + $0x278] sm:$0xff]
        %v2528 = vld [vmem:[%s2402 + $0x280] sm:$0xff]
        %v2529 = vld [vmem:[%s2402 + $0x288] sm:$0xff]
        %v2530 = vld [vmem:[%s2402 + $0x290] sm:$0xff]
        %v2531 = vld [vmem:[%s2402 + $0x298] sm:$0xff]
        %v2532 = vld [vmem:[%s2402 + $0x2a0] sm:$0xff]
        %v2533 = vld [vmem:[%s2402 + $0x2a8] sm:$0xff]
        %v2534 = vld [vmem:[%s2402 + $0x2b0] sm:$0xff]
        %v2535 = vld [vmem:[%s2402 + $0x2b8] sm:$0xff]
        %v2536 = vld [vmem:[%s2402 + $0x2c0] sm:$0xff]
        %v2537 = vld [vmem:[%s2402 + $0x2c8] sm:$0xff]
        %v2538 = vld [vmem:[%s2402 + $0x2d0] sm:$0xff]
        %v2539 = vld [vmem:[%s2402 + $0x2d8] sm:$0xff]
        %v2540 = vld [vmem:[%s2402 + $0x2e0] sm:$0xff]
        %v2541 = vld [vmem:[%s2402 + $0x2e8] sm:$0xff]
        %v2542 = vld [vmem:[%s2402 + $0x2f0] sm:$0xff]
        %v2543 = vld [vmem:[%s2402 + $0x2f8] sm:$0xff]
        %v2544 = vld [vmem:[%s2402 + $0x300] sm:$0xff]
        %v2545 = vld [vmem:[%s2402 + $0x308] sm:$0xff]
        %v2546 = vld [vmem:[%s2402 + $0x310] sm:$0xff]
        %v2547 = vld [vmem:[%s2402 + $0x318] sm:$0xff]
        %v2548 = vld [vmem:[%s2402 + $0x320] sm:$0xff]
        %v2549 = vld [vmem:[%s2402 + $0x328] sm:$0xff]
        %v2550 = vld [vmem:[%s2402 + $0x330] sm:$0xff]
        %v2551 = vld [vmem:[%s2402 + $0x338] sm:$0xff]
        %v2552 = vld [vmem:[%s2402 + $0x340] sm:$0xff]
        %v2553 = vld [vmem:[%s2402 + $0x348] sm:$0xff]
        %v2554 = vld [vmem:[%s2402 + $0x350] sm:$0xff]
        %v2555 = vld [vmem:[%s2402 + $0x358] sm:$0xff]
        %v2556 = vld [vmem:[%s2402 + $0x360] sm:$0xff]
        %v2557 = vld [vmem:[%s2402 + $0x368] sm:$0xff]
        %v2558 = vld [vmem:[%s2402 + $0x370] sm:$0xff]
        %v2559 = vld [vmem:[%s2402 + $0x378] sm:$0xff]
        %v2560 = vld [vmem:[%s2402 + $0x380] sm:$0xff]
        %v2561 = vld [vmem:[%s2402 + $0x388] sm:$0xff]
        %v2562 = vld [vmem:[%s2402 + $0x390] sm:$0xff]
        %v2563 = vld [vmem:[%s2402 + $0x398] sm:$0xff]
        %v2564 = vld [vmem:[%s2402 + $0x3a0] sm:$0xff]
        %v2565 = vld [vmem:[%s2402 + $0x3a8] sm:$0xff]
        %v2566 = vld [vmem:[%s2402 + $0x3b0] sm:$0xff]
        %v2567 = vld [vmem:[%s2402 + $0x3b8] sm:$0xff]
        %v2568 = vld [vmem:[%s2402 + $0x3c0] sm:$0xff]
        %v2569 = vld [vmem:[%s2402 + $0x3c8] sm:$0xff]
        %v2570 = vld [vmem:[%s2402 + $0x3d0] sm:$0xff]
        %v2571 = vld [vmem:[%s2402 + $0x3d8] sm:$0xff]
        %v2572 = vld [vmem:[%s2402 + $0x3e0] sm:$0xff]
        %v2573 = vld [vmem:[%s2402 + $0x3e8] sm:$0xff]
        %v2574 = vld [vmem:[%s2402 + $0x3f0] sm:$0xff]
        %v2575 = vld [vmem:[%s2402 + $0x3f8] sm:$0xff]
        %v2576 = vld [vmem:[%s2402 + $0x400] sm:$0xff]
        %v2577 = vld [vmem:[%s2402 + $0x408] sm:$0xff]
        %v2578 = vld [vmem:[%s2402 + $0x410] sm:$0xff]
        %v2579 = vld [vmem:[%s2402 + $0x418] sm:$0xff]
        %v2580 = vld [vmem:[%s2402 + $0x420] sm:$0xff]
        %v2581 = vld [vmem:[%s2402 + $0x428] sm:$0xff]
        %v2582 = vld [vmem:[%s2402 + $0x430] sm:$0xff]
        %v2583 = vld [vmem:[%s2402 + $0x438] sm:$0xff]
        %v2584 = vld [vmem:[%s2402 + $0x440] sm:$0xff]
        %v2585 = vld [vmem:[%s2402 + $0x448] sm:$0xff]
        %v2586 = vld [vmem:[%s2402 + $0x450] sm:$0xff]
        %v2587 = vld [vmem:[%s2402 + $0x458] sm:$0xff]
        %v2588 = vld [vmem:[%s2402 + $0x460] sm:$0xff]
        %v2589 = vld [vmem:[%s2402 + $0x468] sm:$0xff]
        %v2590 = vld [vmem:[%s2402 + $0x470] sm:$0xff]
        %v2591 = vld [vmem:[%s2402 + $0x478] sm:$0xff]
        %v2592 = vld [vmem:[%s2402 + $0x480] sm:$0xff]
        %v2593 = vld [vmem:[%s2402 + $0x488] sm:$0xff]
        %v2594 = vld [vmem:[%s2402 + $0x490] sm:$0xff]
        %v2595 = vld [vmem:[%s2402 + $0x498] sm:$0xff]
        %v2596 = vld [vmem:[%s2402 + $0x4a0] sm:$0xff]
        %v2597 = vld [vmem:[%s2402 + $0x4a8] sm:$0xff]
        %v2598 = vld [vmem:[%s2402 + $0x4b0] sm:$0xff]
        %v2599 = vld [vmem:[%s2402 + $0x4b8] sm:$0xff]
        %v2600 = vld [vmem:[%s2402 + $0x4c0] sm:$0xff]
        %v2601 = vld [vmem:[%s2402 + $0x4c8] sm:$0xff]
        %v2602 = vld [vmem:[%s2402 + $0x4d0] sm:$0xff]
        %v2603 = vld [vmem:[%s2402 + $0x4d8] sm:$0xff]
        %v2604 = vld [vmem:[%s2402 + $0x4e0] sm:$0xff]
        %v2605 = vld [vmem:[%s2402 + $0x4e8] sm:$0xff]
        %v2606 = vld [vmem:[%s2402 + $0x4f0] sm:$0xff]
        %v2607 = vld [vmem:[%s2402 + $0x4f8] sm:$0xff]
        %v2608 = vld [vmem:[%s2402 + $0x500] sm:$0xff]
        %v2609 = vld [vmem:[%s2402 + $0x508] sm:$0xff]
        %v2610 = vld [vmem:[%s2402 + $0x510] sm:$0xff]
        %v2611 = vld [vmem:[%s2402 + $0x518] sm:$0xff]
        %v2612 = vld [vmem:[%s2402 + $0x520] sm:$0xff]
        %v2613 = vld [vmem:[%s2402 + $0x528] sm:$0xff]
        %v2614 = vld [vmem:[%s2402 + $0x530] sm:$0xff]
        %v2615 = vld [vmem:[%s2402 + $0x538] sm:$0xff]
        %v2616 = vld [vmem:[%s2402 + $0x540] sm:$0xff]
        %v2617 = vld [vmem:[%s2402 + $0x548] sm:$0xff]
        %v2618 = vld [vmem:[%s2402 + $0x550] sm:$0xff]
        %v2619 = vld [vmem:[%s2402 + $0x558] sm:$0xff]
        %v2620 = vld [vmem:[%s2402 + $0x560] sm:$0xff]
        %v2621 = vld [vmem:[%s2402 + $0x568] sm:$0xff]
        %v2622 = vld [vmem:[%s2402 + $0x570] sm:$0xff]
        %v2623 = vld [vmem:[%s2402 + $0x578] sm:$0xff]
        %v2624 = vld [vmem:[%s2402 + $0x580] sm:$0xff]
        %v2625 = vld [vmem:[%s2402 + $0x588] sm:$0xff]
        %v2626 = vld [vmem:[%s2402 + $0x590] sm:$0xff]
        %v2627 = vld [vmem:[%s2402 + $0x598] sm:$0xff]
        %v2628 = vld [vmem:[%s2402 + $0x5a0] sm:$0xff]
        %v2629 = vld [vmem:[%s2402 + $0x5a8] sm:$0xff]
        %v2630 = vld [vmem:[%s2402 + $0x5b0] sm:$0xff]
        %v2631 = vld [vmem:[%s2402 + $0x5b8] sm:$0xff]
        %v2632 = vld [vmem:[%s2402 + $0x5c0] sm:$0xff]
        %v2633 = vld [vmem:[%s2402 + $0x5c8] sm:$0xff]
        %v2634 = vld [vmem:[%s2402 + $0x5d0] sm:$0xff]
        %v2635 = vld [vmem:[%s2402 + $0x5d8] sm:$0xff]
        %v2636 = vld [vmem:[%s2402 + $0x5e0] sm:$0xff]
        %v2637 = vld [vmem:[%s2402 + $0x5e8] sm:$0xff]
        %v2638 = vld [vmem:[%s2402 + $0x5f0] sm:$0xff]
        %v2639 = vld [vmem:[%s2402 + $0x5f8] sm:$0xff]
        %v2640 = vld [vmem:[%s2402 + $0x600] sm:$0xff]
        %v2641 = vld [vmem:[%s2402 + $0x608] sm:$0xff]
        %v2642 = vld [vmem:[%s2402 + $0x610] sm:$0xff]
        %v2643 = vld [vmem:[%s2402 + $0x618] sm:$0xff]
        %v2644 = vld [vmem:[%s2402 + $0x620] sm:$0xff]
        %v2645 = vld [vmem:[%s2402 + $0x628] sm:$0xff]
        %v2646 = vld [vmem:[%s2402 + $0x630] sm:$0xff]
        %v2647 = vld [vmem:[%s2402 + $0x638] sm:$0xff]
        %v2648 = vld [vmem:[%s2402 + $0x640] sm:$0xff]
        %v2649 = vld [vmem:[%s2402 + $0x648] sm:$0xff]
        %v2650 = vld [vmem:[%s2402 + $0x650] sm:$0xff]
        %v2651 = vld [vmem:[%s2402 + $0x658] sm:$0xff]
        %v2652 = vld [vmem:[%s2402 + $0x660] sm:$0xff]
        %v2653 = vld [vmem:[%s2402 + $0x668] sm:$0xff]
        %v2654 = vld [vmem:[%s2402 + $0x670] sm:$0xff]
        %v2655 = vld [vmem:[%s2402 + $0x678] sm:$0xff]
        %v2656 = vld [vmem:[%s2402 + $0x680] sm:$0xff]
        %v2657 = vld [vmem:[%s2402 + $0x688] sm:$0xff]
        %v2658 = vld [vmem:[%s2402 + $0x690] sm:$0xff]
        %v2659 = vld [vmem:[%s2402 + $0x698] sm:$0xff]
        %v2660 = vld [vmem:[%s2402 + $0x6a0] sm:$0xff]
        %v2661 = vld [vmem:[%s2402 + $0x6a8] sm:$0xff]
        %v2662 = vld [vmem:[%s2402 + $0x6b0] sm:$0xff]
        %v2663 = vld [vmem:[%s2402 + $0x6b8] sm:$0xff]
        %v2664 = vld [vmem:[%s2402 + $0x6c0] sm:$0xff]
        %v2665 = vld [vmem:[%s2402 + $0x6c8] sm:$0xff]
        %v2666 = vld [vmem:[%s2402 + $0x6d0] sm:$0xff]
        %v2667 = vld [vmem:[%s2402 + $0x6d8] sm:$0xff]
        %v2668 = vld [vmem:[%s2402 + $0x6e0] sm:$0xff]
        %v2669 = vld [vmem:[%s2402 + $0x6e8] sm:$0xff]
        %v2670 = vld [vmem:[%s2402 + $0x6f0] sm:$0xff]
        %v2671 = vld [vmem:[%s2402 + $0x6f8] sm:$0xff]
        %v2672 = vld [vmem:[%s2402 + $0x700] sm:$0xff]
        %v2673 = vld [vmem:[%s2402 + $0x708] sm:$0xff]
        %v2674 = vld [vmem:[%s2402 + $0x710] sm:$0xff]
        %v2675 = vld [vmem:[%s2402 + $0x718] sm:$0xff]
        %v2676 = vld [vmem:[%s2402 + $0x720] sm:$0xff]
        %v2677 = vld [vmem:[%s2402 + $0x728] sm:$0xff]
        %v2678 = vld [vmem:[%s2402 + $0x730] sm:$0xff]
        %v2679 = vld [vmem:[%s2402 + $0x738] sm:$0xff]
        %v2680 = vld [vmem:[%s2402 + $0x740] sm:$0xff]
        %v2681 = vld [vmem:[%s2402 + $0x748] sm:$0xff]
        %v2682 = vld [vmem:[%s2402 + $0x750] sm:$0xff]
        %v2683 = vld [vmem:[%s2402 + $0x758] sm:$0xff]
        %v2684 = vld [vmem:[%s2402 + $0x760] sm:$0xff]
        %v2685 = vld [vmem:[%s2402 + $0x768] sm:$0xff]
        %v2686 = vld [vmem:[%s2402 + $0x770] sm:$0xff]
        %v2687 = vld [vmem:[%s2402 + $0x778] sm:$0xff]
        %v2688 = vld [vmem:[%s2402 + $0x780] sm:$0xff]
        %v2689 = vld [vmem:[%s2402 + $0x788] sm:$0xff]
        %v2690 = vld [vmem:[%s2402 + $0x790] sm:$0xff]
        %v2691 = vld [vmem:[%s2402 + $0x798] sm:$0xff]
        %v2692 = vld [vmem:[%s2402 + $0x7a0] sm:$0xff]
        %v2693 = vld [vmem:[%s2402 + $0x7a8] sm:$0xff]
        %v2694 = vld [vmem:[%s2402 + $0x7b0] sm:$0xff]
        %v2695 = vld [vmem:[%s2402 + $0x7b8] sm:$0xff]
        %v2696 = vld [vmem:[%s2402 + $0x7c0] sm:$0xff]
        %v2697 = vld [vmem:[%s2402 + $0x7c8] sm:$0xff]
        %v2698 = vld [vmem:[%s2402 + $0x7d0] sm:$0xff]
        %v2699 = vld [vmem:[%s2402 + $0x7d8] sm:$0xff]
        %v2700 = vld [vmem:[%s2402 + $0x7e0] sm:$0xff]
        %v2701 = vld [vmem:[%s2402 + $0x7e8] sm:$0xff]
        %v2702 = vld [vmem:[%s2402 + $0x7f0] sm:$0xff]
        %v2703 = vld [vmem:[%s2402 + $0x7f8] sm:$0xff]
        %v2704 = vld [vmem:[%s2409] sm:$0xff]
        %v2705 = vld [vmem:[%s2409 + $0x8] sm:$0xff]
        %v2706 = vld [vmem:[%s2409 + $0x10] sm:$0xff]
        %v2707 = vld [vmem:[%s2409 + $0x18] sm:$0xff]
        %v2708 = vld [vmem:[%s2409 + $0x20] sm:$0xff]
        %v2709 = vld [vmem:[%s2409 + $0x28] sm:$0xff]
        %v2710 = vld [vmem:[%s2409 + $0x30] sm:$0xff]
        %v2711 = vld [vmem:[%s2409 + $0x38] sm:$0xff]
        %v2712 = vld [vmem:[%s2409 + $0x40] sm:$0xff]
        %v2713 = vld [vmem:[%s2409 + $0x48] sm:$0xff]
        %v2714 = vld [vmem:[%s2409 + $0x50] sm:$0xff]
        %v2715 = vld [vmem:[%s2409 + $0x58] sm:$0xff]
        %v2716 = vld [vmem:[%s2409 + $0x60] sm:$0xff]
        %v2717 = vld [vmem:[%s2409 + $0x68] sm:$0xff]
        %v2718 = vld [vmem:[%s2409 + $0x70] sm:$0xff]
        %v2719 = vld [vmem:[%s2409 + $0x78] sm:$0xff]
        %v2720 = vld [vmem:[%s2409 + $0x80] sm:$0xff]
        %v2721 = vld [vmem:[%s2409 + $0x88] sm:$0xff]
        %v2722 = vld [vmem:[%s2409 + $0x90] sm:$0xff]
        %v2723 = vld [vmem:[%s2409 + $0x98] sm:$0xff]
        %v2724 = vld [vmem:[%s2409 + $0xa0] sm:$0xff]
        %v2725 = vld [vmem:[%s2409 + $0xa8] sm:$0xff]
        %v2726 = vld [vmem:[%s2409 + $0xb0] sm:$0xff]
        %v2727 = vld [vmem:[%s2409 + $0xb8] sm:$0xff]
        %v2728 = vld [vmem:[%s2409 + $0xc0] sm:$0xff]
        %v2729 = vld [vmem:[%s2409 + $0xc8] sm:$0xff]
        %v2730 = vld [vmem:[%s2409 + $0xd0] sm:$0xff]
        %v2731 = vld [vmem:[%s2409 + $0xd8] sm:$0xff]
        %v2732 = vld [vmem:[%s2409 + $0xe0] sm:$0xff]
        %v2733 = vld [vmem:[%s2409 + $0xe8] sm:$0xff]
        %v2734 = vld [vmem:[%s2409 + $0xf0] sm:$0xff]
        %v2735 = vld [vmem:[%s2409 + $0xf8] sm:$0xff]
        %v2736 = vld [vmem:[%s2409 + $0x100] sm:$0xff]
        %v2737 = vld [vmem:[%s2409 + $0x108] sm:$0xff]
        %v2738 = vld [vmem:[%s2409 + $0x110] sm:$0xff]
        %v2739 = vld [vmem:[%s2409 + $0x118] sm:$0xff]
        %v2740 = vld [vmem:[%s2409 + $0x120] sm:$0xff]
        %v2741 = vld [vmem:[%s2409 + $0x128] sm:$0xff]
        %v2742 = vld [vmem:[%s2409 + $0x130] sm:$0xff]
        %v2743 = vld [vmem:[%s2409 + $0x138] sm:$0xff]
        %v2744 = vld [vmem:[%s2409 + $0x140] sm:$0xff]
        %v2745 = vld [vmem:[%s2409 + $0x148] sm:$0xff]
        %v2746 = vld [vmem:[%s2409 + $0x150] sm:$0xff]
        %v2747 = vld [vmem:[%s2409 + $0x158] sm:$0xff]
        %v2748 = vld [vmem:[%s2409 + $0x160] sm:$0xff]
        %v2749 = vld [vmem:[%s2409 + $0x168] sm:$0xff]
        %v2750 = vld [vmem:[%s2409 + $0x170] sm:$0xff]
        %v2751 = vld [vmem:[%s2409 + $0x178] sm:$0xff]
        %v2752 = vld [vmem:[%s2409 + $0x180] sm:$0xff]
        %v2753 = vld [vmem:[%s2409 + $0x188] sm:$0xff]
        %v2754 = vld [vmem:[%s2409 + $0x190] sm:$0xff]
        %v2755 = vld [vmem:[%s2409 + $0x198] sm:$0xff]
        %v2756 = vld [vmem:[%s2409 + $0x1a0] sm:$0xff]
        %v2757 = vld [vmem:[%s2409 + $0x1a8] sm:$0xff]
        %v2758 = vld [vmem:[%s2409 + $0x1b0] sm:$0xff]
        %v2759 = vld [vmem:[%s2409 + $0x1b8] sm:$0xff]
        %v2760 = vld [vmem:[%s2409 + $0x1c0] sm:$0xff]
        %v2761 = vld [vmem:[%s2409 + $0x1c8] sm:$0xff]
        %v2762 = vld [vmem:[%s2409 + $0x1d0] sm:$0xff]
        %v2763 = vld [vmem:[%s2409 + $0x1d8] sm:$0xff]
        %v2764 = vld [vmem:[%s2409 + $0x1e0] sm:$0xff]
        %v2765 = vld [vmem:[%s2409 + $0x1e8] sm:$0xff]
        %v2766 = vld [vmem:[%s2409 + $0x1f0] sm:$0xff]
        %v2767 = vld [vmem:[%s2409 + $0x1f8] sm:$0xff]
        %v2768 = vld [vmem:[%s2409 + $0x200] sm:$0xff]
        %v2769 = vld [vmem:[%s2409 + $0x208] sm:$0xff]
        %v2770 = vld [vmem:[%s2409 + $0x210] sm:$0xff]
        %v2771 = vld [vmem:[%s2409 + $0x218] sm:$0xff]
        %v2772 = vld [vmem:[%s2409 + $0x220] sm:$0xff]
        %v2773 = vld [vmem:[%s2409 + $0x228] sm:$0xff]
        %v2774 = vld [vmem:[%s2409 + $0x230] sm:$0xff]
        %v2775 = vld [vmem:[%s2409 + $0x238] sm:$0xff]
        %v2776 = vld [vmem:[%s2409 + $0x240] sm:$0xff]
        %v2777 = vld [vmem:[%s2409 + $0x248] sm:$0xff]
        %v2778 = vld [vmem:[%s2409 + $0x250] sm:$0xff]
        %v2779 = vld [vmem:[%s2409 + $0x258] sm:$0xff]
        %v2780 = vld [vmem:[%s2409 + $0x260] sm:$0xff]
        %v2781 = vld [vmem:[%s2409 + $0x268] sm:$0xff]
        %v2782 = vld [vmem:[%s2409 + $0x270] sm:$0xff]
        %v2783 = vld [vmem:[%s2409 + $0x278] sm:$0xff]
        %v2784 = vld [vmem:[%s2409 + $0x280] sm:$0xff]
        %v2785 = vld [vmem:[%s2409 + $0x288] sm:$0xff]
        %v2786 = vld [vmem:[%s2409 + $0x290] sm:$0xff]
        %v2787 = vld [vmem:[%s2409 + $0x298] sm:$0xff]
        %v2788 = vld [vmem:[%s2409 + $0x2a0] sm:$0xff]
        %v2789 = vld [vmem:[%s2409 + $0x2a8] sm:$0xff]
        %v2790 = vld [vmem:[%s2409 + $0x2b0] sm:$0xff]
        %v2791 = vld [vmem:[%s2409 + $0x2b8] sm:$0xff]
        %v2792 = vld [vmem:[%s2409 + $0x2c0] sm:$0xff]
        %v2793 = vld [vmem:[%s2409 + $0x2c8] sm:$0xff]
        %v2794 = vld [vmem:[%s2409 + $0x2d0] sm:$0xff]
        %v2795 = vld [vmem:[%s2409 + $0x2d8] sm:$0xff]
        %v2796 = vld [vmem:[%s2409 + $0x2e0] sm:$0xff]
        %v2797 = vld [vmem:[%s2409 + $0x2e8] sm:$0xff]
        %v2798 = vld [vmem:[%s2409 + $0x2f0] sm:$0xff]
        %v2799 = vld [vmem:[%s2409 + $0x2f8] sm:$0xff]
        %v2800 = vld [vmem:[%s2409 + $0x300] sm:$0xff]
        %v2801 = vld [vmem:[%s2409 + $0x308] sm:$0xff]
        %v2802 = vld [vmem:[%s2409 + $0x310] sm:$0xff]
        %v2803 = vld [vmem:[%s2409 + $0x318] sm:$0xff]
        %v2804 = vld [vmem:[%s2409 + $0x320] sm:$0xff]
        %v2805 = vld [vmem:[%s2409 + $0x328] sm:$0xff]
        %v2806 = vld [vmem:[%s2409 + $0x330] sm:$0xff]
        %v2807 = vld [vmem:[%s2409 + $0x338] sm:$0xff]
        %v2808 = vld [vmem:[%s2409 + $0x340] sm:$0xff]
        %v2809 = vld [vmem:[%s2409 + $0x348] sm:$0xff]
        %v2810 = vld [vmem:[%s2409 + $0x350] sm:$0xff]
        %v2811 = vld [vmem:[%s2409 + $0x358] sm:$0xff]
        %v2812 = vld [vmem:[%s2409 + $0x360] sm:$0xff]
        %v2813 = vld [vmem:[%s2409 + $0x368] sm:$0xff]
        %v2814 = vld [vmem:[%s2409 + $0x370] sm:$0xff]
        %v2815 = vld [vmem:[%s2409 + $0x378] sm:$0xff]
        %v2816 = vld [vmem:[%s2409 + $0x380] sm:$0xff]
        %v2817 = vld [vmem:[%s2409 + $0x388] sm:$0xff]
        %v2818 = vld [vmem:[%s2409 + $0x390] sm:$0xff]
        %v2819 = vld [vmem:[%s2409 + $0x398] sm:$0xff]
        %v2820 = vld [vmem:[%s2409 + $0x3a0] sm:$0xff]
        %v2821 = vld [vmem:[%s2409 + $0x3a8] sm:$0xff]
        %v2822 = vld [vmem:[%s2409 + $0x3b0] sm:$0xff]
        %v2823 = vld [vmem:[%s2409 + $0x3b8] sm:$0xff]
        %v2824 = vld [vmem:[%s2409 + $0x3c0] sm:$0xff]
        %v2825 = vld [vmem:[%s2409 + $0x3c8] sm:$0xff]
        %v2826 = vld [vmem:[%s2409 + $0x3d0] sm:$0xff]
        %v2827 = vld [vmem:[%s2409 + $0x3d8] sm:$0xff]
        %v2828 = vld [vmem:[%s2409 + $0x3e0] sm:$0xff]
        %v2829 = vld [vmem:[%s2409 + $0x3e8] sm:$0xff]
        %v2830 = vld [vmem:[%s2409 + $0x3f0] sm:$0xff]
        %v2831 = vld [vmem:[%s2409 + $0x3f8] sm:$0xff]
        %v2832 = vld [vmem:[%s2409 + $0x400] sm:$0xff]
        %v2833 = vld [vmem:[%s2409 + $0x408] sm:$0xff]
        %v2834 = vld [vmem:[%s2409 + $0x410] sm:$0xff]
        %v2835 = vld [vmem:[%s2409 + $0x418] sm:$0xff]
        %v2836 = vld [vmem:[%s2409 + $0x420] sm:$0xff]
        %v2837 = vld [vmem:[%s2409 + $0x428] sm:$0xff]
        %v2838 = vld [vmem:[%s2409 + $0x430] sm:$0xff]
        %v2839 = vld [vmem:[%s2409 + $0x438] sm:$0xff]
        %v2840 = vld [vmem:[%s2409 + $0x440] sm:$0xff]
        %v2841 = vld [vmem:[%s2409 + $0x448] sm:$0xff]
        %v2842 = vld [vmem:[%s2409 + $0x450] sm:$0xff]
        %v2843 = vld [vmem:[%s2409 + $0x458] sm:$0xff]
        %v2844 = vld [vmem:[%s2409 + $0x460] sm:$0xff]
        %v2845 = vld [vmem:[%s2409 + $0x468] sm:$0xff]
        %v2846 = vld [vmem:[%s2409 + $0x470] sm:$0xff]
        %v2847 = vld [vmem:[%s2409 + $0x478] sm:$0xff]
        %v2848 = vld [vmem:[%s2409 + $0x480] sm:$0xff]
        %v2849 = vld [vmem:[%s2409 + $0x488] sm:$0xff]
        %v2850 = vld [vmem:[%s2409 + $0x490] sm:$0xff]
        %v2851 = vld [vmem:[%s2409 + $0x498] sm:$0xff]
        %v2852 = vld [vmem:[%s2409 + $0x4a0] sm:$0xff]
        %v2853 = vld [vmem:[%s2409 + $0x4a8] sm:$0xff]
        %v2854 = vld [vmem:[%s2409 + $0x4b0] sm:$0xff]
        %v2855 = vld [vmem:[%s2409 + $0x4b8] sm:$0xff]
        %v2856 = vld [vmem:[%s2409 + $0x4c0] sm:$0xff]
        %v2857 = vld [vmem:[%s2409 + $0x4c8] sm:$0xff]
        %v2858 = vld [vmem:[%s2409 + $0x4d0] sm:$0xff]
        %v2859 = vld [vmem:[%s2409 + $0x4d8] sm:$0xff]
        %v2860 = vld [vmem:[%s2409 + $0x4e0] sm:$0xff]
        %v2861 = vld [vmem:[%s2409 + $0x4e8] sm:$0xff]
        %v2862 = vld [vmem:[%s2409 + $0x4f0] sm:$0xff]
        %v2863 = vld [vmem:[%s2409 + $0x4f8] sm:$0xff]
        %v2864 = vld [vmem:[%s2409 + $0x500] sm:$0xff]
        %v2865 = vld [vmem:[%s2409 + $0x508] sm:$0xff]
        %v2866 = vld [vmem:[%s2409 + $0x510] sm:$0xff]
        %v2867 = vld [vmem:[%s2409 + $0x518] sm:$0xff]
        %v2868 = vld [vmem:[%s2409 + $0x520] sm:$0xff]
        %v2869 = vld [vmem:[%s2409 + $0x528] sm:$0xff]
        %v2870 = vld [vmem:[%s2409 + $0x530] sm:$0xff]
        %v2871 = vld [vmem:[%s2409 + $0x538] sm:$0xff]
        %v2872 = vld [vmem:[%s2409 + $0x540] sm:$0xff]
        %v2873 = vld [vmem:[%s2409 + $0x548] sm:$0xff]
        %v2874 = vld [vmem:[%s2409 + $0x550] sm:$0xff]
        %v2875 = vld [vmem:[%s2409 + $0x558] sm:$0xff]
        %v2876 = vld [vmem:[%s2409 + $0x560] sm:$0xff]
        %v2877 = vld [vmem:[%s2409 + $0x568] sm:$0xff]
        %v2878 = vld [vmem:[%s2409 + $0x570] sm:$0xff]
        %v2879 = vld [vmem:[%s2409 + $0x578] sm:$0xff]
        %v2880 = vld [vmem:[%s2409 + $0x580] sm:$0xff]
        %v2881 = vld [vmem:[%s2409 + $0x588] sm:$0xff]
        %v2882 = vld [vmem:[%s2409 + $0x590] sm:$0xff]
        %v2883 = vld [vmem:[%s2409 + $0x598] sm:$0xff]
        %v2884 = vld [vmem:[%s2409 + $0x5a0] sm:$0xff]
        %v2885 = vld [vmem:[%s2409 + $0x5a8] sm:$0xff]
        %v2886 = vld [vmem:[%s2409 + $0x5b0] sm:$0xff]
        %v2887 = vld [vmem:[%s2409 + $0x5b8] sm:$0xff]
        %v2888 = vld [vmem:[%s2409 + $0x5c0] sm:$0xff]
        %v2889 = vld [vmem:[%s2409 + $0x5c8] sm:$0xff]
        %v2890 = vld [vmem:[%s2409 + $0x5d0] sm:$0xff]
        %v2891 = vld [vmem:[%s2409 + $0x5d8] sm:$0xff]
        %v2892 = vld [vmem:[%s2409 + $0x5e0] sm:$0xff]
        %v2893 = vld [vmem:[%s2409 + $0x5e8] sm:$0xff]
        %v2894 = vld [vmem:[%s2409 + $0x5f0] sm:$0xff]
        %v2895 = vld [vmem:[%s2409 + $0x5f8] sm:$0xff]
        %v2896 = vld [vmem:[%s2409 + $0x600] sm:$0xff]
        %v2897 = vld [vmem:[%s2409 + $0x608] sm:$0xff]
        %v2898 = vld [vmem:[%s2409 + $0x610] sm:$0xff]
        %v2899 = vld [vmem:[%s2409 + $0x618] sm:$0xff]
        %v2900 = vld [vmem:[%s2409 + $0x620] sm:$0xff]
        %v2901 = vld [vmem:[%s2409 + $0x628] sm:$0xff]
        %v2902 = vld [vmem:[%s2409 + $0x630] sm:$0xff]
        %v2903 = vld [vmem:[%s2409 + $0x638] sm:$0xff]
        %v2904 = vld [vmem:[%s2409 + $0x640] sm:$0xff]
        %v2905 = vld [vmem:[%s2409 + $0x648] sm:$0xff]
        %v2906 = vld [vmem:[%s2409 + $0x650] sm:$0xff]
        %v2907 = vld [vmem:[%s2409 + $0x658] sm:$0xff]
        %v2908 = vld [vmem:[%s2409 + $0x660] sm:$0xff]
        %v2909 = vld [vmem:[%s2409 + $0x668] sm:$0xff]
        %v2910 = vld [vmem:[%s2409 + $0x670] sm:$0xff]
        %v2911 = vld [vmem:[%s2409 + $0x678] sm:$0xff]
        %v2912 = vld [vmem:[%s2409 + $0x680] sm:$0xff]
        %v2913 = vld [vmem:[%s2409 + $0x688] sm:$0xff]
        %v2914 = vld [vmem:[%s2409 + $0x690] sm:$0xff]
        %v2915 = vld [vmem:[%s2409 + $0x698] sm:$0xff]
        %v2916 = vld [vmem:[%s2409 + $0x6a0] sm:$0xff]
        %v2917 = vld [vmem:[%s2409 + $0x6a8] sm:$0xff]
        %v2918 = vld [vmem:[%s2409 + $0x6b0] sm:$0xff]
        %v2919 = vld [vmem:[%s2409 + $0x6b8] sm:$0xff]
        %v2920 = vld [vmem:[%s2409 + $0x6c0] sm:$0xff]
        %v2921 = vld [vmem:[%s2409 + $0x6c8] sm:$0xff]
        %v2922 = vld [vmem:[%s2409 + $0x6d0] sm:$0xff]
        %v2923 = vld [vmem:[%s2409 + $0x6d8] sm:$0xff]
        %v2924 = vld [vmem:[%s2409 + $0x6e0] sm:$0xff]
        %v2925 = vld [vmem:[%s2409 + $0x6e8] sm:$0xff]
        %v2926 = vld [vmem:[%s2409 + $0x6f0] sm:$0xff]
        %v2927 = vld [vmem:[%s2409 + $0x6f8] sm:$0xff]
        %v2928 = vld [vmem:[%s2409 + $0x700] sm:$0xff]
        %v2929 = vld [vmem:[%s2409 + $0x708] sm:$0xff]
        %v2930 = vld [vmem:[%s2409 + $0x710] sm:$0xff]
        %v2931 = vld [vmem:[%s2409 + $0x718] sm:$0xff]
        %v2932 = vld [vmem:[%s2409 + $0x720] sm:$0xff]
        %v2933 = vld [vmem:[%s2409 + $0x728] sm:$0xff]
        %v2934 = vld [vmem:[%s2409 + $0x730] sm:$0xff]
        %v2935 = vld [vmem:[%s2409 + $0x738] sm:$0xff]
        %v2936 = vld [vmem:[%s2409 + $0x740] sm:$0xff]
        %v2937 = vld [vmem:[%s2409 + $0x748] sm:$0xff]
        %v2938 = vld [vmem:[%s2409 + $0x750] sm:$0xff]
        %v2939 = vld [vmem:[%s2409 + $0x758] sm:$0xff]
        %v2940 = vld [vmem:[%s2409 + $0x760] sm:$0xff]
        %v2941 = vld [vmem:[%s2409 + $0x768] sm:$0xff]
        %v2942 = vld [vmem:[%s2409 + $0x770] sm:$0xff]
        %v2943 = vld [vmem:[%s2409 + $0x778] sm:$0xff]
        %v2944 = vld [vmem:[%s2409 + $0x780] sm:$0xff]
        %v2945 = vld [vmem:[%s2409 + $0x788] sm:$0xff]
        %v2946 = vld [vmem:[%s2409 + $0x790] sm:$0xff]
        %v2947 = vld [vmem:[%s2409 + $0x798] sm:$0xff]
        %v2948 = vld [vmem:[%s2409 + $0x7a0] sm:$0xff]
        %v2949 = vld [vmem:[%s2409 + $0x7a8] sm:$0xff]
        %v2950 = vld [vmem:[%s2409 + $0x7b0] sm:$0xff]
        %v2951 = vld [vmem:[%s2409 + $0x7b8] sm:$0xff]
        %v2952 = vld [vmem:[%s2409 + $0x7c0] sm:$0xff]
        %v2953 = vld [vmem:[%s2409 + $0x7c8] sm:$0xff]
        %v2954 = vld [vmem:[%s2409 + $0x7d0] sm:$0xff]
        %v2955 = vld [vmem:[%s2409 + $0x7d8] sm:$0xff]
        %v2956 = vld [vmem:[%s2409 + $0x7e0] sm:$0xff]
        %v2957 = vld [vmem:[%s2409 + $0x7e8] sm:$0xff]
        %v2958 = vld [vmem:[%s2409 + $0x7f0] sm:$0xff]
        %v2959 = vld [vmem:[%s2409 + $0x7f8] sm:$0xff]
        %v2960 = vadd.f32 %v2448, %v2704
        %v2961 = vadd.f32 %v2449, %v2705
        %v2962 = vadd.f32 %v2450, %v2706
        %v2963 = vadd.f32 %v2451, %v2707
        %v2964 = vadd.f32 %v2452, %v2708
        %v2965 = vadd.f32 %v2453, %v2709
        %v2966 = vadd.f32 %v2454, %v2710
        %v2967 = vadd.f32 %v2455, %v2711
        %v2968 = vadd.f32 %v2456, %v2712
        %v2969 = vadd.f32 %v2457, %v2713
        %v2970 = vadd.f32 %v2458, %v2714
        %v2971 = vadd.f32 %v2459, %v2715
        %v2972 = vadd.f32 %v2460, %v2716
        %v2973 = vadd.f32 %v2461, %v2717
        %v2974 = vadd.f32 %v2462, %v2718
        %v2975 = vadd.f32 %v2463, %v2719
        %v2976 = vadd.f32 %v2464, %v2720
        %v2977 = vadd.f32 %v2465, %v2721
        %v2978 = vadd.f32 %v2466, %v2722
        %v2979 = vadd.f32 %v2467, %v2723
        %v2980 = vadd.f32 %v2468, %v2724
        %v2981 = vadd.f32 %v2469, %v2725
        %v2982 = vadd.f32 %v2470, %v2726
        %v2983 = vadd.f32 %v2471, %v2727
        %v2984 = vadd.f32 %v2472, %v2728
        %v2985 = vadd.f32 %v2473, %v2729
        %v2986 = vadd.f32 %v2474, %v2730
        %v2987 = vadd.f32 %v2475, %v2731
        %v2988 = vadd.f32 %v2476, %v2732
        %v2989 = vadd.f32 %v2477, %v2733
        %v2990 = vadd.f32 %v2478, %v2734
        %v2991 = vadd.f32 %v2479, %v2735
        %v2992 = vadd.f32 %v2480, %v2736
        %v2993 = vadd.f32 %v2481, %v2737
        %v2994 = vadd.f32 %v2482, %v2738
        %v2995 = vadd.f32 %v2483, %v2739
        %v2996 = vadd.f32 %v2484, %v2740
        %v2997 = vadd.f32 %v2485, %v2741
        %v2998 = vadd.f32 %v2486, %v2742
        %v2999 = vadd.f32 %v2487, %v2743
        %v3000 = vadd.f32 %v2488, %v2744
        %v3001 = vadd.f32 %v2489, %v2745
        %v3002 = vadd.f32 %v2490, %v2746
        %v3003 = vadd.f32 %v2491, %v2747
        %v3004 = vadd.f32 %v2492, %v2748
        %v3005 = vadd.f32 %v2493, %v2749
        %v3006 = vadd.f32 %v2494, %v2750
        %v3007 = vadd.f32 %v2495, %v2751
        %v3008 = vadd.f32 %v2496, %v2752
        %v3009 = vadd.f32 %v2497, %v2753
        %v3010 = vadd.f32 %v2498, %v2754
        %v3011 = vadd.f32 %v2499, %v2755
        %v3012 = vadd.f32 %v2500, %v2756
        %v3013 = vadd.f32 %v2501, %v2757
        %v3014 = vadd.f32 %v2502, %v2758
        %v3015 = vadd.f32 %v2503, %v2759
        %v3016 = vadd.f32 %v2504, %v2760
        %v3017 = vadd.f32 %v2505, %v2761
        %v3018 = vadd.f32 %v2506, %v2762
        %v3019 = vadd.f32 %v2507, %v2763
        %v3020 = vadd.f32 %v2508, %v2764
        %v3021 = vadd.f32 %v2509, %v2765
        %v3022 = vadd.f32 %v2510, %v2766
        %v3023 = vadd.f32 %v2511, %v2767
        %v3024 = vadd.f32 %v2512, %v2768
        %v3025 = vadd.f32 %v2513, %v2769
        %v3026 = vadd.f32 %v2514, %v2770
        %v3027 = vadd.f32 %v2515, %v2771
        %v3028 = vadd.f32 %v2516, %v2772
        %v3029 = vadd.f32 %v2517, %v2773
        %v3030 = vadd.f32 %v2518, %v2774
        %v3031 = vadd.f32 %v2519, %v2775
        %v3032 = vadd.f32 %v2520, %v2776
        %v3033 = vadd.f32 %v2521, %v2777
        %v3034 = vadd.f32 %v2522, %v2778
        %v3035 = vadd.f32 %v2523, %v2779
        %v3036 = vadd.f32 %v2524, %v2780
        %v3037 = vadd.f32 %v2525, %v2781
        %v3038 = vadd.f32 %v2526, %v2782
        %v3039 = vadd.f32 %v2527, %v2783
        %v3040 = vadd.f32 %v2528, %v2784
        %v3041 = vadd.f32 %v2529, %v2785
        %v3042 = vadd.f32 %v2530, %v2786
        %v3043 = vadd.f32 %v2531, %v2787
        %v3044 = vadd.f32 %v2532, %v2788
        %v3045 = vadd.f32 %v2533, %v2789
        %v3046 = vadd.f32 %v2534, %v2790
        %v3047 = vadd.f32 %v2535, %v2791
        %v3048 = vadd.f32 %v2536, %v2792
        %v3049 = vadd.f32 %v2537, %v2793
        %v3050 = vadd.f32 %v2538, %v2794
        %v3051 = vadd.f32 %v2539, %v2795
        %v3052 = vadd.f32 %v2540, %v2796
        %v3053 = vadd.f32 %v2541, %v2797
        %v3054 = vadd.f32 %v2542, %v2798
        %v3055 = vadd.f32 %v2543, %v2799
        %v3056 = vadd.f32 %v2544, %v2800
        %v3057 = vadd.f32 %v2545, %v2801
        %v3058 = vadd.f32 %v2546, %v2802
        %v3059 = vadd.f32 %v2547, %v2803
        %v3060 = vadd.f32 %v2548, %v2804
        %v3061 = vadd.f32 %v2549, %v2805
        %v3062 = vadd.f32 %v2550, %v2806
        %v3063 = vadd.f32 %v2551, %v2807
        %v3064 = vadd.f32 %v2552, %v2808
        %v3065 = vadd.f32 %v2553, %v2809
        %v3066 = vadd.f32 %v2554, %v2810
        %v3067 = vadd.f32 %v2555, %v2811
        %v3068 = vadd.f32 %v2556, %v2812
        %v3069 = vadd.f32 %v2557, %v2813
        %v3070 = vadd.f32 %v2558, %v2814
        %v3071 = vadd.f32 %v2559, %v2815
        %v3072 = vadd.f32 %v2560, %v2816
        %v3073 = vadd.f32 %v2561, %v2817
        %v3074 = vadd.f32 %v2562, %v2818
        %v3075 = vadd.f32 %v2563, %v2819
        %v3076 = vadd.f32 %v2564, %v2820
        %v3077 = vadd.f32 %v2565, %v2821
        %v3078 = vadd.f32 %v2566, %v2822
        %v3079 = vadd.f32 %v2567, %v2823
        %v3080 = vadd.f32 %v2568, %v2824
        %v3081 = vadd.f32 %v2569, %v2825
        %v3082 = vadd.f32 %v2570, %v2826
        %v3083 = vadd.f32 %v2571, %v2827
        %v3084 = vadd.f32 %v2572, %v2828
        %v3085 = vadd.f32 %v2573, %v2829
        %v3086 = vadd.f32 %v2574, %v2830
        %v3087 = vadd.f32 %v2575, %v2831
        %v3088 = vadd.f32 %v2576, %v2832
        %v3089 = vadd.f32 %v2577, %v2833
        %v3090 = vadd.f32 %v2578, %v2834
        %v3091 = vadd.f32 %v2579, %v2835
        %v3092 = vadd.f32 %v2580, %v2836
        %v3093 = vadd.f32 %v2581, %v2837
        %v3094 = vadd.f32 %v2582, %v2838
        %v3095 = vadd.f32 %v2583, %v2839
        %v3096 = vadd.f32 %v2584, %v2840
        %v3097 = vadd.f32 %v2585, %v2841
        %v3098 = vadd.f32 %v2586, %v2842
        %v3099 = vadd.f32 %v2587, %v2843
        %v3100 = vadd.f32 %v2588, %v2844
        %v3101 = vadd.f32 %v2589, %v2845
        %v3102 = vadd.f32 %v2590, %v2846
        %v3103 = vadd.f32 %v2591, %v2847
        %v3104 = vadd.f32 %v2592, %v2848
        %v3105 = vadd.f32 %v2593, %v2849
        %v3106 = vadd.f32 %v2594, %v2850
        %v3107 = vadd.f32 %v2595, %v2851
        %v3108 = vadd.f32 %v2596, %v2852
        %v3109 = vadd.f32 %v2597, %v2853
        %v3110 = vadd.f32 %v2598, %v2854
        %v3111 = vadd.f32 %v2599, %v2855
        %v3112 = vadd.f32 %v2600, %v2856
        %v3113 = vadd.f32 %v2601, %v2857
        %v3114 = vadd.f32 %v2602, %v2858
        %v3115 = vadd.f32 %v2603, %v2859
        %v3116 = vadd.f32 %v2604, %v2860
        %v3117 = vadd.f32 %v2605, %v2861
        %v3118 = vadd.f32 %v2606, %v2862
        %v3119 = vadd.f32 %v2607, %v2863
        %v3120 = vadd.f32 %v2608, %v2864
        %v3121 = vadd.f32 %v2609, %v2865
        %v3122 = vadd.f32 %v2610, %v2866
        %v3123 = vadd.f32 %v2611, %v2867
        %v3124 = vadd.f32 %v2612, %v2868
        %v3125 = vadd.f32 %v2613, %v2869
        %v3126 = vadd.f32 %v2614, %v2870
        %v3127 = vadd.f32 %v2615, %v2871
        %v3128 = vadd.f32 %v2616, %v2872
        %v3129 = vadd.f32 %v2617, %v2873
        %v3130 = vadd.f32 %v2618, %v2874
        %v3131 = vadd.f32 %v2619, %v2875
        %v3132 = vadd.f32 %v2620, %v2876
        %v3133 = vadd.f32 %v2621, %v2877
        %v3134 = vadd.f32 %v2622, %v2878
        %v3135 = vadd.f32 %v2623, %v2879
        %v3136 = vadd.f32 %v2624, %v2880
        %v3137 = vadd.f32 %v2625, %v2881
        %v3138 = vadd.f32 %v2626, %v2882
        %v3139 = vadd.f32 %v2627, %v2883
        %v3140 = vadd.f32 %v2628, %v2884
        %v3141 = vadd.f32 %v2629, %v2885
        %v3142 = vadd.f32 %v2630, %v2886
        %v3143 = vadd.f32 %v2631, %v2887
        %v3144 = vadd.f32 %v2632, %v2888
        %v3145 = vadd.f32 %v2633, %v2889
        %v3146 = vadd.f32 %v2634, %v2890
        %v3147 = vadd.f32 %v2635, %v2891
        %v3148 = vadd.f32 %v2636, %v2892
        %v3149 = vadd.f32 %v2637, %v2893
        %v3150 = vadd.f32 %v2638, %v2894
        %v3151 = vadd.f32 %v2639, %v2895
        %v3152 = vadd.f32 %v2640, %v2896
        %v3153 = vadd.f32 %v2641, %v2897
        %v3154 = vadd.f32 %v2642, %v2898
        %v3155 = vadd.f32 %v2643, %v2899
        %v3156 = vadd.f32 %v2644, %v2900
        %v3157 = vadd.f32 %v2645, %v2901
        %v3158 = vadd.f32 %v2646, %v2902
        %v3159 = vadd.f32 %v2647, %v2903
        %v3160 = vadd.f32 %v2648, %v2904
        %v3161 = vadd.f32 %v2649, %v2905
        %v3162 = vadd.f32 %v2650, %v2906
        %v3163 = vadd.f32 %v2651, %v2907
        %v3164 = vadd.f32 %v2652, %v2908
        %v3165 = vadd.f32 %v2653, %v2909
        %v3166 = vadd.f32 %v2654, %v2910
        %v3167 = vadd.f32 %v2655, %v2911
        %v3168 = vadd.f32 %v2656, %v2912
        %v3169 = vadd.f32 %v2657, %v2913
        %v3170 = vadd.f32 %v2658, %v2914
        %v3171 = vadd.f32 %v2659, %v2915
        %v3172 = vadd.f32 %v2660, %v2916
        %v3173 = vadd.f32 %v2661, %v2917
        %v3174 = vadd.f32 %v2662, %v2918
        %v3175 = vadd.f32 %v2663, %v2919
        %v3176 = vadd.f32 %v2664, %v2920
        %v3177 = vadd.f32 %v2665, %v2921
        %v3178 = vadd.f32 %v2666, %v2922
        %v3179 = vadd.f32 %v2667, %v2923
        %v3180 = vadd.f32 %v2668, %v2924
        %v3181 = vadd.f32 %v2669, %v2925
        %v3182 = vadd.f32 %v2670, %v2926
        %v3183 = vadd.f32 %v2671, %v2927
        %v3184 = vadd.f32 %v2672, %v2928
        %v3185 = vadd.f32 %v2673, %v2929
        %v3186 = vadd.f32 %v2674, %v2930
        %v3187 = vadd.f32 %v2675, %v2931
        %v3188 = vadd.f32 %v2676, %v2932
        %v3189 = vadd.f32 %v2677, %v2933
        %v3190 = vadd.f32 %v2678, %v2934
        %v3191 = vadd.f32 %v2679, %v2935
        %v3192 = vadd.f32 %v2680, %v2936
        %v3193 = vadd.f32 %v2681, %v2937
        %v3194 = vadd.f32 %v2682, %v2938
        %v3195 = vadd.f32 %v2683, %v2939
        %v3196 = vadd.f32 %v2684, %v2940
        %v3197 = vadd.f32 %v2685, %v2941
        %v3198 = vadd.f32 %v2686, %v2942
        %v3199 = vadd.f32 %v2687, %v2943
        %v3200 = vadd.f32 %v2688, %v2944
        %v3201 = vadd.f32 %v2689, %v2945
        %v3202 = vadd.f32 %v2690, %v2946
        %v3203 = vadd.f32 %v2691, %v2947
        %v3204 = vadd.f32 %v2692, %v2948
        %v3205 = vadd.f32 %v2693, %v2949
        %v3206 = vadd.f32 %v2694, %v2950
        %v3207 = vadd.f32 %v2695, %v2951
        %v3208 = vadd.f32 %v2696, %v2952
        %v3209 = vadd.f32 %v2697, %v2953
        %v3210 = vadd.f32 %v2698, %v2954
        %v3211 = vadd.f32 %v2699, %v2955
        %v3212 = vadd.f32 %v2700, %v2956
        %v3213 = vadd.f32 %v2701, %v2957
        %v3214 = vadd.f32 %v2702, %v2958
        %v3215 = vadd.f32 %v2703, %v2959
        %v3216 = vmax.f32 %v2960, 0.0
        %v3217 = vmax.f32 %v2961, 0.0
        %v3218 = vmax.f32 %v2962, 0.0
        %v3219 = vmax.f32 %v2963, 0.0
        %v3220 = vmax.f32 %v2964, 0.0
        %v3221 = vmax.f32 %v2965, 0.0
        %v3222 = vmax.f32 %v2966, 0.0
        %v3223 = vmax.f32 %v2967, 0.0
        %v3224 = vmax.f32 %v2968, 0.0
        %v3225 = vmax.f32 %v2969, 0.0
        %v3226 = vmax.f32 %v2970, 0.0
        %v3227 = vmax.f32 %v2971, 0.0
        %v3228 = vmax.f32 %v2972, 0.0
        %v3229 = vmax.f32 %v2973, 0.0
        %v3230 = vmax.f32 %v2974, 0.0
        %v3231 = vmax.f32 %v2975, 0.0
        %v3232 = vmax.f32 %v2976, 0.0
        %v3233 = vmax.f32 %v2977, 0.0
        %v3234 = vmax.f32 %v2978, 0.0
        %v3235 = vmax.f32 %v2979, 0.0
        %v3236 = vmax.f32 %v2980, 0.0
        %v3237 = vmax.f32 %v2981, 0.0
        %v3238 = vmax.f32 %v2982, 0.0
        %v3239 = vmax.f32 %v2983, 0.0
        %v3240 = vmax.f32 %v2984, 0.0
        %v3241 = vmax.f32 %v2985, 0.0
        %v3242 = vmax.f32 %v2986, 0.0
        %v3243 = vmax.f32 %v2987, 0.0
        %v3244 = vmax.f32 %v2988, 0.0
        %v3245 = vmax.f32 %v2989, 0.0
        %v3246 = vmax.f32 %v2990, 0.0
        %v3247 = vmax.f32 %v2991, 0.0
        %v3248 = vmax.f32 %v2992, 0.0
        %v3249 = vmax.f32 %v2993, 0.0
        %v3250 = vmax.f32 %v2994, 0.0
        %v3251 = vmax.f32 %v2995, 0.0
        %v3252 = vmax.f32 %v2996, 0.0
        %v3253 = vmax.f32 %v2997, 0.0
        %v3254 = vmax.f32 %v2998, 0.0
        %v3255 = vmax.f32 %v2999, 0.0
        %v3256 = vmax.f32 %v3000, 0.0
        %v3257 = vmax.f32 %v3001, 0.0
        %v3258 = vmax.f32 %v3002, 0.0
        %v3259 = vmax.f32 %v3003, 0.0
        %v3260 = vmax.f32 %v3004, 0.0
        %v3261 = vmax.f32 %v3005, 0.0
        %v3262 = vmax.f32 %v3006, 0.0
        %v3263 = vmax.f32 %v3007, 0.0
        %v3264 = vmax.f32 %v3008, 0.0
        %v3265 = vmax.f32 %v3009, 0.0
        %v3266 = vmax.f32 %v3010, 0.0
        %v3267 = vmax.f32 %v3011, 0.0
        %v3268 = vmax.f32 %v3012, 0.0
        %v3269 = vmax.f32 %v3013, 0.0
        %v3270 = vmax.f32 %v3014, 0.0
        %v3271 = vmax.f32 %v3015, 0.0
        %v3272 = vmax.f32 %v3016, 0.0
        %v3273 = vmax.f32 %v3017, 0.0
        %v3274 = vmax.f32 %v3018, 0.0
        %v3275 = vmax.f32 %v3019, 0.0
        %v3276 = vmax.f32 %v3020, 0.0
        %v3277 = vmax.f32 %v3021, 0.0
        %v3278 = vmax.f32 %v3022, 0.0
        %v3279 = vmax.f32 %v3023, 0.0
        %v3280 = vmax.f32 %v3024, 0.0
        %v3281 = vmax.f32 %v3025, 0.0
        %v3282 = vmax.f32 %v3026, 0.0
        %v3283 = vmax.f32 %v3027, 0.0
        %v3284 = vmax.f32 %v3028, 0.0
        %v3285 = vmax.f32 %v3029, 0.0
        %v3286 = vmax.f32 %v3030, 0.0
        %v3287 = vmax.f32 %v3031, 0.0
        %v3288 = vmax.f32 %v3032, 0.0
        %v3289 = vmax.f32 %v3033, 0.0
        %v3290 = vmax.f32 %v3034, 0.0
        %v3291 = vmax.f32 %v3035, 0.0
        %v3292 = vmax.f32 %v3036, 0.0
        %v3293 = vmax.f32 %v3037, 0.0
        %v3294 = vmax.f32 %v3038, 0.0
        %v3295 = vmax.f32 %v3039, 0.0
        %v3296 = vmax.f32 %v3040, 0.0
        %v3297 = vmax.f32 %v3041, 0.0
        %v3298 = vmax.f32 %v3042, 0.0
        %v3299 = vmax.f32 %v3043, 0.0
        %v3300 = vmax.f32 %v3044, 0.0
        %v3301 = vmax.f32 %v3045, 0.0
        %v3302 = vmax.f32 %v3046, 0.0
        %v3303 = vmax.f32 %v3047, 0.0
        %v3304 = vmax.f32 %v3048, 0.0
        %v3305 = vmax.f32 %v3049, 0.0
        %v3306 = vmax.f32 %v3050, 0.0
        %v3307 = vmax.f32 %v3051, 0.0
        %v3308 = vmax.f32 %v3052, 0.0
        %v3309 = vmax.f32 %v3053, 0.0
        %v3310 = vmax.f32 %v3054, 0.0
        %v3311 = vmax.f32 %v3055, 0.0
        %v3312 = vmax.f32 %v3056, 0.0
        %v3313 = vmax.f32 %v3057, 0.0
        %v3314 = vmax.f32 %v3058, 0.0
        %v3315 = vmax.f32 %v3059, 0.0
        %v3316 = vmax.f32 %v3060, 0.0
        %v3317 = vmax.f32 %v3061, 0.0
        %v3318 = vmax.f32 %v3062, 0.0
        %v3319 = vmax.f32 %v3063, 0.0
        %v3320 = vmax.f32 %v3064, 0.0
        %v3321 = vmax.f32 %v3065, 0.0
        %v3322 = vmax.f32 %v3066, 0.0
        %v3323 = vmax.f32 %v3067, 0.0
        %v3324 = vmax.f32 %v3068, 0.0
        %v3325 = vmax.f32 %v3069, 0.0
        %v3326 = vmax.f32 %v3070, 0.0
        %v3327 = vmax.f32 %v3071, 0.0
        %v3328 = vmax.f32 %v3072, 0.0
        %v3329 = vmax.f32 %v3073, 0.0
        %v3330 = vmax.f32 %v3074, 0.0
        %v3331 = vmax.f32 %v3075, 0.0
        %v3332 = vmax.f32 %v3076, 0.0
        %v3333 = vmax.f32 %v3077, 0.0
        %v3334 = vmax.f32 %v3078, 0.0
        %v3335 = vmax.f32 %v3079, 0.0
        %v3336 = vmax.f32 %v3080, 0.0
        %v3337 = vmax.f32 %v3081, 0.0
        %v3338 = vmax.f32 %v3082, 0.0
        %v3339 = vmax.f32 %v3083, 0.0
        %v3340 = vmax.f32 %v3084, 0.0
        %v3341 = vmax.f32 %v3085, 0.0
        %v3342 = vmax.f32 %v3086, 0.0
        %v3343 = vmax.f32 %v3087, 0.0
        %v3344 = vmax.f32 %v3088, 0.0
        %v3345 = vmax.f32 %v3089, 0.0
        %v3346 = vmax.f32 %v3090, 0.0
        %v3347 = vmax.f32 %v3091, 0.0
        %v3348 = vmax.f32 %v3092, 0.0
        %v3349 = vmax.f32 %v3093, 0.0
        %v3350 = vmax.f32 %v3094, 0.0
        %v3351 = vmax.f32 %v3095, 0.0
        %v3352 = vmax.f32 %v3096, 0.0
        %v3353 = vmax.f32 %v3097, 0.0
        %v3354 = vmax.f32 %v3098, 0.0
        %v3355 = vmax.f32 %v3099, 0.0
        %v3356 = vmax.f32 %v3100, 0.0
        %v3357 = vmax.f32 %v3101, 0.0
        %v3358 = vmax.f32 %v3102, 0.0
        %v3359 = vmax.f32 %v3103, 0.0
        %v3360 = vmax.f32 %v3104, 0.0
        %v3361 = vmax.f32 %v3105, 0.0
        %v3362 = vmax.f32 %v3106, 0.0
        %v3363 = vmax.f32 %v3107, 0.0
        %v3364 = vmax.f32 %v3108, 0.0
        %v3365 = vmax.f32 %v3109, 0.0
        %v3366 = vmax.f32 %v3110, 0.0
        %v3367 = vmax.f32 %v3111, 0.0
        %v3368 = vmax.f32 %v3112, 0.0
        %v3369 = vmax.f32 %v3113, 0.0
        %v3370 = vmax.f32 %v3114, 0.0
        %v3371 = vmax.f32 %v3115, 0.0
        %v3372 = vmax.f32 %v3116, 0.0
        %v3373 = vmax.f32 %v3117, 0.0
        %v3374 = vmax.f32 %v3118, 0.0
        %v3375 = vmax.f32 %v3119, 0.0
        %v3376 = vmax.f32 %v3120, 0.0
        %v3377 = vmax.f32 %v3121, 0.0
        %v3378 = vmax.f32 %v3122, 0.0
        %v3379 = vmax.f32 %v3123, 0.0
        %v3380 = vmax.f32 %v3124, 0.0
        %v3381 = vmax.f32 %v3125, 0.0
        %v3382 = vmax.f32 %v3126, 0.0
        %v3383 = vmax.f32 %v3127, 0.0
        %v3384 = vmax.f32 %v3128, 0.0
        %v3385 = vmax.f32 %v3129, 0.0
        %v3386 = vmax.f32 %v3130, 0.0
        %v3387 = vmax.f32 %v3131, 0.0
        %v3388 = vmax.f32 %v3132, 0.0
        %v3389 = vmax.f32 %v3133, 0.0
        %v3390 = vmax.f32 %v3134, 0.0
        %v3391 = vmax.f32 %v3135, 0.0
        %v3392 = vmax.f32 %v3136, 0.0
        %v3393 = vmax.f32 %v3137, 0.0
        %v3394 = vmax.f32 %v3138, 0.0
        %v3395 = vmax.f32 %v3139, 0.0
        %v3396 = vmax.f32 %v3140, 0.0
        %v3397 = vmax.f32 %v3141, 0.0
        %v3398 = vmax.f32 %v3142, 0.0
        %v3399 = vmax.f32 %v3143, 0.0
        %v3400 = vmax.f32 %v3144, 0.0
        %v3401 = vmax.f32 %v3145, 0.0
        %v3402 = vmax.f32 %v3146, 0.0
        %v3403 = vmax.f32 %v3147, 0.0
        %v3404 = vmax.f32 %v3148, 0.0
        %v3405 = vmax.f32 %v3149, 0.0
        %v3406 = vmax.f32 %v3150, 0.0
        %v3407 = vmax.f32 %v3151, 0.0
        %v3408 = vmax.f32 %v3152, 0.0
        %v3409 = vmax.f32 %v3153, 0.0
        %v3410 = vmax.f32 %v3154, 0.0
        %v3411 = vmax.f32 %v3155, 0.0
        %v3412 = vmax.f32 %v3156, 0.0
        %v3413 = vmax.f32 %v3157, 0.0
        %v3414 = vmax.f32 %v3158, 0.0
        %v3415 = vmax.f32 %v3159, 0.0
        %v3416 = vmax.f32 %v3160, 0.0
        %v3417 = vmax.f32 %v3161, 0.0
        %v3418 = vmax.f32 %v3162, 0.0
        %v3419 = vmax.f32 %v3163, 0.0
        %v3420 = vmax.f32 %v3164, 0.0
        %v3421 = vmax.f32 %v3165, 0.0
        %v3422 = vmax.f32 %v3166, 0.0
        %v3423 = vmax.f32 %v3167, 0.0
        %v3424 = vmax.f32 %v3168, 0.0
        %v3425 = vmax.f32 %v3169, 0.0
        %v3426 = vmax.f32 %v3170, 0.0
        %v3427 = vmax.f32 %v3171, 0.0
        %v3428 = vmax.f32 %v3172, 0.0
        %v3429 = vmax.f32 %v3173, 0.0
        %v3430 = vmax.f32 %v3174, 0.0
        %v3431 = vmax.f32 %v3175, 0.0
        %v3432 = vmax.f32 %v3176, 0.0
        %v3433 = vmax.f32 %v3177, 0.0
        %v3434 = vmax.f32 %v3178, 0.0
        %v3435 = vmax.f32 %v3179, 0.0
        %v3436 = vmax.f32 %v3180, 0.0
        %v3437 = vmax.f32 %v3181, 0.0
        %v3438 = vmax.f32 %v3182, 0.0
        %v3439 = vmax.f32 %v3183, 0.0
        %v3440 = vmax.f32 %v3184, 0.0
        %v3441 = vmax.f32 %v3185, 0.0
        %v3442 = vmax.f32 %v3186, 0.0
        %v3443 = vmax.f32 %v3187, 0.0
        %v3444 = vmax.f32 %v3188, 0.0
        %v3445 = vmax.f32 %v3189, 0.0
        %v3446 = vmax.f32 %v3190, 0.0
        %v3447 = vmax.f32 %v3191, 0.0
        %v3448 = vmax.f32 %v3192, 0.0
        %v3449 = vmax.f32 %v3193, 0.0
        %v3450 = vmax.f32 %v3194, 0.0
        %v3451 = vmax.f32 %v3195, 0.0
        %v3452 = vmax.f32 %v3196, 0.0
        %v3453 = vmax.f32 %v3197, 0.0
        %v3454 = vmax.f32 %v3198, 0.0
        %v3455 = vmax.f32 %v3199, 0.0
        %v3456 = vmax.f32 %v3200, 0.0
        %v3457 = vmax.f32 %v3201, 0.0
        %v3458 = vmax.f32 %v3202, 0.0
        %v3459 = vmax.f32 %v3203, 0.0
        %v3460 = vmax.f32 %v3204, 0.0
        %v3461 = vmax.f32 %v3205, 0.0
        %v3462 = vmax.f32 %v3206, 0.0
        %v3463 = vmax.f32 %v3207, 0.0
        %v3464 = vmax.f32 %v3208, 0.0
        %v3465 = vmax.f32 %v3209, 0.0
        %v3466 = vmax.f32 %v3210, 0.0
        %v3467 = vmax.f32 %v3211, 0.0
        %v3468 = vmax.f32 %v3212, 0.0
        %v3469 = vmax.f32 %v3213, 0.0
        %v3470 = vmax.f32 %v3214, 0.0
        %v3471 = vmax.f32 %v3215, 0.0
        %v3472 = vld [vmem:[%s2] sm:$0xff]
        %v3473 = vld [vmem:[%s2 + $0x8] sm:$0xff]
        %v3474 = vld [vmem:[%s2 + $0x10] sm:$0xff]
        %v3475 = vld [vmem:[%s2 + $0x18] sm:$0xff]
        %v3476 = vld [vmem:[%s2 + $0x20] sm:$0xff]
        %v3477 = vld [vmem:[%s2 + $0x28] sm:$0xff]
        %v3478 = vld [vmem:[%s2 + $0x30] sm:$0xff]
        %v3479 = vld [vmem:[%s2 + $0x38] sm:$0xff]
        %v3480 = vld [vmem:[%s2 + $0x40] sm:$0xff]
        %v3481 = vld [vmem:[%s2 + $0x48] sm:$0xff]
        %v3482 = vld [vmem:[%s2 + $0x50] sm:$0xff]
        %v3483 = vld [vmem:[%s2 + $0x58] sm:$0xff]
        %v3484 = vld [vmem:[%s2 + $0x60] sm:$0xff]
        %v3485 = vld [vmem:[%s2 + $0x68] sm:$0xff]
        %v3486 = vld [vmem:[%s2 + $0x70] sm:$0xff]
        %v3487 = vld [vmem:[%s2 + $0x78] sm:$0xff]
        %v3488 = vld [vmem:[%s2 + $0x80] sm:$0xff]
        %v3489 = vld [vmem:[%s2 + $0x88] sm:$0xff]
        %v3490 = vld [vmem:[%s2 + $0x90] sm:$0xff]
        %v3491 = vld [vmem:[%s2 + $0x98] sm:$0xff]
        %v3492 = vld [vmem:[%s2 + $0xa0] sm:$0xff]
        %v3493 = vld [vmem:[%s2 + $0xa8] sm:$0xff]
        %v3494 = vld [vmem:[%s2 + $0xb0] sm:$0xff]
        %v3495 = vld [vmem:[%s2 + $0xb8] sm:$0xff]
        %v3496 = vld [vmem:[%s2 + $0xc0] sm:$0xff]
        %v3497 = vld [vmem:[%s2 + $0xc8] sm:$0xff]
        %v3498 = vld [vmem:[%s2 + $0xd0] sm:$0xff]
        %v3499 = vld [vmem:[%s2 + $0xd8] sm:$0xff]
        %v3500 = vld [vmem:[%s2 + $0xe0] sm:$0xff]
        %v3501 = vld [vmem:[%s2 + $0xe8] sm:$0xff]
        %v3502 = vld [vmem:[%s2 + $0xf0] sm:$0xff]
        %v3503 = vld [vmem:[%s2 + $0xf8] sm:$0xff]
        %v3504 = vld [vmem:[%s2 + $0x100] sm:$0xff]
        %v3505 = vld [vmem:[%s2 + $0x108] sm:$0xff]
        %v3506 = vld [vmem:[%s2 + $0x110] sm:$0xff]
        %v3507 = vld [vmem:[%s2 + $0x118] sm:$0xff]
        %v3508 = vld [vmem:[%s2 + $0x120] sm:$0xff]
        %v3509 = vld [vmem:[%s2 + $0x128] sm:$0xff]
        %v3510 = vld [vmem:[%s2 + $0x130] sm:$0xff]
        %v3511 = vld [vmem:[%s2 + $0x138] sm:$0xff]
        %v3512 = vld [vmem:[%s2 + $0x140] sm:$0xff]
        %v3513 = vld [vmem:[%s2 + $0x148] sm:$0xff]
        %v3514 = vld [vmem:[%s2 + $0x150] sm:$0xff]
        %v3515 = vld [vmem:[%s2 + $0x158] sm:$0xff]
        %v3516 = vld [vmem:[%s2 + $0x160] sm:$0xff]
        %v3517 = vld [vmem:[%s2 + $0x168] sm:$0xff]
        %v3518 = vld [vmem:[%s2 + $0x170] sm:$0xff]
        %v3519 = vld [vmem:[%s2 + $0x178] sm:$0xff]
        %v3520 = vld [vmem:[%s2 + $0x180] sm:$0xff]
        %v3521 = vld [vmem:[%s2 + $0x188] sm:$0xff]
        %v3522 = vld [vmem:[%s2 + $0x190] sm:$0xff]
        %v3523 = vld [vmem:[%s2 + $0x198] sm:$0xff]
        %v3524 = vld [vmem:[%s2 + $0x1a0] sm:$0xff]
        %v3525 = vld [vmem:[%s2 + $0x1a8] sm:$0xff]
        %v3526 = vld [vmem:[%s2 + $0x1b0] sm:$0xff]
        %v3527 = vld [vmem:[%s2 + $0x1b8] sm:$0xff]
        %v3528 = vld [vmem:[%s2 + $0x1c0] sm:$0xff]
        %v3529 = vld [vmem:[%s2 + $0x1c8] sm:$0xff]
        %v3530 = vld [vmem:[%s2 + $0x1d0] sm:$0xff]
        %v3531 = vld [vmem:[%s2 + $0x1d8] sm:$0xff]
        %v3532 = vld [vmem:[%s2 + $0x1e0] sm:$0xff]
        %v3533 = vld [vmem:[%s2 + $0x1e8] sm:$0xff]
        %v3534 = vld [vmem:[%s2 + $0x1f0] sm:$0xff]
        %v3535 = vld [vmem:[%s2 + $0x1f8] sm:$0xff]
        %v3536 = vld [vmem:[%s2 + $0x200] sm:$0xff]
        %v3537 = vld [vmem:[%s2 + $0x208] sm:$0xff]
        %v3538 = vld [vmem:[%s2 + $0x210] sm:$0xff]
        %v3539 = vld [vmem:[%s2 + $0x218] sm:$0xff]
        %v3540 = vld [vmem:[%s2 + $0x220] sm:$0xff]
        %v3541 = vld [vmem:[%s2 + $0x228] sm:$0xff]
        %v3542 = vld [vmem:[%s2 + $0x230] sm:$0xff]
        %v3543 = vld [vmem:[%s2 + $0x238] sm:$0xff]
        %v3544 = vld [vmem:[%s2 + $0x240] sm:$0xff]
        %v3545 = vld [vmem:[%s2 + $0x248] sm:$0xff]
        %v3546 = vld [vmem:[%s2 + $0x250] sm:$0xff]
        %v3547 = vld [vmem:[%s2 + $0x258] sm:$0xff]
        %v3548 = vld [vmem:[%s2 + $0x260] sm:$0xff]
        %v3549 = vld [vmem:[%s2 + $0x268] sm:$0xff]
        %v3550 = vld [vmem:[%s2 + $0x270] sm:$0xff]
        %v3551 = vld [vmem:[%s2 + $0x278] sm:$0xff]
        %v3552 = vld [vmem:[%s2 + $0x280] sm:$0xff]
        %v3553 = vld [vmem:[%s2 + $0x288] sm:$0xff]
        %v3554 = vld [vmem:[%s2 + $0x290] sm:$0xff]
        %v3555 = vld [vmem:[%s2 + $0x298] sm:$0xff]
        %v3556 = vld [vmem:[%s2 + $0x2a0] sm:$0xff]
        %v3557 = vld [vmem:[%s2 + $0x2a8] sm:$0xff]
        %v3558 = vld [vmem:[%s2 + $0x2b0] sm:$0xff]
        %v3559 = vld [vmem:[%s2 + $0x2b8] sm:$0xff]
        %v3560 = vld [vmem:[%s2 + $0x2c0] sm:$0xff]
        %v3561 = vld [vmem:[%s2 + $0x2c8] sm:$0xff]
        %v3562 = vld [vmem:[%s2 + $0x2d0] sm:$0xff]
        %v3563 = vld [vmem:[%s2 + $0x2d8] sm:$0xff]
        %v3564 = vld [vmem:[%s2 + $0x2e0] sm:$0xff]
        %v3565 = vld [vmem:[%s2 + $0x2e8] sm:$0xff]
        %v3566 = vld [vmem:[%s2 + $0x2f0] sm:$0xff]
        %v3567 = vld [vmem:[%s2 + $0x2f8] sm:$0xff]
        %v3568 = vld [vmem:[%s2 + $0x300] sm:$0xff]
        %v3569 = vld [vmem:[%s2 + $0x308] sm:$0xff]
        %v3570 = vld [vmem:[%s2 + $0x310] sm:$0xff]
        %v3571 = vld [vmem:[%s2 + $0x318] sm:$0xff]
        %v3572 = vld [vmem:[%s2 + $0x320] sm:$0xff]
        %v3573 = vld [vmem:[%s2 + $0x328] sm:$0xff]
        %v3574 = vld [vmem:[%s2 + $0x330] sm:$0xff]
        %v3575 = vld [vmem:[%s2 + $0x338] sm:$0xff]
        %v3576 = vld [vmem:[%s2 + $0x340] sm:$0xff]
        %v3577 = vld [vmem:[%s2 + $0x348] sm:$0xff]
        %v3578 = vld [vmem:[%s2 + $0x350] sm:$0xff]
        %v3579 = vld [vmem:[%s2 + $0x358] sm:$0xff]
        %v3580 = vld [vmem:[%s2 + $0x360] sm:$0xff]
        %v3581 = vld [vmem:[%s2 + $0x368] sm:$0xff]
        %v3582 = vld [vmem:[%s2 + $0x370] sm:$0xff]
        %v3583 = vld [vmem:[%s2 + $0x378] sm:$0xff]
        %v3584 = vld [vmem:[%s2 + $0x380] sm:$0xff]
        %v3585 = vld [vmem:[%s2 + $0x388] sm:$0xff]
        %v3586 = vld [vmem:[%s2 + $0x390] sm:$0xff]
        %v3587 = vld [vmem:[%s2 + $0x398] sm:$0xff]
        %v3588 = vld [vmem:[%s2 + $0x3a0] sm:$0xff]
        %v3589 = vld [vmem:[%s2 + $0x3a8] sm:$0xff]
        %v3590 = vld [vmem:[%s2 + $0x3b0] sm:$0xff]
        %v3591 = vld [vmem:[%s2 + $0x3b8] sm:$0xff]
        %v3592 = vld [vmem:[%s2 + $0x3c0] sm:$0xff]
        %v3593 = vld [vmem:[%s2 + $0x3c8] sm:$0xff]
        %v3594 = vld [vmem:[%s2 + $0x3d0] sm:$0xff]
        %v3595 = vld [vmem:[%s2 + $0x3d8] sm:$0xff]
        %v3596 = vld [vmem:[%s2 + $0x3e0] sm:$0xff]
        %v3597 = vld [vmem:[%s2 + $0x3e8] sm:$0xff]
        %v3598 = vld [vmem:[%s2 + $0x3f0] sm:$0xff]
        %v3599 = vld [vmem:[%s2 + $0x3f8] sm:$0xff]
        %v3600 = vpack.c.bf16 %v3218, %v3216
        %v3601 = vpack.c.bf16 %v3219, %v3217
        %v3602 = vpack.c.bf16 %v3222, %v3220
        %v3603 = vpack.c.bf16 %v3223, %v3221
        %v3604 = vpack.c.bf16 %v3226, %v3224
        %v3605 = vpack.c.bf16 %v3227, %v3225
        %v3606 = vpack.c.bf16 %v3230, %v3228
        %v3607 = vpack.c.bf16 %v3231, %v3229
        %v3608 = vpack.c.bf16 %v3234, %v3232
        %v3609 = vpack.c.bf16 %v3235, %v3233
        %v3610 = vpack.c.bf16 %v3238, %v3236
        %v3611 = vpack.c.bf16 %v3239, %v3237
        %v3612 = vpack.c.bf16 %v3242, %v3240
        %v3613 = vpack.c.bf16 %v3243, %v3241
        %v3614 = vpack.c.bf16 %v3246, %v3244
        %v3615 = vpack.c.bf16 %v3247, %v3245
        %v3616 = vpack.c.bf16 %v3250, %v3248
        %v3617 = vpack.c.bf16 %v3251, %v3249
        %v3618 = vpack.c.bf16 %v3254, %v3252
        %v3619 = vpack.c.bf16 %v3255, %v3253
        %v3620 = vpack.c.bf16 %v3258, %v3256
        %v3621 = vpack.c.bf16 %v3259, %v3257
        %v3622 = vpack.c.bf16 %v3262, %v3260
        %v3623 = vpack.c.bf16 %v3263, %v3261
        %v3624 = vpack.c.bf16 %v3266, %v3264
        %v3625 = vpack.c.bf16 %v3267, %v3265
        %v3626 = vpack.c.bf16 %v3270, %v3268
        %v3627 = vpack.c.bf16 %v3271, %v3269
        %v3628 = vpack.c.bf16 %v3274, %v3272
        %v3629 = vpack.c.bf16 %v3275, %v3273
        %v3630 = vpack.c.bf16 %v3278, %v3276
        %v3631 = vpack.c.bf16 %v3279, %v3277
        %v3632 = vpack.c.bf16 %v3282, %v3280
        %v3633 = vpack.c.bf16 %v3283, %v3281
        %v3634 = vpack.c.bf16 %v3286, %v3284
        %v3635 = vpack.c.bf16 %v3287, %v3285
        %v3636 = vpack.c.bf16 %v3290, %v3288
        %v3637 = vpack.c.bf16 %v3291, %v3289
        %v3638 = vpack.c.bf16 %v3294, %v3292
        %v3639 = vpack.c.bf16 %v3295, %v3293
        %v3640 = vpack.c.bf16 %v3298, %v3296
        %v3641 = vpack.c.bf16 %v3299, %v3297
        %v3642 = vpack.c.bf16 %v3302, %v3300
        %v3643 = vpack.c.bf16 %v3303, %v3301
        %v3644 = vpack.c.bf16 %v3306, %v3304
        %v3645 = vpack.c.bf16 %v3307, %v3305
        %v3646 = vpack.c.bf16 %v3310, %v3308
        %v3647 = vpack.c.bf16 %v3311, %v3309
        %v3648 = vpack.c.bf16 %v3314, %v3312
        %v3649 = vpack.c.bf16 %v3315, %v3313
        %v3650 = vpack.c.bf16 %v3318, %v3316
        %v3651 = vpack.c.bf16 %v3319, %v3317
        %v3652 = vpack.c.bf16 %v3322, %v3320
        %v3653 = vpack.c.bf16 %v3323, %v3321
        %v3654 = vpack.c.bf16 %v3326, %v3324
        %v3655 = vpack.c.bf16 %v3327, %v3325
        %v3656 = vpack.c.bf16 %v3330, %v3328
        %v3657 = vpack.c.bf16 %v3331, %v3329
        %v3658 = vpack.c.bf16 %v3334, %v3332
        %v3659 = vpack.c.bf16 %v3335, %v3333
        %v3660 = vpack.c.bf16 %v3338, %v3336
        %v3661 = vpack.c.bf16 %v3339, %v3337
        %v3662 = vpack.c.bf16 %v3342, %v3340
        %v3663 = vpack.c.bf16 %v3343, %v3341
        %v3664 = vpack.c.bf16 %v3346, %v3344
        %v3665 = vpack.c.bf16 %v3347, %v3345
        %v3666 = vpack.c.bf16 %v3350, %v3348
        %v3667 = vpack.c.bf16 %v3351, %v3349
        %v3668 = vpack.c.bf16 %v3354, %v3352
        %v3669 = vpack.c.bf16 %v3355, %v3353
        %v3670 = vpack.c.bf16 %v3358, %v3356
        %v3671 = vpack.c.bf16 %v3359, %v3357
        %v3672 = vpack.c.bf16 %v3362, %v3360
        %v3673 = vpack.c.bf16 %v3363, %v3361
        %v3674 = vpack.c.bf16 %v3366, %v3364
        %v3675 = vpack.c.bf16 %v3367, %v3365
        %v3676 = vpack.c.bf16 %v3370, %v3368
        %v3677 = vpack.c.bf16 %v3371, %v3369
        %v3678 = vpack.c.bf16 %v3374, %v3372
        %v3679 = vpack.c.bf16 %v3375, %v3373
        %v3680 = vpack.c.bf16 %v3378, %v3376
        %v3681 = vpack.c.bf16 %v3379, %v3377
        %v3682 = vpack.c.bf16 %v3382, %v3380
        %v3683 = vpack.c.bf16 %v3383, %v3381
        %v3684 = vpack.c.bf16 %v3386, %v3384
        %v3685 = vpack.c.bf16 %v3387, %v3385
        %v3686 = vpack.c.bf16 %v3390, %v3388
        %v3687 = vpack.c.bf16 %v3391, %v3389
        %v3688 = vpack.c.bf16 %v3394, %v3392
        %v3689 = vpack.c.bf16 %v3395, %v3393
        %v3690 = vpack.c.bf16 %v3398, %v3396
        %v3691 = vpack.c.bf16 %v3399, %v3397
        %v3692 = vpack.c.bf16 %v3402, %v3400
        %v3693 = vpack.c.bf16 %v3403, %v3401
        %v3694 = vpack.c.bf16 %v3406, %v3404
        %v3695 = vpack.c.bf16 %v3407, %v3405
        %v3696 = vpack.c.bf16 %v3410, %v3408
        %v3697 = vpack.c.bf16 %v3411, %v3409
        %v3698 = vpack.c.bf16 %v3414, %v3412
        %v3699 = vpack.c.bf16 %v3415, %v3413
        %v3700 = vpack.c.bf16 %v3418, %v3416
        %v3701 = vpack.c.bf16 %v3419, %v3417
        %v3702 = vpack.c.bf16 %v3422, %v3420
        %v3703 = vpack.c.bf16 %v3423, %v3421
        %v3704 = vpack.c.bf16 %v3426, %v3424
        %v3705 = vpack.c.bf16 %v3427, %v3425
        %v3706 = vpack.c.bf16 %v3430, %v3428
        %v3707 = vpack.c.bf16 %v3431, %v3429
        %v3708 = vpack.c.bf16 %v3434, %v3432
        %v3709 = vpack.c.bf16 %v3435, %v3433
        %v3710 = vpack.c.bf16 %v3438, %v3436
        %v3711 = vpack.c.bf16 %v3439, %v3437
        %v3712 = vpack.c.bf16 %v3442, %v3440
        %v3713 = vpack.c.bf16 %v3443, %v3441
        %v3714 = vpack.c.bf16 %v3446, %v3444
        %v3715 = vpack.c.bf16 %v3447, %v3445
        %v3716 = vpack.c.bf16 %v3450, %v3448
        %v3717 = vpack.c.bf16 %v3451, %v3449
        %v3718 = vpack.c.bf16 %v3454, %v3452
        %v3719 = vpack.c.bf16 %v3455, %v3453
        %v3720 = vpack.c.bf16 %v3458, %v3456
        %v3721 = vpack.c.bf16 %v3459, %v3457
        %v3722 = vpack.c.bf16 %v3462, %v3460
        %v3723 = vpack.c.bf16 %v3463, %v3461
        %v3724 = vpack.c.bf16 %v3466, %v3464
        %v3725 = vpack.c.bf16 %v3467, %v3465
        %v3726 = vpack.c.bf16 %v3470, %v3468
        %v3727 = vpack.c.bf16 %v3471, %v3469
        %v3856 = vunpack.c.l.b16 %v3472
        %v3857 = vunpack.c.h.b16 %v3472
        %v3858 = vunpack.c.l.b16 %v3473
        %v3859 = vunpack.c.h.b16 %v3473
        %v3860 = vunpack.c.l.b16 %v3474
        %v3861 = vunpack.c.h.b16 %v3474
        %v3862 = vunpack.c.l.b16 %v3475
        %v3863 = vunpack.c.h.b16 %v3475
        %v3864 = vunpack.c.l.b16 %v3476
        %v3865 = vunpack.c.h.b16 %v3476
        %v3866 = vunpack.c.l.b16 %v3477
        %v3867 = vunpack.c.h.b16 %v3477
        %v3868 = vunpack.c.l.b16 %v3478
        %v3869 = vunpack.c.h.b16 %v3478
        %v3870 = vunpack.c.l.b16 %v3479
        %v3871 = vunpack.c.h.b16 %v3479
        %v3872 = vunpack.c.l.b16 %v3480
        %v3873 = vunpack.c.h.b16 %v3480
        %v3874 = vunpack.c.l.b16 %v3481
        %v3875 = vunpack.c.h.b16 %v3481
        %v3876 = vunpack.c.l.b16 %v3482
        %v3877 = vunpack.c.h.b16 %v3482
        %v3878 = vunpack.c.l.b16 %v3483
        %v3879 = vunpack.c.h.b16 %v3483
        %v3880 = vunpack.c.l.b16 %v3484
        %v3881 = vunpack.c.h.b16 %v3484
        %v3882 = vunpack.c.l.b16 %v3485
        %v3883 = vunpack.c.h.b16 %v3485
        %v3884 = vunpack.c.l.b16 %v3486
        %v3885 = vunpack.c.h.b16 %v3486
        %v3886 = vunpack.c.l.b16 %v3487
        %v3887 = vunpack.c.h.b16 %v3487
        %v3888 = vunpack.c.l.b16 %v3488
        %v3889 = vunpack.c.h.b16 %v3488
        %v3890 = vunpack.c.l.b16 %v3489
        %v3891 = vunpack.c.h.b16 %v3489
        %v3892 = vunpack.c.l.b16 %v3490
        %v3893 = vunpack.c.h.b16 %v3490
        %v3894 = vunpack.c.l.b16 %v3491
        %v3895 = vunpack.c.h.b16 %v3491
        %v3896 = vunpack.c.l.b16 %v3492
        %v3897 = vunpack.c.h.b16 %v3492
        %v3898 = vunpack.c.l.b16 %v3493
        %v3899 = vunpack.c.h.b16 %v3493
        %v3900 = vunpack.c.l.b16 %v3494
        %v3901 = vunpack.c.h.b16 %v3494
        %v3902 = vunpack.c.l.b16 %v3495
        %v3903 = vunpack.c.h.b16 %v3495
        %v3904 = vunpack.c.l.b16 %v3496
        %v3905 = vunpack.c.h.b16 %v3496
        %v3906 = vunpack.c.l.b16 %v3497
        %v3907 = vunpack.c.h.b16 %v3497
        %v3908 = vunpack.c.l.b16 %v3498
        %v3909 = vunpack.c.h.b16 %v3498
        %v3910 = vunpack.c.l.b16 %v3499
        %v3911 = vunpack.c.h.b16 %v3499
        %v3912 = vunpack.c.l.b16 %v3500
        %v3913 = vunpack.c.h.b16 %v3500
        %v3914 = vunpack.c.l.b16 %v3501
        %v3915 = vunpack.c.h.b16 %v3501
        %v3916 = vunpack.c.l.b16 %v3502
        %v3917 = vunpack.c.h.b16 %v3502
        %v3918 = vunpack.c.l.b16 %v3503
        %v3919 = vunpack.c.h.b16 %v3503
        %v3920 = vunpack.c.l.b16 %v3504
        %v3921 = vunpack.c.h.b16 %v3504
        %v3922 = vunpack.c.l.b16 %v3505
        %v3923 = vunpack.c.h.b16 %v3505
        %v3924 = vunpack.c.l.b16 %v3506
        %v3925 = vunpack.c.h.b16 %v3506
        %v3926 = vunpack.c.l.b16 %v3507
        %v3927 = vunpack.c.h.b16 %v3507
        %v3928 = vunpack.c.l.b16 %v3508
        %v3929 = vunpack.c.h.b16 %v3508
        %v3930 = vunpack.c.l.b16 %v3509
        %v3931 = vunpack.c.h.b16 %v3509
        %v3932 = vunpack.c.l.b16 %v3510
        %v3933 = vunpack.c.h.b16 %v3510
        %v3934 = vunpack.c.l.b16 %v3511
        %v3935 = vunpack.c.h.b16 %v3511
        %v3936 = vunpack.c.l.b16 %v3512
        %v3937 = vunpack.c.h.b16 %v3512
        %v3938 = vunpack.c.l.b16 %v3513
        %v3939 = vunpack.c.h.b16 %v3513
        %v3940 = vunpack.c.l.b16 %v3514
        %v3941 = vunpack.c.h.b16 %v3514
        %v3942 = vunpack.c.l.b16 %v3515
        %v3943 = vunpack.c.h.b16 %v3515
        %v3944 = vunpack.c.l.b16 %v3516
        %v3945 = vunpack.c.h.b16 %v3516
        %v3946 = vunpack.c.l.b16 %v3517
        %v3947 = vunpack.c.h.b16 %v3517
        %v3948 = vunpack.c.l.b16 %v3518
        %v3949 = vunpack.c.h.b16 %v3518
        %v3950 = vunpack.c.l.b16 %v3519
        %v3951 = vunpack.c.h.b16 %v3519
        %v3952 = vunpack.c.l.b16 %v3520
        %v3953 = vunpack.c.h.b16 %v3520
        %v3954 = vunpack.c.l.b16 %v3521
        %v3955 = vunpack.c.h.b16 %v3521
        %v3956 = vunpack.c.l.b16 %v3522
        %v3957 = vunpack.c.h.b16 %v3522
        %v3958 = vunpack.c.l.b16 %v3523
        %v3959 = vunpack.c.h.b16 %v3523
        %v3960 = vunpack.c.l.b16 %v3524
        %v3961 = vunpack.c.h.b16 %v3524
        %v3962 = vunpack.c.l.b16 %v3525
        %v3963 = vunpack.c.h.b16 %v3525
        %v3964 = vunpack.c.l.b16 %v3526
        %v3965 = vunpack.c.h.b16 %v3526
        %v3966 = vunpack.c.l.b16 %v3527
        %v3967 = vunpack.c.h.b16 %v3527
        %v3968 = vunpack.c.l.b16 %v3528
        %v3969 = vunpack.c.h.b16 %v3528
        %v3970 = vunpack.c.l.b16 %v3529
        %v3971 = vunpack.c.h.b16 %v3529
        %v3972 = vunpack.c.l.b16 %v3530
        %v3973 = vunpack.c.h.b16 %v3530
        %v3974 = vunpack.c.l.b16 %v3531
        %v3975 = vunpack.c.h.b16 %v3531
        %v3976 = vunpack.c.l.b16 %v3532
        %v3977 = vunpack.c.h.b16 %v3532
        %v3978 = vunpack.c.l.b16 %v3533
        %v3979 = vunpack.c.h.b16 %v3533
        %v3980 = vunpack.c.l.b16 %v3534
        %v3981 = vunpack.c.h.b16 %v3534
        %v3982 = vunpack.c.l.b16 %v3535
        %v3983 = vunpack.c.h.b16 %v3535
        %v3984 = vunpack.c.l.b16 %v3536
        %v3985 = vunpack.c.h.b16 %v3536
        %v3986 = vunpack.c.l.b16 %v3537
        %v3987 = vunpack.c.h.b16 %v3537
        %v3988 = vunpack.c.l.b16 %v3538
        %v3989 = vunpack.c.h.b16 %v3538
        %v3990 = vunpack.c.l.b16 %v3539
        %v3991 = vunpack.c.h.b16 %v3539
        %v3992 = vunpack.c.l.b16 %v3540
        %v3993 = vunpack.c.h.b16 %v3540
        %v3994 = vunpack.c.l.b16 %v3541
        %v3995 = vunpack.c.h.b16 %v3541
        %v3996 = vunpack.c.l.b16 %v3542
        %v3997 = vunpack.c.h.b16 %v3542
        %v3998 = vunpack.c.l.b16 %v3543
        %v3999 = vunpack.c.h.b16 %v3543
        %v4000 = vunpack.c.l.b16 %v3544
        %v4001 = vunpack.c.h.b16 %v3544
        %v4002 = vunpack.c.l.b16 %v3545
        %v4003 = vunpack.c.h.b16 %v3545
        %v4004 = vunpack.c.l.b16 %v3546
        %v4005 = vunpack.c.h.b16 %v3546
        %v4006 = vunpack.c.l.b16 %v3547
        %v4007 = vunpack.c.h.b16 %v3547
        %v4008 = vunpack.c.l.b16 %v3548
        %v4009 = vunpack.c.h.b16 %v3548
        %v4010 = vunpack.c.l.b16 %v3549
        %v4011 = vunpack.c.h.b16 %v3549
        %v4012 = vunpack.c.l.b16 %v3550
        %v4013 = vunpack.c.h.b16 %v3550
        %v4014 = vunpack.c.l.b16 %v3551
        %v4015 = vunpack.c.h.b16 %v3551
        %v4016 = vunpack.c.l.b16 %v3552
        %v4017 = vunpack.c.h.b16 %v3552
        %v4018 = vunpack.c.l.b16 %v3553
        %v4019 = vunpack.c.h.b16 %v3553
        %v4020 = vunpack.c.l.b16 %v3554
        %v4021 = vunpack.c.h.b16 %v3554
        %v4022 = vunpack.c.l.b16 %v3555
        %v4023 = vunpack.c.h.b16 %v3555
        %v4024 = vunpack.c.l.b16 %v3556
        %v4025 = vunpack.c.h.b16 %v3556
        %v4026 = vunpack.c.l.b16 %v3557
        %v4027 = vunpack.c.h.b16 %v3557
        %v4028 = vunpack.c.l.b16 %v3558
        %v4029 = vunpack.c.h.b16 %v3558
        %v4030 = vunpack.c.l.b16 %v3559
        %v4031 = vunpack.c.h.b16 %v3559
        %v4032 = vunpack.c.l.b16 %v3560
        %v4033 = vunpack.c.h.b16 %v3560
        %v4034 = vunpack.c.l.b16 %v3561
        %v4035 = vunpack.c.h.b16 %v3561
        %v4036 = vunpack.c.l.b16 %v3562
        %v4037 = vunpack.c.h.b16 %v3562
        %v4038 = vunpack.c.l.b16 %v3563
        %v4039 = vunpack.c.h.b16 %v3563
        %v4040 = vunpack.c.l.b16 %v3564
        %v4041 = vunpack.c.h.b16 %v3564
        %v4042 = vunpack.c.l.b16 %v3565
        %v4043 = vunpack.c.h.b16 %v3565
        %v4044 = vunpack.c.l.b16 %v3566
        %v4045 = vunpack.c.h.b16 %v3566
        %v4046 = vunpack.c.l.b16 %v3567
        %v4047 = vunpack.c.h.b16 %v3567
        %v4048 = vunpack.c.l.b16 %v3568
        %v4049 = vunpack.c.h.b16 %v3568
        %v4050 = vunpack.c.l.b16 %v3569
        %v4051 = vunpack.c.h.b16 %v3569
        %v4052 = vunpack.c.l.b16 %v3570
        %v4053 = vunpack.c.h.b16 %v3570
        %v4054 = vunpack.c.l.b16 %v3571
        %v4055 = vunpack.c.h.b16 %v3571
        %v4056 = vunpack.c.l.b16 %v3572
        %v4057 = vunpack.c.h.b16 %v3572
        %v4058 = vunpack.c.l.b16 %v3573
        %v4059 = vunpack.c.h.b16 %v3573
        %v4060 = vunpack.c.l.b16 %v3574
        %v4061 = vunpack.c.h.b16 %v3574
        %v4062 = vunpack.c.l.b16 %v3575
        %v4063 = vunpack.c.h.b16 %v3575
        %v4064 = vunpack.c.l.b16 %v3576
        %v4065 = vunpack.c.h.b16 %v3576
        %v4066 = vunpack.c.l.b16 %v3577
        %v4067 = vunpack.c.h.b16 %v3577
        %v4068 = vunpack.c.l.b16 %v3578
        %v4069 = vunpack.c.h.b16 %v3578
        %v4070 = vunpack.c.l.b16 %v3579
        %v4071 = vunpack.c.h.b16 %v3579
        %v4072 = vunpack.c.l.b16 %v3580
        %v4073 = vunpack.c.h.b16 %v3580
        %v4074 = vunpack.c.l.b16 %v3581
        %v4075 = vunpack.c.h.b16 %v3581
        %v4076 = vunpack.c.l.b16 %v3582
        %v4077 = vunpack.c.h.b16 %v3582
        %v4078 = vunpack.c.l.b16 %v3583
        %v4079 = vunpack.c.h.b16 %v3583
        %v4080 = vunpack.c.l.b16 %v3584
        %v4081 = vunpack.c.h.b16 %v3584
        %v4082 = vunpack.c.l.b16 %v3585
        %v4083 = vunpack.c.h.b16 %v3585
        %v4084 = vunpack.c.l.b16 %v3586
        %v4085 = vunpack.c.h.b16 %v3586
        %v4086 = vunpack.c.l.b16 %v3587
        %v4087 = vunpack.c.h.b16 %v3587
        %v4088 = vunpack.c.l.b16 %v3588
        %v4089 = vunpack.c.h.b16 %v3588
        %v4090 = vunpack.c.l.b16 %v3589
        %v4091 = vunpack.c.h.b16 %v3589
        %v4092 = vunpack.c.l.b16 %v3590
        %v4093 = vunpack.c.h.b16 %v3590
        %v4094 = vunpack.c.l.b16 %v3591
        %v4095 = vunpack.c.h.b16 %v3591
        %v4096 = vunpack.c.l.b16 %v3592
        %v4097 = vunpack.c.h.b16 %v3592
        %v4098 = vunpack.c.l.b16 %v3593
        %v4099 = vunpack.c.h.b16 %v3593
        %v4100 = vunpack.c.l.b16 %v3594
        %v4101 = vunpack.c.h.b16 %v3594
        %v4102 = vunpack.c.l.b16 %v3595
        %v4103 = vunpack.c.h.b16 %v3595
        %v4104 = vunpack.c.l.b16 %v3596
        %v4105 = vunpack.c.h.b16 %v3596
        %v4106 = vunpack.c.l.b16 %v3597
        %v4107 = vunpack.c.h.b16 %v3597
        %v4108 = vunpack.c.l.b16 %v3598
        %v4109 = vunpack.c.h.b16 %v3598
        %v4110 = vunpack.c.l.b16 %v3599
        %v4111 = vunpack.c.h.b16 %v3599
        %v4112 = vpack.c.b16 %v3864, %v3856
        %v4113 = vpack.c.b16 %v3865, %v3857
        %v4114 = vpack.c.b16 %v3866, %v3858
        %v4115 = vpack.c.b16 %v3867, %v3859
        %v4116 = vpack.c.b16 %v3868, %v3860
        %v4117 = vpack.c.b16 %v3869, %v3861
        %v4118 = vpack.c.b16 %v3870, %v3862
        %v4119 = vpack.c.b16 %v3871, %v3863
        %v4120 = vpack.c.b16 %v3880, %v3872
        %v4121 = vpack.c.b16 %v3881, %v3873
        %v4122 = vpack.c.b16 %v3882, %v3874
        %v4123 = vpack.c.b16 %v3883, %v3875
        %v4124 = vpack.c.b16 %v3884, %v3876
        %v4125 = vpack.c.b16 %v3885, %v3877
        %v4126 = vpack.c.b16 %v3886, %v3878
        %v4127 = vpack.c.b16 %v3887, %v3879
        %v4128 = vpack.c.b16 %v3896, %v3888
        %v4129 = vpack.c.b16 %v3897, %v3889
        %v4130 = vpack.c.b16 %v3898, %v3890
        %v4131 = vpack.c.b16 %v3899, %v3891
        %v4132 = vpack.c.b16 %v3900, %v3892
        %v4133 = vpack.c.b16 %v3901, %v3893
        %v4134 = vpack.c.b16 %v3902, %v3894
        %v4135 = vpack.c.b16 %v3903, %v3895
        %v4136 = vpack.c.b16 %v3912, %v3904
        %v4137 = vpack.c.b16 %v3913, %v3905
        %v4138 = vpack.c.b16 %v3914, %v3906
        %v4139 = vpack.c.b16 %v3915, %v3907
        %v4140 = vpack.c.b16 %v3916, %v3908
        %v4141 = vpack.c.b16 %v3917, %v3909
        %v4142 = vpack.c.b16 %v3918, %v3910
        %v4143 = vpack.c.b16 %v3919, %v3911
        %v4144 = vpack.c.b16 %v3928, %v3920
        %v4145 = vpack.c.b16 %v3929, %v3921
        %v4146 = vpack.c.b16 %v3930, %v3922
        %v4147 = vpack.c.b16 %v3931, %v3923
        %v4148 = vpack.c.b16 %v3932, %v3924
        %v4149 = vpack.c.b16 %v3933, %v3925
        %v4150 = vpack.c.b16 %v3934, %v3926
        %v4151 = vpack.c.b16 %v3935, %v3927
        %v4152 = vpack.c.b16 %v3944, %v3936
        %v4153 = vpack.c.b16 %v3945, %v3937
        %v4154 = vpack.c.b16 %v3946, %v3938
        %v4155 = vpack.c.b16 %v3947, %v3939
        %v4156 = vpack.c.b16 %v3948, %v3940
        %v4157 = vpack.c.b16 %v3949, %v3941
        %v4158 = vpack.c.b16 %v3950, %v3942
        %v4159 = vpack.c.b16 %v3951, %v3943
        %v4160 = vpack.c.b16 %v3960, %v3952
        %v4161 = vpack.c.b16 %v3961, %v3953
        %v4162 = vpack.c.b16 %v3962, %v3954
        %v4163 = vpack.c.b16 %v3963, %v3955
        %v4164 = vpack.c.b16 %v3964, %v3956
        %v4165 = vpack.c.b16 %v3965, %v3957
        %v4166 = vpack.c.b16 %v3966, %v3958
        %v4167 = vpack.c.b16 %v3967, %v3959
        %v4168 = vpack.c.b16 %v3976, %v3968
        %v4169 = vpack.c.b16 %v3977, %v3969
        %v4170 = vpack.c.b16 %v3978, %v3970
        %v4171 = vpack.c.b16 %v3979, %v3971
        %v4172 = vpack.c.b16 %v3980, %v3972
        %v4173 = vpack.c.b16 %v3981, %v3973
        %v4174 = vpack.c.b16 %v3982, %v3974
        %v4175 = vpack.c.b16 %v3983, %v3975
        %v4176 = vpack.c.b16 %v3992, %v3984
        %v4177 = vpack.c.b16 %v3993, %v3985
        %v4178 = vpack.c.b16 %v3994, %v3986
        %v4179 = vpack.c.b16 %v3995, %v3987
        %v4180 = vpack.c.b16 %v3996, %v3988
        %v4181 = vpack.c.b16 %v3997, %v3989
        %v4182 = vpack.c.b16 %v3998, %v3990
        %v4183 = vpack.c.b16 %v3999, %v3991
        %v4184 = vpack.c.b16 %v4008, %v4000
        %v4185 = vpack.c.b16 %v4009, %v4001
        %v4186 = vpack.c.b16 %v4010, %v4002
        %v4187 = vpack.c.b16 %v4011, %v4003
        %v4188 = vpack.c.b16 %v4012, %v4004
        %v4189 = vpack.c.b16 %v4013, %v4005
        %v4190 = vpack.c.b16 %v4014, %v4006
        %v4191 = vpack.c.b16 %v4015, %v4007
        %v4192 = vpack.c.b16 %v4024, %v4016
        %v4193 = vpack.c.b16 %v4025, %v4017
        %v4194 = vpack.c.b16 %v4026, %v4018
        %v4195 = vpack.c.b16 %v4027, %v4019
        %v4196 = vpack.c.b16 %v4028, %v4020
        %v4197 = vpack.c.b16 %v4029, %v4021
        %v4198 = vpack.c.b16 %v4030, %v4022
        %v4199 = vpack.c.b16 %v4031, %v4023
        %v4200 = vpack.c.b16 %v4040, %v4032
        %v4201 = vpack.c.b16 %v4041, %v4033
        %v4202 = vpack.c.b16 %v4042, %v4034
        %v4203 = vpack.c.b16 %v4043, %v4035
        %v4204 = vpack.c.b16 %v4044, %v4036
        %v4205 = vpack.c.b16 %v4045, %v4037
        %v4206 = vpack.c.b16 %v4046, %v4038
        %v4207 = vpack.c.b16 %v4047, %v4039
        %v4208 = vpack.c.b16 %v4056, %v4048
        %v4209 = vpack.c.b16 %v4057, %v4049
        %v4210 = vpack.c.b16 %v4058, %v4050
        %v4211 = vpack.c.b16 %v4059, %v4051
        %v4212 = vpack.c.b16 %v4060, %v4052
        %v4213 = vpack.c.b16 %v4061, %v4053
        %v4214 = vpack.c.b16 %v4062, %v4054
        %v4215 = vpack.c.b16 %v4063, %v4055
        %v4216 = vpack.c.b16 %v4072, %v4064
        %v4217 = vpack.c.b16 %v4073, %v4065
        %v4218 = vpack.c.b16 %v4074, %v4066
        %v4219 = vpack.c.b16 %v4075, %v4067
        %v4220 = vpack.c.b16 %v4076, %v4068
        %v4221 = vpack.c.b16 %v4077, %v4069
        %v4222 = vpack.c.b16 %v4078, %v4070
        %v4223 = vpack.c.b16 %v4079, %v4071
        %v4224 = vpack.c.b16 %v4088, %v4080
        %v4225 = vpack.c.b16 %v4089, %v4081
        %v4226 = vpack.c.b16 %v4090, %v4082
        %v4227 = vpack.c.b16 %v4091, %v4083
        %v4228 = vpack.c.b16 %v4092, %v4084
        %v4229 = vpack.c.b16 %v4093, %v4085
        %v4230 = vpack.c.b16 %v4094, %v4086
        %v4231 = vpack.c.b16 %v4095, %v4087
        %v4232 = vpack.c.b16 %v4104, %v4096
        %v4233 = vpack.c.b16 %v4105, %v4097
        %v4234 = vpack.c.b16 %v4106, %v4098
        %v4235 = vpack.c.b16 %v4107, %v4099
        %v4236 = vpack.c.b16 %v4108, %v4100
        %v4237 = vpack.c.b16 %v4109, %v4101
        %v4238 = vpack.c.b16 %v4110, %v4102
        %v4239 = vpack.c.b16 %v4111, %v4103
        %4368 = vmatprep.subr.bf16.mxu0 %v3601
        %4369 = vmatpush1.bf16.msra.mxu0 %v3600
        %4370 = vmatprep.subr.bf16.mxu0 %v3603
        %4371 = vmatpush1.bf16.msra.mxu0 %v3602
        %4372 = vmatprep.subr.bf16.mxu0 %v3605
        %4373 = vmatpush1.bf16.msra.mxu0 %v3604
        %4374 = vmatprep.subr.bf16.mxu0 %v3607
        %4375 = vmatpush1.bf16.msra.mxu0 %v3606
        %4376 = vmatprep.subr.bf16.mxu0 %v3609
        %4377 = vmatpush1.bf16.msra.mxu0 %v3608
        %4378 = vmatprep.subr.bf16.mxu0 %v3611
        %4379 = vmatpush1.bf16.msra.mxu0 %v3610
        %4380 = vmatprep.subr.bf16.mxu0 %v3613
        %4381 = vmatpush1.bf16.msra.mxu0 %v3612
        %4382 = vmatprep.subr.bf16.mxu0 %v3615
        %4383 = vmatpush1.bf16.msra.mxu0 %v3614
        %4384 = vmatprep.subr.bf16.mxu0 %v3617
        %4385 = vmatpush1.bf16.msra.mxu0 %v3616
        %4386 = vmatprep.subr.bf16.mxu0 %v3619
        %4387 = vmatpush1.bf16.msra.mxu0 %v3618
        %4388 = vmatprep.subr.bf16.mxu0 %v3621
        %4389 = vmatpush1.bf16.msra.mxu0 %v3620
        %4390 = vmatprep.subr.bf16.mxu0 %v3623
        %4391 = vmatpush1.bf16.msra.mxu0 %v3622
        %4392 = vmatprep.subr.bf16.mxu0 %v3625
        %4393 = vmatpush1.bf16.msra.mxu0 %v3624
        %4394 = vmatprep.subr.bf16.mxu0 %v3627
        %4395 = vmatpush1.bf16.msra.mxu0 %v3626
        %4396 = vmatprep.subr.bf16.mxu0 %v3629
        %4397 = vmatpush1.bf16.msra.mxu0 %v3628
        %4398 = vmatprep.subr.bf16.mxu0 %v3631
        %4399 = vmatpush1.bf16.msra.mxu0 %v3630
        %4400 = vmatprep.mubr.bf16.mxu0 %v4113
        %4401 = vmatmul.mubr.bf16.gmra.mrb[0].mxu0 %v4112
        %v4402 = vpop.f32.mrb[0].mxu0
        %v4403 = vadd.f32 0.0, %v4402
        %v4404 = vpop.f32.mrb[0].mxu0
        %v4405 = vadd.f32 0.0, %v4404
        %v4406 = vpop.f32.mrb[0].mxu0
        %v4407 = vadd.f32 0.0, %v4406
        %v4408 = vpop.f32.mrb[0].mxu0
        %v4409 = vadd.f32 0.0, %v4408
        %4410 = vmatprep.mubr.bf16.mxu0 %v4121
        %4411 = vmatmul.mubr.bf16.gmra.mrb[0].mxu0 %v4120
        %v4412 = vpop.f32.mrb[0].mxu0
        %v4413 = vadd.f32 0.0, %v4412
        %v4414 = vpop.f32.mrb[0].mxu0
        %v4415 = vadd.f32 0.0, %v4414
        %v4416 = vpop.f32.mrb[0].mxu0
        %v4417 = vadd.f32 0.0, %v4416
        %v4418 = vpop.f32.mrb[0].mxu0
        %v4419 = vadd.f32 0.0, %v4418
        %4420 = vmatprep.mubr.bf16.mxu0 %v4129
        %4421 = vmatmul.mubr.bf16.gmra.mrb[0].mxu0 %v4128
        %v4422 = vpop.f32.mrb[0].mxu0
        %v4423 = vadd.f32 0.0, %v4422
        %v4424 = vpop.f32.mrb[0].mxu0
        %v4425 = vadd.f32 0.0, %v4424
        %v4426 = vpop.f32.mrb[0].mxu0
        %v4427 = vadd.f32 0.0, %v4426
        %v4428 = vpop.f32.mrb[0].mxu0
        %v4429 = vadd.f32 0.0, %v4428
        %4430 = vmatprep.mubr.bf16.mxu0 %v4137
        %4431 = vmatmul.mubr.bf16.gmra.mrb[0].mxu0 %v4136
        %v4432 = vpop.f32.mrb[0].mxu0
        %v4433 = vadd.f32 0.0, %v4432
        %v4434 = vpop.f32.mrb[0].mxu0
        %v4435 = vadd.f32 0.0, %v4434
        %v4436 = vpop.f32.mrb[0].mxu0
        %v4437 = vadd.f32 0.0, %v4436
        %v4438 = vpop.f32.mrb[0].mxu0
        %v4439 = vadd.f32 0.0, %v4438
        %4440 = vmatprep.mubr.bf16.mxu0 %v4145
        %4441 = vmatmul.mubr.bf16.gmra.mrb[0].mxu0 %v4144
        %v4442 = vpop.f32.mrb[0].mxu0
        %v4443 = vadd.f32 0.0, %v4442
        %v4444 = vpop.f32.mrb[0].mxu0
        %v4445 = vadd.f32 0.0, %v4444
        %v4446 = vpop.f32.mrb[0].mxu0
        %v4447 = vadd.f32 0.0, %v4446
        %v4448 = vpop.f32.mrb[0].mxu0
        %v4449 = vadd.f32 0.0, %v4448
        %4450 = vmatprep.mubr.bf16.mxu0 %v4153
        %4451 = vmatmul.mubr.bf16.gmra.mrb[0].mxu0 %v4152
        %v4452 = vpop.f32.mrb[0].mxu0
        %v4453 = vadd.f32 0.0, %v4452
        %v4454 = vpop.f32.mrb[0].mxu0
        %v4455 = vadd.f32 0.0, %v4454
        %v4456 = vpop.f32.mrb[0].mxu0
        %v4457 = vadd.f32 0.0, %v4456
        %v4458 = vpop.f32.mrb[0].mxu0
        %v4459 = vadd.f32 0.0, %v4458
        %4460 = vmatprep.mubr.bf16.mxu0 %v4161
        %4461 = vmatmul.mubr.bf16.gmra.mrb[0].mxu0 %v4160
        %v4462 = vpop.f32.mrb[0].mxu0
        %v4463 = vadd.f32 0.0, %v4462
        %v4464 = vpop.f32.mrb[0].mxu0
        %v4465 = vadd.f32 0.0, %v4464
        %v4466 = vpop.f32.mrb[0].mxu0
        %v4467 = vadd.f32 0.0, %v4466
        %v4468 = vpop.f32.mrb[0].mxu0
        %v4469 = vadd.f32 0.0, %v4468
        %4470 = vmatprep.mubr.bf16.mxu0 %v4169
        %4471 = vmatmul.mubr.bf16.gmra.mrb[0].mxu0 %v4168
        %v4472 = vpop.f32.mrb[0].mxu0
        %v4473 = vadd.f32 0.0, %v4472
        %v4474 = vpop.f32.mrb[0].mxu0
        %v4475 = vadd.f32 0.0, %v4474
        %v4476 = vpop.f32.mrb[0].mxu0
        %v4477 = vadd.f32 0.0, %v4476
        %v4478 = vpop.f32.mrb[0].mxu0
        %v4479 = vadd.f32 0.0, %v4478
        %4480 = vmatprep.mubr.bf16.mxu0 %v4177
        %4481 = vmatmul.mubr.bf16.gmra.mrb[0].mxu0 %v4176
        %v4482 = vpop.f32.mrb[0].mxu0
        %v4483 = vadd.f32 0.0, %v4482
        %v4484 = vpop.f32.mrb[0].mxu0
        %v4485 = vadd.f32 0.0, %v4484
        %v4486 = vpop.f32.mrb[0].mxu0
        %v4487 = vadd.f32 0.0, %v4486
        %v4488 = vpop.f32.mrb[0].mxu0
        %v4489 = vadd.f32 0.0, %v4488
        %4490 = vmatprep.mubr.bf16.mxu0 %v4185
        %4491 = vmatmul.mubr.bf16.gmra.mrb[0].mxu0 %v4184
        %v4492 = vpop.f32.mrb[0].mxu0
        %v4493 = vadd.f32 0.0, %v4492
        %v4494 = vpop.f32.mrb[0].mxu0
        %v4495 = vadd.f32 0.0, %v4494
        %v4496 = vpop.f32.mrb[0].mxu0
        %v4497 = vadd.f32 0.0, %v4496
        %v4498 = vpop.f32.mrb[0].mxu0
        %v4499 = vadd.f32 0.0, %v4498
        %4500 = vmatprep.mubr.bf16.mxu0 %v4193
        %4501 = vmatmul.mubr.bf16.gmra.mrb[0].mxu0 %v4192
        %v4502 = vpop.f32.mrb[0].mxu0
        %v4503 = vadd.f32 0.0, %v4502
        %v4504 = vpop.f32.mrb[0].mxu0
        %v4505 = vadd.f32 0.0, %v4504
        %v4506 = vpop.f32.mrb[0].mxu0
        %v4507 = vadd.f32 0.0, %v4506
        %v4508 = vpop.f32.mrb[0].mxu0
        %v4509 = vadd.f32 0.0, %v4508
        %4510 = vmatprep.mubr.bf16.mxu0 %v4201
        %4511 = vmatmul.mubr.bf16.gmra.mrb[0].mxu0 %v4200
        %v4512 = vpop.f32.mrb[0].mxu0
        %v4513 = vadd.f32 0.0, %v4512
        %v4514 = vpop.f32.mrb[0].mxu0
        %v4515 = vadd.f32 0.0, %v4514
        %v4516 = vpop.f32.mrb[0].mxu0
        %v4517 = vadd.f32 0.0, %v4516
        %v4518 = vpop.f32.mrb[0].mxu0
        %v4519 = vadd.f32 0.0, %v4518
        %4520 = vmatprep.mubr.bf16.mxu0 %v4209
        %4521 = vmatmul.mubr.bf16.gmra.mrb[0].mxu0 %v4208
        %v4522 = vpop.f32.mrb[0].mxu0
        %v4523 = vadd.f32 0.0, %v4522
        %v4524 = vpop.f32.mrb[0].mxu0
        %v4525 = vadd.f32 0.0, %v4524
        %v4526 = vpop.f32.mrb[0].mxu0
        %v4527 = vadd.f32 0.0, %v4526
        %v4528 = vpop.f32.mrb[0].mxu0
        %v4529 = vadd.f32 0.0, %v4528
        %4530 = vmatprep.mubr.bf16.mxu0 %v4217
        %4531 = vmatmul.mubr.bf16.gmra.mrb[0].mxu0 %v4216
        %v4532 = vpop.f32.mrb[0].mxu0
        %v4533 = vadd.f32 0.0, %v4532
        %v4534 = vpop.f32.mrb[0].mxu0
        %v4535 = vadd.f32 0.0, %v4534
        %v4536 = vpop.f32.mrb[0].mxu0
        %v4537 = vadd.f32 0.0, %v4536
        %v4538 = vpop.f32.mrb[0].mxu0
        %v4539 = vadd.f32 0.0, %v4538
        %4540 = vmatprep.mubr.bf16.mxu0 %v4225
        %4541 = vmatmul.mubr.bf16.gmra.mrb[0].mxu0 %v4224
        %v4542 = vpop.f32.mrb[0].mxu0
        %v4543 = vadd.f32 0.0, %v4542
        %v4544 = vpop.f32.mrb[0].mxu0
        %v4545 = vadd.f32 0.0, %v4544
        %v4546 = vpop.f32.mrb[0].mxu0
        %v4547 = vadd.f32 0.0, %v4546
        %v4548 = vpop.f32.mrb[0].mxu0
        %v4549 = vadd.f32 0.0, %v4548
        %4550 = vmatprep.mubr.bf16.mxu0 %v4233
        %4551 = vmatmul.mubr.bf16.gmra.mrb[0].mxu0 %v4232
        %v4552 = vpop.f32.mrb[0].mxu0
        %v4553 = vadd.f32 0.0, %v4552
        %v4554 = vpop.f32.mrb[0].mxu0
        %v4555 = vadd.f32 0.0, %v4554
        %v4556 = vpop.f32.mrb[0].mxu0
        %v4557 = vadd.f32 0.0, %v4556
        %v4558 = vpop.f32.mrb[0].mxu0
        %v4559 = vadd.f32 0.0, %v4558
        %4560 = vdwg.mxu0
        %4561 = vmatprep.subr.bf16.mxu0 %v3633
        %4562 = vmatpush1.bf16.msra.mxu0 %v3632
        %4563 = vmatprep.subr.bf16.mxu0 %v3635
        %4564 = vmatpush1.bf16.msra.mxu0 %v3634
        %4565 = vmatprep.subr.bf16.mxu0 %v3637
        %4566 = vmatpush1.bf16.msra.mxu0 %v3636
        %4567 = vmatprep.subr.bf16.mxu0 %v3639
        %4568 = vmatpush1.bf16.msra.mxu0 %v3638
        %4569 = vmatprep.subr.bf16.mxu0 %v3641
        %4570 = vmatpush1.bf16.msra.mxu0 %v3640
        %4571 = vmatprep.subr.bf16.mxu0 %v3643
        %4572 = vmatpush1.bf16.msra.mxu0 %v3642
        %4573 = vmatprep.subr.bf16.mxu0 %v3645
        %4574 = vmatpush1.bf16.msra.mxu0 %v3644
        %4575 = vmatprep.subr.bf16.mxu0 %v3647
        %4576 = vmatpush1.bf16.msra.mxu0 %v3646
        %4577 = vmatprep.subr.bf16.mxu0 %v3649
        %4578 = vmatpush1.bf16.msra.mxu0 %v3648
        %4579 = vmatprep.subr.bf16.mxu0 %v3651
        %4580 = vmatpush1.bf16.msra.mxu0 %v3650
        %4581 = vmatprep.subr.bf16.mxu0 %v3653
        %4582 = vmatpush1.bf16.msra.mxu0 %v3652
        %4583 = vmatprep.subr.bf16.mxu0 %v3655
        %4584 = vmatpush1.bf16.msra.mxu0 %v3654
        %4585 = vmatprep.subr.bf16.mxu0 %v3657
        %4586 = vmatpush1.bf16.msra.mxu0 %v3656
        %4587 = vmatprep.subr.bf16.mxu0 %v3659
        %4588 = vmatpush1.bf16.msra.mxu0 %v3658
        %4589 = vmatprep.subr.bf16.mxu0 %v3661
        %4590 = vmatpush1.bf16.msra.mxu0 %v3660
        %4591 = vmatprep.subr.bf16.mxu0 %v3663
        %4592 = vmatpush1.bf16.msra.mxu0 %v3662
        %4593 = vmatprep.mubr.bf16.mxu0 %v4115
        %4594 = vmatmul.mubr.bf16.gmra.mrb[0].mxu0 %v4114
        %v4595 = vpop.f32.mrb[0].mxu0
        %v4596 = vadd.f32 %v4403, %v4595
        %v4597 = vpop.f32.mrb[0].mxu0
        %v4598 = vadd.f32 %v4405, %v4597
        %v4599 = vpop.f32.mrb[0].mxu0
        %v4600 = vadd.f32 %v4407, %v4599
        %v4601 = vpop.f32.mrb[0].mxu0
        %v4602 = vadd.f32 %v4409, %v4601
        %4603 = vmatprep.mubr.bf16.mxu0 %v4123
        %4604 = vmatmul.mubr.bf16.gmra.mrb[0].mxu0 %v4122
        %v4605 = vpop.f32.mrb[0].mxu0
        %v4606 = vadd.f32 %v4413, %v4605
        %v4607 = vpop.f32.mrb[0].mxu0
        %v4608 = vadd.f32 %v4415, %v4607
        %v4609 = vpop.f32.mrb[0].mxu0
        %v4610 = vadd.f32 %v4417, %v4609
        %v4611 = vpop.f32.mrb[0].mxu0
        %v4612 = vadd.f32 %v4419, %v4611
        %4613 = vmatprep.mubr.bf16.mxu0 %v4131
        %4614 = vmatmul.mubr.bf16.gmra.mrb[0].mxu0 %v4130
        %v4615 = vpop.f32.mrb[0].mxu0
        %v4616 = vadd.f32 %v4423, %v4615
        %v4617 = vpop.f32.mrb[0].mxu0
        %v4618 = vadd.f32 %v4425, %v4617
        %v4619 = vpop.f32.mrb[0].mxu0
        %v4620 = vadd.f32 %v4427, %v4619
        %v4621 = vpop.f32.mrb[0].mxu0
        %v4622 = vadd.f32 %v4429, %v4621
        %4623 = vmatprep.mubr.bf16.mxu0 %v4139
        %4624 = vmatmul.mubr.bf16.gmra.mrb[0].mxu0 %v4138
        %v4625 = vpop.f32.mrb[0].mxu0
        %v4626 = vadd.f32 %v4433, %v4625
        %v4627 = vpop.f32.mrb[0].mxu0
        %v4628 = vadd.f32 %v4435, %v4627
        %v4629 = vpop.f32.mrb[0].mxu0
        %v4630 = vadd.f32 %v4437, %v4629
        %v4631 = vpop.f32.mrb[0].mxu0
        %v4632 = vadd.f32 %v4439, %v4631
        %4633 = vmatprep.mubr.bf16.mxu0 %v4147
        %4634 = vmatmul.mubr.bf16.gmra.mrb[0].mxu0 %v4146
        %v4635 = vpop.f32.mrb[0].mxu0
        %v4636 = vadd.f32 %v4443, %v4635
        %v4637 = vpop.f32.mrb[0].mxu0
        %v4638 = vadd.f32 %v4445, %v4637
        %v4639 = vpop.f32.mrb[0].mxu0
        %v4640 = vadd.f32 %v4447, %v4639
        %v4641 = vpop.f32.mrb[0].mxu0
        %v4642 = vadd.f32 %v4449, %v4641
        %4643 = vmatprep.mubr.bf16.mxu0 %v4155
        %4644 = vmatmul.mubr.bf16.gmra.mrb[0].mxu0 %v4154
        %v4645 = vpop.f32.mrb[0].mxu0
        %v4646 = vadd.f32 %v4453, %v4645
        %v4647 = vpop.f32.mrb[0].mxu0
        %v4648 = vadd.f32 %v4455, %v4647
        %v4649 = vpop.f32.mrb[0].mxu0
        %v4650 = vadd.f32 %v4457, %v4649
        %v4651 = vpop.f32.mrb[0].mxu0
        %v4652 = vadd.f32 %v4459, %v4651
        %4653 = vmatprep.mubr.bf16.mxu0 %v4163
        %4654 = vmatmul.mubr.bf16.gmra.mrb[0].mxu0 %v4162
        %v4655 = vpop.f32.mrb[0].mxu0
        %v4656 = vadd.f32 %v4463, %v4655
        %v4657 = vpop.f32.mrb[0].mxu0
        %v4658 = vadd.f32 %v4465, %v4657
        %v4659 = vpop.f32.mrb[0].mxu0
        %v4660 = vadd.f32 %v4467, %v4659
        %v4661 = vpop.f32.mrb[0].mxu0
        %v4662 = vadd.f32 %v4469, %v4661
        %4663 = vmatprep.mubr.bf16.mxu0 %v4171
        %4664 = vmatmul.mubr.bf16.gmra.mrb[0].mxu0 %v4170
        %v4665 = vpop.f32.mrb[0].mxu0
        %v4666 = vadd.f32 %v4473, %v4665
        %v4667 = vpop.f32.mrb[0].mxu0
        %v4668 = vadd.f32 %v4475, %v4667
        %v4669 = vpop.f32.mrb[0].mxu0
        %v4670 = vadd.f32 %v4477, %v4669
        %v4671 = vpop.f32.mrb[0].mxu0
        %v4672 = vadd.f32 %v4479, %v4671
        %4673 = vmatprep.mubr.bf16.mxu0 %v4179
        %4674 = vmatmul.mubr.bf16.gmra.mrb[0].mxu0 %v4178
        %v4675 = vpop.f32.mrb[0].mxu0
        %v4676 = vadd.f32 %v4483, %v4675
        %v4677 = vpop.f32.mrb[0].mxu0
        %v4678 = vadd.f32 %v4485, %v4677
        %v4679 = vpop.f32.mrb[0].mxu0
        %v4680 = vadd.f32 %v4487, %v4679
        %v4681 = vpop.f32.mrb[0].mxu0
        %v4682 = vadd.f32 %v4489, %v4681
        %4683 = vmatprep.mubr.bf16.mxu0 %v4187
        %4684 = vmatmul.mubr.bf16.gmra.mrb[0].mxu0 %v4186
        %v4685 = vpop.f32.mrb[0].mxu0
        %v4686 = vadd.f32 %v4493, %v4685
        %v4687 = vpop.f32.mrb[0].mxu0
        %v4688 = vadd.f32 %v4495, %v4687
        %v4689 = vpop.f32.mrb[0].mxu0
        %v4690 = vadd.f32 %v4497, %v4689
        %v4691 = vpop.f32.mrb[0].mxu0
        %v4692 = vadd.f32 %v4499, %v4691
        %4693 = vmatprep.mubr.bf16.mxu0 %v4195
        %4694 = vmatmul.mubr.bf16.gmra.mrb[0].mxu0 %v4194
        %v4695 = vpop.f32.mrb[0].mxu0
        %v4696 = vadd.f32 %v4503, %v4695
        %v4697 = vpop.f32.mrb[0].mxu0
        %v4698 = vadd.f32 %v4505, %v4697
        %v4699 = vpop.f32.mrb[0].mxu0
        %v4700 = vadd.f32 %v4507, %v4699
        %v4701 = vpop.f32.mrb[0].mxu0
        %v4702 = vadd.f32 %v4509, %v4701
        %4703 = vmatprep.mubr.bf16.mxu0 %v4203
        %4704 = vmatmul.mubr.bf16.gmra.mrb[0].mxu0 %v4202
        %v4705 = vpop.f32.mrb[0].mxu0
        %v4706 = vadd.f32 %v4513, %v4705
        %v4707 = vpop.f32.mrb[0].mxu0
        %v4708 = vadd.f32 %v4515, %v4707
        %v4709 = vpop.f32.mrb[0].mxu0
        %v4710 = vadd.f32 %v4517, %v4709
        %v4711 = vpop.f32.mrb[0].mxu0
        %v4712 = vadd.f32 %v4519, %v4711
        %4713 = vmatprep.mubr.bf16.mxu0 %v4211
        %4714 = vmatmul.mubr.bf16.gmra.mrb[0].mxu0 %v4210
        %v4715 = vpop.f32.mrb[0].mxu0
        %v4716 = vadd.f32 %v4523, %v4715
        %v4717 = vpop.f32.mrb[0].mxu0
        %v4718 = vadd.f32 %v4525, %v4717
        %v4719 = vpop.f32.mrb[0].mxu0
        %v4720 = vadd.f32 %v4527, %v4719
        %v4721 = vpop.f32.mrb[0].mxu0
        %v4722 = vadd.f32 %v4529, %v4721
        %4723 = vmatprep.mubr.bf16.mxu0 %v4219
        %4724 = vmatmul.mubr.bf16.gmra.mrb[0].mxu0 %v4218
        %v4725 = vpop.f32.mrb[0].mxu0
        %v4726 = vadd.f32 %v4533, %v4725
        %v4727 = vpop.f32.mrb[0].mxu0
        %v4728 = vadd.f32 %v4535, %v4727
        %v4729 = vpop.f32.mrb[0].mxu0
        %v4730 = vadd.f32 %v4537, %v4729
        %v4731 = vpop.f32.mrb[0].mxu0
        %v4732 = vadd.f32 %v4539, %v4731
        %4733 = vmatprep.mubr.bf16.mxu0 %v4227
        %4734 = vmatmul.mubr.bf16.gmra.mrb[0].mxu0 %v4226
        %v4735 = vpop.f32.mrb[0].mxu0
        %v4736 = vadd.f32 %v4543, %v4735
        %v4737 = vpop.f32.mrb[0].mxu0
        %v4738 = vadd.f32 %v4545, %v4737
        %v4739 = vpop.f32.mrb[0].mxu0
        %v4740 = vadd.f32 %v4547, %v4739
        %v4741 = vpop.f32.mrb[0].mxu0
        %v4742 = vadd.f32 %v4549, %v4741
        %4743 = vmatprep.mubr.bf16.mxu0 %v4235
        %4744 = vmatmul.mubr.bf16.gmra.mrb[0].mxu0 %v4234
        %v4745 = vpop.f32.mrb[0].mxu0
        %v4746 = vadd.f32 %v4553, %v4745
        %v4747 = vpop.f32.mrb[0].mxu0
        %v4748 = vadd.f32 %v4555, %v4747
        %v4749 = vpop.f32.mrb[0].mxu0
        %v4750 = vadd.f32 %v4557, %v4749
        %v4751 = vpop.f32.mrb[0].mxu0
        %v4752 = vadd.f32 %v4559, %v4751
        %4753 = vdwg.mxu0
        %4754 = vmatprep.subr.bf16.mxu0 %v3665
        %4755 = vmatpush1.bf16.msra.mxu0 %v3664
        %4756 = vmatprep.subr.bf16.mxu0 %v3667
        %4757 = vmatpush1.bf16.msra.mxu0 %v3666
        %4758 = vmatprep.subr.bf16.mxu0 %v3669
        %4759 = vmatpush1.bf16.msra.mxu0 %v3668
        %4760 = vmatprep.subr.bf16.mxu0 %v3671
        %4761 = vmatpush1.bf16.msra.mxu0 %v3670
        %4762 = vmatprep.subr.bf16.mxu0 %v3673
        %4763 = vmatpush1.bf16.msra.mxu0 %v3672
        %4764 = vmatprep.subr.bf16.mxu0 %v3675
        %4765 = vmatpush1.bf16.msra.mxu0 %v3674
        %4766 = vmatprep.subr.bf16.mxu0 %v3677
        %4767 = vmatpush1.bf16.msra.mxu0 %v3676
        %4768 = vmatprep.subr.bf16.mxu0 %v3679
        %4769 = vmatpush1.bf16.msra.mxu0 %v3678
        %4770 = vmatprep.subr.bf16.mxu0 %v3681
        %4771 = vmatpush1.bf16.msra.mxu0 %v3680
        %4772 = vmatprep.subr.bf16.mxu0 %v3683
        %4773 = vmatpush1.bf16.msra.mxu0 %v3682
        %4774 = vmatprep.subr.bf16.mxu0 %v3685
        %4775 = vmatpush1.bf16.msra.mxu0 %v3684
        %4776 = vmatprep.subr.bf16.mxu0 %v3687
        %4777 = vmatpush1.bf16.msra.mxu0 %v3686
        %4778 = vmatprep.subr.bf16.mxu0 %v3689
        %4779 = vmatpush1.bf16.msra.mxu0 %v3688
        %4780 = vmatprep.subr.bf16.mxu0 %v3691
        %4781 = vmatpush1.bf16.msra.mxu0 %v3690
        %4782 = vmatprep.subr.bf16.mxu0 %v3693
        %4783 = vmatpush1.bf16.msra.mxu0 %v3692
        %4784 = vmatprep.subr.bf16.mxu0 %v3695
        %4785 = vmatpush1.bf16.msra.mxu0 %v3694
        %4786 = vmatprep.mubr.bf16.mxu0 %v4117
        %4787 = vmatmul.mubr.bf16.gmra.mrb[0].mxu0 %v4116
        %v4788 = vpop.f32.mrb[0].mxu0
        %v4789 = vadd.f32 %v4596, %v4788
        %v4790 = vpop.f32.mrb[0].mxu0
        %v4791 = vadd.f32 %v4598, %v4790
        %v4792 = vpop.f32.mrb[0].mxu0
        %v4793 = vadd.f32 %v4600, %v4792
        %v4794 = vpop.f32.mrb[0].mxu0
        %v4795 = vadd.f32 %v4602, %v4794
        %4796 = vmatprep.mubr.bf16.mxu0 %v4125
        %4797 = vmatmul.mubr.bf16.gmra.mrb[0].mxu0 %v4124
        %v4798 = vpop.f32.mrb[0].mxu0
        %v4799 = vadd.f32 %v4606, %v4798
        %v4800 = vpop.f32.mrb[0].mxu0
        %v4801 = vadd.f32 %v4608, %v4800
        %v4802 = vpop.f32.mrb[0].mxu0
        %v4803 = vadd.f32 %v4610, %v4802
        %v4804 = vpop.f32.mrb[0].mxu0
        %v4805 = vadd.f32 %v4612, %v4804
        %4806 = vmatprep.mubr.bf16.mxu0 %v4133
        %4807 = vmatmul.mubr.bf16.gmra.mrb[0].mxu0 %v4132
        %v4808 = vpop.f32.mrb[0].mxu0
        %v4809 = vadd.f32 %v4616, %v4808
        %v4810 = vpop.f32.mrb[0].mxu0
        %v4811 = vadd.f32 %v4618, %v4810
        %v4812 = vpop.f32.mrb[0].mxu0
        %v4813 = vadd.f32 %v4620, %v4812
        %v4814 = vpop.f32.mrb[0].mxu0
        %v4815 = vadd.f32 %v4622, %v4814
        %4816 = vmatprep.mubr.bf16.mxu0 %v4141
        %4817 = vmatmul.mubr.bf16.gmra.mrb[0].mxu0 %v4140
        %v4818 = vpop.f32.mrb[0].mxu0
        %v4819 = vadd.f32 %v4626, %v4818
        %v4820 = vpop.f32.mrb[0].mxu0
        %v4821 = vadd.f32 %v4628, %v4820
        %v4822 = vpop.f32.mrb[0].mxu0
        %v4823 = vadd.f32 %v4630, %v4822
        %v4824 = vpop.f32.mrb[0].mxu0
        %v4825 = vadd.f32 %v4632, %v4824
        %4826 = vmatprep.mubr.bf16.mxu0 %v4149
        %4827 = vmatmul.mubr.bf16.gmra.mrb[0].mxu0 %v4148
        %v4828 = vpop.f32.mrb[0].mxu0
        %v4829 = vadd.f32 %v4636, %v4828
        %v4830 = vpop.f32.mrb[0].mxu0
        %v4831 = vadd.f32 %v4638, %v4830
        %v4832 = vpop.f32.mrb[0].mxu0
        %v4833 = vadd.f32 %v4640, %v4832
        %v4834 = vpop.f32.mrb[0].mxu0
        %v4835 = vadd.f32 %v4642, %v4834
        %4836 = vmatprep.mubr.bf16.mxu0 %v4157
        %4837 = vmatmul.mubr.bf16.gmra.mrb[0].mxu0 %v4156
        %v4838 = vpop.f32.mrb[0].mxu0
        %v4839 = vadd.f32 %v4646, %v4838
        %v4840 = vpop.f32.mrb[0].mxu0
        %v4841 = vadd.f32 %v4648, %v4840
        %v4842 = vpop.f32.mrb[0].mxu0
        %v4843 = vadd.f32 %v4650, %v4842
        %v4844 = vpop.f32.mrb[0].mxu0
        %v4845 = vadd.f32 %v4652, %v4844
        %4846 = vmatprep.mubr.bf16.mxu0 %v4165
        %4847 = vmatmul.mubr.bf16.gmra.mrb[0].mxu0 %v4164
        %v4848 = vpop.f32.mrb[0].mxu0
        %v4849 = vadd.f32 %v4656, %v4848
        %v4850 = vpop.f32.mrb[0].mxu0
        %v4851 = vadd.f32 %v4658, %v4850
        %v4852 = vpop.f32.mrb[0].mxu0
        %v4853 = vadd.f32 %v4660, %v4852
        %v4854 = vpop.f32.mrb[0].mxu0
        %v4855 = vadd.f32 %v4662, %v4854
        %4856 = vmatprep.mubr.bf16.mxu0 %v4173
        %4857 = vmatmul.mubr.bf16.gmra.mrb[0].mxu0 %v4172
        %v4858 = vpop.f32.mrb[0].mxu0
        %v4859 = vadd.f32 %v4666, %v4858
        %v4860 = vpop.f32.mrb[0].mxu0
        %v4861 = vadd.f32 %v4668, %v4860
        %v4862 = vpop.f32.mrb[0].mxu0
        %v4863 = vadd.f32 %v4670, %v4862
        %v4864 = vpop.f32.mrb[0].mxu0
        %v4865 = vadd.f32 %v4672, %v4864
        %4866 = vmatprep.mubr.bf16.mxu0 %v4181
        %4867 = vmatmul.mubr.bf16.gmra.mrb[0].mxu0 %v4180
        %v4868 = vpop.f32.mrb[0].mxu0
        %v4869 = vadd.f32 %v4676, %v4868
        %v4870 = vpop.f32.mrb[0].mxu0
        %v4871 = vadd.f32 %v4678, %v4870
        %v4872 = vpop.f32.mrb[0].mxu0
        %v4873 = vadd.f32 %v4680, %v4872
        %v4874 = vpop.f32.mrb[0].mxu0
        %v4875 = vadd.f32 %v4682, %v4874
        %4876 = vmatprep.mubr.bf16.mxu0 %v4189
        %4877 = vmatmul.mubr.bf16.gmra.mrb[0].mxu0 %v4188
        %v4878 = vpop.f32.mrb[0].mxu0
        %v4879 = vadd.f32 %v4686, %v4878
        %v4880 = vpop.f32.mrb[0].mxu0
        %v4881 = vadd.f32 %v4688, %v4880
        %v4882 = vpop.f32.mrb[0].mxu0
        %v4883 = vadd.f32 %v4690, %v4882
        %v4884 = vpop.f32.mrb[0].mxu0
        %v4885 = vadd.f32 %v4692, %v4884
        %4886 = vmatprep.mubr.bf16.mxu0 %v4197
        %4887 = vmatmul.mubr.bf16.gmra.mrb[0].mxu0 %v4196
        %v4888 = vpop.f32.mrb[0].mxu0
        %v4889 = vadd.f32 %v4696, %v4888
        %v4890 = vpop.f32.mrb[0].mxu0
        %v4891 = vadd.f32 %v4698, %v4890
        %v4892 = vpop.f32.mrb[0].mxu0
        %v4893 = vadd.f32 %v4700, %v4892
        %v4894 = vpop.f32.mrb[0].mxu0
        %v4895 = vadd.f32 %v4702, %v4894
        %4896 = vmatprep.mubr.bf16.mxu0 %v4205
        %4897 = vmatmul.mubr.bf16.gmra.mrb[0].mxu0 %v4204
        %v4898 = vpop.f32.mrb[0].mxu0
        %v4899 = vadd.f32 %v4706, %v4898
        %v4900 = vpop.f32.mrb[0].mxu0
        %v4901 = vadd.f32 %v4708, %v4900
        %v4902 = vpop.f32.mrb[0].mxu0
        %v4903 = vadd.f32 %v4710, %v4902
        %v4904 = vpop.f32.mrb[0].mxu0
        %v4905 = vadd.f32 %v4712, %v4904
        %4906 = vmatprep.mubr.bf16.mxu0 %v4213
        %4907 = vmatmul.mubr.bf16.gmra.mrb[0].mxu0 %v4212
        %v4908 = vpop.f32.mrb[0].mxu0
        %v4909 = vadd.f32 %v4716, %v4908
        %v4910 = vpop.f32.mrb[0].mxu0
        %v4911 = vadd.f32 %v4718, %v4910
        %v4912 = vpop.f32.mrb[0].mxu0
        %v4913 = vadd.f32 %v4720, %v4912
        %v4914 = vpop.f32.mrb[0].mxu0
        %v4915 = vadd.f32 %v4722, %v4914
        %4916 = vmatprep.mubr.bf16.mxu0 %v4221
        %4917 = vmatmul.mubr.bf16.gmra.mrb[0].mxu0 %v4220
        %v4918 = vpop.f32.mrb[0].mxu0
        %v4919 = vadd.f32 %v4726, %v4918
        %v4920 = vpop.f32.mrb[0].mxu0
        %v4921 = vadd.f32 %v4728, %v4920
        %v4922 = vpop.f32.mrb[0].mxu0
        %v4923 = vadd.f32 %v4730, %v4922
        %v4924 = vpop.f32.mrb[0].mxu0
        %v4925 = vadd.f32 %v4732, %v4924
        %4926 = vmatprep.mubr.bf16.mxu0 %v4229
        %4927 = vmatmul.mubr.bf16.gmra.mrb[0].mxu0 %v4228
        %v4928 = vpop.f32.mrb[0].mxu0
        %v4929 = vadd.f32 %v4736, %v4928
        %v4930 = vpop.f32.mrb[0].mxu0
        %v4931 = vadd.f32 %v4738, %v4930
        %v4932 = vpop.f32.mrb[0].mxu0
        %v4933 = vadd.f32 %v4740, %v4932
        %v4934 = vpop.f32.mrb[0].mxu0
        %v4935 = vadd.f32 %v4742, %v4934
        %4936 = vmatprep.mubr.bf16.mxu0 %v4237
        %4937 = vmatmul.mubr.bf16.gmra.mrb[0].mxu0 %v4236
        %v4938 = vpop.f32.mrb[0].mxu0
        %v4939 = vadd.f32 %v4746, %v4938
        %v4940 = vpop.f32.mrb[0].mxu0
        %v4941 = vadd.f32 %v4748, %v4940
        %v4942 = vpop.f32.mrb[0].mxu0
        %v4943 = vadd.f32 %v4750, %v4942
        %v4944 = vpop.f32.mrb[0].mxu0
        %v4945 = vadd.f32 %v4752, %v4944
        %4946 = vdwg.mxu0
        %4947 = vmatprep.subr.bf16.mxu0 %v3697
        %4948 = vmatpush1.bf16.msra.mxu0 %v3696
        %4949 = vmatprep.subr.bf16.mxu0 %v3699
        %4950 = vmatpush1.bf16.msra.mxu0 %v3698
        %4951 = vmatprep.subr.bf16.mxu0 %v3701
        %4952 = vmatpush1.bf16.msra.mxu0 %v3700
        %4953 = vmatprep.subr.bf16.mxu0 %v3703
        %4954 = vmatpush1.bf16.msra.mxu0 %v3702
        %4955 = vmatprep.subr.bf16.mxu0 %v3705
        %4956 = vmatpush1.bf16.msra.mxu0 %v3704
        %4957 = vmatprep.subr.bf16.mxu0 %v3707
        %4958 = vmatpush1.bf16.msra.mxu0 %v3706
        %4959 = vmatprep.subr.bf16.mxu0 %v3709
        %4960 = vmatpush1.bf16.msra.mxu0 %v3708
        %4961 = vmatprep.subr.bf16.mxu0 %v3711
        %4962 = vmatpush1.bf16.msra.mxu0 %v3710
        %4963 = vmatprep.subr.bf16.mxu0 %v3713
        %4964 = vmatpush1.bf16.msra.mxu0 %v3712
        %4965 = vmatprep.subr.bf16.mxu0 %v3715
        %4966 = vmatpush1.bf16.msra.mxu0 %v3714
        %4967 = vmatprep.subr.bf16.mxu0 %v3717
        %4968 = vmatpush1.bf16.msra.mxu0 %v3716
        %4969 = vmatprep.subr.bf16.mxu0 %v3719
        %4970 = vmatpush1.bf16.msra.mxu0 %v3718
        %4971 = vmatprep.subr.bf16.mxu0 %v3721
        %4972 = vmatpush1.bf16.msra.mxu0 %v3720
        %4973 = vmatprep.subr.bf16.mxu0 %v3723
        %4974 = vmatpush1.bf16.msra.mxu0 %v3722
        %4975 = vmatprep.subr.bf16.mxu0 %v3725
        %4976 = vmatpush1.bf16.msra.mxu0 %v3724
        %4977 = vmatprep.subr.bf16.mxu0 %v3727
        %4978 = vmatpush1.bf16.msra.mxu0 %v3726
        %4979 = vmatprep.mubr.bf16.mxu0 %v4119
        %4980 = vmatmul.mubr.bf16.gmra.mrb[0].mxu0 %v4118
        %v4981 = vpop.f32.mrb[0].mxu0
        %v4982 = vadd.f32 %v4789, %v4981
        %v4983 = vpop.f32.mrb[0].mxu0
        %v4984 = vadd.f32 %v4791, %v4983
        %v4985 = vpop.f32.mrb[0].mxu0
        %v4986 = vadd.f32 %v4793, %v4985
        %v4987 = vpop.f32.mrb[0].mxu0
        %v4988 = vadd.f32 %v4795, %v4987
        %4989 = vmatprep.mubr.bf16.mxu0 %v4127
        %4990 = vmatmul.mubr.bf16.gmra.mrb[0].mxu0 %v4126
        %v4991 = vpop.f32.mrb[0].mxu0
        %v4992 = vadd.f32 %v4799, %v4991
        %v4993 = vpop.f32.mrb[0].mxu0
        %v4994 = vadd.f32 %v4801, %v4993
        %v4995 = vpop.f32.mrb[0].mxu0
        %v4996 = vadd.f32 %v4803, %v4995
        %v4997 = vpop.f32.mrb[0].mxu0
        %v4998 = vadd.f32 %v4805, %v4997
        %4999 = vmatprep.mubr.bf16.mxu0 %v4135
        %5000 = vmatmul.mubr.bf16.gmra.mrb[0].mxu0 %v4134
        %v5001 = vpop.f32.mrb[0].mxu0
        %v5002 = vadd.f32 %v4809, %v5001
        %v5003 = vpop.f32.mrb[0].mxu0
        %v5004 = vadd.f32 %v4811, %v5003
        %v5005 = vpop.f32.mrb[0].mxu0
        %v5006 = vadd.f32 %v4813, %v5005
        %v5007 = vpop.f32.mrb[0].mxu0
        %v5008 = vadd.f32 %v4815, %v5007
        %5009 = vmatprep.mubr.bf16.mxu0 %v4143
        %5010 = vmatmul.mubr.bf16.gmra.mrb[0].mxu0 %v4142
        %v5011 = vpop.f32.mrb[0].mxu0
        %v5012 = vadd.f32 %v4819, %v5011
        %v5013 = vpop.f32.mrb[0].mxu0
        %v5014 = vadd.f32 %v4821, %v5013
        %v5015 = vpop.f32.mrb[0].mxu0
        %v5016 = vadd.f32 %v4823, %v5015
        %v5017 = vpop.f32.mrb[0].mxu0
        %v5018 = vadd.f32 %v4825, %v5017
        %5019 = vmatprep.mubr.bf16.mxu0 %v4151
        %5020 = vmatmul.mubr.bf16.gmra.mrb[0].mxu0 %v4150
        %v5021 = vpop.f32.mrb[0].mxu0
        %v5022 = vadd.f32 %v4829, %v5021
        %v5023 = vpop.f32.mrb[0].mxu0
        %v5024 = vadd.f32 %v4831, %v5023
        %v5025 = vpop.f32.mrb[0].mxu0
        %v5026 = vadd.f32 %v4833, %v5025
        %v5027 = vpop.f32.mrb[0].mxu0
        %v5028 = vadd.f32 %v4835, %v5027
        %5029 = vmatprep.mubr.bf16.mxu0 %v4159
        %5030 = vmatmul.mubr.bf16.gmra.mrb[0].mxu0 %v4158
        %v5031 = vpop.f32.mrb[0].mxu0
        %v5032 = vadd.f32 %v4839, %v5031
        %v5033 = vpop.f32.mrb[0].mxu0
        %v5034 = vadd.f32 %v4841, %v5033
        %v5035 = vpop.f32.mrb[0].mxu0
        %v5036 = vadd.f32 %v4843, %v5035
        %v5037 = vpop.f32.mrb[0].mxu0
        %v5038 = vadd.f32 %v4845, %v5037
        %5039 = vmatprep.mubr.bf16.mxu0 %v4167
        %5040 = vmatmul.mubr.bf16.gmra.mrb[0].mxu0 %v4166
        %v5041 = vpop.f32.mrb[0].mxu0
        %v5042 = vadd.f32 %v4849, %v5041
        %v5043 = vpop.f32.mrb[0].mxu0
        %v5044 = vadd.f32 %v4851, %v5043
        %v5045 = vpop.f32.mrb[0].mxu0
        %v5046 = vadd.f32 %v4853, %v5045
        %v5047 = vpop.f32.mrb[0].mxu0
        %v5048 = vadd.f32 %v4855, %v5047
        %5049 = vmatprep.mubr.bf16.mxu0 %v4175
        %5050 = vmatmul.mubr.bf16.gmra.mrb[0].mxu0 %v4174
        %v5051 = vpop.f32.mrb[0].mxu0
        %v5052 = vadd.f32 %v4859, %v5051
        %v5053 = vpop.f32.mrb[0].mxu0
        %v5054 = vadd.f32 %v4861, %v5053
        %v5055 = vpop.f32.mrb[0].mxu0
        %v5056 = vadd.f32 %v4863, %v5055
        %v5057 = vpop.f32.mrb[0].mxu0
        %v5058 = vadd.f32 %v4865, %v5057
        %5059 = vmatprep.mubr.bf16.mxu0 %v4183
        %5060 = vmatmul.mubr.bf16.gmra.mrb[0].mxu0 %v4182
        %v5061 = vpop.f32.mrb[0].mxu0
        %v5062 = vadd.f32 %v4869, %v5061
        %v5063 = vpop.f32.mrb[0].mxu0
        %v5064 = vadd.f32 %v4871, %v5063
        %v5065 = vpop.f32.mrb[0].mxu0
        %v5066 = vadd.f32 %v4873, %v5065
        %v5067 = vpop.f32.mrb[0].mxu0
        %v5068 = vadd.f32 %v4875, %v5067
        %5069 = vmatprep.mubr.bf16.mxu0 %v4191
        %5070 = vmatmul.mubr.bf16.gmra.mrb[0].mxu0 %v4190
        %v5071 = vpop.f32.mrb[0].mxu0
        %v5072 = vadd.f32 %v4879, %v5071
        %v5073 = vpop.f32.mrb[0].mxu0
        %v5074 = vadd.f32 %v4881, %v5073
        %v5075 = vpop.f32.mrb[0].mxu0
        %v5076 = vadd.f32 %v4883, %v5075
        %v5077 = vpop.f32.mrb[0].mxu0
        %v5078 = vadd.f32 %v4885, %v5077
        %5079 = vmatprep.mubr.bf16.mxu0 %v4199
        %5080 = vmatmul.mubr.bf16.gmra.mrb[0].mxu0 %v4198
        %v5081 = vpop.f32.mrb[0].mxu0
        %v5082 = vadd.f32 %v4889, %v5081
        %v5083 = vpop.f32.mrb[0].mxu0
        %v5084 = vadd.f32 %v4891, %v5083
        %v5085 = vpop.f32.mrb[0].mxu0
        %v5086 = vadd.f32 %v4893, %v5085
        %v5087 = vpop.f32.mrb[0].mxu0
        %v5088 = vadd.f32 %v4895, %v5087
        %5089 = vmatprep.mubr.bf16.mxu0 %v4207
        %5090 = vmatmul.mubr.bf16.gmra.mrb[0].mxu0 %v4206
        %v5091 = vpop.f32.mrb[0].mxu0
        %v5092 = vadd.f32 %v4899, %v5091
        %v5093 = vpop.f32.mrb[0].mxu0
        %v5094 = vadd.f32 %v4901, %v5093
        %v5095 = vpop.f32.mrb[0].mxu0
        %v5096 = vadd.f32 %v4903, %v5095
        %v5097 = vpop.f32.mrb[0].mxu0
        %v5098 = vadd.f32 %v4905, %v5097
        %5099 = vmatprep.mubr.bf16.mxu0 %v4215
        %5100 = vmatmul.mubr.bf16.gmra.mrb[0].mxu0 %v4214
        %v5101 = vpop.f32.mrb[0].mxu0
        %v5102 = vadd.f32 %v4909, %v5101
        %v5103 = vpop.f32.mrb[0].mxu0
        %v5104 = vadd.f32 %v4911, %v5103
        %v5105 = vpop.f32.mrb[0].mxu0
        %v5106 = vadd.f32 %v4913, %v5105
        %v5107 = vpop.f32.mrb[0].mxu0
        %v5108 = vadd.f32 %v4915, %v5107
        %5109 = vmatprep.mubr.bf16.mxu0 %v4223
        %5110 = vmatmul.mubr.bf16.gmra.mrb[0].mxu0 %v4222
        %v5111 = vpop.f32.mrb[0].mxu0
        %v5112 = vadd.f32 %v4919, %v5111
        %v5113 = vpop.f32.mrb[0].mxu0
        %v5114 = vadd.f32 %v4921, %v5113
        %v5115 = vpop.f32.mrb[0].mxu0
        %v5116 = vadd.f32 %v4923, %v5115
        %v5117 = vpop.f32.mrb[0].mxu0
        %v5118 = vadd.f32 %v4925, %v5117
        %5119 = vmatprep.mubr.bf16.mxu0 %v4231
        %5120 = vmatmul.mubr.bf16.gmra.mrb[0].mxu0 %v4230
        %v5121 = vpop.f32.mrb[0].mxu0
        %v5122 = vadd.f32 %v4929, %v5121
        %v5123 = vpop.f32.mrb[0].mxu0
        %v5124 = vadd.f32 %v4931, %v5123
        %v5125 = vpop.f32.mrb[0].mxu0
        %v5126 = vadd.f32 %v4933, %v5125
        %v5127 = vpop.f32.mrb[0].mxu0
        %v5128 = vadd.f32 %v4935, %v5127
        %5129 = vmatprep.mubr.bf16.mxu0 %v4239
        %5130 = vmatmul.mubr.bf16.gmra.mrb[0].mxu0 %v4238
        %v5131 = vpop.f32.mrb[0].mxu0
        %v5132 = vadd.f32 %v4939, %v5131
        %v5133 = vpop.f32.mrb[0].mxu0
        %v5134 = vadd.f32 %v4941, %v5133
        %v5135 = vpop.f32.mrb[0].mxu0
        %v5136 = vadd.f32 %v4943, %v5135
        %v5137 = vpop.f32.mrb[0].mxu0
        %v5138 = vadd.f32 %v4945, %v5137
        %5139 = vdwg.mxu0
        %5140 = vst [vmem:[%s2432] sm:$0xff] %v4982
        %5141 = vst [vmem:[%s2432 + $0x8] sm:$0xff] %v4984
        %5142 = vst [vmem:[%s2432 + $0x10] sm:$0xff] %v4986
        %5143 = vst [vmem:[%s2432 + $0x18] sm:$0xff] %v4988
        %5144 = vst [vmem:[%s2432 + $0x20] sm:$0xff] %v4992
        %5145 = vst [vmem:[%s2432 + $0x28] sm:$0xff] %v4994
        %5146 = vst [vmem:[%s2432 + $0x30] sm:$0xff] %v4996
        %5147 = vst [vmem:[%s2432 + $0x38] sm:$0xff] %v4998
        %5148 = vst [vmem:[%s2432 + $0x40] sm:$0xff] %v5002
        %5149 = vst [vmem:[%s2432 + $0x48] sm:$0xff] %v5004
        %5150 = vst [vmem:[%s2432 + $0x50] sm:$0xff] %v5006
        %5151 = vst [vmem:[%s2432 + $0x58] sm:$0xff] %v5008
        %5152 = vst [vmem:[%s2432 + $0x60] sm:$0xff] %v5012
        %5153 = vst [vmem:[%s2432 + $0x68] sm:$0xff] %v5014
        %5154 = vst [vmem:[%s2432 + $0x70] sm:$0xff] %v5016
        %5155 = vst [vmem:[%s2432 + $0x78] sm:$0xff] %v5018
        %5156 = vst [vmem:[%s2432 + $0x80] sm:$0xff] %v5022
        %5157 = vst [vmem:[%s2432 + $0x88] sm:$0xff] %v5024
        %5158 = vst [vmem:[%s2432 + $0x90] sm:$0xff] %v5026
        %5159 = vst [vmem:[%s2432 + $0x98] sm:$0xff] %v5028
        %5160 = vst [vmem:[%s2432 + $0xa0] sm:$0xff] %v5032
        %5161 = vst [vmem:[%s2432 + $0xa8] sm:$0xff] %v5034
        %5162 = vst [vmem:[%s2432 + $0xb0] sm:$0xff] %v5036
        %5163 = vst [vmem:[%s2432 + $0xb8] sm:$0xff] %v5038
        %5164 = vst [vmem:[%s2432 + $0xc0] sm:$0xff] %v5042
        %5165 = vst [vmem:[%s2432 + $0xc8] sm:$0xff] %v5044
        %5166 = vst [vmem:[%s2432 + $0xd0] sm:$0xff] %v5046
        %5167 = vst [vmem:[%s2432 + $0xd8] sm:$0xff] %v5048
        %5168 = vst [vmem:[%s2432 + $0xe0] sm:$0xff] %v5052
        %5169 = vst [vmem:[%s2432 + $0xe8] sm:$0xff] %v5054
        %5170 = vst [vmem:[%s2432 + $0xf0] sm:$0xff] %v5056
        %5171 = vst [vmem:[%s2432 + $0xf8] sm:$0xff] %v5058
        %5172 = vst [vmem:[%s2432 + $0x100] sm:$0xff] %v5062
        %5173 = vst [vmem:[%s2432 + $0x108] sm:$0xff] %v5064
        %5174 = vst [vmem:[%s2432 + $0x110] sm:$0xff] %v5066
        %5175 = vst [vmem:[%s2432 + $0x118] sm:$0xff] %v5068
        %5176 = vst [vmem:[%s2432 + $0x120] sm:$0xff] %v5072
        %5177 = vst [vmem:[%s2432 + $0x128] sm:$0xff] %v5074
        %5178 = vst [vmem:[%s2432 + $0x130] sm:$0xff] %v5076
        %5179 = vst [vmem:[%s2432 + $0x138] sm:$0xff] %v5078
        %5180 = vst [vmem:[%s2432 + $0x140] sm:$0xff] %v5082
        %5181 = vst [vmem:[%s2432 + $0x148] sm:$0xff] %v5084
        %5182 = vst [vmem:[%s2432 + $0x150] sm:$0xff] %v5086
        %5183 = vst [vmem:[%s2432 + $0x158] sm:$0xff] %v5088
        %5184 = vst [vmem:[%s2432 + $0x160] sm:$0xff] %v5092
        %5185 = vst [vmem:[%s2432 + $0x168] sm:$0xff] %v5094
        %5186 = vst [vmem:[%s2432 + $0x170] sm:$0xff] %v5096
        %5187 = vst [vmem:[%s2432 + $0x178] sm:$0xff] %v5098
        %5188 = vst [vmem:[%s2432 + $0x180] sm:$0xff] %v5102
        %5189 = vst [vmem:[%s2432 + $0x188] sm:$0xff] %v5104
        %5190 = vst [vmem:[%s2432 + $0x190] sm:$0xff] %v5106
        %5191 = vst [vmem:[%s2432 + $0x198] sm:$0xff] %v5108
        %5192 = vst [vmem:[%s2432 + $0x1a0] sm:$0xff] %v5112
        %5193 = vst [vmem:[%s2432 + $0x1a8] sm:$0xff] %v5114
        %5194 = vst [vmem:[%s2432 + $0x1b0] sm:$0xff] %v5116
        %5195 = vst [vmem:[%s2432 + $0x1b8] sm:$0xff] %v5118
        %5196 = vst [vmem:[%s2432 + $0x1c0] sm:$0xff] %v5122
        %5197 = vst [vmem:[%s2432 + $0x1c8] sm:$0xff] %v5124
        %5198 = vst [vmem:[%s2432 + $0x1d0] sm:$0xff] %v5126
        %5199 = vst [vmem:[%s2432 + $0x1d8] sm:$0xff] %v5128
        %5200 = vst [vmem:[%s2432 + $0x1e0] sm:$0xff] %v5132
        %5201 = vst [vmem:[%s2432 + $0x1e8] sm:$0xff] %v5134
        %5202 = vst [vmem:[%s2432 + $0x1f0] sm:$0xff] %v5136
        %5203 = vst [vmem:[%s2432 + $0x1f8] sm:$0xff] %v5138
        %s5204 = sand.u32 %s113, 1
        %s5205 = sand.u32 %s113, 1
        %s5206 = smul.addr %s5205, 512
        %s5207 = scalar_lea.vmem [#allocation4], %s5206
        // Predicated region
        $region137: #{tpu_custom_call.1} parent=127 // pred_check
          %p5208 = pneg %p123
        $region138: #{tpu_custom_call.1} parent=127 // pred_check_branch
          %5210 = sbr.rel (%p5208) target = $region140
        $region139: #{tpu_custom_call.1} parent=127 // pred_region
          %s5211 = smul.u32 2, %s19
          %s5212 = ssub.s32 7, %s5211
          %p5213 = scmp.lt.s32.totalorder %s5212, 2
          %s5214 = scalar_select %p5213, %s5212, 2
          %s5215 = smul.u32 4096, %s5214
          %p5216 = scmp.ne.s32.totalorder 0, %s5215
          %s5217 = smul.addr %s18, 224
          %s5218 = sadd.s32 %s5211, %s5217
          %s5219 = smul.addr %s5218, 8
          %s5220 = scalar_lea.vmem %s3, %s5219
          %s5221 = smul.u32 %s5214, 8
          // Predicated region
          $region141: #{tpu_custom_call.1} parent=139 // pred_check
            %p5222 = pneg %p5216
          $region142: #{tpu_custom_call.1} parent=139 // pred_check_branch
            %5224 = sbr.rel (%p5222) target = $region144
          $region143: #{tpu_custom_call.1} parent=139 // pred_region
            %p5225 = scmp.lt.u32.totalorder %s5221, 8
            %p5226 = pneg %p5225
            // Predicated region
            $region145: #{tpu_custom_call.1} parent=143 // pred_check
              _
            $region146: #{tpu_custom_call.1} parent=143 // pred_check_branch
              %5228 = sbr.rel (%p5225) target = $region148
            $region147: #{tpu_custom_call.1} parent=143 // pred_region
              %s5305 = sand.u32 %s5221, 7
              %p5306 = scmp.eq.s32.totalorder %s5305, 0
              // Predicated region
              $region160: #{tpu_custom_call.1} parent=147 // pred_check
                %p5307 = pneg %p5306
              $region161: #{tpu_custom_call.1} parent=147 // pred_check_branch
                %5309 = sbr.rel (%p5307) target = $region163
              $region162: #{tpu_custom_call.1} parent=147 // pred_region
                %s5310 = sshrl.u32 %s5221, 3
                %s5311 = sshrl.u32 %s5310, 1
                // While loop
                $region164: #{tpu_custom_call.1} parent=162 // loop_pre_header
                  _
                $region165: #{tpu_custom_call.1} parent=162 // loop_header
                  %s5315 = sphi 0, %s5317
                  %p5316 = scmp.ge.s32.totalorder %s5315, %s5311
                  %s5320 = sphi 0, %s5453
                  %s5321 = sphi %s5207, %s5456
                  %s5322 = sphi %s5220, %s5457
                $region166: #{tpu_custom_call.1} parent=162 // loop_header_branch
                  %5319 = sbr.rel (%p5316) target = $region170
                $region167: #{tpu_custom_call.1} parent=162 // loop_body
                  %v5323 = vld [vmem:[%s5321] sm:$0xff]
                  %5324 = vst [vmem:[%s5322] sm:$0xff] %v5323
                  %v5325 = vld [vmem:[%s5321 + $0x8] sm:$0xff]
                  %5326 = vst [vmem:[%s5322 + $0x8] sm:$0xff] %v5325
                  %v5327 = vld [vmem:[%s5321 + $0x10] sm:$0xff]
                  %5328 = vst [vmem:[%s5322 + $0x38] sm:$0xff] %v5327
                  %v5329 = vld [vmem:[%s5321 + $0x18] sm:$0xff]
                  %5330 = vst [vmem:[%s5322 + $0x40] sm:$0xff] %v5329
                  %v5331 = vld [vmem:[%s5321 + $0x20] sm:$0xff]
                  %5332 = vst [vmem:[%s5322 + $0x70] sm:$0xff] %v5331
                  %v5333 = vld [vmem:[%s5321 + $0x28] sm:$0xff]
                  %5334 = vst [vmem:[%s5322 + $0x78] sm:$0xff] %v5333
                  %v5335 = vld [vmem:[%s5321 + $0x30] sm:$0xff]
                  %5336 = vst [vmem:[%s5322 + $0xa8] sm:$0xff] %v5335
                  %v5337 = vld [vmem:[%s5321 + $0x38] sm:$0xff]
                  %5338 = vst [vmem:[%s5322 + $0xb0] sm:$0xff] %v5337
                  %v5339 = vld [vmem:[%s5321 + $0x40] sm:$0xff]
                  %5340 = vst [vmem:[%s5322 + $0xe0] sm:$0xff] %v5339
                  %v5341 = vld [vmem:[%s5321 + $0x48] sm:$0xff]
                  %5342 = vst [vmem:[%s5322 + $0xe8] sm:$0xff] %v5341
                  %v5343 = vld [vmem:[%s5321 + $0x50] sm:$0xff]
                  %5344 = vst [vmem:[%s5322 + $0x118] sm:$0xff] %v5343
                  %v5345 = vld [vmem:[%s5321 + $0x58] sm:$0xff]
                  %5346 = vst [vmem:[%s5322 + $0x120] sm:$0xff] %v5345
                  %v5347 = vld [vmem:[%s5321 + $0x60] sm:$0xff]
                  %5348 = vst [vmem:[%s5322 + $0x150] sm:$0xff] %v5347
                  %v5349 = vld [vmem:[%s5321 + $0x68] sm:$0xff]
                  %5350 = vst [vmem:[%s5322 + $0x158] sm:$0xff] %v5349
                  %v5351 = vld [vmem:[%s5321 + $0x70] sm:$0xff]
                  %5352 = vst [vmem:[%s5322 + $0x188] sm:$0xff] %v5351
                  %v5353 = vld [vmem:[%s5321 + $0x78] sm:$0xff]
                  %5354 = vst [vmem:[%s5322 + $0x190] sm:$0xff] %v5353
                  %v5355 = vld [vmem:[%s5321 + $0x80] sm:$0xff]
                  %5356 = vst [vmem:[%s5322 + $0x1c0] sm:$0xff] %v5355
                  %v5357 = vld [vmem:[%s5321 + $0x88] sm:$0xff]
                  %5358 = vst [vmem:[%s5322 + $0x1c8] sm:$0xff] %v5357
                  %v5359 = vld [vmem:[%s5321 + $0x90] sm:$0xff]
                  %5360 = vst [vmem:[%s5322 + $0x1f8] sm:$0xff] %v5359
                  %v5361 = vld [vmem:[%s5321 + $0x98] sm:$0xff]
                  %5362 = vst [vmem:[%s5322 + $0x200] sm:$0xff] %v5361
                  %v5363 = vld [vmem:[%s5321 + $0xa0] sm:$0xff]
                  %5364 = vst [vmem:[%s5322 + $0x230] sm:$0xff] %v5363
                  %v5365 = vld [vmem:[%s5321 + $0xa8] sm:$0xff]
                  %5366 = vst [vmem:[%s5322 + $0x238] sm:$0xff] %v5365
                  %v5367 = vld [vmem:[%s5321 + $0xb0] sm:$0xff]
                  %5368 = vst [vmem:[%s5322 + $0x268] sm:$0xff] %v5367
                  %v5369 = vld [vmem:[%s5321 + $0xb8] sm:$0xff]
                  %5370 = vst [vmem:[%s5322 + $0x270] sm:$0xff] %v5369
                  %v5371 = vld [vmem:[%s5321 + $0xc0] sm:$0xff]
                  %5372 = vst [vmem:[%s5322 + $0x2a0] sm:$0xff] %v5371
                  %v5373 = vld [vmem:[%s5321 + $0xc8] sm:$0xff]
                  %5374 = vst [vmem:[%s5322 + $0x2a8] sm:$0xff] %v5373
                  %v5375 = vld [vmem:[%s5321 + $0xd0] sm:$0xff]
                  %5376 = vst [vmem:[%s5322 + $0x2d8] sm:$0xff] %v5375
                  %v5377 = vld [vmem:[%s5321 + $0xd8] sm:$0xff]
                  %5378 = vst [vmem:[%s5322 + $0x2e0] sm:$0xff] %v5377
                  %v5379 = vld [vmem:[%s5321 + $0xe0] sm:$0xff]
                  %5380 = vst [vmem:[%s5322 + $0x310] sm:$0xff] %v5379
                  %v5381 = vld [vmem:[%s5321 + $0xe8] sm:$0xff]
                  %5382 = vst [vmem:[%s5322 + $0x318] sm:$0xff] %v5381
                  %v5383 = vld [vmem:[%s5321 + $0xf0] sm:$0xff]
                  %5384 = vst [vmem:[%s5322 + $0x348] sm:$0xff] %v5383
                  %v5385 = vld [vmem:[%s5321 + $0xf8] sm:$0xff]
                  %5386 = vst [vmem:[%s5322 + $0x350] sm:$0xff] %v5385
                  %v5387 = vld [vmem:[%s5321 + $0x100] sm:$0xff]
                  %5388 = vst [vmem:[%s5322 + $0x380] sm:$0xff] %v5387
                  %v5389 = vld [vmem:[%s5321 + $0x108] sm:$0xff]
                  %5390 = vst [vmem:[%s5322 + $0x388] sm:$0xff] %v5389
                  %v5391 = vld [vmem:[%s5321 + $0x110] sm:$0xff]
                  %5392 = vst [vmem:[%s5322 + $0x3b8] sm:$0xff] %v5391
                  %v5393 = vld [vmem:[%s5321 + $0x118] sm:$0xff]
                  %5394 = vst [vmem:[%s5322 + $0x3c0] sm:$0xff] %v5393
                  %v5395 = vld [vmem:[%s5321 + $0x120] sm:$0xff]
                  %5396 = vst [vmem:[%s5322 + $0x3f0] sm:$0xff] %v5395
                  %v5397 = vld [vmem:[%s5321 + $0x128] sm:$0xff]
                  %5398 = vst [vmem:[%s5322 + $0x3f8] sm:$0xff] %v5397
                  %v5399 = vld [vmem:[%s5321 + $0x130] sm:$0xff]
                  %5400 = vst [vmem:[%s5322 + $0x428] sm:$0xff] %v5399
                  %v5401 = vld [vmem:[%s5321 + $0x138] sm:$0xff]
                  %5402 = vst [vmem:[%s5322 + $0x430] sm:$0xff] %v5401
                  %v5403 = vld [vmem:[%s5321 + $0x140] sm:$0xff]
                  %5404 = vst [vmem:[%s5322 + $0x460] sm:$0xff] %v5403
                  %v5405 = vld [vmem:[%s5321 + $0x148] sm:$0xff]
                  %5406 = vst [vmem:[%s5322 + $0x468] sm:$0xff] %v5405
                  %v5407 = vld [vmem:[%s5321 + $0x150] sm:$0xff]
                  %5408 = vst [vmem:[%s5322 + $0x498] sm:$0xff] %v5407
                  %v5409 = vld [vmem:[%s5321 + $0x158] sm:$0xff]
                  %5410 = vst [vmem:[%s5322 + $0x4a0] sm:$0xff] %v5409
                  %v5411 = vld [vmem:[%s5321 + $0x160] sm:$0xff]
                  %5412 = vst [vmem:[%s5322 + $0x4d0] sm:$0xff] %v5411
                  %v5413 = vld [vmem:[%s5321 + $0x168] sm:$0xff]
                  %5414 = vst [vmem:[%s5322 + $0x4d8] sm:$0xff] %v5413
                  %v5415 = vld [vmem:[%s5321 + $0x170] sm:$0xff]
                  %5416 = vst [vmem:[%s5322 + $0x508] sm:$0xff] %v5415
                  %v5417 = vld [vmem:[%s5321 + $0x178] sm:$0xff]
                  %5418 = vst [vmem:[%s5322 + $0x510] sm:$0xff] %v5417
                  %v5419 = vld [vmem:[%s5321 + $0x180] sm:$0xff]
                  %5420 = vst [vmem:[%s5322 + $0x540] sm:$0xff] %v5419
                  %v5421 = vld [vmem:[%s5321 + $0x188] sm:$0xff]
                  %5422 = vst [vmem:[%s5322 + $0x548] sm:$0xff] %v5421
                  %v5423 = vld [vmem:[%s5321 + $0x190] sm:$0xff]
                  %5424 = vst [vmem:[%s5322 + $0x578] sm:$0xff] %v5423
                  %v5425 = vld [vmem:[%s5321 + $0x198] sm:$0xff]
                  %5426 = vst [vmem:[%s5322 + $0x580] sm:$0xff] %v5425
                  %v5427 = vld [vmem:[%s5321 + $0x1a0] sm:$0xff]
                  %5428 = vst [vmem:[%s5322 + $0x5b0] sm:$0xff] %v5427
                  %v5429 = vld [vmem:[%s5321 + $0x1a8] sm:$0xff]
                  %5430 = vst [vmem:[%s5322 + $0x5b8] sm:$0xff] %v5429
                  %v5431 = vld [vmem:[%s5321 + $0x1b0] sm:$0xff]
                  %5432 = vst [vmem:[%s5322 + $0x5e8] sm:$0xff] %v5431
                  %v5433 = vld [vmem:[%s5321 + $0x1b8] sm:$0xff]
                  %5434 = vst [vmem:[%s5322 + $0x5f0] sm:$0xff] %v5433
                  %v5435 = vld [vmem:[%s5321 + $0x1c0] sm:$0xff]
                  %5436 = vst [vmem:[%s5322 + $0x620] sm:$0xff] %v5435
                  %v5437 = vld [vmem:[%s5321 + $0x1c8] sm:$0xff]
                  %5438 = vst [vmem:[%s5322 + $0x628] sm:$0xff] %v5437
                  %v5439 = vld [vmem:[%s5321 + $0x1d0] sm:$0xff]
                  %5440 = vst [vmem:[%s5322 + $0x658] sm:$0xff] %v5439
                  %v5441 = vld [vmem:[%s5321 + $0x1d8] sm:$0xff]
                  %5442 = vst [vmem:[%s5322 + $0x660] sm:$0xff] %v5441
                  %v5443 = vld [vmem:[%s5321 + $0x1e0] sm:$0xff]
                  %5444 = vst [vmem:[%s5322 + $0x690] sm:$0xff] %v5443
                  %v5445 = vld [vmem:[%s5321 + $0x1e8] sm:$0xff]
                  %5446 = vst [vmem:[%s5322 + $0x698] sm:$0xff] %v5445
                  %v5447 = vld [vmem:[%s5321 + $0x1f0] sm:$0xff]
                  %5448 = vst [vmem:[%s5322 + $0x6c8] sm:$0xff] %v5447
                  %v5449 = vld [vmem:[%s5321 + $0x1f8] sm:$0xff]
                  %5450 = vst [vmem:[%s5322 + $0x6d0] sm:$0xff] %v5449
                  %s5451 = sadd.s32 1, %s5320
                  %p5452 = scmp.ge.s32.totalorder %s5451, %s5311
                  %s5453 = scalar_select %p5452, 0, %s5451
                  %s5454 = smul.u32 %s5453, 16
                  %s5455 = smul.u32 %s5453, 16
                  %s5456 = scalar_lea.vmem %s5207, %s5454 [#allocation4]
                  %s5457 = scalar_lea.vmem %s5220, %s5455
                $region168: #{tpu_custom_call.1} parent=162 // loop_footer
                  %s5317 = sadd.s32 %s5315, 1
                $region169: #{tpu_custom_call.1} parent=162 // loop_footer_branch
                  %5314 = sbr.rel target = $region165
                $region170: #{tpu_custom_call.1} parent=162 // loop_exit
                  _
                %s5458 = sshrl.u32 %s5310, 1
                %s5459 = sand.u32 %s5310, 1
                %s5460 = smul.u32 %s5458, 2
                %s5461 = smul.u32 128, %s5460
                %s5462 = sshra.s32 %s5461, 4
                %s5463 = scalar_lea.vmem %s5207, %s5462 [#allocation4]
                %s5464 = smul.u32 128, %s5460
                %s5465 = sshra.s32 %s5464, 4
                %s5466 = scalar_lea.vmem %s5220, %s5465
                // While loop
                $region171: #{tpu_custom_call.1} parent=162 // loop_pre_header
                  _
                $region172: #{tpu_custom_call.1} parent=162 // loop_header
                  %s5470 = sphi 0, %s5472
                  %p5471 = scmp.ge.s32.totalorder %s5470, %s5459
                  %s5475 = sphi 0, %s5544
                  %s5476 = sphi %s5463, %s5547
                  %s5477 = sphi %s5466, %s5548
                $region173: #{tpu_custom_call.1} parent=162 // loop_header_branch
                  %5474 = sbr.rel (%p5471) target = $region177
                $region174: #{tpu_custom_call.1} parent=162 // loop_body
                  %v5478 = vld [vmem:[%s5476] sm:$0xff]
                  %5479 = vst [vmem:[%s5477] sm:$0xff] %v5478
                  %v5480 = vld [vmem:[%s5476 + $0x10] sm:$0xff]
                  %5481 = vst [vmem:[%s5477 + $0x38] sm:$0xff] %v5480
                  %v5482 = vld [vmem:[%s5476 + $0x20] sm:$0xff]
                  %5483 = vst [vmem:[%s5477 + $0x70] sm:$0xff] %v5482
                  %v5484 = vld [vmem:[%s5476 + $0x30] sm:$0xff]
                  %5485 = vst [vmem:[%s5477 + $0xa8] sm:$0xff] %v5484
                  %v5486 = vld [vmem:[%s5476 + $0x40] sm:$0xff]
                  %5487 = vst [vmem:[%s5477 + $0xe0] sm:$0xff] %v5486
                  %v5488 = vld [vmem:[%s5476 + $0x50] sm:$0xff]
                  %5489 = vst [vmem:[%s5477 + $0x118] sm:$0xff] %v5488
                  %v5490 = vld [vmem:[%s5476 + $0x60] sm:$0xff]
                  %5491 = vst [vmem:[%s5477 + $0x150] sm:$0xff] %v5490
                  %v5492 = vld [vmem:[%s5476 + $0x70] sm:$0xff]
                  %5493 = vst [vmem:[%s5477 + $0x188] sm:$0xff] %v5492
                  %v5494 = vld [vmem:[%s5476 + $0x80] sm:$0xff]
                  %5495 = vst [vmem:[%s5477 + $0x1c0] sm:$0xff] %v5494
                  %v5496 = vld [vmem:[%s5476 + $0x90] sm:$0xff]
                  %5497 = vst [vmem:[%s5477 + $0x1f8] sm:$0xff] %v5496
                  %v5498 = vld [vmem:[%s5476 + $0xa0] sm:$0xff]
                  %5499 = vst [vmem:[%s5477 + $0x230] sm:$0xff] %v5498
                  %v5500 = vld [vmem:[%s5476 + $0xb0] sm:$0xff]
                  %5501 = vst [vmem:[%s5477 + $0x268] sm:$0xff] %v5500
                  %v5502 = vld [vmem:[%s5476 + $0xc0] sm:$0xff]
                  %5503 = vst [vmem:[%s5477 + $0x2a0] sm:$0xff] %v5502
                  %v5504 = vld [vmem:[%s5476 + $0xd0] sm:$0xff]
                  %5505 = vst [vmem:[%s5477 + $0x2d8] sm:$0xff] %v5504
                  %v5506 = vld [vmem:[%s5476 + $0xe0] sm:$0xff]
                  %5507 = vst [vmem:[%s5477 + $0x310] sm:$0xff] %v5506
                  %v5508 = vld [vmem:[%s5476 + $0xf0] sm:$0xff]
                  %5509 = vst [vmem:[%s5477 + $0x348] sm:$0xff] %v5508
                  %v5510 = vld [vmem:[%s5476 + $0x100] sm:$0xff]
                  %5511 = vst [vmem:[%s5477 + $0x380] sm:$0xff] %v5510
                  %v5512 = vld [vmem:[%s5476 + $0x110] sm:$0xff]
                  %5513 = vst [vmem:[%s5477 + $0x3b8] sm:$0xff] %v5512
                  %v5514 = vld [vmem:[%s5476 + $0x120] sm:$0xff]
                  %5515 = vst [vmem:[%s5477 + $0x3f0] sm:$0xff] %v5514
                  %v5516 = vld [vmem:[%s5476 + $0x130] sm:$0xff]
                  %5517 = vst [vmem:[%s5477 + $0x428] sm:$0xff] %v5516
                  %v5518 = vld [vmem:[%s5476 + $0x140] sm:$0xff]
                  %5519 = vst [vmem:[%s5477 + $0x460] sm:$0xff] %v5518
                  %v5520 = vld [vmem:[%s5476 + $0x150] sm:$0xff]
                  %5521 = vst [vmem:[%s5477 + $0x498] sm:$0xff] %v5520
                  %v5522 = vld [vmem:[%s5476 + $0x160] sm:$0xff]
                  %5523 = vst [vmem:[%s5477 + $0x4d0] sm:$0xff] %v5522
                  %v5524 = vld [vmem:[%s5476 + $0x170] sm:$0xff]
                  %5525 = vst [vmem:[%s5477 + $0x508] sm:$0xff] %v5524
                  %v5526 = vld [vmem:[%s5476 + $0x180] sm:$0xff]
                  %5527 = vst [vmem:[%s5477 + $0x540] sm:$0xff] %v5526
                  %v5528 = vld [vmem:[%s5476 + $0x190] sm:$0xff]
                  %5529 = vst [vmem:[%s5477 + $0x578] sm:$0xff] %v5528
                  %v5530 = vld [vmem:[%s5476 + $0x1a0] sm:$0xff]
                  %5531 = vst [vmem:[%s5477 + $0x5b0] sm:$0xff] %v5530
                  %v5532 = vld [vmem:[%s5476 + $0x1b0] sm:$0xff]
                  %5533 = vst [vmem:[%s5477 + $0x5e8] sm:$0xff] %v5532
                  %v5534 = vld [vmem:[%s5476 + $0x1c0] sm:$0xff]
                  %5535 = vst [vmem:[%s5477 + $0x620] sm:$0xff] %v5534
                  %v5536 = vld [vmem:[%s5476 + $0x1d0] sm:$0xff]
                  %5537 = vst [vmem:[%s5477 + $0x658] sm:$0xff] %v5536
                  %v5538 = vld [vmem:[%s5476 + $0x1e0] sm:$0xff]
                  %5539 = vst [vmem:[%s5477 + $0x690] sm:$0xff] %v5538
                  %v5540 = vld [vmem:[%s5476 + $0x1f0] sm:$0xff]
                  %5541 = vst [vmem:[%s5477 + $0x6c8] sm:$0xff] %v5540
                  %s5542 = sadd.s32 1, %s5475
                  %p5543 = scmp.ge.s32.totalorder %s5542, %s5459
                  %s5544 = scalar_select %p5543, 0, %s5542
                  %s5545 = smul.u32 %s5544, 8
                  %s5546 = smul.u32 %s5544, 8
                  %s5547 = scalar_lea.vmem %s5463, %s5545 [#allocation4]
                  %s5548 = scalar_lea.vmem %s5466, %s5546
                $region175: #{tpu_custom_call.1} parent=162 // loop_footer
                  %s5472 = sadd.s32 %s5470, 1
                $region176: #{tpu_custom_call.1} parent=162 // loop_footer_branch
                  %5469 = sbr.rel target = $region172
                $region177: #{tpu_custom_call.1} parent=162 // loop_exit
                  _
              $region163: #{tpu_custom_call.1} parent=147 // pred_fallthru
                _
              %p5549 = pneg %p5306
              // Predicated region
              $region178: #{tpu_custom_call.1} parent=147 // pred_check
                _
              $region179: #{tpu_custom_call.1} parent=147 // pred_check_branch
                %5551 = sbr.rel (%p5306) target = $region181
              $region180: #{tpu_custom_call.1} parent=147 // pred_region
                %s5552 = sand.u32 %s5221, 7
                %s5553 = ssub.s32 %s5221, %s5552
                %s5554 = scalar_lea.vmem %s5207, %s5553 [#allocation4]
                %s5555 = ssub.s32 %s5221, %s5552
                %s5556 = scalar_lea.vmem %s5220, %s5555
                %s5557 = sshrl.u32 %s5221, 3
                %s5558 = sshrl.u32 %s5557, 1
                // While loop
                $region182: #{tpu_custom_call.1} parent=180 // loop_pre_header
                  _
                $region183: #{tpu_custom_call.1} parent=180 // loop_header
                  %s5562 = sphi 0, %s5564
                  %p5563 = scmp.ge.s32.totalorder %s5562, %s5558
                  %s5567 = sphi 0, %s5700
                  %s5568 = sphi %s5207, %s5703
                  %s5569 = sphi %s5220, %s5704
                $region184: #{tpu_custom_call.1} parent=180 // loop_header_branch
                  %5566 = sbr.rel (%p5563) target = $region188
                $region185: #{tpu_custom_call.1} parent=180 // loop_body
                  %v5570 = vld [vmem:[%s5568] sm:$0xff]
                  %5571 = vst [vmem:[%s5569] sm:$0xff] %v5570
                  %v5572 = vld [vmem:[%s5568 + $0x8] sm:$0xff]
                  %5573 = vst [vmem:[%s5569 + $0x8] sm:$0xff] %v5572
                  %v5574 = vld [vmem:[%s5568 + $0x10] sm:$0xff]
                  %5575 = vst [vmem:[%s5569 + $0x38] sm:$0xff] %v5574
                  %v5576 = vld [vmem:[%s5568 + $0x18] sm:$0xff]
                  %5577 = vst [vmem:[%s5569 + $0x40] sm:$0xff] %v5576
                  %v5578 = vld [vmem:[%s5568 + $0x20] sm:$0xff]
                  %5579 = vst [vmem:[%s5569 + $0x70] sm:$0xff] %v5578
                  %v5580 = vld [vmem:[%s5568 + $0x28] sm:$0xff]
                  %5581 = vst [vmem:[%s5569 + $0x78] sm:$0xff] %v5580
                  %v5582 = vld [vmem:[%s5568 + $0x30] sm:$0xff]
                  %5583 = vst [vmem:[%s5569 + $0xa8] sm:$0xff] %v5582
                  %v5584 = vld [vmem:[%s5568 + $0x38] sm:$0xff]
                  %5585 = vst [vmem:[%s5569 + $0xb0] sm:$0xff] %v5584
                  %v5586 = vld [vmem:[%s5568 + $0x40] sm:$0xff]
                  %5587 = vst [vmem:[%s5569 + $0xe0] sm:$0xff] %v5586
                  %v5588 = vld [vmem:[%s5568 + $0x48] sm:$0xff]
                  %5589 = vst [vmem:[%s5569 + $0xe8] sm:$0xff] %v5588
                  %v5590 = vld [vmem:[%s5568 + $0x50] sm:$0xff]
                  %5591 = vst [vmem:[%s5569 + $0x118] sm:$0xff] %v5590
                  %v5592 = vld [vmem:[%s5568 + $0x58] sm:$0xff]
                  %5593 = vst [vmem:[%s5569 + $0x120] sm:$0xff] %v5592
                  %v5594 = vld [vmem:[%s5568 + $0x60] sm:$0xff]
                  %5595 = vst [vmem:[%s5569 + $0x150] sm:$0xff] %v5594
                  %v5596 = vld [vmem:[%s5568 + $0x68] sm:$0xff]
                  %5597 = vst [vmem:[%s5569 + $0x158] sm:$0xff] %v5596
                  %v5598 = vld [vmem:[%s5568 + $0x70] sm:$0xff]
                  %5599 = vst [vmem:[%s5569 + $0x188] sm:$0xff] %v5598
                  %v5600 = vld [vmem:[%s5568 + $0x78] sm:$0xff]
                  %5601 = vst [vmem:[%s5569 + $0x190] sm:$0xff] %v5600
                  %v5602 = vld [vmem:[%s5568 + $0x80] sm:$0xff]
                  %5603 = vst [vmem:[%s5569 + $0x1c0] sm:$0xff] %v5602
                  %v5604 = vld [vmem:[%s5568 + $0x88] sm:$0xff]
                  %5605 = vst [vmem:[%s5569 + $0x1c8] sm:$0xff] %v5604
                  %v5606 = vld [vmem:[%s5568 + $0x90] sm:$0xff]
                  %5607 = vst [vmem:[%s5569 + $0x1f8] sm:$0xff] %v5606
                  %v5608 = vld [vmem:[%s5568 + $0x98] sm:$0xff]
                  %5609 = vst [vmem:[%s5569 + $0x200] sm:$0xff] %v5608
                  %v5610 = vld [vmem:[%s5568 + $0xa0] sm:$0xff]
                  %5611 = vst [vmem:[%s5569 + $0x230] sm:$0xff] %v5610
                  %v5612 = vld [vmem:[%s5568 + $0xa8] sm:$0xff]
                  %5613 = vst [vmem:[%s5569 + $0x238] sm:$0xff] %v5612
                  %v5614 = vld [vmem:[%s5568 + $0xb0] sm:$0xff]
                  %5615 = vst [vmem:[%s5569 + $0x268] sm:$0xff] %v5614
                  %v5616 = vld [vmem:[%s5568 + $0xb8] sm:$0xff]
                  %5617 = vst [vmem:[%s5569 + $0x270] sm:$0xff] %v5616
                  %v5618 = vld [vmem:[%s5568 + $0xc0] sm:$0xff]
                  %5619 = vst [vmem:[%s5569 + $0x2a0] sm:$0xff] %v5618
                  %v5620 = vld [vmem:[%s5568 + $0xc8] sm:$0xff]
                  %5621 = vst [vmem:[%s5569 + $0x2a8] sm:$0xff] %v5620
                  %v5622 = vld [vmem:[%s5568 + $0xd0] sm:$0xff]
                  %5623 = vst [vmem:[%s5569 + $0x2d8] sm:$0xff] %v5622
                  %v5624 = vld [vmem:[%s5568 + $0xd8] sm:$0xff]
                  %5625 = vst [vmem:[%s5569 + $0x2e0] sm:$0xff] %v5624
                  %v5626 = vld [vmem:[%s5568 + $0xe0] sm:$0xff]
                  %5627 = vst [vmem:[%s5569 + $0x310] sm:$0xff] %v5626
                  %v5628 = vld [vmem:[%s5568 + $0xe8] sm:$0xff]
                  %5629 = vst [vmem:[%s5569 + $0x318] sm:$0xff] %v5628
                  %v5630 = vld [vmem:[%s5568 + $0xf0] sm:$0xff]
                  %5631 = vst [vmem:[%s5569 + $0x348] sm:$0xff] %v5630
                  %v5632 = vld [vmem:[%s5568 + $0xf8] sm:$0xff]
                  %5633 = vst [vmem:[%s5569 + $0x350] sm:$0xff] %v5632
                  %v5634 = vld [vmem:[%s5568 + $0x100] sm:$0xff]
                  %5635 = vst [vmem:[%s5569 + $0x380] sm:$0xff] %v5634
                  %v5636 = vld [vmem:[%s5568 + $0x108] sm:$0xff]
                  %5637 = vst [vmem:[%s5569 + $0x388] sm:$0xff] %v5636
                  %v5638 = vld [vmem:[%s5568 + $0x110] sm:$0xff]
                  %5639 = vst [vmem:[%s5569 + $0x3b8] sm:$0xff] %v5638
                  %v5640 = vld [vmem:[%s5568 + $0x118] sm:$0xff]
                  %5641 = vst [vmem:[%s5569 + $0x3c0] sm:$0xff] %v5640
                  %v5642 = vld [vmem:[%s5568 + $0x120] sm:$0xff]
                  %5643 = vst [vmem:[%s5569 + $0x3f0] sm:$0xff] %v5642
                  %v5644 = vld [vmem:[%s5568 + $0x128] sm:$0xff]
                  %5645 = vst [vmem:[%s5569 + $0x3f8] sm:$0xff] %v5644
                  %v5646 = vld [vmem:[%s5568 + $0x130] sm:$0xff]
                  %5647 = vst [vmem:[%s5569 + $0x428] sm:$0xff] %v5646
                  %v5648 = vld [vmem:[%s5568 + $0x138] sm:$0xff]
                  %5649 = vst [vmem:[%s5569 + $0x430] sm:$0xff] %v5648
                  %v5650 = vld [vmem:[%s5568 + $0x140] sm:$0xff]
                  %5651 = vst [vmem:[%s5569 + $0x460] sm:$0xff] %v5650
                  %v5652 = vld [vmem:[%s5568 + $0x148] sm:$0xff]
                  %5653 = vst [vmem:[%s5569 + $0x468] sm:$0xff] %v5652
                  %v5654 = vld [vmem:[%s5568 + $0x150] sm:$0xff]
                  %5655 = vst [vmem:[%s5569 + $0x498] sm:$0xff] %v5654
                  %v5656 = vld [vmem:[%s5568 + $0x158] sm:$0xff]
                  %5657 = vst [vmem:[%s5569 + $0x4a0] sm:$0xff] %v5656
                  %v5658 = vld [vmem:[%s5568 + $0x160] sm:$0xff]
                  %5659 = vst [vmem:[%s5569 + $0x4d0] sm:$0xff] %v5658
                  %v5660 = vld [vmem:[%s5568 + $0x168] sm:$0xff]
                  %5661 = vst [vmem:[%s5569 + $0x4d8] sm:$0xff] %v5660
                  %v5662 = vld [vmem:[%s5568 + $0x170] sm:$0xff]
                  %5663 = vst [vmem:[%s5569 + $0x508] sm:$0xff] %v5662
                  %v5664 = vld [vmem:[%s5568 + $0x178] sm:$0xff]
                  %5665 = vst [vmem:[%s5569 + $0x510] sm:$0xff] %v5664
                  %v5666 = vld [vmem:[%s5568 + $0x180] sm:$0xff]
                  %5667 = vst [vmem:[%s5569 + $0x540] sm:$0xff] %v5666
                  %v5668 = vld [vmem:[%s5568 + $0x188] sm:$0xff]
                  %5669 = vst [vmem:[%s5569 + $0x548] sm:$0xff] %v5668
                  %v5670 = vld [vmem:[%s5568 + $0x190] sm:$0xff]
                  %5671 = vst [vmem:[%s5569 + $0x578] sm:$0xff] %v5670
                  %v5672 = vld [vmem:[%s5568 + $0x198] sm:$0xff]
                  %5673 = vst [vmem:[%s5569 + $0x580] sm:$0xff] %v5672
                  %v5674 = vld [vmem:[%s5568 + $0x1a0] sm:$0xff]
                  %5675 = vst [vmem:[%s5569 + $0x5b0] sm:$0xff] %v5674
                  %v5676 = vld [vmem:[%s5568 + $0x1a8] sm:$0xff]
                  %5677 = vst [vmem:[%s5569 + $0x5b8] sm:$0xff] %v5676
                  %v5678 = vld [vmem:[%s5568 + $0x1b0] sm:$0xff]
                  %5679 = vst [vmem:[%s5569 + $0x5e8] sm:$0xff] %v5678
                  %v5680 = vld [vmem:[%s5568 + $0x1b8] sm:$0xff]
                  %5681 = vst [vmem:[%s5569 + $0x5f0] sm:$0xff] %v5680
                  %v5682 = vld [vmem:[%s5568 + $0x1c0] sm:$0xff]
                  %5683 = vst [vmem:[%s5569 + $0x620] sm:$0xff] %v5682
                  %v5684 = vld [vmem:[%s5568 + $0x1c8] sm:$0xff]
                  %5685 = vst [vmem:[%s5569 + $0x628] sm:$0xff] %v5684
                  %v5686 = vld [vmem:[%s5568 + $0x1d0] sm:$0xff]
                  %5687 = vst [vmem:[%s5569 + $0x658] sm:$0xff] %v5686
                  %v5688 = vld [vmem:[%s5568 + $0x1d8] sm:$0xff]
                  %5689 = vst [vmem:[%s5569 + $0x660] sm:$0xff] %v5688
                  %v5690 = vld [vmem:[%s5568 + $0x1e0] sm:$0xff]
                  %5691 = vst [vmem:[%s5569 + $0x690] sm:$0xff] %v5690
                  %v5692 = vld [vmem:[%s5568 + $0x1e8] sm:$0xff]
                  %5693 = vst [vmem:[%s5569 + $0x698] sm:$0xff] %v5692
                  %v5694 = vld [vmem:[%s5568 + $0x1f0] sm:$0xff]
                  %5695 = vst [vmem:[%s5569 + $0x6c8] sm:$0xff] %v5694
                  %v5696 = vld [vmem:[%s5568 + $0x1f8] sm:$0xff]
                  %5697 = vst [vmem:[%s5569 + $0x6d0] sm:$0xff] %v5696
                  %s5698 = sadd.s32 1, %s5567
                  %p5699 = scmp.ge.s32.totalorder %s5698, %s5558
                  %s5700 = scalar_select %p5699, 0, %s5698
                  %s5701 = smul.u32 %s5700, 16
                  %s5702 = smul.u32 %s5700, 16
                  %s5703 = scalar_lea.vmem %s5207, %s5701 [#allocation4]
                  %s5704 = scalar_lea.vmem %s5220, %s5702
                $region186: #{tpu_custom_call.1} parent=180 // loop_footer
                  %s5564 = sadd.s32 %s5562, 1
                $region187: #{tpu_custom_call.1} parent=180 // loop_footer_branch
                  %5561 = sbr.rel target = $region183
                $region188: #{tpu_custom_call.1} parent=180 // loop_exit
                  _
                %s5705 = sshrl.u32 %s5557, 1
                %s5706 = sand.u32 %s5557, 1
                %s5707 = smul.u32 %s5705, 2
                %s5708 = smul.u32 128, %s5707
                %s5709 = sshra.s32 %s5708, 4
                %s5710 = scalar_lea.vmem %s5207, %s5709 [#allocation4]
                %s5711 = smul.u32 128, %s5707
                %s5712 = sshra.s32 %s5711, 4
                %s5713 = scalar_lea.vmem %s5220, %s5712
                // While loop
                $region189: #{tpu_custom_call.1} parent=180 // loop_pre_header
                  _
                $region190: #{tpu_custom_call.1} parent=180 // loop_header
                  %s5717 = sphi 0, %s5719
                  %p5718 = scmp.ge.s32.totalorder %s5717, %s5706
                  %s5722 = sphi 0, %s5791
                  %s5723 = sphi %s5710, %s5794
                  %s5724 = sphi %s5713, %s5795
                $region191: #{tpu_custom_call.1} parent=180 // loop_header_branch
                  %5721 = sbr.rel (%p5718) target = $region195
                $region192: #{tpu_custom_call.1} parent=180 // loop_body
                  %v5725 = vld [vmem:[%s5723] sm:$0xff]
                  %5726 = vst [vmem:[%s5724] sm:$0xff] %v5725
                  %v5727 = vld [vmem:[%s5723 + $0x10] sm:$0xff]
                  %5728 = vst [vmem:[%s5724 + $0x38] sm:$0xff] %v5727
                  %v5729 = vld [vmem:[%s5723 + $0x20] sm:$0xff]
                  %5730 = vst [vmem:[%s5724 + $0x70] sm:$0xff] %v5729
                  %v5731 = vld [vmem:[%s5723 + $0x30] sm:$0xff]
                  %5732 = vst [vmem:[%s5724 + $0xa8] sm:$0xff] %v5731
                  %v5733 = vld [vmem:[%s5723 + $0x40] sm:$0xff]
                  %5734 = vst [vmem:[%s5724 + $0xe0] sm:$0xff] %v5733
                  %v5735 = vld [vmem:[%s5723 + $0x50] sm:$0xff]
                  %5736 = vst [vmem:[%s5724 + $0x118] sm:$0xff] %v5735
                  %v5737 = vld [vmem:[%s5723 + $0x60] sm:$0xff]
                  %5738 = vst [vmem:[%s5724 + $0x150] sm:$0xff] %v5737
                  %v5739 = vld [vmem:[%s5723 + $0x70] sm:$0xff]
                  %5740 = vst [vmem:[%s5724 + $0x188] sm:$0xff] %v5739
                  %v5741 = vld [vmem:[%s5723 + $0x80] sm:$0xff]
                  %5742 = vst [vmem:[%s5724 + $0x1c0] sm:$0xff] %v5741
                  %v5743 = vld [vmem:[%s5723 + $0x90] sm:$0xff]
                  %5744 = vst [vmem:[%s5724 + $0x1f8] sm:$0xff] %v5743
                  %v5745 = vld [vmem:[%s5723 + $0xa0] sm:$0xff]
                  %5746 = vst [vmem:[%s5724 + $0x230] sm:$0xff] %v5745
                  %v5747 = vld [vmem:[%s5723 + $0xb0] sm:$0xff]
                  %5748 = vst [vmem:[%s5724 + $0x268] sm:$0xff] %v5747
                  %v5749 = vld [vmem:[%s5723 + $0xc0] sm:$0xff]
                  %5750 = vst [vmem:[%s5724 + $0x2a0] sm:$0xff] %v5749
                  %v5751 = vld [vmem:[%s5723 + $0xd0] sm:$0xff]
                  %5752 = vst [vmem:[%s5724 + $0x2d8] sm:$0xff] %v5751
                  %v5753 = vld [vmem:[%s5723 + $0xe0] sm:$0xff]
                  %5754 = vst [vmem:[%s5724 + $0x310] sm:$0xff] %v5753
                  %v5755 = vld [vmem:[%s5723 + $0xf0] sm:$0xff]
                  %5756 = vst [vmem:[%s5724 + $0x348] sm:$0xff] %v5755
                  %v5757 = vld [vmem:[%s5723 + $0x100] sm:$0xff]
                  %5758 = vst [vmem:[%s5724 + $0x380] sm:$0xff] %v5757
                  %v5759 = vld [vmem:[%s5723 + $0x110] sm:$0xff]
                  %5760 = vst [vmem:[%s5724 + $0x3b8] sm:$0xff] %v5759
                  %v5761 = vld [vmem:[%s5723 + $0x120] sm:$0xff]
                  %5762 = vst [vmem:[%s5724 + $0x3f0] sm:$0xff] %v5761
                  %v5763 = vld [vmem:[%s5723 + $0x130] sm:$0xff]
                  %5764 = vst [vmem:[%s5724 + $0x428] sm:$0xff] %v5763
                  %v5765 = vld [vmem:[%s5723 + $0x140] sm:$0xff]
                  %5766 = vst [vmem:[%s5724 + $0x460] sm:$0xff] %v5765
                  %v5767 = vld [vmem:[%s5723 + $0x150] sm:$0xff]
                  %5768 = vst [vmem:[%s5724 + $0x498] sm:$0xff] %v5767
                  %v5769 = vld [vmem:[%s5723 + $0x160] sm:$0xff]
                  %5770 = vst [vmem:[%s5724 + $0x4d0] sm:$0xff] %v5769
                  %v5771 = vld [vmem:[%s5723 + $0x170] sm:$0xff]
                  %5772 = vst [vmem:[%s5724 + $0x508] sm:$0xff] %v5771
                  %v5773 = vld [vmem:[%s5723 + $0x180] sm:$0xff]
                  %5774 = vst [vmem:[%s5724 + $0x540] sm:$0xff] %v5773
                  %v5775 = vld [vmem:[%s5723 + $0x190] sm:$0xff]
                  %5776 = vst [vmem:[%s5724 + $0x578] sm:$0xff] %v5775
                  %v5777 = vld [vmem:[%s5723 + $0x1a0] sm:$0xff]
                  %5778 = vst [vmem:[%s5724 + $0x5b0] sm:$0xff] %v5777
                  %v5779 = vld [vmem:[%s5723 + $0x1b0] sm:$0xff]
                  %5780 = vst [vmem:[%s5724 + $0x5e8] sm:$0xff] %v5779
                  %v5781 = vld [vmem:[%s5723 + $0x1c0] sm:$0xff]
                  %5782 = vst [vmem:[%s5724 + $0x620] sm:$0xff] %v5781
                  %v5783 = vld [vmem:[%s5723 + $0x1d0] sm:$0xff]
                  %5784 = vst [vmem:[%s5724 + $0x658] sm:$0xff] %v5783
                  %v5785 = vld [vmem:[%s5723 + $0x1e0] sm:$0xff]
                  %5786 = vst [vmem:[%s5724 + $0x690] sm:$0xff] %v5785
                  %v5787 = vld [vmem:[%s5723 + $0x1f0] sm:$0xff]
                  %5788 = vst [vmem:[%s5724 + $0x6c8] sm:$0xff] %v5787
                  %s5789 = sadd.s32 1, %s5722
                  %p5790 = scmp.ge.s32.totalorder %s5789, %s5706
                  %s5791 = scalar_select %p5790, 0, %s5789
                  %s5792 = smul.u32 %s5791, 8
                  %s5793 = smul.u32 %s5791, 8
                  %s5794 = scalar_lea.vmem %s5710, %s5792 [#allocation4]
                  %s5795 = scalar_lea.vmem %s5713, %s5793
                $region193: #{tpu_custom_call.1} parent=180 // loop_footer
                  %s5719 = sadd.s32 %s5717, 1
                $region194: #{tpu_custom_call.1} parent=180 // loop_footer_branch
                  %5716 = sbr.rel target = $region190
                $region195: #{tpu_custom_call.1} parent=180 // loop_exit
                  _
                %s5796 = sshllo.u32 0, %s5552
                loop: start=0, step=1, limit=1
                $region196: #{tpu_custom_call.1} parent=180 // loop_pre_header
                  _
                $region197: #{tpu_custom_call.1} parent=180 // loop_header
                  %s5798 = sphi 0, %s5802
                  %p5799 = scmp.ge.s32.totalorder %s5798, 1
                  %s5803 = sphi %s5554, %s5554
                  %s5804 = sphi %s5556, %s5556
                $region198: #{tpu_custom_call.1} parent=180 // loop_header_branch
                  %5801 = sbr.rel (%p5799) target = $region202
                $region199: #{tpu_custom_call.1} parent=180 // loop_body
                  %v5805 = vld [vmem:[%s5803] sm:%s5796]
                  %5806 = vst [vmem:[%s5804] sm:%s5796] %v5805
                  %v5807 = vld [vmem:[%s5803 + $0x10] sm:%s5796]
                  %5808 = vst [vmem:[%s5804 + $0x38] sm:%s5796] %v5807
                  %v5809 = vld [vmem:[%s5803 + $0x20] sm:%s5796]
                  %5810 = vst [vmem:[%s5804 + $0x70] sm:%s5796] %v5809
                  %v5811 = vld [vmem:[%s5803 + $0x30] sm:%s5796]
                  %5812 = vst [vmem:[%s5804 + $0xa8] sm:%s5796] %v5811
                  %v5813 = vld [vmem:[%s5803 + $0x40] sm:%s5796]
                  %5814 = vst [vmem:[%s5804 + $0xe0] sm:%s5796] %v5813
                  %v5815 = vld [vmem:[%s5803 + $0x50] sm:%s5796]
                  %5816 = vst [vmem:[%s5804 + $0x118] sm:%s5796] %v5815
                  %v5817 = vld [vmem:[%s5803 + $0x60] sm:%s5796]
                  %5818 = vst [vmem:[%s5804 + $0x150] sm:%s5796] %v5817
                  %v5819 = vld [vmem:[%s5803 + $0x70] sm:%s5796]
                  %5820 = vst [vmem:[%s5804 + $0x188] sm:%s5796] %v5819
                  %v5821 = vld [vmem:[%s5803 + $0x80] sm:%s5796]
                  %5822 = vst [vmem:[%s5804 + $0x1c0] sm:%s5796] %v5821
                  %v5823 = vld [vmem:[%s5803 + $0x90] sm:%s5796]
                  %5824 = vst [vmem:[%s5804 + $0x1f8] sm:%s5796] %v5823
                  %v5825 = vld [vmem:[%s5803 + $0xa0] sm:%s5796]
                  %5826 = vst [vmem:[%s5804 + $0x230] sm:%s5796] %v5825
                  %v5827 = vld [vmem:[%s5803 + $0xb0] sm:%s5796]
                  %5828 = vst [vmem:[%s5804 + $0x268] sm:%s5796] %v5827
                  %v5829 = vld [vmem:[%s5803 + $0xc0] sm:%s5796]
                  %5830 = vst [vmem:[%s5804 + $0x2a0] sm:%s5796] %v5829
                  %v5831 = vld [vmem:[%s5803 + $0xd0] sm:%s5796]
                  %5832 = vst [vmem:[%s5804 + $0x2d8] sm:%s5796] %v5831
                  %v5833 = vld [vmem:[%s5803 + $0xe0] sm:%s5796]
                  %5834 = vst [vmem:[%s5804 + $0x310] sm:%s5796] %v5833
                  %v5835 = vld [vmem:[%s5803 + $0xf0] sm:%s5796]
                  %5836 = vst [vmem:[%s5804 + $0x348] sm:%s5796] %v5835
                  %v5837 = vld [vmem:[%s5803 + $0x100] sm:%s5796]
                  %5838 = vst [vmem:[%s5804 + $0x380] sm:%s5796] %v5837
                  %v5839 = vld [vmem:[%s5803 + $0x110] sm:%s5796]
                  %5840 = vst [vmem:[%s5804 + $0x3b8] sm:%s5796] %v5839
                  %v5841 = vld [vmem:[%s5803 + $0x120] sm:%s5796]
                  %5842 = vst [vmem:[%s5804 + $0x3f0] sm:%s5796] %v5841
                  %v5843 = vld [vmem:[%s5803 + $0x130] sm:%s5796]
                  %5844 = vst [vmem:[%s5804 + $0x428] sm:%s5796] %v5843
                  %v5845 = vld [vmem:[%s5803 + $0x140] sm:%s5796]
                  %5846 = vst [vmem:[%s5804 + $0x460] sm:%s5796] %v5845
                  %v5847 = vld [vmem:[%s5803 + $0x150] sm:%s5796]
                  %5848 = vst [vmem:[%s5804 + $0x498] sm:%s5796] %v5847
                  %v5849 = vld [vmem:[%s5803 + $0x160] sm:%s5796]
                  %5850 = vst [vmem:[%s5804 + $0x4d0] sm:%s5796] %v5849
                  %v5851 = vld [vmem:[%s5803 + $0x170] sm:%s5796]
                  %5852 = vst [vmem:[%s5804 + $0x508] sm:%s5796] %v5851
                  %v5853 = vld [vmem:[%s5803 + $0x180] sm:%s5796]
                  %5854 = vst [vmem:[%s5804 + $0x540] sm:%s5796] %v5853
                  %v5855 = vld [vmem:[%s5803 + $0x190] sm:%s5796]
                  %5856 = vst [vmem:[%s5804 + $0x578] sm:%s5796] %v5855
                  %v5857 = vld [vmem:[%s5803 + $0x1a0] sm:%s5796]
                  %5858 = vst [vmem:[%s5804 + $0x5b0] sm:%s5796] %v5857
                  %v5859 = vld [vmem:[%s5803 + $0x1b0] sm:%s5796]
                  %5860 = vst [vmem:[%s5804 + $0x5e8] sm:%s5796] %v5859
                  %v5861 = vld [vmem:[%s5803 + $0x1c0] sm:%s5796]
                  %5862 = vst [vmem:[%s5804 + $0x620] sm:%s5796] %v5861
                  %v5863 = vld [vmem:[%s5803 + $0x1d0] sm:%s5796]
                  %5864 = vst [vmem:[%s5804 + $0x658] sm:%s5796] %v5863
                  %v5865 = vld [vmem:[%s5803 + $0x1e0] sm:%s5796]
                  %5866 = vst [vmem:[%s5804 + $0x690] sm:%s5796] %v5865
                  %v5867 = vld [vmem:[%s5803 + $0x1f0] sm:%s5796]
                  %5868 = vst [vmem:[%s5804 + $0x6c8] sm:%s5796] %v5867
                $region200: #{tpu_custom_call.1} parent=180 // loop_footer
                  %s5802 = sadd.s32 1, %s5798
                $region201: #{tpu_custom_call.1} parent=180 // loop_footer_branch
                  %5797 = sbr.rel target = $region197
                $region202: #{tpu_custom_call.1} parent=180 // loop_exit
                  _
              $region181: #{tpu_custom_call.1} parent=147 // pred_fallthru
                _
            $region148: #{tpu_custom_call.1} parent=143 // pred_fallthru
              _
            // Predicated region
            $region149: #{tpu_custom_call.1} parent=143 // pred_check
              %p5229 = pneg %p5225
            $region150: #{tpu_custom_call.1} parent=143 // pred_check_branch
              %5231 = sbr.rel (%p5229) target = $region152
            $region151: #{tpu_custom_call.1} parent=143 // pred_region
              %s5232 = sshllo.u32 0, %s5221
              loop: start=0, step=1, limit=1
              $region153: #{tpu_custom_call.1} parent=151 // loop_pre_header
                _
              $region154: #{tpu_custom_call.1} parent=151 // loop_header
                %s5234 = sphi 0, %s5238
                %p5235 = scmp.ge.s32.totalorder %s5234, 1
                %s5239 = sphi %s5207, %s5207
                %s5240 = sphi %s5220, %s5220
              $region155: #{tpu_custom_call.1} parent=151 // loop_header_branch
                %5237 = sbr.rel (%p5235) target = $region159
              $region156: #{tpu_custom_call.1} parent=151 // loop_body
                %v5241 = vld [vmem:[%s5239] sm:%s5232]
                %5242 = vst [vmem:[%s5240] sm:%s5232] %v5241
                %v5243 = vld [vmem:[%s5239 + $0x10] sm:%s5232]
                %5244 = vst [vmem:[%s5240 + $0x38] sm:%s5232] %v5243
                %v5245 = vld [vmem:[%s5239 + $0x20] sm:%s5232]
                %5246 = vst [vmem:[%s5240 + $0x70] sm:%s5232] %v5245
                %v5247 = vld [vmem:[%s5239 + $0x30] sm:%s5232]
                %5248 = vst [vmem:[%s5240 + $0xa8] sm:%s5232] %v5247
                %v5249 = vld [vmem:[%s5239 + $0x40] sm:%s5232]
                %5250 = vst [vmem:[%s5240 + $0xe0] sm:%s5232] %v5249
                %v5251 = vld [vmem:[%s5239 + $0x50] sm:%s5232]
                %5252 = vst [vmem:[%s5240 + $0x118] sm:%s5232] %v5251
                %v5253 = vld [vmem:[%s5239 + $0x60] sm:%s5232]
                %5254 = vst [vmem:[%s5240 + $0x150] sm:%s5232] %v5253
                %v5255 = vld [vmem:[%s5239 + $0x70] sm:%s5232]
                %5256 = vst [vmem:[%s5240 + $0x188] sm:%s5232] %v5255
                %v5257 = vld [vmem:[%s5239 + $0x80] sm:%s5232]
                %5258 = vst [vmem:[%s5240 + $0x1c0] sm:%s5232] %v5257
                %v5259 = vld [vmem:[%s5239 + $0x90] sm:%s5232]
                %5260 = vst [vmem:[%s5240 + $0x1f8] sm:%s5232] %v5259
                %v5261 = vld [vmem:[%s5239 + $0xa0] sm:%s5232]
                %5262 = vst [vmem:[%s5240 + $0x230] sm:%s5232] %v5261
                %v5263 = vld [vmem:[%s5239 + $0xb0] sm:%s5232]
                %5264 = vst [vmem:[%s5240 + $0x268] sm:%s5232] %v5263
                %v5265 = vld [vmem:[%s5239 + $0xc0] sm:%s5232]
                %5266 = vst [vmem:[%s5240 + $0x2a0] sm:%s5232] %v5265
                %v5267 = vld [vmem:[%s5239 + $0xd0] sm:%s5232]
                %5268 = vst [vmem:[%s5240 + $0x2d8] sm:%s5232] %v5267
                %v5269 = vld [vmem:[%s5239 + $0xe0] sm:%s5232]
                %5270 = vst [vmem:[%s5240 + $0x310] sm:%s5232] %v5269
                %v5271 = vld [vmem:[%s5239 + $0xf0] sm:%s5232]
                %5272 = vst [vmem:[%s5240 + $0x348] sm:%s5232] %v5271
                %v5273 = vld [vmem:[%s5239 + $0x100] sm:%s5232]
                %5274 = vst [vmem:[%s5240 + $0x380] sm:%s5232] %v5273
                %v5275 = vld [vmem:[%s5239 + $0x110] sm:%s5232]
                %5276 = vst [vmem:[%s5240 + $0x3b8] sm:%s5232] %v5275
                %v5277 = vld [vmem:[%s5239 + $0x120] sm:%s5232]
                %5278 = vst [vmem:[%s5240 + $0x3f0] sm:%s5232] %v5277
                %v5279 = vld [vmem:[%s5239 + $0x130] sm:%s5232]
                %5280 = vst [vmem:[%s5240 + $0x428] sm:%s5232] %v5279
                %v5281 = vld [vmem:[%s5239 + $0x140] sm:%s5232]
                %5282 = vst [vmem:[%s5240 + $0x460] sm:%s5232] %v5281
                %v5283 = vld [vmem:[%s5239 + $0x150] sm:%s5232]
                %5284 = vst [vmem:[%s5240 + $0x498] sm:%s5232] %v5283
                %v5285 = vld [vmem:[%s5239 + $0x160] sm:%s5232]
                %5286 = vst [vmem:[%s5240 + $0x4d0] sm:%s5232] %v5285
                %v5287 = vld [vmem:[%s5239 + $0x170] sm:%s5232]
                %5288 = vst [vmem:[%s5240 + $0x508] sm:%s5232] %v5287
                %v5289 = vld [vmem:[%s5239 + $0x180] sm:%s5232]
                %5290 = vst [vmem:[%s5240 + $0x540] sm:%s5232] %v5289
                %v5291 = vld [vmem:[%s5239 + $0x190] sm:%s5232]
                %5292 = vst [vmem:[%s5240 + $0x578] sm:%s5232] %v5291
                %v5293 = vld [vmem:[%s5239 + $0x1a0] sm:%s5232]
                %5294 = vst [vmem:[%s5240 + $0x5b0] sm:%s5232] %v5293
                %v5295 = vld [vmem:[%s5239 + $0x1b0] sm:%s5232]
                %5296 = vst [vmem:[%s5240 + $0x5e8] sm:%s5232] %v5295
                %v5297 = vld [vmem:[%s5239 + $0x1c0] sm:%s5232]
                %5298 = vst [vmem:[%s5240 + $0x620] sm:%s5232] %v5297
                %v5299 = vld [vmem:[%s5239 + $0x1d0] sm:%s5232]
                %5300 = vst [vmem:[%s5240 + $0x658] sm:%s5232] %v5299
                %v5301 = vld [vmem:[%s5239 + $0x1e0] sm:%s5232]
                %5302 = vst [vmem:[%s5240 + $0x690] sm:%s5232] %v5301
                %v5303 = vld [vmem:[%s5239 + $0x1f0] sm:%s5232]
                %5304 = vst [vmem:[%s5240 + $0x6c8] sm:%s5232] %v5303
              $region157: #{tpu_custom_call.1} parent=151 // loop_footer
                %s5238 = sadd.s32 1, %s5234
              $region158: #{tpu_custom_call.1} parent=151 // loop_footer_branch
                %5233 = sbr.rel target = $region154
              $region159: #{tpu_custom_call.1} parent=151 // loop_exit
                _
            $region152: #{tpu_custom_call.1} parent=143 // pred_fallthru
              _
          $region144: #{tpu_custom_call.1} parent=139 // pred_fallthru
            _
          %5869 = vnop
        $region140: #{tpu_custom_call.1} parent=127 // pred_fallthru
          _
      $region128: #{tpu_custom_call.1} parent=5 // pred_fallthru
        _
      %p5870 = scmp.le.s32.totalorder 2, %s9
      // Predicated region
      $region203: #{tpu_custom_call.1} parent=5 // pred_check
        %p5871 = pneg %p5870
      $region204: #{tpu_custom_call.1} parent=5 // pred_check_branch
        %5873 = sbr.rel (%p5871) target = $region206
      $region205: #{tpu_custom_call.1} parent=5 // pred_region
        %s5874 = ssub.s32 %s9, 2
        // Predicated region
        $region207: #{tpu_custom_call.1} parent=205 // pred_check
          %p5875 = pneg %p129
        $region208: #{tpu_custom_call.1} parent=205 // pred_check_branch
          %5877 = sbr.rel (%p5875) target = $region210
        $region209: #{tpu_custom_call.1} parent=205 // pred_region
          %s5878 = sand.u32 %s114, 1
          %s5879 = sand.u32 %s114, 1
          %s5880 = smul.addr %s5879, 512
          %s5881 = scalar_lea.vmem [#allocation4], %s5880
        $region210: #{tpu_custom_call.1} parent=205 // pred_fallthru
          _
      $region206: #{tpu_custom_call.1} parent=5 // pred_fallthru
        _
    $region6: #{tpu_custom_call.1} parent=1 // loop_footer
      %s13 = sadd.s32 1, %s9
    $region7: #{tpu_custom_call.1} parent=1 // loop_footer_branch
      %8 = sbr.rel target = $region3
    $region8: #{tpu_custom_call.1} parent=1 // loop_exit
      _

</llo_original>
